<compile_context>
chip_gen: v5e
topology: v5e:2x2
jax: 0.10.0
libtpu: 0.0.40
codegen_flags: <defaults>
</compile_context>

<pallas_src>
import numpy as np
import jax
import jax.numpy as jnp
from jax.experimental import pallas as pl
from jax.experimental.pallas import tpu as pltpu


# ----------------------------------------------------------------------------
# Small helpers
# ----------------------------------------------------------------------------
def _round_up(x, m):
    return ((x + m - 1) // m) * m


def _pick_tile(n, target, align=1):
    """Largest divisor of n that is <= target and a multiple of `align`.
    Falls back to n itself (full dim, which BlockSpec always allows)."""
    for d in range(min(n, target), 0, -1):
        if n % d == 0 and d % align == 0:
            return d
    return n


def _pad_gate_cols(w, H, Hp):
    """(..., 3H) -> (..., 3Hp): each H-wide gate block (r, z, n) is placed at
    the start of its lane-aligned Hp-wide slot; padding columns are zero."""
    if Hp == H:
        return w
    out = jnp.zeros(w.shape[:-1] + (3 * Hp,), w.dtype)
    for g in range(3):
        out = out.at[..., g * Hp:g * Hp + H].set(w[..., g * H:(g + 1) * H])
    return out


def _pad_in_rows(w, H, Hp):
    """(2H, X) -> (2Hp, X): real fwd rows at [0:H], real bwd rows at
    [Hp:Hp+H]; padded rows are zero (they multiply zero activation lanes)."""
    if Hp == H:
        return w
    out = jnp.zeros((2 * Hp, w.shape[-1]), w.dtype)
    out = out.at[0:H].set(w[0:H])
    out = out.at[Hp:Hp + H].set(w[H:2 * H])
    return out


def _pad_h_rows(w, H, Hp):
    """(H, X) -> (Hp, X), zero-padded rows."""
    if Hp == H:
        return w
    return jnp.concatenate([w, jnp.zeros((Hp - H, w.shape[-1]), w.dtype)],
                           axis=0)


# ----------------------------------------------------------------------------
# Pallas kernels
# ----------------------------------------------------------------------------
def _bigru_chunk_kernel(xf_ref, xb_ref, len_ref, wihf_ref, wihb_ref,
                        whhf_ref, whhb_ref, b_ref, yf_ref, yb_ref,
                        gif_scr, gib_scr, yf_scr, yb_scr, hf_scr, hb_scr):
    """One T-chunk of a fused bidirectional GRU layer.

    Grid: (num_chunks,) marked "arbitrary" (recurrence).  Grid step i
    processes forward times [i*Tc, (i+1)*Tc) and backward times
    [(nc-1-i)*Tc, (nc-i)*Tc) in reverse order; the hidden states of both
    directions live in persistent VMEM scratch carried across grid steps.

    xf_ref: (Tc*B, Din) bf16 input rows of the forward chunk (chunk i)
    xb_ref: (Tc*B, Din) bf16 input rows of the backward chunk (chunk nc-1-i)
    len_ref: (B, 1) int32 valid lengths (trailing padding assumed)
    wihf_ref/wihb_ref: (Din, 3Hp) bf16 input->gate weights per direction
    whhf_ref/whhb_ref: (Hp, 3Hp)  bf16 hidden->gate weights per direction
    b_ref: (2, 6Hp) f32, row 0 = [bih_f | bih_b], row 1 = [bhh_f | bhh_b]
    yf_ref: (Tc*B, Hp) bf16 forward outputs of chunk i
    yb_ref: (Tc*B, Hp) bf16 backward outputs of chunk nc-1-i
    """
    B = len_ref.shape[0]
    Hp = whhf_ref.shape[0]
    H3 = 3 * Hp
    TcB = xf_ref.shape[0]
    Tc = TcB // B
    i = pl.program_id(0)
    nc = pl.num_programs(0)

    @pl.when(i == 0)
    def _init():
        hf_scr[...] = jnp.zeros_like(hf_scr)
        hb_scr[...] = jnp.zeros_like(hb_scr)

    # Hoisted input projection: one chunk-sized bf16 MXU matmul per direction
    # (f32 accumulation), written straight into lane-dense f32 scratch.
    gif_scr[...] = (jnp.dot(xf_ref[...], wihf_ref[...],
                            preferred_element_type=jnp.float32)
                    + b_ref[0:1, 0:H3])
    gib_scr[...] = (jnp.dot(xb_ref[...], wihb_ref[...],
                            preferred_element_type=jnp.float32)
                    + b_ref[0:1, H3:2 * H3])

    lens = len_ref[...]                                   # (B, 1) int32
    whh_f = whhf_ref[...]                                 # (Hp, 3Hp) bf16
    whh_b = whhb_ref[...]
    # Hoisted bias broadcasts (JAX does not CSE broadcast_in_dim in loops).
    bhh_f = jnp.broadcast_to(b_ref[1:2, 0:H3], (B, H3))
    bhh_b = jnp.broadcast_to(b_ref[1:2, H3:2 * H3], (B, H3))

    t0_f = i * Tc                  # global time of local step 0 (forward)
    t0_b = (nc - 1 - i) * Tc       # global time of local row 0 (bwd chunk)

    def gates(gi_t, gh_t, h_prev):
        r = jax.nn.sigmoid(gi_t[:, 0:Hp] + gh_t[:, 0:Hp])
        z = jax.nn.sigmoid(gi_t[:, Hp:2 * Hp] + gh_t[:, Hp:2 * Hp])
        n = jnp.tanh(gi_t[:, 2 * Hp:H3] + r * gh_t[:, 2 * Hp:H3])
        return (1.0 - z) * n + z * h_prev

    def body(t, carry):
        hf, hb = carry                                    # (B, Hp) f32 each
        tb = Tc - 1 - t                                   # local backward step
        off_f = pl.multiple_of(t * B, B)
        off_b = pl.multiple_of(tb * B, B)
        gi_f = gif_scr[pl.ds(off_f, B), :]                # (B, 3Hp) f32
        gi_b = gib_scr[pl.ds(off_b, B), :]

        # Two dense hidden->gate matmuls (no zero block-diagonal passes).
        gh_f = jnp.dot(hf.astype(whh_f.dtype), whh_f,
                       preferred_element_type=jnp.float32) + bhh_f
        gh_b = jnp.dot(hb.astype(whh_b.dtype), whh_b,
                       preferred_element_type=jnp.float32) + bhh_b

        hf_new = gates(gi_f, gh_f, hf)
        hb_new = gates(gi_b, gh_b, hb)

        valid_f = (t0_f + t) < lens                       # (B, 1) bool
        valid_b = (t0_b + tb) < lens
        # Packed-backward semantics: hold the backward hidden state at zero
        # inside the trailing pad region so the first valid (reversed) step
        # starts from h = 0.
        hb_new = jnp.where(valid_b, hb_new, 0.0)

        yf_scr[pl.ds(off_f, B), :] = jnp.where(valid_f, hf_new, 0.0)
        yb_scr[pl.ds(off_b, B), :] = hb_new
        return hf_new, hb_new

    hf_fin, hb_fin = jax.lax.fori_loop(0, Tc, body,
                                       (hf_scr[...], hb_scr[...]))
    hf_scr[...] = hf_fin
    hb_scr[...] = hb_fin

    # Single static lane-dense bf16 store of this chunk's outputs.
    yf_ref[...] = yf_scr[...].astype(yf_ref.dtype)
    yb_ref[...] = yb_scr[...].astype(yb_ref.dtype)


def _linear_kernel(x_ref, w_ref, b_ref, o_ref):
    o_ref[...] = (jnp.dot(x_ref[...], w_ref[...],
                          preferred_element_type=jnp.float32)
                  + b_ref[...]).astype(o_ref.dtype)


# ----------------------------------------------------------------------------
# Pallas wrappers
# ----------------------------------------------------------------------------
def bigru_layer_pallas(x2d, lens_col, lyr, *, chunk_target=64):
    """One fused bidirectional GRU layer.

    x2d: (T*B, Din) bf16 time-major activations (row t*B + b <-> (t, b)).
    Returns (y_fwd, y_bwd), each (T*B, Hp) bf16.
    """
    TB, Din = x2d.shape
    B = lens_col.shape[0]
    T = TB // B
    wih_f, wih_b = lyr["wih_f"], lyr["wih_b"]
    whh_f, whh_b = lyr["whh_f"], lyr["whh_b"]
    b2 = lyr["b"]
    Hp = whh_f.shape[0]
    H3 = 3 * Hp

    # Chunk the time axis (even Tc keeps bf16 (16,128) tiling happy at B=8).
    Tc = _pick_tile(T, chunk_target, 2)
    if (Tc * B) % 16 != 0:
        Tc = T
    nc = T // Tc

    yf, yb = pl.pallas_call(
        _bigru_chunk_kernel,
        out_shape=(jax.ShapeDtypeStruct((TB, Hp), x2d.dtype),
                   jax.ShapeDtypeStruct((TB, Hp), x2d.dtype)),
        grid=(nc,),
        in_specs=[
            pl.BlockSpec((Tc * B, Din), lambda i: (i, 0)),           # fwd chunk
            pl.BlockSpec((Tc * B, Din), lambda i: (nc - 1 - i, 0)),  # bwd chunk
            pl.BlockSpec((B, 1), lambda i: (0, 0)),
            pl.BlockSpec((Din, H3), lambda i: (0, 0)),
            pl.BlockSpec((Din, H3), lambda i: (0, 0)),
            pl.BlockSpec((Hp, H3), lambda i: (0, 0)),
            pl.BlockSpec((Hp, H3), lambda i: (0, 0)),
            pl.BlockSpec((2, 2 * H3), lambda i: (0, 0)),
        ],
        out_specs=(pl.BlockSpec((Tc * B, Hp), lambda i: (i, 0)),
                   pl.BlockSpec((Tc * B, Hp), lambda i: (nc - 1 - i, 0))),
        scratch_shapes=[
            pltpu.VMEM((Tc * B, H3), jnp.float32),   # gi fwd
            pltpu.VMEM((Tc * B, H3), jnp.float32),   # gi bwd
            pltpu.VMEM((Tc * B, Hp), jnp.float32),   # y fwd (f32 staging)
            pltpu.VMEM((Tc * B, Hp), jnp.float32),   # y bwd (f32 staging)
            pltpu.VMEM((B, Hp), jnp.float32),        # h fwd (persistent)
            pltpu.VMEM((B, Hp), jnp.float32),        # h bwd (persistent)
        ],
        compiler_params=pltpu.CompilerParams(
            dimension_semantics=("arbitrary",),      # recurrence -> sequential
            vmem_limit_bytes=48 * 1024 * 1024),
    )(x2d, x2d, lens_col, wih_f, wih_b, whh_f, whh_b, b2)
    return yf, yb


def linear_pallas(x2d, w_t, b_row, *, row_tile_target=256,
                  vocab_tile_target=2048):
    """x2d (N, Din) @ w_t (Din, V) + b_row (1, V), tiled over rows and vocab."""
    N, Din = x2d.shape
    V = w_t.shape[1]
    tn = _pick_tile(N, row_tile_target, 16)
    tv = _pick_tile(V, vocab_tile_target, 128)
    return pl.pallas_call(
        _linear_kernel,
        out_shape=jax.ShapeDtypeStruct((N, V), jnp.float32),
        grid=(N // tn, V // tv),
        in_specs=[
            pl.BlockSpec((tn, Din), lambda r, c: (r, 0)),
            pl.BlockSpec((Din, tv), lambda r, c: (0, c)),
            pl.BlockSpec((1, tv), lambda r, c: (0, c)),
        ],
        out_specs=pl.BlockSpec((tn, tv), lambda r, c: (r, c)),
        compiler_params=pltpu.CompilerParams(
            dimension_semantics=("parallel", "parallel")),
    )(x2d, w_t, b_row)


# ----------------------------------------------------------------------------
# Pure-JAX reference (same math / same bf16 operand casts) for self-check
# ----------------------------------------------------------------------------
def _gru_dir_ref(x_tbe, lens_col, wih, whh, bih, bhh, reverse):
    T, B, _ = x_tbe.shape
    Hp = whh.shape[0]
    gi_all = jnp.dot(x_tbe, wih, preferred_element_type=jnp.float32) + bih
    ts = jnp.arange(T, dtype=jnp.int32)

    def step(h, inp):
        gi, t = inp
        gh = jnp.dot(h.astype(whh.dtype), whh,
                     preferred_element_type=jnp.float32) + bhh
        r = jax.nn.sigmoid(gi[:, 0:Hp] + gh[:, 0:Hp])
        z = jax.nn.sigmoid(gi[:, Hp:2 * Hp] + gh[:, Hp:2 * Hp])
        n = jnp.tanh(gi[:, 2 * Hp:] + r * gh[:, 2 * Hp:])
        h_new = (1.0 - z) * n + z * h
        valid = t < lens_col
        if reverse:
            h_new = jnp.where(valid, h_new, 0.0)
            y = h_new
        else:
            y = jnp.where(valid, h_new, 0.0)
        return h_new, y.astype(jnp.bfloat16)

    _, ys = jax.lax.scan(step, jnp.zeros((B, Hp), jnp.float32),
                         (gi_all, ts), reverse=reverse)
    return ys                                              # (T, B, Hp) bf16


def bigru_layer_ref(x2d, lens_col, lyr):
    TB, Din = x2d.shape
    B = lens_col.shape[0]
    T = TB // B
    Hp = lyr["whh_f"].shape[0]
    H3 = 3 * Hp
    x_tbe = x2d.reshape(T, B, Din)
    b = lyr["b"]
    yf = _gru_dir_ref(x_tbe, lens_col, lyr["wih_f"], lyr["whh_f"],
                      b[0:1, 0:H3], b[1:2, 0:H3], reverse=False)
    yb = _gru_dir_ref(x_tbe, lens_col, lyr["wih_b"], lyr["whh_b"],
                      b[0:1, H3:], b[1:2, H3:], reverse=True)
    return yf.reshape(TB, Hp), yb.reshape(TB, Hp)


# ----------------------------------------------------------------------------
# Model: parameters + forward pass
# ----------------------------------------------------------------------------
def init_params(key, vocab_size, embed_dim, hidden_dim, num_layers,
                pad_token_id):
    H = hidden_dim
    Hp = _round_up(H, 128)                 # lane-aligned per-direction width
    params = {}

    key, k_emb = jax.random.split(key)
    emb = jax.random.normal(k_emb, (vocab_size, embed_dim), jnp.float32)
    emb = emb.at[pad_token_id].set(0.0)    # nn.Embedding(padding_idx=...)
    params["embedding"] = emb

    bound = 1.0 / np.sqrt(H)

    def u(k, shape):
        return jax.random.uniform(k, shape, jnp.float32, -bound, bound)

    layers = []
    in_dim = embed_dim
    for layer in range(num_layers):
        key, *ks = jax.random.split(key, 9)
        wih_f = u(ks[0], (in_dim, 3 * H))
        wih_b = u(ks[1], (in_dim, 3 * H))
        whh_f = u(ks[2], (H, 3 * H))
        whh_b = u(ks[3], (H, 3 * H))
        bih_f = u(ks[4], (3 * H,))
        bih_b = u(ks[5], (3 * H,))
        bhh_f = u(ks[6], (3 * H,))
        bhh_b = u(ks[7], (3 * H,))

        if layer == 0:
            wih_f_p = _pad_gate_cols(wih_f, H, Hp)
            wih_b_p = _pad_gate_cols(wih_b, H, Hp)
        else:
            wih_f_p = _pad_gate_cols(_pad_in_rows(wih_f, H, Hp), H, Hp)
            wih_b_p = _pad_gate_cols(_pad_in_rows(wih_b, H, Hp), H, Hp)

        whh_f_p = _pad_gate_cols(_pad_h_rows(whh_f, H, Hp), H, Hp)
        whh_b_p = _pad_gate_cols(_pad_h_rows(whh_b, H, Hp), H, Hp)

        bih = jnp.concatenate([_pad_gate_cols(bih_f[None], H, Hp),
                               _pad_gate_cols(bih_b[None], H, Hp)], axis=1)
        bhh = jnp.concatenate([_pad_gate_cols(bhh_f[None], H, Hp),
                               _pad_gate_cols(bhh_b[None], H, Hp)], axis=1)
        layers.append({
            "wih_f": wih_f_p.astype(jnp.bfloat16),    # (Din_pad, 3Hp)
            "wih_b": wih_b_p.astype(jnp.bfloat16),
            "whh_f": whh_f_p.astype(jnp.bfloat16),    # (Hp, 3Hp)
            "whh_b": whh_b_p.astype(jnp.bfloat16),
            "b": jnp.concatenate([bih, bhh], axis=0), # (2, 6Hp) f32
        })
        in_dim = 2 * H
    params["gru"] = layers

    key, kc1, kc2 = jax.random.split(key, 3)
    cb = 1.0 / np.sqrt(2 * H)
    cls_w = jax.random.uniform(kc1, (2 * H, vocab_size), jnp.float32, -cb, cb)
    params["cls_w_t"] = _pad_in_rows(cls_w, H, Hp).astype(jnp.bfloat16)
    params["cls_b"] = jax.random.uniform(kc2, (1, vocab_size),
                                         jnp.float32, -cb, cb)
    return params


def forward(params, input_ids, pad_token_id, t_out=None, use_pallas=True):
    """Mirrors CodeAutocompleteRNN.forward (inference mode).

    t_out: static output length (max valid length, as pad_packed_sequence
    would produce).  Passing it avoids a host sync on jnp.max(lengths).
    """
    B, T = input_ids.shape
    if t_out is None:
        t_out = T

    # NOTE: assumes strictly trailing padding (pad_token_id never mid-seq).
    lengths = jnp.sum(input_ids != pad_token_id, axis=1).astype(jnp.int32)
    lens_col = lengths[:, None]                              # (B, 1)

    # Embedding lookup, time-major: row t*B + b <-> (t, b); pad row is zero.
    # TODO(synk): fuse the gather into the first GRU layer via scalar-prefetch.
    x = params["embedding"][input_ids.T].reshape(T * B, -1)
    x = x.astype(jnp.bfloat16)                               # MXU operand dtype

    for lyr in params["gru"]:
        if use_pallas:
            yf, yb = bigru_layer_pallas(x, lens_col, lyr)
        else:
            yf, yb = bigru_layer_ref(x, lens_col, lyr)
        # TODO(synk): feed (yf, yb) directly to the next kernel to drop this
        # concat; nn.GRU inter-layer dropout is inactive at inference.
        x = jnp.concatenate([yf, yb], axis=1)                # (T*B, 2Hp) bf16

    out2d = x[: t_out * B]                                   # (t_out*B, 2Hp)
    if use_pallas:
        logits2d = linear_pallas(out2d, params["cls_w_t"], params["cls_b"])
    else:
        logits2d = (jnp.dot(out2d, params["cls_w_t"],
                            preferred_element_type=jnp.float32)
                    + params["cls_b"])
    # time-major -> batch-first (single transpose at the model boundary)
    return jnp.transpose(logits2d.reshape(t_out, B, -1), (1, 0, 2))


# ----------------------------------------------------------------------------
# Main
# ----------------------------------------------------------------------------
if __name__ == "__main__":
    vocab_size, embed_dim, hidden_dim, num_layers = 512, 32, 32, 2
    pad_token_id = 0
    B, T = 8, 96       # T=96 -> 2 time-chunks of 48 steps (exercises carry)

    key = jax.random.PRNGKey(0)
    pkey, dkey = jax.random.split(key)
    params = init_params(pkey, vocab_size, embed_dim, hidden_dim,
                         num_layers, pad_token_id)

    tokens = jax.random.randint(dkey, (B, T), 1, vocab_size, dtype=jnp.int32)
    lengths_np = np.array([80, 37, 5, 64, 80, 12, 49, 3], dtype=np.int32)
    valid = np.arange(T)[None, :] < lengths_np[:, None]      # trailing padding
    input_ids = jnp.where(jnp.asarray(valid), tokens, pad_token_id)

    # Static (host-side) max length -> no device sync, no per-batch recompile.
    t_out = int(lengths_np.max())

    fwd = jax.jit(forward, static_argnums=(2, 3, 4))
    logits = fwd(params, input_ids, pad_token_id, t_out, True)
    jax.block_until_ready(logits)

    ref = fwd(params, input_ids, pad_token_id, t_out, False)
    np.testing.assert_allclose(np.asarray(logits), np.asarray(ref),
                               rtol=2e-3, atol=2e-3)
    assert logits.shape == (B, t_out, vocab_size)
    print("KERNEL_OK")
</pallas_src>

<mosaic_0001>
module attributes {stable_mosaic.version = 11 : i64} {
  func.func @_bigru_chunk_kernel(%arg0: i32, %arg1: memref<384x32xbf16, #tpu.memory_space<vmem>>, %arg2: memref<384x32xbf16, #tpu.memory_space<vmem>>, %arg3: memref<8x1xi32, #tpu.memory_space<vmem>>, %arg4: memref<32x384xbf16, #tpu.memory_space<vmem>>, %arg5: memref<32x384xbf16, #tpu.memory_space<vmem>>, %arg6: memref<128x384xbf16, #tpu.memory_space<vmem>>, %arg7: memref<128x384xbf16, #tpu.memory_space<vmem>>, %arg8: memref<2x768xf32, #tpu.memory_space<vmem>>, %arg9: memref<384x128xbf16, #tpu.memory_space<vmem>>, %arg10: memref<384x128xbf16, #tpu.memory_space<vmem>>, %arg11: memref<384x384xf32, #tpu.memory_space<vmem>>, %arg12: memref<384x384xf32, #tpu.memory_space<vmem>>, %arg13: memref<384x128xf32, #tpu.memory_space<vmem>>, %arg14: memref<384x128xf32, #tpu.memory_space<vmem>>, %arg15: memref<8x128xf32, #tpu.memory_space<vmem>>, %arg16: memref<8x128xf32, #tpu.memory_space<vmem>>) attributes {dimension_semantics = [#tpu.dimension_semantics<arbitrary>], iteration_bounds = array<i64: 2>, scalar_prefetch = 0 : i64, scratch_operands = 6 : i64, tpu.core_type = #tpu.core_type<tc>, window_params = [{transform_indices = @transform_0, window_bounds = array<i64: 384, 32>}, {transform_indices = @transform_1, window_bounds = array<i64: 384, 32>}, {pipeline_mode = #tpu.pipeline_mode<synchronous>, transform_indices = @transform_2, window_bounds = array<i64: 8, 1>}, {pipeline_mode = #tpu.pipeline_mode<synchronous>, transform_indices = @transform_3, window_bounds = array<i64: 32, 384>}, {pipeline_mode = #tpu.pipeline_mode<synchronous>, transform_indices = @transform_4, window_bounds = array<i64: 32, 384>}, {pipeline_mode = #tpu.pipeline_mode<synchronous>, transform_indices = @transform_5, window_bounds = array<i64: 128, 384>}, {pipeline_mode = #tpu.pipeline_mode<synchronous>, transform_indices = @transform_6, window_bounds = array<i64: 128, 384>}, {pipeline_mode = #tpu.pipeline_mode<synchronous>, transform_indices = @transform_7, window_bounds = array<i64: 2, 768>}, {transform_indices = @transform_8, window_bounds = array<i64: 384, 128>}, {transform_indices = @transform_9, window_bounds = array<i64: 384, 128>}]} {
    %c0_i32 = arith.constant 0 : i32
    %0 = arith.cmpi eq, %arg0, %c0_i32 : i32
    %1 = arith.extui %0 : i1 to i32
    %c0_i32_0 = arith.constant 0 : i32
    %2 = arith.cmpi ne, %1, %c0_i32_0 : i32
    scf.if %2 {
      %cst_46 = arith.constant 0.000000e+00 : f32
      %41 = vector.broadcast %cst_46 : f32 to vector<8x128xf32>
      %c0_47 = arith.constant 0 : index
      %c0_48 = arith.constant 0 : index
      %42 = vector.load %arg15[%c0_47, %c0_48] : memref<8x128xf32, #tpu.memory_space<vmem>>, vector<8x128xf32>
      tpu.vector_store %arg15[%c0_47, %c0_48], %41 {strides = array<i32>} : memref<8x128xf32, #tpu.memory_space<vmem>>, vector<8x128xf32>,
      %cst_49 = arith.constant 0.000000e+00 : f32
      %43 = vector.broadcast %cst_49 : f32 to vector<8x128xf32>
      %c0_50 = arith.constant 0 : index
      %c0_51 = arith.constant 0 : index
      %44 = vector.load %arg16[%c0_50, %c0_51] : memref<8x128xf32, #tpu.memory_space<vmem>>, vector<8x128xf32>
      tpu.vector_store %arg16[%c0_50, %c0_51], %43 {strides = array<i32>} : memref<8x128xf32, #tpu.memory_space<vmem>>, vector<8x128xf32>,
    } else {
    }
    %c0 = arith.constant 0 : index
    %c0_1 = arith.constant 0 : index
    %3 = vector.load %arg1[%c0, %c0_1] : memref<384x32xbf16, #tpu.memory_space<vmem>>, vector<384x32xbf16>
    %c0_2 = arith.constant 0 : index
    %c0_3 = arith.constant 0 : index
    %4 = vector.load %arg4[%c0_2, %c0_3] : memref<32x384xbf16, #tpu.memory_space<vmem>>, vector<32x384xbf16>
    %cst = arith.constant dense<0.000000e+00> : vector<384x384xf32>
    %5 = tpu.matmul %3, %4, %cst {dimension_numbers = #tpu.dot_dimension_numbers<[1], [0], [0], [1], [0, 0, 1, 1], [], []>} : vector<384x32xbf16>, vector<32x384xbf16>, vector<384x384xf32> -> vector<384x384xf32>
    %c0_4 = arith.constant 0 : index
    %c0_5 = arith.constant 0 : index
    %6 = vector.load %arg8[%c0_4, %c0_5] : memref<2x768xf32, #tpu.memory_space<vmem>>, vector<1x384xf32>
    %7 = vector.broadcast %6 : vector<1x384xf32> to vector<384x384xf32>
    %8 = arith.addf %5, %7 : vector<384x384xf32>
    %c0_6 = arith.constant 0 : index
    %c0_7 = arith.constant 0 : index
    %9 = vector.load %arg11[%c0_6, %c0_7] : memref<384x384xf32, #tpu.memory_space<vmem>>, vector<384x384xf32>
    tpu.vector_store %arg11[%c0_6, %c0_7], %8 {strides = array<i32>} : memref<384x384xf32, #tpu.memory_space<vmem>>, vector<384x384xf32>,
    %c0_8 = arith.constant 0 : index
    %c0_9 = arith.constant 0 : index
    %10 = vector.load %arg2[%c0_8, %c0_9] : memref<384x32xbf16, #tpu.memory_space<vmem>>, vector<384x32xbf16>
    %c0_10 = arith.constant 0 : index
    %c0_11 = arith.constant 0 : index
    %11 = vector.load %arg5[%c0_10, %c0_11] : memref<32x384xbf16, #tpu.memory_space<vmem>>, vector<32x384xbf16>
    %cst_12 = arith.constant dense<0.000000e+00> : vector<384x384xf32>
    %12 = tpu.matmul %10, %11, %cst_12 {dimension_numbers = #tpu.dot_dimension_numbers<[1], [0], [0], [1], [0, 0, 1, 1], [], []>} : vector<384x32xbf16>, vector<32x384xbf16>, vector<384x384xf32> -> vector<384x384xf32>
    %c0_13 = arith.constant 0 : index
    %c384 = arith.constant 384 : index
    %13 = vector.load %arg8[%c0_13, %c384] : memref<2x768xf32, #tpu.memory_space<vmem>>, vector<1x384xf32>
    %14 = vector.broadcast %13 : vector<1x384xf32> to vector<384x384xf32>
    %15 = arith.addf %12, %14 : vector<384x384xf32>
    %c0_14 = arith.constant 0 : index
    %c0_15 = arith.constant 0 : index
    %16 = vector.load %arg12[%c0_14, %c0_15] : memref<384x384xf32, #tpu.memory_space<vmem>>, vector<384x384xf32>
    tpu.vector_store %arg12[%c0_14, %c0_15], %15 {strides = array<i32>} : memref<384x384xf32, #tpu.memory_space<vmem>>, vector<384x384xf32>,
    %c0_16 = arith.constant 0 : index
    %c0_17 = arith.constant 0 : index
    %17 = vector.load %arg3[%c0_16, %c0_17] : memref<8x1xi32, #tpu.memory_space<vmem>>, vector<8x1xi32>
    %c0_18 = arith.constant 0 : index
    %c0_19 = arith.constant 0 : index
    %18 = vector.load %arg6[%c0_18, %c0_19] : memref<128x384xbf16, #tpu.memory_space<vmem>>, vector<128x384xbf16>
    %c0_20 = arith.constant 0 : index
    %c0_21 = arith.constant 0 : index
    %19 = vector.load %arg7[%c0_20, %c0_21] : memref<128x384xbf16, #tpu.memory_space<vmem>>, vector<128x384xbf16>
    %c1 = arith.constant 1 : index
    %c0_22 = arith.constant 0 : index
    %20 = vector.load %arg8[%c1, %c0_22] : memref<2x768xf32, #tpu.memory_space<vmem>>, vector<1x384xf32>
    %21 = vector.shape_cast %20 : vector<1x384xf32> to vector<1x384xf32>
    %22 = vector.broadcast %21 : vector<1x384xf32> to vector<8x384xf32>
    %c1_23 = arith.constant 1 : index
    %c384_24 = arith.constant 384 : index
    %23 = vector.load %arg8[%c1_23, %c384_24] : memref<2x768xf32, #tpu.memory_space<vmem>>, vector<1x384xf32>
    %24 = vector.shape_cast %23 : vector<1x384xf32> to vector<1x384xf32>
    %25 = vector.broadcast %24 : vector<1x384xf32> to vector<8x384xf32>
    %c48_i32 = arith.constant 48 : i32
    %26 = arith.muli %arg0, %c48_i32 : i32
    %c1_i32 = arith.constant 1 : i32
    %27 = arith.subi %c1_i32, %arg0 : i32
    %c48_i32_25 = arith.constant 48 : i32
    %28 = arith.muli %27, %c48_i32_25 : i32
    %c0_26 = arith.constant 0 : index
    %c0_27 = arith.constant 0 : index
    %29 = vector.load %arg15[%c0_26, %c0_27] : memref<8x128xf32, #tpu.memory_space<vmem>>, vector<8x128xf32>
    %c0_28 = arith.constant 0 : index
    %c0_29 = arith.constant 0 : index
    %30 = vector.load %arg16[%c0_28, %c0_29] : memref<8x128xf32, #tpu.memory_space<vmem>>, vector<8x128xf32>
    %c0_i32_30 = arith.constant 0 : i32
    %c48_i32_31 = arith.constant 48 : i32
    %31 = arith.addi %c0_i32_30, %c48_i32_31 : i32
    %c1_i32_32 = arith.constant 1 : i32
    %32:2 = scf.for %arg17 = %c0_i32_30 to %31 step %c1_i32_32 iter_args(%arg18 = %29, %arg19 = %30) -> (vector<8x128xf32>, vector<8x128xf32>)  : i32 {
      %c47_i32 = arith.constant 47 : i32
      %41 = arith.subi %c47_i32, %arg17 : i32
      %c8_i32 = arith.constant 8 : i32
      %42 = arith.muli %arg17, %c8_i32 : i32
      %43 = tpu.assume_multiple %42, 8 : i32
      %c8_i32_46 = arith.constant 8 : i32
      %44 = arith.muli %41, %c8_i32_46 : i32
      %45 = tpu.assume_multiple %44, 8 : i32
      %46 = arith.index_cast %43 : i32 to index
      %c0_47 = arith.constant 0 : index
      %47 = vector.load %arg11[%46, %c0_47] : memref<384x384xf32, #tpu.memory_space<vmem>>, vector<8x384xf32>
      %48 = arith.index_cast %45 : i32 to index
      %c0_48 = arith.constant 0 : index
      %49 = vector.load %arg12[%48, %c0_48] : memref<384x384xf32, #tpu.memory_space<vmem>>, vector<8x384xf32>
      %50 = arith.truncf %arg18 : vector<8x128xf32> to vector<8x128xbf16>
      %cst_49 = arith.constant dense<0.000000e+00> : vector<8x384xf32>
      %51 = tpu.matmul %50, %18, %cst_49 {dimension_numbers = #tpu.dot_dimension_numbers<[1], [0], [0], [1], [0, 0, 1, 1], [], []>} : vector<8x128xbf16>, vector<128x384xbf16>, vector<8x384xf32> -> vector<8x384xf32>
      %52 = arith.addf %51, %22 : vector<8x384xf32>
      %53 = arith.truncf %arg19 : vector<8x128xf32> to vector<8x128xbf16>
      %cst_50 = arith.constant dense<0.000000e+00> : vector<8x384xf32>
      %54 = tpu.matmul %53, %19, %cst_50 {dimension_numbers = #tpu.dot_dimension_numbers<[1], [0], [0], [1], [0, 0, 1, 1], [], []>} : vector<8x128xbf16>, vector<128x384xbf16>, vector<8x384xf32> -> vector<8x384xf32>
      %55 = arith.addf %54, %25 : vector<8x384xf32>
      %56 = vector.extract_strided_slice %47 {offsets = [0, 0], sizes = [8, 128], strides = [1, 1]} : vector<8x384xf32> to vector<8x128xf32>
      %57 = vector.extract_strided_slice %52 {offsets = [0, 0], sizes = [8, 128], strides = [1, 1]} : vector<8x384xf32> to vector<8x128xf32>
      %58 = arith.addf %56, %57 : vector<8x128xf32>
      %59 = arith.negf %58 : vector<8x128xf32>
      %60 = math.exp %59 : vector<8x128xf32>
      %cst_51 = arith.constant 1.000000e+00 : f32
      %61 = vector.broadcast %cst_51 : f32 to vector<8x128xf32>
      %62 = arith.addf %61, %60 : vector<8x128xf32>
      %63 = arith.divf %61, %62 : vector<8x128xf32>
      %64 = vector.extract_strided_slice %47 {offsets = [0, 128], sizes = [8, 128], strides = [1, 1]} : vector<8x384xf32> to vector<8x128xf32>
      %65 = vector.extract_strided_slice %52 {offsets = [0, 128], sizes = [8, 128], strides = [1, 1]} : vector<8x384xf32> to vector<8x128xf32>
      %66 = arith.addf %64, %65 : vector<8x128xf32>
      %67 = arith.negf %66 : vector<8x128xf32>
      %68 = math.exp %67 : vector<8x128xf32>
      %cst_52 = arith.constant 1.000000e+00 : f32
      %69 = vector.broadcast %cst_52 : f32 to vector<8x128xf32>
      %70 = arith.addf %69, %68 : vector<8x128xf32>
      %71 = arith.divf %69, %70 : vector<8x128xf32>
      %72 = vector.extract_strided_slice %47 {offsets = [0, 256], sizes = [8, 128], strides = [1, 1]} : vector<8x384xf32> to vector<8x128xf32>
      %73 = vector.extract_strided_slice %52 {offsets = [0, 256], sizes = [8, 128], strides = [1, 1]} : vector<8x384xf32> to vector<8x128xf32>
      %74 = arith.mulf %63, %73 : vector<8x128xf32>
      %75 = arith.addf %72, %74 : vector<8x128xf32>
      %76 = math.tanh %75 : vector<8x128xf32>
      %cst_53 = arith.constant 1.000000e+00 : f32
      %77 = vector.broadcast %cst_53 : f32 to vector<8x128xf32>
      %78 = arith.subf %77, %71 : vector<8x128xf32>
      %79 = arith.mulf %78, %76 : vector<8x128xf32>
      %80 = arith.mulf %71, %arg18 : vector<8x128xf32>
      %81 = arith.addf %79, %80 : vector<8x128xf32>
      %82 = vector.extract_strided_slice %49 {offsets = [0, 0], sizes = [8, 128], strides = [1, 1]} : vector<8x384xf32> to vector<8x128xf32>
      %83 = vector.extract_strided_slice %55 {offsets = [0, 0], sizes = [8, 128], strides = [1, 1]} : vector<8x384xf32> to vector<8x128xf32>
      %84 = arith.addf %82, %83 : vector<8x128xf32>
      %85 = arith.negf %84 : vector<8x128xf32>
      %86 = math.exp %85 : vector<8x128xf32>
      %cst_54 = arith.constant 1.000000e+00 : f32
      %87 = vector.broadcast %cst_54 : f32 to vector<8x128xf32>
      %88 = arith.addf %87, %86 : vector<8x128xf32>
      %89 = arith.divf %87, %88 : vector<8x128xf32>
      %90 = vector.extract_strided_slice %49 {offsets = [0, 128], sizes = [8, 128], strides = [1, 1]} : vector<8x384xf32> to vector<8x128xf32>
      %91 = vector.extract_strided_slice %55 {offsets = [0, 128], sizes = [8, 128], strides = [1, 1]} : vector<8x384xf32> to vector<8x128xf32>
      %92 = arith.addf %90, %91 : vector<8x128xf32>
      %93 = arith.negf %92 : vector<8x128xf32>
      %94 = math.exp %93 : vector<8x128xf32>
      %cst_55 = arith.constant 1.000000e+00 : f32
      %95 = vector.broadcast %cst_55 : f32 to vector<8x128xf32>
      %96 = arith.addf %95, %94 : vector<8x128xf32>
      %97 = arith.divf %95, %96 : vector<8x128xf32>
      %98 = vector.extract_strided_slice %49 {offsets = [0, 256], sizes = [8, 128], strides = [1, 1]} : vector<8x384xf32> to vector<8x128xf32>
      %99 = vector.extract_strided_slice %55 {offsets = [0, 256], sizes = [8, 128], strides = [1, 1]} : vector<8x384xf32> to vector<8x128xf32>
      %100 = arith.mulf %89, %99 : vector<8x128xf32>
      %101 = arith.addf %98, %100 : vector<8x128xf32>
      %102 = math.tanh %101 : vector<8x128xf32>
      %cst_56 = arith.constant 1.000000e+00 : f32
      %103 = vector.broadcast %cst_56 : f32 to vector<8x128xf32>
      %104 = arith.subf %103, %97 : vector<8x128xf32>
      %105 = arith.mulf %104, %102 : vector<8x128xf32>
      %106 = arith.mulf %97, %arg19 : vector<8x128xf32>
      %107 = arith.addf %105, %106 : vector<8x128xf32>
      %108 = arith.addi %26, %arg17 : i32
      %109 = vector.broadcast %108 : i32 to vector<8x1xi32>
      %110 = arith.cmpi slt, %109, %17 : vector<8x1xi32>
      %111 = arith.addi %28, %41 : i32
      %112 = vector.broadcast %111 : i32 to vector<8x1xi32>
      %113 = arith.cmpi slt, %112, %17 : vector<8x1xi32>
      %cst_57 = arith.constant 0.000000e+00 : f32
      %114 = vector.shape_cast %113 : vector<8x1xi1> to vector<8x1xi1>
      %115 = vector.broadcast %114 : vector<8x1xi1> to vector<8x128xi1>
      %116 = vector.broadcast %cst_57 : f32 to vector<8x128xf32>
      %117 = arith.select %115, %107, %116 : vector<8x128xi1>, vector<8x128xf32>
      %cst_58 = arith.constant 0.000000e+00 : f32
      %118 = vector.shape_cast %110 : vector<8x1xi1> to vector<8x1xi1>
      %119 = vector.broadcast %118 : vector<8x1xi1> to vector<8x128xi1>
      %120 = vector.broadcast %cst_58 : f32 to vector<8x128xf32>
      %121 = arith.select %119, %81, %120 : vector<8x128xi1>, vector<8x128xf32>
      %122 = arith.index_cast %43 : i32 to index
      %c0_59 = arith.constant 0 : index
      %123 = vector.load %arg13[%122, %c0_59] : memref<384x128xf32, #tpu.memory_space<vmem>>, vector<8x128xf32>
      tpu.vector_store %arg13[%122, %c0_59], %121 {strides = array<i32>} : memref<384x128xf32, #tpu.memory_space<vmem>>, vector<8x128xf32>,
      %124 = arith.index_cast %45 : i32 to index
      %c0_60 = arith.constant 0 : index
      %125 = vector.load %arg14[%124, %c0_60] : memref<384x128xf32, #tpu.memory_space<vmem>>, vector<8x128xf32>
      tpu.vector_store %arg14[%124, %c0_60], %117 {strides = array<i32>} : memref<384x128xf32, #tpu.memory_space<vmem>>, vector<8x128xf32>,
      scf.yield %81, %117 : vector<8x128xf32>, vector<8x128xf32>
    }
    %c48_i32_33 = arith.constant 48 : i32
    %c0_34 = arith.constant 0 : index
    %c0_35 = arith.constant 0 : index
    %33 = vector.load %arg15[%c0_34, %c0_35] : memref<8x128xf32, #tpu.memory_space<vmem>>, vector<8x128xf32>
    tpu.vector_store %arg15[%c0_34, %c0_35], %32#0 {strides = array<i32>} : memref<8x128xf32, #tpu.memory_space<vmem>>, vector<8x128xf32>,
    %c0_36 = arith.constant 0 : index
    %c0_37 = arith.constant 0 : index
    %34 = vector.load %arg16[%c0_36, %c0_37] : memref<8x128xf32, #tpu.memory_space<vmem>>, vector<8x128xf32>
    tpu.vector_store %arg16[%c0_36, %c0_37], %32#1 {strides = array<i32>} : memref<8x128xf32, #tpu.memory_space<vmem>>, vector<8x128xf32>,
    %c0_38 = arith.constant 0 : index
    %c0_39 = arith.constant 0 : index
    %35 = vector.load %arg13[%c0_38, %c0_39] : memref<384x128xf32, #tpu.memory_space<vmem>>, vector<384x128xf32>
    %36 = arith.truncf %35 : vector<384x128xf32> to vector<384x128xbf16>
    %c0_40 = arith.constant 0 : index
    %c0_41 = arith.constant 0 : index
    %37 = vector.load %arg9[%c0_40, %c0_41] : memref<384x128xbf16, #tpu.memory_space<vmem>>, vector<384x128xbf16>
    tpu.vector_store %arg9[%c0_40, %c0_41], %36 {strides = array<i32>} : memref<384x128xbf16, #tpu.memory_space<vmem>>, vector<384x128xbf16>,
    %c0_42 = arith.constant 0 : index
    %c0_43 = arith.constant 0 : index
    %38 = vector.load %arg14[%c0_42, %c0_43] : memref<384x128xf32, #tpu.memory_space<vmem>>, vector<384x128xf32>
    %39 = arith.truncf %38 : vector<384x128xf32> to vector<384x128xbf16>
    %c0_44 = arith.constant 0 : index
    %c0_45 = arith.constant 0 : index
    %40 = vector.load %arg10[%c0_44, %c0_45] : memref<384x128xbf16, #tpu.memory_space<vmem>>, vector<384x128xbf16>
    tpu.vector_store %arg10[%c0_44, %c0_45], %39 {strides = array<i32>} : memref<384x128xbf16, #tpu.memory_space<vmem>>, vector<384x128xbf16>,
    return
  }
  func.func @transform_0(%arg0: i32) -> (i32, i32) {
    %c0_i32 = arith.constant 0 : i32
    %c0_i32_0 = arith.constant 0 : i32
    return %arg0, %c0_i32 : i32, i32
  }
  func.func @transform_1(%arg0: i32) -> (i32, i32) {
    %c1_i32 = arith.constant 1 : i32
    %0 = arith.subi %c1_i32, %arg0 : i32
    %c0_i32 = arith.constant 0 : i32
    %c0_i32_0 = arith.constant 0 : i32
    return %0, %c0_i32 : i32, i32
  }
  func.func @transform_2(%arg0: i32) -> (i32, i32) {
    %c0_i32 = arith.constant 0 : i32
    %c0_i32_0 = arith.constant 0 : i32
    %c0_i32_1 = arith.constant 0 : i32
    return %c0_i32, %c0_i32_0 : i32, i32
  }
  func.func @transform_3(%arg0: i32) -> (i32, i32) {
    %c0_i32 = arith.constant 0 : i32
    %c0_i32_0 = arith.constant 0 : i32
    %c0_i32_1 = arith.constant 0 : i32
    return %c0_i32, %c0_i32_0 : i32, i32
  }
  func.func @transform_4(%arg0: i32) -> (i32, i32) {
    %c0_i32 = arith.constant 0 : i32
    %c0_i32_0 = arith.constant 0 : i32
    %c0_i32_1 = arith.constant 0 : i32
    return %c0_i32, %c0_i32_0 : i32, i32
  }
  func.func @transform_5(%arg0: i32) -> (i32, i32) {
    %c0_i32 = arith.constant 0 : i32
    %c0_i32_0 = arith.constant 0 : i32
    %c0_i32_1 = arith.constant 0 : i32
    return %c0_i32, %c0_i32_0 : i32, i32
  }
  func.func @transform_6(%arg0: i32) -> (i32, i32) {
    %c0_i32 = arith.constant 0 : i32
    %c0_i32_0 = arith.constant 0 : i32
    %c0_i32_1 = arith.constant 0 : i32
    return %c0_i32, %c0_i32_0 : i32, i32
  }
  func.func @transform_7(%arg0: i32) -> (i32, i32) {
    %c0_i32 = arith.constant 0 : i32
    %c0_i32_0 = arith.constant 0 : i32
    %c0_i32_1 = arith.constant 0 : i32
    return %c0_i32, %c0_i32_0 : i32, i32
  }
  func.func @transform_8(%arg0: i32) -> (i32, i32) {
    %c0_i32 = arith.constant 0 : i32
    %c0_i32_0 = arith.constant 0 : i32
    return %arg0, %c0_i32 : i32, i32
  }
  func.func @transform_9(%arg0: i32) -> (i32, i32) {
    %c1_i32 = arith.constant 1 : i32
    %0 = arith.subi %c1_i32, %arg0 : i32
    %c0_i32 = arith.constant 0 : i32
    %c0_i32_0 = arith.constant 0 : i32
    return %0, %c0_i32 : i32, i32
  }
}

module attributes {stable_mosaic.version = 11 : i64} {
  func.func @_bigru_chunk_kernel(%arg0: i32, %arg1: memref<384x256xbf16, #tpu.memory_space<vmem>>, %arg2: memref<384x256xbf16, #tpu.memory_space<vmem>>, %arg3: memref<8x1xi32, #tpu.memory_space<vmem>>, %arg4: memref<256x384xbf16, #tpu.memory_space<vmem>>, %arg5: memref<256x384xbf16, #tpu.memory_space<vmem>>, %arg6: memref<128x384xbf16, #tpu.memory_space<vmem>>, %arg7: memref<128x384xbf16, #tpu.memory_space<vmem>>, %arg8: memref<2x768xf32, #tpu.memory_space<vmem>>, %arg9: memref<384x128xbf16, #tpu.memory_space<vmem>>, %arg10: memref<384x128xbf16, #tpu.memory_space<vmem>>, %arg11: memref<384x384xf32, #tpu.memory_space<vmem>>, %arg12: memref<384x384xf32, #tpu.memory_space<vmem>>, %arg13: memref<384x128xf32, #tpu.memory_space<vmem>>, %arg14: memref<384x128xf32, #tpu.memory_space<vmem>>, %arg15: memref<8x128xf32, #tpu.memory_space<vmem>>, %arg16: memref<8x128xf32, #tpu.memory_space<vmem>>) attributes {dimension_semantics = [#tpu.dimension_semantics<arbitrary>], iteration_bounds = array<i64: 2>, scalar_prefetch = 0 : i64, scratch_operands = 6 : i64, tpu.core_type = #tpu.core_type<tc>, window_params = [{transform_indices = @transform_0, window_bounds = array<i64: 384, 256>}, {transform_indices = @transform_1, window_bounds = array<i64: 384, 256>}, {pipeline_mode = #tpu.pipeline_mode<synchronous>, transform_indices = @transform_2, window_bounds = array<i64: 8, 1>}, {pipeline_mode = #tpu.pipeline_mode<synchronous>, transform_indices = @transform_3, window_bounds = array<i64: 256, 384>}, {pipeline_mode = #tpu.pipeline_mode<synchronous>, transform_indices = @transform_4, window_bounds = array<i64: 256, 384>}, {pipeline_mode = #tpu.pipeline_mode<synchronous>, transform_indices = @transform_5, window_bounds = array<i64: 128, 384>}, {pipeline_mode = #tpu.pipeline_mode<synchronous>, transform_indices = @transform_6, window_bounds = array<i64: 128, 384>}, {pipeline_mode = #tpu.pipeline_mode<synchronous>, transform_indices = @transform_7, window_bounds = array<i64: 2, 768>}, {transform_indices = @transform_8, window_bounds = array<i64: 384, 128>}, {transform_indices = @transform_9, window_bounds = array<i64: 384, 128>}]} {
    %c0_i32 = arith.constant 0 : i32
    %0 = arith.cmpi eq, %arg0, %c0_i32 : i32
    %1 = arith.extui %0 : i1 to i32
    %c0_i32_0 = arith.constant 0 : i32
    %2 = arith.cmpi ne, %1, %c0_i32_0 : i32
    scf.if %2 {
      %cst_46 = arith.constant 0.000000e+00 : f32
      %41 = vector.broadcast %cst_46 : f32 to vector<8x128xf32>
      %c0_47 = arith.constant 0 : index
      %c0_48 = arith.constant 0 : index
      %42 = vector.load %arg15[%c0_47, %c0_48] : memref<8x128xf32, #tpu.memory_space<vmem>>, vector<8x128xf32>
      tpu.vector_store %arg15[%c0_47, %c0_48], %41 {strides = array<i32>} : memref<8x128xf32, #tpu.memory_space<vmem>>, vector<8x128xf32>,
      %cst_49 = arith.constant 0.000000e+00 : f32
      %43 = vector.broadcast %cst_49 : f32 to vector<8x128xf32>
      %c0_50 = arith.constant 0 : index
      %c0_51 = arith.constant 0 : index
      %44 = vector.load %arg16[%c0_50, %c0_51] : memref<8x128xf32, #tpu.memory_space<vmem>>, vector<8x128xf32>
      tpu.vector_store %arg16[%c0_50, %c0_51], %43 {strides = array<i32>} : memref<8x128xf32, #tpu.memory_space<vmem>>, vector<8x128xf32>,
    } else {
    }
    %c0 = arith.constant 0 : index
    %c0_1 = arith.constant 0 : index
    %3 = vector.load %arg1[%c0, %c0_1] : memref<384x256xbf16, #tpu.memory_space<vmem>>, vector<384x256xbf16>
    %c0_2 = arith.constant 0 : index
    %c0_3 = arith.constant 0 : index
    %4 = vector.load %arg4[%c0_2, %c0_3] : memref<256x384xbf16, #tpu.memory_space<vmem>>, vector<256x384xbf16>
    %cst = arith.constant dense<0.000000e+00> : vector<384x384xf32>
    %5 = tpu.matmul %3, %4, %cst {dimension_numbers = #tpu.dot_dimension_numbers<[1], [0], [0], [1], [0, 0, 1, 1], [], []>} : vector<384x256xbf16>, vector<256x384xbf16>, vector<384x384xf32> -> vector<384x384xf32>
    %c0_4 = arith.constant 0 : index
    %c0_5 = arith.constant 0 : index
    %6 = vector.load %arg8[%c0_4, %c0_5] : memref<2x768xf32, #tpu.memory_space<vmem>>, vector<1x384xf32>
    %7 = vector.broadcast %6 : vector<1x384xf32> to vector<384x384xf32>
    %8 = arith.addf %5, %7 : vector<384x384xf32>
    %c0_6 = arith.constant 0 : index
    %c0_7 = arith.constant 0 : index
    %9 = vector.load %arg11[%c0_6, %c0_7] : memref<384x384xf32, #tpu.memory_space<vmem>>, vector<384x384xf32>
    tpu.vector_store %arg11[%c0_6, %c0_7], %8 {strides = array<i32>} : memref<384x384xf32, #tpu.memory_space<vmem>>, vector<384x384xf32>,
    %c0_8 = arith.constant 0 : index
    %c0_9 = arith.constant 0 : index
    %10 = vector.load %arg2[%c0_8, %c0_9] : memref<384x256xbf16, #tpu.memory_space<vmem>>, vector<384x256xbf16>
    %c0_10 = arith.constant 0 : index
    %c0_11 = arith.constant 0 : index
    %11 = vector.load %arg5[%c0_10, %c0_11] : memref<256x384xbf16, #tpu.memory_space<vmem>>, vector<256x384xbf16>
    %cst_12 = arith.constant dense<0.000000e+00> : vector<384x384xf32>
    %12 = tpu.matmul %10, %11, %cst_12 {dimension_numbers = #tpu.dot_dimension_numbers<[1], [0], [0], [1], [0, 0, 1, 1], [], []>} : vector<384x256xbf16>, vector<256x384xbf16>, vector<384x384xf32> -> vector<384x384xf32>
    %c0_13 = arith.constant 0 : index
    %c384 = arith.constant 384 : index
    %13 = vector.load %arg8[%c0_13, %c384] : memref<2x768xf32, #tpu.memory_space<vmem>>, vector<1x384xf32>
    %14 = vector.broadcast %13 : vector<1x384xf32> to vector<384x384xf32>
    %15 = arith.addf %12, %14 : vector<384x384xf32>
    %c0_14 = arith.constant 0 : index
    %c0_15 = arith.constant 0 : index
    %16 = vector.load %arg12[%c0_14, %c0_15] : memref<384x384xf32, #tpu.memory_space<vmem>>, vector<384x384xf32>
    tpu.vector_store %arg12[%c0_14, %c0_15], %15 {strides = array<i32>} : memref<384x384xf32, #tpu.memory_space<vmem>>, vector<384x384xf32>,
    %c0_16 = arith.constant 0 : index
    %c0_17 = arith.constant 0 : index
    %17 = vector.load %arg3[%c0_16, %c0_17] : memref<8x1xi32, #tpu.memory_space<vmem>>, vector<8x1xi32>
    %c0_18 = arith.constant 0 : index
    %c0_19 = arith.constant 0 : index
    %18 = vector.load %arg6[%c0_18, %c0_19] : memref<128x384xbf16, #tpu.memory_space<vmem>>, vector<128x384xbf16>
    %c0_20 = arith.constant 0 : index
    %c0_21 = arith.constant 0 : index
    %19 = vector.load %arg7[%c0_20, %c0_21] : memref<128x384xbf16, #tpu.memory_space<vmem>>, vector<128x384xbf16>
    %c1 = arith.constant 1 : index
    %c0_22 = arith.constant 0 : index
    %20 = vector.load %arg8[%c1, %c0_22] : memref<2x768xf32, #tpu.memory_space<vmem>>, vector<1x384xf32>
    %21 = vector.shape_cast %20 : vector<1x384xf32> to vector<1x384xf32>
    %22 = vector.broadcast %21 : vector<1x384xf32> to vector<8x384xf32>
    %c1_23 = arith.constant 1 : index
    %c384_24 = arith.constant 384 : index
    %23 = vector.load %arg8[%c1_23, %c384_24] : memref<2x768xf32, #tpu.memory_space<vmem>>, vector<1x384xf32>
    %24 = vector.shape_cast %23 : vector<1x384xf32> to vector<1x384xf32>
    %25 = vector.broadcast %24 : vector<1x384xf32> to vector<8x384xf32>
    %c48_i32 = arith.constant 48 : i32
    %26 = arith.muli %arg0, %c48_i32 : i32
    %c1_i32 = arith.constant 1 : i32
    %27 = arith.subi %c1_i32, %arg0 : i32
    %c48_i32_25 = arith.constant 48 : i32
    %28 = arith.muli %27, %c48_i32_25 : i32
    %c0_26 = arith.constant 0 : index
    %c0_27 = arith.constant 0 : index
    %29 = vector.load %arg15[%c0_26, %c0_27] : memref<8x128xf32, #tpu.memory_space<vmem>>, vector<8x128xf32>
    %c0_28 = arith.constant 0 : index
    %c0_29 = arith.constant 0 : index
    %30 = vector.load %arg16[%c0_28, %c0_29] : memref<8x128xf32, #tpu.memory_space<vmem>>, vector<8x128xf32>
    %c0_i32_30 = arith.constant 0 : i32
    %c48_i32_31 = arith.constant 48 : i32
    %31 = arith.addi %c0_i32_30, %c48_i32_31 : i32
    %c1_i32_32 = arith.constant 1 : i32
    %32:2 = scf.for %arg17 = %c0_i32_30 to %31 step %c1_i32_32 iter_args(%arg18 = %29, %arg19 = %30) -> (vector<8x128xf32>, vector<8x128xf32>)  : i32 {
      %c47_i32 = arith.constant 47 : i32
      %41 = arith.subi %c47_i32, %arg17 : i32
      %c8_i32 = arith.constant 8 : i32
      %42 = arith.muli %arg17, %c8_i32 : i32
      %43 = tpu.assume_multiple %42, 8 : i32
      %c8_i32_46 = arith.constant 8 : i32
      %44 = arith.muli %41, %c8_i32_46 : i32
      %45 = tpu.assume_multiple %44, 8 : i32
      %46 = arith.index_cast %43 : i32 to index
      %c0_47 = arith.constant 0 : index
      %47 = vector.load %arg11[%46, %c0_47] : memref<384x384xf32, #tpu.memory_space<vmem>>, vector<8x384xf32>
      %48 = arith.index_cast %45 : i32 to index
      %c0_48 = arith.constant 0 : index
      %49 = vector.load %arg12[%48, %c0_48] : memref<384x384xf32, #tpu.memory_space<vmem>>, vector<8x384xf32>
      %50 = arith.truncf %arg18 : vector<8x128xf32> to vector<8x128xbf16>
      %cst_49 = arith.constant dense<0.000000e+00> : vector<8x384xf32>
      %51 = tpu.matmul %50, %18, %cst_49 {dimension_numbers = #tpu.dot_dimension_numbers<[1], [0], [0], [1], [0, 0, 1, 1], [], []>} : vector<8x128xbf16>, vector<128x384xbf16>, vector<8x384xf32> -> vector<8x384xf32>
      %52 = arith.addf %51, %22 : vector<8x384xf32>
      %53 = arith.truncf %arg19 : vector<8x128xf32> to vector<8x128xbf16>
      %cst_50 = arith.constant dense<0.000000e+00> : vector<8x384xf32>
      %54 = tpu.matmul %53, %19, %cst_50 {dimension_numbers = #tpu.dot_dimension_numbers<[1], [0], [0], [1], [0, 0, 1, 1], [], []>} : vector<8x128xbf16>, vector<128x384xbf16>, vector<8x384xf32> -> vector<8x384xf32>
      %55 = arith.addf %54, %25 : vector<8x384xf32>
      %56 = vector.extract_strided_slice %47 {offsets = [0, 0], sizes = [8, 128], strides = [1, 1]} : vector<8x384xf32> to vector<8x128xf32>
      %57 = vector.extract_strided_slice %52 {offsets = [0, 0], sizes = [8, 128], strides = [1, 1]} : vector<8x384xf32> to vector<8x128xf32>
      %58 = arith.addf %56, %57 : vector<8x128xf32>
      %59 = arith.negf %58 : vector<8x128xf32>
      %60 = math.exp %59 : vector<8x128xf32>
      %cst_51 = arith.constant 1.000000e+00 : f32
      %61 = vector.broadcast %cst_51 : f32 to vector<8x128xf32>
      %62 = arith.addf %61, %60 : vector<8x128xf32>
      %63 = arith.divf %61, %62 : vector<8x128xf32>
      %64 = vector.extract_strided_slice %47 {offsets = [0, 128], sizes = [8, 128], strides = [1, 1]} : vector<8x384xf32> to vector<8x128xf32>
      %65 = vector.extract_strided_slice %52 {offsets = [0, 128], sizes = [8, 128], strides = [1, 1]} : vector<8x384xf32> to vector<8x128xf32>
      %66 = arith.addf %64, %65 : vector<8x128xf32>
      %67 = arith.negf %66 : vector<8x128xf32>
      %68 = math.exp %67 : vector<8x128xf32>
      %cst_52 = arith.constant 1.000000e+00 : f32
      %69 = vector.broadcast %cst_52 : f32 to vector<8x128xf32>
      %70 = arith.addf %69, %68 : vector<8x128xf32>
      %71 = arith.divf %69, %70 : vector<8x128xf32>
      %72 = vector.extract_strided_slice %47 {offsets = [0, 256], sizes = [8, 128], strides = [1, 1]} : vector<8x384xf32> to vector<8x128xf32>
      %73 = vector.extract_strided_slice %52 {offsets = [0, 256], sizes = [8, 128], strides = [1, 1]} : vector<8x384xf32> to vector<8x128xf32>
      %74 = arith.mulf %63, %73 : vector<8x128xf32>
      %75 = arith.addf %72, %74 : vector<8x128xf32>
      %76 = math.tanh %75 : vector<8x128xf32>
      %cst_53 = arith.constant 1.000000e+00 : f32
      %77 = vector.broadcast %cst_53 : f32 to vector<8x128xf32>
      %78 = arith.subf %77, %71 : vector<8x128xf32>
      %79 = arith.mulf %78, %76 : vector<8x128xf32>
      %80 = arith.mulf %71, %arg18 : vector<8x128xf32>
      %81 = arith.addf %79, %80 : vector<8x128xf32>
      %82 = vector.extract_strided_slice %49 {offsets = [0, 0], sizes = [8, 128], strides = [1, 1]} : vector<8x384xf32> to vector<8x128xf32>
      %83 = vector.extract_strided_slice %55 {offsets = [0, 0], sizes = [8, 128], strides = [1, 1]} : vector<8x384xf32> to vector<8x128xf32>
      %84 = arith.addf %82, %83 : vector<8x128xf32>
      %85 = arith.negf %84 : vector<8x128xf32>
      %86 = math.exp %85 : vector<8x128xf32>
      %cst_54 = arith.constant 1.000000e+00 : f32
      %87 = vector.broadcast %cst_54 : f32 to vector<8x128xf32>
      %88 = arith.addf %87, %86 : vector<8x128xf32>
      %89 = arith.divf %87, %88 : vector<8x128xf32>
      %90 = vector.extract_strided_slice %49 {offsets = [0, 128], sizes = [8, 128], strides = [1, 1]} : vector<8x384xf32> to vector<8x128xf32>
      %91 = vector.extract_strided_slice %55 {offsets = [0, 128], sizes = [8, 128], strides = [1, 1]} : vector<8x384xf32> to vector<8x128xf32>
      %92 = arith.addf %90, %91 : vector<8x128xf32>
      %93 = arith.negf %92 : vector<8x128xf32>
      %94 = math.exp %93 : vector<8x128xf32>
      %cst_55 = arith.constant 1.000000e+00 : f32
      %95 = vector.broadcast %cst_55 : f32 to vector<8x128xf32>
      %96 = arith.addf %95, %94 : vector<8x128xf32>
      %97 = arith.divf %95, %96 : vector<8x128xf32>
      %98 = vector.extract_strided_slice %49 {offsets = [0, 256], sizes = [8, 128], strides = [1, 1]} : vector<8x384xf32> to vector<8x128xf32>
      %99 = vector.extract_strided_slice %55 {offsets = [0, 256], sizes = [8, 128], strides = [1, 1]} : vector<8x384xf32> to vector<8x128xf32>
      %100 = arith.mulf %89, %99 : vector<8x128xf32>
      %101 = arith.addf %98, %100 : vector<8x128xf32>
      %102 = math.tanh %101 : vector<8x128xf32>
      %cst_56 = arith.constant 1.000000e+00 : f32
      %103 = vector.broadcast %cst_56 : f32 to vector<8x128xf32>
      %104 = arith.subf %103, %97 : vector<8x128xf32>
      %105 = arith.mulf %104, %102 : vector<8x128xf32>
      %106 = arith.mulf %97, %arg19 : vector<8x128xf32>
      %107 = arith.addf %105, %106 : vector<8x128xf32>
      %108 = arith.addi %26, %arg17 : i32
      %109 = vector.broadcast %108 : i32 to vector<8x1xi32>
      %110 = arith.cmpi slt, %109, %17 : vector<8x1xi32>
      %111 = arith.addi %28, %41 : i32
      %112 = vector.broadcast %111 : i32 to vector<8x1xi32>
      %113 = arith.cmpi slt, %112, %17 : vector<8x1xi32>
      %cst_57 = arith.constant 0.000000e+00 : f32
      %114 = vector.shape_cast %113 : vector<8x1xi1> to vector<8x1xi1>
      %115 = vector.broadcast %114 : vector<8x1xi1> to vector<8x128xi1>
      %116 = vector.broadcast %cst_57 : f32 to vector<8x128xf32>
      %117 = arith.select %115, %107, %116 : vector<8x128xi1>, vector<8x128xf32>
      %cst_58 = arith.constant 0.000000e+00 : f32
      %118 = vector.shape_cast %110 : vector<8x1xi1> to vector<8x1xi1>
      %119 = vector.broadcast %118 : vector<8x1xi1> to vector<8x128xi1>
      %120 = vector.broadcast %cst_58 : f32 to vector<8x128xf32>
      %121 = arith.select %119, %81, %120 : vector<8x128xi1>, vector<8x128xf32>
      %122 = arith.index_cast %43 : i32 to index
      %c0_59 = arith.constant 0 : index
      %123 = vector.load %arg13[%122, %c0_59] : memref<384x128xf32, #tpu.memory_space<vmem>>, vector<8x128xf32>
      tpu.vector_store %arg13[%122, %c0_59], %121 {strides = array<i32>} : memref<384x128xf32, #tpu.memory_space<vmem>>, vector<8x128xf32>,
      %124 = arith.index_cast %45 : i32 to index
      %c0_60 = arith.constant 0 : index
      %125 = vector.load %arg14[%124, %c0_60] : memref<384x128xf32, #tpu.memory_space<vmem>>, vector<8x128xf32>
      tpu.vector_store %arg14[%124, %c0_60], %117 {strides = array<i32>} : memref<384x128xf32, #tpu.memory_space<vmem>>, vector<8x128xf32>,
      scf.yield %81, %117 : vector<8x128xf32>, vector<8x128xf32>
    }
    %c48_i32_33 = arith.constant 48 : i32
    %c0_34 = arith.constant 0 : index
    %c0_35 = arith.constant 0 : index
    %33 = vector.load %arg15[%c0_34, %c0_35] : memref<8x128xf32, #tpu.memory_space<vmem>>, vector<8x128xf32>
    tpu.vector_store %arg15[%c0_34, %c0_35], %32#0 {strides = array<i32>} : memref<8x128xf32, #tpu.memory_space<vmem>>, vector<8x128xf32>,
    %c0_36 = arith.constant 0 : index
    %c0_37 = arith.constant 0 : index
    %34 = vector.load %arg16[%c0_36, %c0_37] : memref<8x128xf32, #tpu.memory_space<vmem>>, vector<8x128xf32>
    tpu.vector_store %arg16[%c0_36, %c0_37], %32#1 {strides = array<i32>} : memref<8x128xf32, #tpu.memory_space<vmem>>, vector<8x128xf32>,
    %c0_38 = arith.constant 0 : index
    %c0_39 = arith.constant 0 : index
    %35 = vector.load %arg13[%c0_38, %c0_39] : memref<384x128xf32, #tpu.memory_space<vmem>>, vector<384x128xf32>
    %36 = arith.truncf %35 : vector<384x128xf32> to vector<384x128xbf16>
    %c0_40 = arith.constant 0 : index
    %c0_41 = arith.constant 0 : index
    %37 = vector.load %arg9[%c0_40, %c0_41] : memref<384x128xbf16, #tpu.memory_space<vmem>>, vector<384x128xbf16>
    tpu.vector_store %arg9[%c0_40, %c0_41], %36 {strides = array<i32>} : memref<384x128xbf16, #tpu.memory_space<vmem>>, vector<384x128xbf16>,
    %c0_42 = arith.constant 0 : index
    %c0_43 = arith.constant 0 : index
    %38 = vector.load %arg14[%c0_42, %c0_43] : memref<384x128xf32, #tpu.memory_space<vmem>>, vector<384x128xf32>
    %39 = arith.truncf %38 : vector<384x128xf32> to vector<384x128xbf16>
    %c0_44 = arith.constant 0 : index
    %c0_45 = arith.constant 0 : index
    %40 = vector.load %arg10[%c0_44, %c0_45] : memref<384x128xbf16, #tpu.memory_space<vmem>>, vector<384x128xbf16>
    tpu.vector_store %arg10[%c0_44, %c0_45], %39 {strides = array<i32>} : memref<384x128xbf16, #tpu.memory_space<vmem>>, vector<384x128xbf16>,
    return
  }
  func.func @transform_0(%arg0: i32) -> (i32, i32) {
    %c0_i32 = arith.constant 0 : i32
    %c0_i32_0 = arith.constant 0 : i32
    return %arg0, %c0_i32 : i32, i32
  }
  func.func @transform_1(%arg0: i32) -> (i32, i32) {
    %c1_i32 = arith.constant 1 : i32
    %0 = arith.subi %c1_i32, %arg0 : i32
    %c0_i32 = arith.constant 0 : i32
    %c0_i32_0 = arith.constant 0 : i32
    return %0, %c0_i32 : i32, i32
  }
  func.func @transform_2(%arg0: i32) -> (i32, i32) {
    %c0_i32 = arith.constant 0 : i32
    %c0_i32_0 = arith.constant 0 : i32
    %c0_i32_1 = arith.constant 0 : i32
    return %c0_i32, %c0_i32_0 : i32, i32
  }
  func.func @transform_3(%arg0: i32) -> (i32, i32) {
    %c0_i32 = arith.constant 0 : i32
    %c0_i32_0 = arith.constant 0 : i32
    %c0_i32_1 = arith.constant 0 : i32
    return %c0_i32, %c0_i32_0 : i32, i32
  }
  func.func @transform_4(%arg0: i32) -> (i32, i32) {
    %c0_i32 = arith.constant 0 : i32
    %c0_i32_0 = arith.constant 0 : i32
    %c0_i32_1 = arith.constant 0 : i32
    return %c0_i32, %c0_i32_0 : i32, i32
  }
  func.func @transform_5(%arg0: i32) -> (i32, i32) {
    %c0_i32 = arith.constant 0 : i32
    %c0_i32_0 = arith.constant 0 : i32
    %c0_i32_1 = arith.constant 0 : i32
    return %c0_i32, %c0_i32_0 : i32, i32
  }
  func.func @transform_6(%arg0: i32) -> (i32, i32) {
    %c0_i32 = arith.constant 0 : i32
    %c0_i32_0 = arith.constant 0 : i32
    %c0_i32_1 = arith.constant 0 : i32
    return %c0_i32, %c0_i32_0 : i32, i32
  }
  func.func @transform_7(%arg0: i32) -> (i32, i32) {
    %c0_i32 = arith.constant 0 : i32
    %c0_i32_0 = arith.constant 0 : i32
    %c0_i32_1 = arith.constant 0 : i32
    return %c0_i32, %c0_i32_0 : i32, i32
  }
  func.func @transform_8(%arg0: i32) -> (i32, i32) {
    %c0_i32 = arith.constant 0 : i32
    %c0_i32_0 = arith.constant 0 : i32
    return %arg0, %c0_i32 : i32, i32
  }
  func.func @transform_9(%arg0: i32) -> (i32, i32) {
    %c1_i32 = arith.constant 1 : i32
    %0 = arith.subi %c1_i32, %arg0 : i32
    %c0_i32 = arith.constant 0 : i32
    %c0_i32_0 = arith.constant 0 : i32
    return %0, %c0_i32 : i32, i32
  }
}

module attributes {stable_mosaic.version = 11 : i64} {
  func.func @_linear_kernel(%arg0: i32, %arg1: i32, %arg2: memref<160x256xbf16, #tpu.memory_space<vmem>>, %arg3: memref<256x512xbf16, #tpu.memory_space<vmem>>, %arg4: memref<1x512xf32, #tpu.memory_space<vmem>>, %arg5: memref<160x512xf32, #tpu.memory_space<vmem>>) attributes {dimension_semantics = [#tpu.dimension_semantics<parallel>, #tpu.dimension_semantics<parallel>], iteration_bounds = array<i64: 4, 1>, scalar_prefetch = 0 : i64, scratch_operands = 0 : i64, tpu.core_type = #tpu.core_type<tc>, window_params = [{transform_indices = @transform_0, window_bounds = array<i64: 160, 256>}, {transform_indices = @transform_1, window_bounds = array<i64: 256, 512>}, {transform_indices = @transform_2, window_bounds = array<i64: 1, 512>}, {transform_indices = @transform_3, window_bounds = array<i64: 160, 512>}]} {
    %c0 = arith.constant 0 : index
    %c0_0 = arith.constant 0 : index
    %0 = vector.load %arg2[%c0, %c0_0] : memref<160x256xbf16, #tpu.memory_space<vmem>>, vector<160x256xbf16>
    %c0_1 = arith.constant 0 : index
    %c0_2 = arith.constant 0 : index
    %1 = vector.load %arg3[%c0_1, %c0_2] : memref<256x512xbf16, #tpu.memory_space<vmem>>, vector<256x512xbf16>
    %cst = arith.constant dense<0.000000e+00> : vector<160x512xf32>
    %2 = tpu.matmul %0, %1, %cst {dimension_numbers = #tpu.dot_dimension_numbers<[1], [0], [0], [1], [0, 0, 1, 1], [], []>} : vector<160x256xbf16>, vector<256x512xbf16>, vector<160x512xf32> -> vector<160x512xf32>
    %c0_3 = arith.constant 0 : index
    %c0_4 = arith.constant 0 : index
    %3 = vector.load %arg4[%c0_3, %c0_4] : memref<1x512xf32, #tpu.memory_space<vmem>>, vector<1x512xf32>
    %4 = vector.broadcast %3 : vector<1x512xf32> to vector<160x512xf32>
    %5 = arith.addf %2, %4 : vector<160x512xf32>
    %c0_5 = arith.constant 0 : index
    %c0_6 = arith.constant 0 : index
    %6 = vector.load %arg5[%c0_5, %c0_6] : memref<160x512xf32, #tpu.memory_space<vmem>>, vector<160x512xf32>
    tpu.vector_store %arg5[%c0_5, %c0_6], %5 {strides = array<i32>} : memref<160x512xf32, #tpu.memory_space<vmem>>, vector<160x512xf32>,
    return
  }
  func.func @transform_0(%arg0: i32, %arg1: i32) -> (i32, i32) {
    %c0_i32 = arith.constant 0 : i32
    %c0_i32_0 = arith.constant 0 : i32
    return %arg0, %c0_i32 : i32, i32
  }
  func.func @transform_1(%arg0: i32, %arg1: i32) -> (i32, i32) {
    %c0_i32 = arith.constant 0 : i32
    %c0_i32_0 = arith.constant 0 : i32
    return %c0_i32, %arg1 : i32, i32
  }
  func.func @transform_2(%arg0: i32, %arg1: i32) -> (i32, i32) {
    %c0_i32 = arith.constant 0 : i32
    %c0_i32_0 = arith.constant 0 : i32
    return %c0_i32, %arg1 : i32, i32
  }
  func.func @transform_3(%arg0: i32, %arg1: i32) -> (i32, i32) {
    %c0_i32 = arith.constant 0 : i32
    return %arg0, %arg1 : i32, i32
  }
}

</mosaic_0001>

<llo_original>
// kernel: forward.5
$region0: #{forward.5}
  #allocation0 [shape = 'u32[]', space=smem, size = 0x4, offset = 0x4, fixed_abs, tag = 'smem constant byte address 0x4 - core index']
  #allocation1 [shape = 'u32[72,128]{1,0:T(1,128)}', space=vmem, size = 0x9000, scoped, tag = 'internal scratch']
  %s0 = inlined_call_operand.vmem [shape: bf16[640,256], index: 0, kind: input, shape index: {}]
  %s1 = inlined_call_operand.vmem [shape: bf16[256,512], index: 1, kind: input, shape index: {}]
  %s2 = inlined_call_operand.vmem [shape: f32[1,512], index: 2, kind: input, shape index: {}]
  %s3 = inlined_call_operand.vmem [shape: f32[640,512], index: 3, kind: output, shape index: {}]
  %s4 = sld [smem:[#allocation0]]
  $region45: #{forward.5} parent=0
    _
  %s6 = ssub.s32 1, %s4
  %s7 = scalar_select 0, %s6, %s4
  loop: start=0, step=1, limit=6
  $region2: #{forward.5} parent=0 // loop_pre_header
    _
  $region3: #{forward.5} parent=0 // loop_header
    %s9 = sphi 0, %s13
    %p10 = scmp.ge.s32.totalorder %s9, 6
    %s16 = sphi 0, %s28
    %s17 = sphi 0, %s24
    %s18 = sphi 0, %s16
    %s19 = sphi 0, %s17
    %s20 = sphi 0, %s18
    %s21 = sphi 0, %s19
    %s31 = sphi 0, %s33
    %s34 = sphi 0, %s31
    %s35 = sphi 0, %s34
    %s51 = sphi 0, %s35
    %s57 = sphi 0, %s59
    %s60 = sphi 0, %s57
    %s61 = sphi 0, %s60
    %s77 = sphi 0, %s61
    %s83 = sphi 0, %s85
    %s86 = sphi 0, %s83
    %s87 = sphi 0, %s86
    %s103 = sphi 0, %s87
    %s111 = sphi 0, %s113
    %s114 = sphi 0, %s111
    %s115 = sphi 0, %s114
    %s131 = sphi 0, %s115
  $region4: #{forward.5} parent=0 // loop_header_branch
    %12 = sbr.rel (%p10) target = $region8
  $region5: #{forward.5} parent=0 // loop_body
    %s14 = ssub.s32 %s9, 1
    %s15 = ssub.s32 %s9, 2
    %s22 = sadd.s32 1, %s17
    %p23 = scmp.ge.s32.totalorder %s22, 1
    %s24 = scalar_select %p23, 0, %s22
    %s25 = sadd.s32 1, %s16
    %s26 = scalar_select %p23, %s25, %s16
    %p27 = scmp.ge.s32.totalorder %s26, 4
    %s28 = scalar_select %p27, 0, %s26
    %s29 = ssub.s32 %s16, %s28
    %p30 = scmp.eq.s32.totalorder %s29, 0
    %s32 = sadd.s32 %s31, 1
    %s33 = scalar_select %p30, %s31, %s32
    %p36 = pneg %p30
    %p37 = scmp.eq.s32.totalorder %s9, 3
    %p38 = por %p36, %p37
    %p39 = scmp.ne.s32.totalorder %s31, %s34
    %p40 = scmp.eq.s32.totalorder %s9, 0
    %p41 = por %p39, %p40
    %p42 = scmp.ne.s32.totalorder %s31, %s34
    %p43 = scmp.eq.s32.totalorder %s14, 3
    %p44 = por %p42, %p43
    %p45 = scmp.ne.s32.totalorder %s34, %s35
    %p46 = scmp.eq.s32.totalorder %s14, 0
    %p47 = por %p45, %p46
    %p48 = scmp.ne.s32.totalorder %s34, %s35
    %p49 = scmp.eq.s32.totalorder %s15, 3
    %p50 = por %p48, %p49
    %p52 = scmp.ne.s32.totalorder %s35, %s51
    %p53 = scmp.eq.s32.totalorder %s15, 0
    %p54 = por %p52, %p53
    %s55 = ssub.s32 %s17, %s24
    %p56 = scmp.eq.s32.totalorder %s55, 0
    %s58 = sadd.s32 %s57, 1
    %s59 = scalar_select %p56, %s57, %s58
    %p62 = pneg %p56
    %p63 = scmp.eq.s32.totalorder %s9, 3
    %p64 = por %p62, %p63
    %p65 = scmp.ne.s32.totalorder %s57, %s60
    %p66 = scmp.eq.s32.totalorder %s9, 0
    %p67 = por %p65, %p66
    %p68 = scmp.ne.s32.totalorder %s57, %s60
    %p69 = scmp.eq.s32.totalorder %s14, 3
    %p70 = por %p68, %p69
    %p71 = scmp.ne.s32.totalorder %s60, %s61
    %p72 = scmp.eq.s32.totalorder %s14, 0
    %p73 = por %p71, %p72
    %p74 = scmp.ne.s32.totalorder %s60, %s61
    %p75 = scmp.eq.s32.totalorder %s15, 3
    %p76 = por %p74, %p75
    %p78 = scmp.ne.s32.totalorder %s61, %s77
    %p79 = scmp.eq.s32.totalorder %s15, 0
    %p80 = por %p78, %p79
    %s81 = ssub.s32 %s17, %s24
    %p82 = scmp.eq.s32.totalorder %s81, 0
    %s84 = sadd.s32 %s83, 1
    %s85 = scalar_select %p82, %s83, %s84
    %p88 = pneg %p82
    %p89 = scmp.eq.s32.totalorder %s9, 3
    %p90 = por %p88, %p89
    %p91 = scmp.ne.s32.totalorder %s83, %s86
    %p92 = scmp.eq.s32.totalorder %s9, 0
    %p93 = por %p91, %p92
    %p94 = scmp.ne.s32.totalorder %s83, %s86
    %p95 = scmp.eq.s32.totalorder %s14, 3
    %p96 = por %p94, %p95
    %p97 = scmp.ne.s32.totalorder %s86, %s87
    %p98 = scmp.eq.s32.totalorder %s14, 0
    %p99 = por %p97, %p98
    %p100 = scmp.ne.s32.totalorder %s86, %s87
    %p101 = scmp.eq.s32.totalorder %s15, 3
    %p102 = por %p100, %p101
    %p104 = scmp.ne.s32.totalorder %s87, %s103
    %p105 = scmp.eq.s32.totalorder %s15, 0
    %p106 = por %p104, %p105
    %s107 = ssub.s32 %s16, %s28
    %s108 = ssub.s32 %s17, %s24
    %s109 = sor.u32 %s107, %s108
    %p110 = scmp.eq.s32.totalorder %s109, 0
    %s112 = sadd.s32 %s111, 1
    %s113 = scalar_select %p110, %s111, %s112
    %p116 = pneg %p110
    %p117 = scmp.eq.s32.totalorder %s9, 3
    %p118 = por %p116, %p117
    %p119 = scmp.ne.s32.totalorder %s111, %s114
    %p120 = scmp.eq.s32.totalorder %s9, 0
    %p121 = por %p119, %p120
    %p122 = scmp.ne.s32.totalorder %s111, %s114
    %p123 = scmp.eq.s32.totalorder %s14, 3
    %p124 = por %p122, %p123
    %p125 = scmp.ne.s32.totalorder %s114, %s115
    %p126 = scmp.eq.s32.totalorder %s14, 0
    %p127 = por %p125, %p126
    %p128 = scmp.ne.s32.totalorder %s114, %s115
    %p129 = scmp.eq.s32.totalorder %s15, 3
    %p130 = por %p128, %p129
    %p132 = scmp.ne.s32.totalorder %s115, %s131
    %p133 = scmp.eq.s32.totalorder %s15, 0
    %p134 = por %p132, %p133
    %p135 = scmp.le.s32.totalorder 1, %s9
    %p136 = scmp.lt.s32.totalorder %s9, 5
    %p137 = pnand %p135, %p136
    %p138 = pneg %p137
    // Predicated region
    $region9: #{forward.5} parent=5 // pred_check
      _
    $region10: #{forward.5} parent=5 // pred_check_branch
      %140 = sbr.rel (%p137) target = $region12
    $region11: #{forward.5} parent=5 // pred_region
      %s141 = ssub.s32 %s9, 1
      // Predicated region
      $region13: #{forward.5} parent=11 // pred_check
        %p142 = pneg %p73
      $region14: #{forward.5} parent=11 // pred_check_branch
        %144 = sbr.rel (%p142) target = $region16
      $region15: #{forward.5} parent=11 // pred_region
        %s145 = smul.u32 4, %s19
        %p146 = scmp.lt.s32.totalorder %s145, 3
        %s147 = scalar_select %p146, %s145, 3
        %s148 = smul.addr %s147, 4
        %s149 = scalar_lea.vmem %s1, %s148
        %s150 = smul.u32 4, %s19
      $region16: #{forward.5} parent=11 // pred_fallthru
        _
      // Predicated region
      $region17: #{forward.5} parent=11 // pred_check
        %p151 = pneg %p99
      $region18: #{forward.5} parent=11 // pred_check_branch
        %153 = sbr.rel (%p151) target = $region20
      $region19: #{forward.5} parent=11 // pred_region
        %s154 = smul.u32 4, %s19
        %p155 = scmp.lt.s32.totalorder %s154, 3
        %s156 = scalar_select %p155, %s154, 3
        %s157 = scalar_lea.vmem %s2, %s156
        %s158 = smul.u32 4, %s19
      $region20: #{forward.5} parent=11 // pred_fallthru
        _
    $region12: #{forward.5} parent=5 // pred_fallthru
      _
    %p159 = scmp.lt.s32.totalorder %s9, 4
    // Predicated region
    $region21: #{forward.5} parent=5 // pred_check
      %p160 = pneg %p159
    $region22: #{forward.5} parent=5 // pred_check_branch
      %162 = sbr.rel (%p160) target = $region24
    $region23: #{forward.5} parent=5 // pred_region
      // Predicated region
      $region25: #{forward.5} parent=23 // pred_check
        %p163 = pneg %p41
      $region26: #{forward.5} parent=23 // pred_check_branch
        %165 = sbr.rel (%p163) target = $region28
      $region27: #{forward.5} parent=23 // pred_region
        %s166 = smul.u32 20, %s16
        %p167 = scmp.lt.s32.totalorder %s166, 79
        %s168 = scalar_select %p167, %s166, 79
        %s169 = smul.addr %s168, 2
        %s170 = smul.addr %s169, 4
        %s171 = scalar_lea.vmem %s0, %s170
        %s172 = smul.u32 20, %s16
      $region28: #{forward.5} parent=23 // pred_fallthru
        _
    $region24: #{forward.5} parent=5 // pred_fallthru
      _
    %p173 = scmp.le.s32.totalorder 1, %s9
    %p174 = scmp.lt.s32.totalorder %s9, 5
    %p175 = pnand %p173, %p174
    %p176 = pneg %p175
    // Predicated region
    $region29: #{forward.5} parent=5 // pred_check
      _
    $region30: #{forward.5} parent=5 // pred_check_branch
      %178 = sbr.rel (%p175) target = $region32
    $region31: #{forward.5} parent=5 // pred_region
      %s179 = ssub.s32 %s9, 1
      %s180 = smul.u32 20, %s18
      %p181 = scmp.lt.s32.totalorder %s180, 79
      %s182 = scalar_select %p181, %s180, 79
      %s183 = smul.addr %s182, 2
      %s184 = smul.addr %s183, 4
      %s185 = scalar_lea.vmem %s0, %s184
      %p186 = pneg %p47
      %p187 = pneg %p44
      %s188 = smul.u32 4, %s19
      %p189 = scmp.lt.s32.totalorder %s188, 3
      %s190 = scalar_select %p189, %s188, 3
      %s191 = smul.addr %s190, 4
      %s192 = scalar_lea.vmem %s1, %s191
      %p193 = pneg %p73
      %p194 = pneg %p70
      %s195 = smul.u32 4, %s19
      %p196 = scmp.lt.s32.totalorder %s195, 3
      %s197 = scalar_select %p196, %s195, 3
      %s198 = scalar_lea.vmem %s2, %s197
      %p199 = pneg %p99
      %p200 = pneg %p96
      %p201 = pneg %p127
      %p202 = pneg %p124
      %s203 = smul.u32 20, %s18
      %s204 = smul.u32 4, %s19
      %p205 = scmp.lt.s32.totalorder %s203, 79
      %s206 = scalar_select %p205, %s203, 79
      %p207 = scmp.lt.s32.totalorder %s204, 3
      %s208 = scalar_select %p207, %s204, 3
      %s209 = smul.addr %s206, 4
      %s210 = sadd.s32 %s208, %s209
      %s211 = smul.addr %s210, 8
      %s212 = scalar_lea.vmem %s3, %s211
      %s213 = smul.u32 20, %s18
      %p214 = scmp.lt.s32.totalorder %s213, 79
      %s215 = scalar_select %p214, %s213, 79
      %s216 = smul.addr %s215, 2
      %s217 = smul.addr %s216, 4
      %s218 = scalar_lea.vmem %s0, %s217
      %s219 = smul.u32 20, %s18
      %s220 = smul.u32 4, %s19
      %p221 = scmp.lt.s32.totalorder %s220, 3
      %s222 = scalar_select %p221, %s220, 3
      %s223 = smul.addr %s222, 4
      %s224 = scalar_lea.vmem %s1, %s223
      %s225 = smul.u32 4, %s19
      %s226 = smul.u32 4, %s19
      %p227 = scmp.lt.s32.totalorder %s226, 3
      %s228 = scalar_select %p227, %s226, 3
      %s229 = scalar_lea.vmem %s2, %s228
      %s230 = smul.u32 4, %s19
      %s231 = smul.u32 20, %s18
      %s232 = smul.u32 4, %s19
      %p233 = scmp.lt.s32.totalorder %s231, 79
      %s234 = scalar_select %p233, %s231, 79
      %p235 = scmp.lt.s32.totalorder %s232, 3
      %s236 = scalar_select %p235, %s232, 3
      %s237 = smul.addr %s234, 4
      %s238 = sadd.s32 %s236, %s237
      %s239 = smul.addr %s238, 8
      %s240 = scalar_lea.vmem %s3, %s239
      %s241 = smul.u32 20, %s18
      %s242 = smul.u32 4, %s19
      %v243 = vld [vmem:[%s218] sm:$0xff]
      %v244 = vld [vmem:[%s218 + $0x8] sm:$0xff]
      %v245 = vld [vmem:[%s218 + $0x10] sm:$0xff]
      %v246 = vld [vmem:[%s218 + $0x18] sm:$0xff]
      %v247 = vld [vmem:[%s218 + $0x20] sm:$0xff]
      %v248 = vld [vmem:[%s218 + $0x28] sm:$0xff]
      %v249 = vld [vmem:[%s218 + $0x30] sm:$0xff]
      %v250 = vld [vmem:[%s218 + $0x38] sm:$0xff]
      %v251 = vld [vmem:[%s218 + $0x40] sm:$0xff]
      %v252 = vld [vmem:[%s218 + $0x48] sm:$0xff]
      %v253 = vld [vmem:[%s218 + $0x50] sm:$0xff]
      %v254 = vld [vmem:[%s218 + $0x58] sm:$0xff]
      %v255 = vld [vmem:[%s218 + $0x60] sm:$0xff]
      %v256 = vld [vmem:[%s218 + $0x68] sm:$0xff]
      %v257 = vld [vmem:[%s218 + $0x70] sm:$0xff]
      %v258 = vld [vmem:[%s218 + $0x78] sm:$0xff]
      %v259 = vld [vmem:[%s218 + $0x80] sm:$0xff]
      %v260 = vld [vmem:[%s218 + $0x88] sm:$0xff]
      %v261 = vld [vmem:[%s218 + $0x90] sm:$0xff]
      %v262 = vld [vmem:[%s218 + $0x98] sm:$0xff]
      %v263 = vld [vmem:[%s224] sm:$0xff]
      %v264 = vld [vmem:[%s224 + $0x8] sm:$0xff]
      %v265 = vld [vmem:[%s224 + $0x10] sm:$0xff]
      %v266 = vld [vmem:[%s224 + $0x18] sm:$0xff]
      %v267 = vld [vmem:[%s224 + $0x20] sm:$0xff]
      %v268 = vld [vmem:[%s224 + $0x28] sm:$0xff]
      %v269 = vld [vmem:[%s224 + $0x30] sm:$0xff]
      %v270 = vld [vmem:[%s224 + $0x38] sm:$0xff]
      %v271 = vld [vmem:[%s224 + $0x40] sm:$0xff]
      %v272 = vld [vmem:[%s224 + $0x48] sm:$0xff]
      %v273 = vld [vmem:[%s224 + $0x50] sm:$0xff]
      %v274 = vld [vmem:[%s224 + $0x58] sm:$0xff]
      %v275 = vld [vmem:[%s224 + $0x60] sm:$0xff]
      %v276 = vld [vmem:[%s224 + $0x68] sm:$0xff]
      %v277 = vld [vmem:[%s224 + $0x70] sm:$0xff]
      %v278 = vld [vmem:[%s224 + $0x78] sm:$0xff]
      %v279 = vld [vmem:[%s224 + $0x80] sm:$0xff]
      %v280 = vld [vmem:[%s224 + $0x88] sm:$0xff]
      %v281 = vld [vmem:[%s224 + $0x90] sm:$0xff]
      %v282 = vld [vmem:[%s224 + $0x98] sm:$0xff]
      %v283 = vld [vmem:[%s224 + $0xa0] sm:$0xff]
      %v284 = vld [vmem:[%s224 + $0xa8] sm:$0xff]
      %v285 = vld [vmem:[%s224 + $0xb0] sm:$0xff]
      %v286 = vld [vmem:[%s224 + $0xb8] sm:$0xff]
      %v287 = vld [vmem:[%s224 + $0xc0] sm:$0xff]
      %v288 = vld [vmem:[%s224 + $0xc8] sm:$0xff]
      %v289 = vld [vmem:[%s224 + $0xd0] sm:$0xff]
      %v290 = vld [vmem:[%s224 + $0xd8] sm:$0xff]
      %v291 = vld [vmem:[%s224 + $0xe0] sm:$0xff]
      %v292 = vld [vmem:[%s224 + $0xe8] sm:$0xff]
      %v293 = vld [vmem:[%s224 + $0xf0] sm:$0xff]
      %v294 = vld [vmem:[%s224 + $0xf8] sm:$0xff]
      %v295 = vld [vmem:[%s224 + $0x100] sm:$0xff]
      %v296 = vld [vmem:[%s224 + $0x108] sm:$0xff]
      %v297 = vld [vmem:[%s224 + $0x110] sm:$0xff]
      %v298 = vld [vmem:[%s224 + $0x118] sm:$0xff]
      %v299 = vld [vmem:[%s224 + $0x120] sm:$0xff]
      %v300 = vld [vmem:[%s224 + $0x128] sm:$0xff]
      %v301 = vld [vmem:[%s224 + $0x130] sm:$0xff]
      %v302 = vld [vmem:[%s224 + $0x138] sm:$0xff]
      %v303 = vld [vmem:[%s224 + $0x140] sm:$0xff]
      %v304 = vld [vmem:[%s224 + $0x148] sm:$0xff]
      %v305 = vld [vmem:[%s224 + $0x150] sm:$0xff]
      %v306 = vld [vmem:[%s224 + $0x158] sm:$0xff]
      %v307 = vld [vmem:[%s224 + $0x160] sm:$0xff]
      %v308 = vld [vmem:[%s224 + $0x168] sm:$0xff]
      %v309 = vld [vmem:[%s224 + $0x170] sm:$0xff]
      %v310 = vld [vmem:[%s224 + $0x178] sm:$0xff]
      %v311 = vld [vmem:[%s224 + $0x180] sm:$0xff]
      %v312 = vld [vmem:[%s224 + $0x188] sm:$0xff]
      %v313 = vld [vmem:[%s224 + $0x190] sm:$0xff]
      %v314 = vld [vmem:[%s224 + $0x198] sm:$0xff]
      %v315 = vld [vmem:[%s224 + $0x1a0] sm:$0xff]
      %v316 = vld [vmem:[%s224 + $0x1a8] sm:$0xff]
      %v317 = vld [vmem:[%s224 + $0x1b0] sm:$0xff]
      %v318 = vld [vmem:[%s224 + $0x1b8] sm:$0xff]
      %v319 = vld [vmem:[%s224 + $0x1c0] sm:$0xff]
      %v320 = vld [vmem:[%s224 + $0x1c8] sm:$0xff]
      %v321 = vld [vmem:[%s224 + $0x1d0] sm:$0xff]
      %v322 = vld [vmem:[%s224 + $0x1d8] sm:$0xff]
      %v323 = vld [vmem:[%s224 + $0x1e0] sm:$0xff]
      %v324 = vld [vmem:[%s224 + $0x1e8] sm:$0xff]
      %v325 = vld [vmem:[%s224 + $0x1f0] sm:$0xff]
      %v326 = vld [vmem:[%s224 + $0x1f8] sm:$0xff]
      %v327 = vld [vmem:[%s229] sm:$0xf]
      %v329 = vperm.slane %v327, 0
      %v330 = vperm.slane %v327, 1
      %v331 = vperm.slane %v327, 2
      %v332 = vperm.slane %v327, 3
      %v357 = vunpack.c.l.b16 %v243
      %v358 = vunpack.c.h.b16 %v243
      %v359 = vunpack.c.l.b16 %v244
      %v360 = vunpack.c.h.b16 %v244
      %v361 = vunpack.c.l.b16 %v245
      %v362 = vunpack.c.h.b16 %v245
      %v363 = vunpack.c.l.b16 %v246
      %v364 = vunpack.c.h.b16 %v246
      %v365 = vunpack.c.l.b16 %v247
      %v366 = vunpack.c.h.b16 %v247
      %v367 = vunpack.c.l.b16 %v248
      %v368 = vunpack.c.h.b16 %v248
      %v369 = vunpack.c.l.b16 %v249
      %v370 = vunpack.c.h.b16 %v249
      %v371 = vunpack.c.l.b16 %v250
      %v372 = vunpack.c.h.b16 %v250
      %v373 = vunpack.c.l.b16 %v251
      %v374 = vunpack.c.h.b16 %v251
      %v375 = vunpack.c.l.b16 %v252
      %v376 = vunpack.c.h.b16 %v252
      %v377 = vunpack.c.l.b16 %v253
      %v378 = vunpack.c.h.b16 %v253
      %v379 = vunpack.c.l.b16 %v254
      %v380 = vunpack.c.h.b16 %v254
      %v381 = vunpack.c.l.b16 %v255
      %v382 = vunpack.c.h.b16 %v255
      %v383 = vunpack.c.l.b16 %v256
      %v384 = vunpack.c.h.b16 %v256
      %v385 = vunpack.c.l.b16 %v257
      %v386 = vunpack.c.h.b16 %v257
      %v387 = vunpack.c.l.b16 %v258
      %v388 = vunpack.c.h.b16 %v258
      %v389 = vunpack.c.l.b16 %v259
      %v390 = vunpack.c.h.b16 %v259
      %v391 = vunpack.c.l.b16 %v260
      %v392 = vunpack.c.h.b16 %v260
      %v393 = vunpack.c.l.b16 %v261
      %v394 = vunpack.c.h.b16 %v261
      %v395 = vunpack.c.l.b16 %v262
      %v396 = vunpack.c.h.b16 %v262
      %v397 = vpack.c.b16 %v359, %v357
      %v398 = vpack.c.b16 %v360, %v358
      %v399 = vpack.c.b16 %v363, %v361
      %v400 = vpack.c.b16 %v364, %v362
      %v401 = vpack.c.b16 %v367, %v365
      %v402 = vpack.c.b16 %v368, %v366
      %v403 = vpack.c.b16 %v371, %v369
      %v404 = vpack.c.b16 %v372, %v370
      %v405 = vpack.c.b16 %v375, %v373
      %v406 = vpack.c.b16 %v376, %v374
      %v407 = vpack.c.b16 %v379, %v377
      %v408 = vpack.c.b16 %v380, %v378
      %v409 = vpack.c.b16 %v383, %v381
      %v410 = vpack.c.b16 %v384, %v382
      %v411 = vpack.c.b16 %v387, %v385
      %v412 = vpack.c.b16 %v388, %v386
      %v413 = vpack.c.b16 %v391, %v389
      %v414 = vpack.c.b16 %v392, %v390
      %v415 = vpack.c.b16 %v395, %v393
      %v416 = vpack.c.b16 %v396, %v394
      %v501 = vunpack.c.l.b16 %v263
      %v502 = vunpack.c.h.b16 %v263
      %v503 = vunpack.c.l.b16 %v264
      %v504 = vunpack.c.h.b16 %v264
      %v505 = vunpack.c.l.b16 %v265
      %v506 = vunpack.c.h.b16 %v265
      %v507 = vunpack.c.l.b16 %v266
      %v508 = vunpack.c.h.b16 %v266
      %v509 = vunpack.c.l.b16 %v267
      %v510 = vunpack.c.h.b16 %v267
      %v511 = vunpack.c.l.b16 %v268
      %v512 = vunpack.c.h.b16 %v268
      %v513 = vunpack.c.l.b16 %v269
      %v514 = vunpack.c.h.b16 %v269
      %v515 = vunpack.c.l.b16 %v270
      %v516 = vunpack.c.h.b16 %v270
      %v517 = vunpack.c.l.b16 %v271
      %v518 = vunpack.c.h.b16 %v271
      %v519 = vunpack.c.l.b16 %v272
      %v520 = vunpack.c.h.b16 %v272
      %v521 = vunpack.c.l.b16 %v273
      %v522 = vunpack.c.h.b16 %v273
      %v523 = vunpack.c.l.b16 %v274
      %v524 = vunpack.c.h.b16 %v274
      %v525 = vunpack.c.l.b16 %v275
      %v526 = vunpack.c.h.b16 %v275
      %v527 = vunpack.c.l.b16 %v276
      %v528 = vunpack.c.h.b16 %v276
      %v529 = vunpack.c.l.b16 %v277
      %v530 = vunpack.c.h.b16 %v277
      %v531 = vunpack.c.l.b16 %v278
      %v532 = vunpack.c.h.b16 %v278
      %v533 = vunpack.c.l.b16 %v279
      %v534 = vunpack.c.h.b16 %v279
      %v535 = vunpack.c.l.b16 %v280
      %v536 = vunpack.c.h.b16 %v280
      %v537 = vunpack.c.l.b16 %v281
      %v538 = vunpack.c.h.b16 %v281
      %v539 = vunpack.c.l.b16 %v282
      %v540 = vunpack.c.h.b16 %v282
      %v541 = vunpack.c.l.b16 %v283
      %v542 = vunpack.c.h.b16 %v283
      %v543 = vunpack.c.l.b16 %v284
      %v544 = vunpack.c.h.b16 %v284
      %v545 = vunpack.c.l.b16 %v285
      %v546 = vunpack.c.h.b16 %v285
      %v547 = vunpack.c.l.b16 %v286
      %v548 = vunpack.c.h.b16 %v286
      %v549 = vunpack.c.l.b16 %v287
      %v550 = vunpack.c.h.b16 %v287
      %v551 = vunpack.c.l.b16 %v288
      %v552 = vunpack.c.h.b16 %v288
      %v553 = vunpack.c.l.b16 %v289
      %v554 = vunpack.c.h.b16 %v289
      %v555 = vunpack.c.l.b16 %v290
      %v556 = vunpack.c.h.b16 %v290
      %v557 = vunpack.c.l.b16 %v291
      %v558 = vunpack.c.h.b16 %v291
      %v559 = vunpack.c.l.b16 %v292
      %v560 = vunpack.c.h.b16 %v292
      %v561 = vunpack.c.l.b16 %v293
      %v562 = vunpack.c.h.b16 %v293
      %v563 = vunpack.c.l.b16 %v294
      %v564 = vunpack.c.h.b16 %v294
      %v565 = vunpack.c.l.b16 %v295
      %v566 = vunpack.c.h.b16 %v295
      %v567 = vunpack.c.l.b16 %v296
      %v568 = vunpack.c.h.b16 %v296
      %v569 = vunpack.c.l.b16 %v297
      %v570 = vunpack.c.h.b16 %v297
      %v571 = vunpack.c.l.b16 %v298
      %v572 = vunpack.c.h.b16 %v298
      %v573 = vunpack.c.l.b16 %v299
      %v574 = vunpack.c.h.b16 %v299
      %v575 = vunpack.c.l.b16 %v300
      %v576 = vunpack.c.h.b16 %v300
      %v577 = vunpack.c.l.b16 %v301
      %v578 = vunpack.c.h.b16 %v301
      %v579 = vunpack.c.l.b16 %v302
      %v580 = vunpack.c.h.b16 %v302
      %v581 = vunpack.c.l.b16 %v303
      %v582 = vunpack.c.h.b16 %v303
      %v583 = vunpack.c.l.b16 %v304
      %v584 = vunpack.c.h.b16 %v304
      %v585 = vunpack.c.l.b16 %v305
      %v586 = vunpack.c.h.b16 %v305
      %v587 = vunpack.c.l.b16 %v306
      %v588 = vunpack.c.h.b16 %v306
      %v589 = vunpack.c.l.b16 %v307
      %v590 = vunpack.c.h.b16 %v307
      %v591 = vunpack.c.l.b16 %v308
      %v592 = vunpack.c.h.b16 %v308
      %v593 = vunpack.c.l.b16 %v309
      %v594 = vunpack.c.h.b16 %v309
      %v595 = vunpack.c.l.b16 %v310
      %v596 = vunpack.c.h.b16 %v310
      %v597 = vunpack.c.l.b16 %v311
      %v598 = vunpack.c.h.b16 %v311
      %v599 = vunpack.c.l.b16 %v312
      %v600 = vunpack.c.h.b16 %v312
      %v601 = vunpack.c.l.b16 %v313
      %v602 = vunpack.c.h.b16 %v313
      %v603 = vunpack.c.l.b16 %v314
      %v604 = vunpack.c.h.b16 %v314
      %v605 = vunpack.c.l.b16 %v315
      %v606 = vunpack.c.h.b16 %v315
      %v607 = vunpack.c.l.b16 %v316
      %v608 = vunpack.c.h.b16 %v316
      %v609 = vunpack.c.l.b16 %v317
      %v610 = vunpack.c.h.b16 %v317
      %v611 = vunpack.c.l.b16 %v318
      %v612 = vunpack.c.h.b16 %v318
      %v613 = vunpack.c.l.b16 %v319
      %v614 = vunpack.c.h.b16 %v319
      %v615 = vunpack.c.l.b16 %v320
      %v616 = vunpack.c.h.b16 %v320
      %v617 = vunpack.c.l.b16 %v321
      %v618 = vunpack.c.h.b16 %v321
      %v619 = vunpack.c.l.b16 %v322
      %v620 = vunpack.c.h.b16 %v322
      %v621 = vunpack.c.l.b16 %v323
      %v622 = vunpack.c.h.b16 %v323
      %v623 = vunpack.c.l.b16 %v324
      %v624 = vunpack.c.h.b16 %v324
      %v625 = vunpack.c.l.b16 %v325
      %v626 = vunpack.c.h.b16 %v325
      %v627 = vunpack.c.l.b16 %v326
      %v628 = vunpack.c.h.b16 %v326
      %v629 = vpack.c.b16 %v505, %v501
      %v630 = vpack.c.b16 %v506, %v502
      %v631 = vpack.c.b16 %v507, %v503
      %v632 = vpack.c.b16 %v508, %v504
      %v633 = vpack.c.b16 %v513, %v509
      %v634 = vpack.c.b16 %v514, %v510
      %v635 = vpack.c.b16 %v515, %v511
      %v636 = vpack.c.b16 %v516, %v512
      %v637 = vpack.c.b16 %v521, %v517
      %v638 = vpack.c.b16 %v522, %v518
      %v639 = vpack.c.b16 %v523, %v519
      %v640 = vpack.c.b16 %v524, %v520
      %v641 = vpack.c.b16 %v529, %v525
      %v642 = vpack.c.b16 %v530, %v526
      %v643 = vpack.c.b16 %v531, %v527
      %v644 = vpack.c.b16 %v532, %v528
      %v645 = vpack.c.b16 %v537, %v533
      %v646 = vpack.c.b16 %v538, %v534
      %v647 = vpack.c.b16 %v539, %v535
      %v648 = vpack.c.b16 %v540, %v536
      %v649 = vpack.c.b16 %v545, %v541
      %v650 = vpack.c.b16 %v546, %v542
      %v651 = vpack.c.b16 %v547, %v543
      %v652 = vpack.c.b16 %v548, %v544
      %v653 = vpack.c.b16 %v553, %v549
      %v654 = vpack.c.b16 %v554, %v550
      %v655 = vpack.c.b16 %v555, %v551
      %v656 = vpack.c.b16 %v556, %v552
      %v657 = vpack.c.b16 %v561, %v557
      %v658 = vpack.c.b16 %v562, %v558
      %v659 = vpack.c.b16 %v563, %v559
      %v660 = vpack.c.b16 %v564, %v560
      %v661 = vpack.c.b16 %v569, %v565
      %v662 = vpack.c.b16 %v570, %v566
      %v663 = vpack.c.b16 %v571, %v567
      %v664 = vpack.c.b16 %v572, %v568
      %v665 = vpack.c.b16 %v577, %v573
      %v666 = vpack.c.b16 %v578, %v574
      %v667 = vpack.c.b16 %v579, %v575
      %v668 = vpack.c.b16 %v580, %v576
      %v669 = vpack.c.b16 %v585, %v581
      %v670 = vpack.c.b16 %v586, %v582
      %v671 = vpack.c.b16 %v587, %v583
      %v672 = vpack.c.b16 %v588, %v584
      %v673 = vpack.c.b16 %v593, %v589
      %v674 = vpack.c.b16 %v594, %v590
      %v675 = vpack.c.b16 %v595, %v591
      %v676 = vpack.c.b16 %v596, %v592
      %v677 = vpack.c.b16 %v601, %v597
      %v678 = vpack.c.b16 %v602, %v598
      %v679 = vpack.c.b16 %v603, %v599
      %v680 = vpack.c.b16 %v604, %v600
      %v681 = vpack.c.b16 %v609, %v605
      %v682 = vpack.c.b16 %v610, %v606
      %v683 = vpack.c.b16 %v611, %v607
      %v684 = vpack.c.b16 %v612, %v608
      %v685 = vpack.c.b16 %v617, %v613
      %v686 = vpack.c.b16 %v618, %v614
      %v687 = vpack.c.b16 %v619, %v615
      %v688 = vpack.c.b16 %v620, %v616
      %v689 = vpack.c.b16 %v625, %v621
      %v690 = vpack.c.b16 %v626, %v622
      %v691 = vpack.c.b16 %v627, %v623
      %v692 = vpack.c.b16 %v628, %v624
      %757 = vmatpush.bf16.msra.mxu0 %v657
      %758 = vmatpush.bf16.msra.mxu0 %v653
      %759 = vmatpush.bf16.msra.mxu0 %v649
      %760 = vmatpush.bf16.msra.mxu0 %v645
      %761 = vmatpush.bf16.msra.mxu0 %v641
      %762 = vmatpush.bf16.msra.mxu0 %v637
      %763 = vmatpush.bf16.msra.mxu0 %v633
      %764 = vmatpush.bf16.msra.mxu0 %v629
      %765 = vmatmul.bf16.gmra.mxu0 %v397
      %v766 = vpop.f32.mrf.mxu0
      %v767 = vadd.f32 %v329, %v766
      %v768 = vpop.f32.mrf.mxu0
      %v769 = vadd.f32 %v329, %v768
      %770 = vmatmul.bf16.gmra.mxu0 %v399
      %v771 = vpop.f32.mrf.mxu0
      %v772 = vadd.f32 %v329, %v771
      %v773 = vpop.f32.mrf.mxu0
      %v774 = vadd.f32 %v329, %v773
      %775 = vmatmul.bf16.gmra.mxu0 %v401
      %v776 = vpop.f32.mrf.mxu0
      %v777 = vadd.f32 %v329, %v776
      %v778 = vpop.f32.mrf.mxu0
      %v779 = vadd.f32 %v329, %v778
      %780 = vmatmul.bf16.gmra.mxu0 %v403
      %v781 = vpop.f32.mrf.mxu0
      %v782 = vadd.f32 %v329, %v781
      %v783 = vpop.f32.mrf.mxu0
      %v784 = vadd.f32 %v329, %v783
      %785 = vmatmul.bf16.gmra.mxu0 %v405
      %v786 = vpop.f32.mrf.mxu0
      %v787 = vadd.f32 %v329, %v786
      %v788 = vpop.f32.mrf.mxu0
      %v789 = vadd.f32 %v329, %v788
      %790 = vmatmul.bf16.gmra.mxu0 %v407
      %v791 = vpop.f32.mrf.mxu0
      %v792 = vadd.f32 %v329, %v791
      %v793 = vpop.f32.mrf.mxu0
      %v794 = vadd.f32 %v329, %v793
      %795 = vmatmul.bf16.gmra.mxu0 %v409
      %v796 = vpop.f32.mrf.mxu0
      %v797 = vadd.f32 %v329, %v796
      %v798 = vpop.f32.mrf.mxu0
      %v799 = vadd.f32 %v329, %v798
      %800 = vmatmul.bf16.gmra.mxu0 %v411
      %v801 = vpop.f32.mrf.mxu0
      %v802 = vadd.f32 %v329, %v801
      %v803 = vpop.f32.mrf.mxu0
      %v804 = vadd.f32 %v329, %v803
      %805 = vmatmul.bf16.gmra.mxu0 %v413
      %v806 = vpop.f32.mrf.mxu0
      %v807 = vadd.f32 %v329, %v806
      %v808 = vpop.f32.mrf.mxu0
      %v809 = vadd.f32 %v329, %v808
      %810 = vmatmul.bf16.gmra.mxu0 %v415
      %v811 = vpop.f32.mrf.mxu0
      %v812 = vadd.f32 %v329, %v811
      %v813 = vpop.f32.mrf.mxu0
      %v814 = vadd.f32 %v329, %v813
      %815 = vdwg.mxu0
      %816 = vmatpush.bf16.msra.mxu0 %v689
      %817 = vmatpush.bf16.msra.mxu0 %v685
      %818 = vmatpush.bf16.msra.mxu0 %v681
      %819 = vmatpush.bf16.msra.mxu0 %v677
      %820 = vmatpush.bf16.msra.mxu0 %v673
      %821 = vmatpush.bf16.msra.mxu0 %v669
      %822 = vmatpush.bf16.msra.mxu0 %v665
      %823 = vmatpush.bf16.msra.mxu0 %v661
      %824 = vmatmul.bf16.gmra.mxu0 %v398
      %v825 = vpop.f32.mrf.mxu0
      %v826 = vadd.f32 %v767, %v825
      %v827 = vpop.f32.mrf.mxu0
      %v828 = vadd.f32 %v769, %v827
      %829 = vmatmul.bf16.gmra.mxu0 %v400
      %v830 = vpop.f32.mrf.mxu0
      %v831 = vadd.f32 %v772, %v830
      %v832 = vpop.f32.mrf.mxu0
      %v833 = vadd.f32 %v774, %v832
      %834 = vmatmul.bf16.gmra.mxu0 %v402
      %v835 = vpop.f32.mrf.mxu0
      %v836 = vadd.f32 %v777, %v835
      %v837 = vpop.f32.mrf.mxu0
      %v838 = vadd.f32 %v779, %v837
      %839 = vmatmul.bf16.gmra.mxu0 %v404
      %v840 = vpop.f32.mrf.mxu0
      %v841 = vadd.f32 %v782, %v840
      %v842 = vpop.f32.mrf.mxu0
      %v843 = vadd.f32 %v784, %v842
      %844 = vmatmul.bf16.gmra.mxu0 %v406
      %v845 = vpop.f32.mrf.mxu0
      %v846 = vadd.f32 %v787, %v845
      %v847 = vpop.f32.mrf.mxu0
      %v848 = vadd.f32 %v789, %v847
      %849 = vmatmul.bf16.gmra.mxu0 %v408
      %v850 = vpop.f32.mrf.mxu0
      %v851 = vadd.f32 %v792, %v850
      %v852 = vpop.f32.mrf.mxu0
      %v853 = vadd.f32 %v794, %v852
      %854 = vmatmul.bf16.gmra.mxu0 %v410
      %v855 = vpop.f32.mrf.mxu0
      %v856 = vadd.f32 %v797, %v855
      %v857 = vpop.f32.mrf.mxu0
      %v858 = vadd.f32 %v799, %v857
      %859 = vmatmul.bf16.gmra.mxu0 %v412
      %v860 = vpop.f32.mrf.mxu0
      %v861 = vadd.f32 %v802, %v860
      %v862 = vpop.f32.mrf.mxu0
      %v863 = vadd.f32 %v804, %v862
      %864 = vmatmul.bf16.gmra.mxu0 %v414
      %v865 = vpop.f32.mrf.mxu0
      %v866 = vadd.f32 %v807, %v865
      %v867 = vpop.f32.mrf.mxu0
      %v868 = vadd.f32 %v809, %v867
      %869 = vmatmul.bf16.gmra.mxu0 %v416
      %v870 = vpop.f32.mrf.mxu0
      %v871 = vadd.f32 %v812, %v870
      %v872 = vpop.f32.mrf.mxu0
      %v873 = vadd.f32 %v814, %v872
      %874 = vdwg.mxu0
      %875 = vmatpush.bf16.msra.mxu0 %v658
      %876 = vmatpush.bf16.msra.mxu0 %v654
      %877 = vmatpush.bf16.msra.mxu0 %v650
      %878 = vmatpush.bf16.msra.mxu0 %v646
      %879 = vmatpush.bf16.msra.mxu0 %v642
      %880 = vmatpush.bf16.msra.mxu0 %v638
      %881 = vmatpush.bf16.msra.mxu0 %v634
      %882 = vmatpush.bf16.msra.mxu0 %v630
      %883 = vmatmul.bf16.gmra.mxu0 %v397
      %v884 = vpop.f32.mrf.mxu0
      %v885 = vadd.f32 %v330, %v884
      %v886 = vpop.f32.mrf.mxu0
      %v887 = vadd.f32 %v330, %v886
      %888 = vmatmul.bf16.gmra.mxu0 %v399
      %v889 = vpop.f32.mrf.mxu0
      %v890 = vadd.f32 %v330, %v889
      %v891 = vpop.f32.mrf.mxu0
      %v892 = vadd.f32 %v330, %v891
      %893 = vmatmul.bf16.gmra.mxu0 %v401
      %v894 = vpop.f32.mrf.mxu0
      %v895 = vadd.f32 %v330, %v894
      %v896 = vpop.f32.mrf.mxu0
      %v897 = vadd.f32 %v330, %v896
      %898 = vmatmul.bf16.gmra.mxu0 %v403
      %v899 = vpop.f32.mrf.mxu0
      %v900 = vadd.f32 %v330, %v899
      %v901 = vpop.f32.mrf.mxu0
      %v902 = vadd.f32 %v330, %v901
      %903 = vmatmul.bf16.gmra.mxu0 %v405
      %v904 = vpop.f32.mrf.mxu0
      %v905 = vadd.f32 %v330, %v904
      %v906 = vpop.f32.mrf.mxu0
      %v907 = vadd.f32 %v330, %v906
      %908 = vmatmul.bf16.gmra.mxu0 %v407
      %v909 = vpop.f32.mrf.mxu0
      %v910 = vadd.f32 %v330, %v909
      %v911 = vpop.f32.mrf.mxu0
      %v912 = vadd.f32 %v330, %v911
      %913 = vmatmul.bf16.gmra.mxu0 %v409
      %v914 = vpop.f32.mrf.mxu0
      %v915 = vadd.f32 %v330, %v914
      %v916 = vpop.f32.mrf.mxu0
      %v917 = vadd.f32 %v330, %v916
      %918 = vmatmul.bf16.gmra.mxu0 %v411
      %v919 = vpop.f32.mrf.mxu0
      %v920 = vadd.f32 %v330, %v919
      %v921 = vpop.f32.mrf.mxu0
      %v922 = vadd.f32 %v330, %v921
      %923 = vmatmul.bf16.gmra.mxu0 %v413
      %v924 = vpop.f32.mrf.mxu0
      %v925 = vadd.f32 %v330, %v924
      %v926 = vpop.f32.mrf.mxu0
      %v927 = vadd.f32 %v330, %v926
      %928 = vmatmul.bf16.gmra.mxu0 %v415
      %v929 = vpop.f32.mrf.mxu0
      %v930 = vadd.f32 %v330, %v929
      %v931 = vpop.f32.mrf.mxu0
      %v932 = vadd.f32 %v330, %v931
      %933 = vdwg.mxu0
      %934 = vmatpush.bf16.msra.mxu0 %v690
      %935 = vmatpush.bf16.msra.mxu0 %v686
      %936 = vmatpush.bf16.msra.mxu0 %v682
      %937 = vmatpush.bf16.msra.mxu0 %v678
      %938 = vmatpush.bf16.msra.mxu0 %v674
      %939 = vmatpush.bf16.msra.mxu0 %v670
      %940 = vmatpush.bf16.msra.mxu0 %v666
      %941 = vmatpush.bf16.msra.mxu0 %v662
      %942 = vmatmul.bf16.gmra.mxu0 %v398
      %v943 = vpop.f32.mrf.mxu0
      %v944 = vadd.f32 %v885, %v943
      %v945 = vpop.f32.mrf.mxu0
      %v946 = vadd.f32 %v887, %v945
      %947 = vmatmul.bf16.gmra.mxu0 %v400
      %v948 = vpop.f32.mrf.mxu0
      %v949 = vadd.f32 %v890, %v948
      %v950 = vpop.f32.mrf.mxu0
      %v951 = vadd.f32 %v892, %v950
      %952 = vmatmul.bf16.gmra.mxu0 %v402
      %v953 = vpop.f32.mrf.mxu0
      %v954 = vadd.f32 %v895, %v953
      %v955 = vpop.f32.mrf.mxu0
      %v956 = vadd.f32 %v897, %v955
      %957 = vmatmul.bf16.gmra.mxu0 %v404
      %v958 = vpop.f32.mrf.mxu0
      %v959 = vadd.f32 %v900, %v958
      %v960 = vpop.f32.mrf.mxu0
      %v961 = vadd.f32 %v902, %v960
      %962 = vmatmul.bf16.gmra.mxu0 %v406
      %v963 = vpop.f32.mrf.mxu0
      %v964 = vadd.f32 %v905, %v963
      %v965 = vpop.f32.mrf.mxu0
      %v966 = vadd.f32 %v907, %v965
      %967 = vmatmul.bf16.gmra.mxu0 %v408
      %v968 = vpop.f32.mrf.mxu0
      %v969 = vadd.f32 %v910, %v968
      %v970 = vpop.f32.mrf.mxu0
      %v971 = vadd.f32 %v912, %v970
      %972 = vmatmul.bf16.gmra.mxu0 %v410
      %v973 = vpop.f32.mrf.mxu0
      %v974 = vadd.f32 %v915, %v973
      %v975 = vpop.f32.mrf.mxu0
      %v976 = vadd.f32 %v917, %v975
      %977 = vmatmul.bf16.gmra.mxu0 %v412
      %v978 = vpop.f32.mrf.mxu0
      %v979 = vadd.f32 %v920, %v978
      %v980 = vpop.f32.mrf.mxu0
      %v981 = vadd.f32 %v922, %v980
      %982 = vmatmul.bf16.gmra.mxu0 %v414
      %v983 = vpop.f32.mrf.mxu0
      %v984 = vadd.f32 %v925, %v983
      %v985 = vpop.f32.mrf.mxu0
      %v986 = vadd.f32 %v927, %v985
      %987 = vmatmul.bf16.gmra.mxu0 %v416
      %v988 = vpop.f32.mrf.mxu0
      %v989 = vadd.f32 %v930, %v988
      %v990 = vpop.f32.mrf.mxu0
      %v991 = vadd.f32 %v932, %v990
      %992 = vdwg.mxu0
      %993 = vmatpush.bf16.msra.mxu0 %v659
      %994 = vmatpush.bf16.msra.mxu0 %v655
      %995 = vmatpush.bf16.msra.mxu0 %v651
      %996 = vmatpush.bf16.msra.mxu0 %v647
      %997 = vmatpush.bf16.msra.mxu0 %v643
      %998 = vmatpush.bf16.msra.mxu0 %v639
      %999 = vmatpush.bf16.msra.mxu0 %v635
      %1000 = vmatpush.bf16.msra.mxu0 %v631
      %1001 = vmatmul.bf16.gmra.mxu0 %v397
      %v1002 = vpop.f32.mrf.mxu0
      %v1003 = vadd.f32 %v331, %v1002
      %v1004 = vpop.f32.mrf.mxu0
      %v1005 = vadd.f32 %v331, %v1004
      %1006 = vmatmul.bf16.gmra.mxu0 %v399
      %v1007 = vpop.f32.mrf.mxu0
      %v1008 = vadd.f32 %v331, %v1007
      %v1009 = vpop.f32.mrf.mxu0
      %v1010 = vadd.f32 %v331, %v1009
      %1011 = vmatmul.bf16.gmra.mxu0 %v401
      %v1012 = vpop.f32.mrf.mxu0
      %v1013 = vadd.f32 %v331, %v1012
      %v1014 = vpop.f32.mrf.mxu0
      %v1015 = vadd.f32 %v331, %v1014
      %1016 = vmatmul.bf16.gmra.mxu0 %v403
      %v1017 = vpop.f32.mrf.mxu0
      %v1018 = vadd.f32 %v331, %v1017
      %v1019 = vpop.f32.mrf.mxu0
      %v1020 = vadd.f32 %v331, %v1019
      %1021 = vmatmul.bf16.gmra.mxu0 %v405
      %v1022 = vpop.f32.mrf.mxu0
      %v1023 = vadd.f32 %v331, %v1022
      %v1024 = vpop.f32.mrf.mxu0
      %v1025 = vadd.f32 %v331, %v1024
      %1026 = vmatmul.bf16.gmra.mxu0 %v407
      %v1027 = vpop.f32.mrf.mxu0
      %v1028 = vadd.f32 %v331, %v1027
      %v1029 = vpop.f32.mrf.mxu0
      %v1030 = vadd.f32 %v331, %v1029
      %1031 = vmatmul.bf16.gmra.mxu0 %v409
      %v1032 = vpop.f32.mrf.mxu0
      %v1033 = vadd.f32 %v331, %v1032
      %v1034 = vpop.f32.mrf.mxu0
      %v1035 = vadd.f32 %v331, %v1034
      %1036 = vmatmul.bf16.gmra.mxu0 %v411
      %v1037 = vpop.f32.mrf.mxu0
      %v1038 = vadd.f32 %v331, %v1037
      %v1039 = vpop.f32.mrf.mxu0
      %v1040 = vadd.f32 %v331, %v1039
      %1041 = vmatmul.bf16.gmra.mxu0 %v413
      %v1042 = vpop.f32.mrf.mxu0
      %v1043 = vadd.f32 %v331, %v1042
      %v1044 = vpop.f32.mrf.mxu0
      %v1045 = vadd.f32 %v331, %v1044
      %1046 = vmatmul.bf16.gmra.mxu0 %v415
      %v1047 = vpop.f32.mrf.mxu0
      %v1048 = vadd.f32 %v331, %v1047
      %v1049 = vpop.f32.mrf.mxu0
      %v1050 = vadd.f32 %v331, %v1049
      %1051 = vdwg.mxu0
      %1052 = vmatpush.bf16.msra.mxu0 %v691
      %1053 = vmatpush.bf16.msra.mxu0 %v687
      %1054 = vmatpush.bf16.msra.mxu0 %v683
      %1055 = vmatpush.bf16.msra.mxu0 %v679
      %1056 = vmatpush.bf16.msra.mxu0 %v675
      %1057 = vmatpush.bf16.msra.mxu0 %v671
      %1058 = vmatpush.bf16.msra.mxu0 %v667
      %1059 = vmatpush.bf16.msra.mxu0 %v663
      %1060 = vmatmul.bf16.gmra.mxu0 %v398
      %v1061 = vpop.f32.mrf.mxu0
      %v1062 = vadd.f32 %v1003, %v1061
      %v1063 = vpop.f32.mrf.mxu0
      %v1064 = vadd.f32 %v1005, %v1063
      %1065 = vmatmul.bf16.gmra.mxu0 %v400
      %v1066 = vpop.f32.mrf.mxu0
      %v1067 = vadd.f32 %v1008, %v1066
      %v1068 = vpop.f32.mrf.mxu0
      %v1069 = vadd.f32 %v1010, %v1068
      %1070 = vmatmul.bf16.gmra.mxu0 %v402
      %v1071 = vpop.f32.mrf.mxu0
      %v1072 = vadd.f32 %v1013, %v1071
      %v1073 = vpop.f32.mrf.mxu0
      %v1074 = vadd.f32 %v1015, %v1073
      %1075 = vmatmul.bf16.gmra.mxu0 %v404
      %v1076 = vpop.f32.mrf.mxu0
      %v1077 = vadd.f32 %v1018, %v1076
      %v1078 = vpop.f32.mrf.mxu0
      %v1079 = vadd.f32 %v1020, %v1078
      %1080 = vmatmul.bf16.gmra.mxu0 %v406
      %v1081 = vpop.f32.mrf.mxu0
      %v1082 = vadd.f32 %v1023, %v1081
      %v1083 = vpop.f32.mrf.mxu0
      %v1084 = vadd.f32 %v1025, %v1083
      %1085 = vmatmul.bf16.gmra.mxu0 %v408
      %v1086 = vpop.f32.mrf.mxu0
      %v1087 = vadd.f32 %v1028, %v1086
      %v1088 = vpop.f32.mrf.mxu0
      %v1089 = vadd.f32 %v1030, %v1088
      %1090 = vmatmul.bf16.gmra.mxu0 %v410
      %v1091 = vpop.f32.mrf.mxu0
      %v1092 = vadd.f32 %v1033, %v1091
      %v1093 = vpop.f32.mrf.mxu0
      %v1094 = vadd.f32 %v1035, %v1093
      %1095 = vmatmul.bf16.gmra.mxu0 %v412
      %v1096 = vpop.f32.mrf.mxu0
      %v1097 = vadd.f32 %v1038, %v1096
      %v1098 = vpop.f32.mrf.mxu0
      %v1099 = vadd.f32 %v1040, %v1098
      %1100 = vmatmul.bf16.gmra.mxu0 %v414
      %v1101 = vpop.f32.mrf.mxu0
      %v1102 = vadd.f32 %v1043, %v1101
      %v1103 = vpop.f32.mrf.mxu0
      %v1104 = vadd.f32 %v1045, %v1103
      %1105 = vmatmul.bf16.gmra.mxu0 %v416
      %v1106 = vpop.f32.mrf.mxu0
      %v1107 = vadd.f32 %v1048, %v1106
      %v1108 = vpop.f32.mrf.mxu0
      %v1109 = vadd.f32 %v1050, %v1108
      %1110 = vdwg.mxu0
      %1111 = vmatpush.bf16.msra.mxu0 %v660
      %1112 = vmatpush.bf16.msra.mxu0 %v656
      %1113 = vmatpush.bf16.msra.mxu0 %v652
      %1114 = vmatpush.bf16.msra.mxu0 %v648
      %1115 = vmatpush.bf16.msra.mxu0 %v644
      %1116 = vmatpush.bf16.msra.mxu0 %v640
      %1117 = vmatpush.bf16.msra.mxu0 %v636
      %1118 = vmatpush.bf16.msra.mxu0 %v632
      %1119 = vmatmul.bf16.gmra.mxu0 %v397
      %v1120 = vpop.f32.mrf.mxu0
      %v1121 = vadd.f32 %v332, %v1120
      %v1122 = vpop.f32.mrf.mxu0
      %v1123 = vadd.f32 %v332, %v1122
      %1124 = vmatmul.bf16.gmra.mxu0 %v399
      %v1125 = vpop.f32.mrf.mxu0
      %v1126 = vadd.f32 %v332, %v1125
      %v1127 = vpop.f32.mrf.mxu0
      %v1128 = vadd.f32 %v332, %v1127
      %1129 = vmatmul.bf16.gmra.mxu0 %v401
      %v1130 = vpop.f32.mrf.mxu0
      %v1131 = vadd.f32 %v332, %v1130
      %v1132 = vpop.f32.mrf.mxu0
      %v1133 = vadd.f32 %v332, %v1132
      %1134 = vmatmul.bf16.gmra.mxu0 %v403
      %v1135 = vpop.f32.mrf.mxu0
      %v1136 = vadd.f32 %v332, %v1135
      %v1137 = vpop.f32.mrf.mxu0
      %v1138 = vadd.f32 %v332, %v1137
      %1139 = vmatmul.bf16.gmra.mxu0 %v405
      %v1140 = vpop.f32.mrf.mxu0
      %v1141 = vadd.f32 %v332, %v1140
      %v1142 = vpop.f32.mrf.mxu0
      %v1143 = vadd.f32 %v332, %v1142
      %1144 = vmatmul.bf16.gmra.mxu0 %v407
      %v1145 = vpop.f32.mrf.mxu0
      %v1146 = vadd.f32 %v332, %v1145
      %v1147 = vpop.f32.mrf.mxu0
      %v1148 = vadd.f32 %v332, %v1147
      %1149 = vmatmul.bf16.gmra.mxu0 %v409
      %v1150 = vpop.f32.mrf.mxu0
      %v1151 = vadd.f32 %v332, %v1150
      %v1152 = vpop.f32.mrf.mxu0
      %v1153 = vadd.f32 %v332, %v1152
      %1154 = vmatmul.bf16.gmra.mxu0 %v411
      %v1155 = vpop.f32.mrf.mxu0
      %v1156 = vadd.f32 %v332, %v1155
      %v1157 = vpop.f32.mrf.mxu0
      %v1158 = vadd.f32 %v332, %v1157
      %1159 = vmatmul.bf16.gmra.mxu0 %v413
      %v1160 = vpop.f32.mrf.mxu0
      %v1161 = vadd.f32 %v332, %v1160
      %v1162 = vpop.f32.mrf.mxu0
      %v1163 = vadd.f32 %v332, %v1162
      %1164 = vmatmul.bf16.gmra.mxu0 %v415
      %v1165 = vpop.f32.mrf.mxu0
      %v1166 = vadd.f32 %v332, %v1165
      %v1167 = vpop.f32.mrf.mxu0
      %v1168 = vadd.f32 %v332, %v1167
      %1169 = vdwg.mxu0
      %1170 = vmatpush.bf16.msra.mxu0 %v692
      %1171 = vmatpush.bf16.msra.mxu0 %v688
      %1172 = vmatpush.bf16.msra.mxu0 %v684
      %1173 = vmatpush.bf16.msra.mxu0 %v680
      %1174 = vmatpush.bf16.msra.mxu0 %v676
      %1175 = vmatpush.bf16.msra.mxu0 %v672
      %1176 = vmatpush.bf16.msra.mxu0 %v668
      %1177 = vmatpush.bf16.msra.mxu0 %v664
      %1178 = vmatmul.bf16.gmra.mxu0 %v398
      %v1179 = vpop.f32.mrf.mxu0
      %v1180 = vadd.f32 %v1121, %v1179
      %v1181 = vpop.f32.mrf.mxu0
      %v1182 = vadd.f32 %v1123, %v1181
      %1183 = vmatmul.bf16.gmra.mxu0 %v400
      %v1184 = vpop.f32.mrf.mxu0
      %v1185 = vadd.f32 %v1126, %v1184
      %v1186 = vpop.f32.mrf.mxu0
      %v1187 = vadd.f32 %v1128, %v1186
      %1188 = vmatmul.bf16.gmra.mxu0 %v402
      %v1189 = vpop.f32.mrf.mxu0
      %v1190 = vadd.f32 %v1131, %v1189
      %v1191 = vpop.f32.mrf.mxu0
      %v1192 = vadd.f32 %v1133, %v1191
      %1193 = vmatmul.bf16.gmra.mxu0 %v404
      %v1194 = vpop.f32.mrf.mxu0
      %v1195 = vadd.f32 %v1136, %v1194
      %v1196 = vpop.f32.mrf.mxu0
      %v1197 = vadd.f32 %v1138, %v1196
      %1198 = vmatmul.bf16.gmra.mxu0 %v406
      %v1199 = vpop.f32.mrf.mxu0
      %v1200 = vadd.f32 %v1141, %v1199
      %v1201 = vpop.f32.mrf.mxu0
      %v1202 = vadd.f32 %v1143, %v1201
      %1203 = vmatmul.bf16.gmra.mxu0 %v408
      %v1204 = vpop.f32.mrf.mxu0
      %v1205 = vadd.f32 %v1146, %v1204
      %v1206 = vpop.f32.mrf.mxu0
      %v1207 = vadd.f32 %v1148, %v1206
      %1208 = vmatmul.bf16.gmra.mxu0 %v410
      %v1209 = vpop.f32.mrf.mxu0
      %v1210 = vadd.f32 %v1151, %v1209
      %v1211 = vpop.f32.mrf.mxu0
      %v1212 = vadd.f32 %v1153, %v1211
      %1213 = vmatmul.bf16.gmra.mxu0 %v412
      %v1214 = vpop.f32.mrf.mxu0
      %v1215 = vadd.f32 %v1156, %v1214
      %v1216 = vpop.f32.mrf.mxu0
      %v1217 = vadd.f32 %v1158, %v1216
      %1218 = vmatmul.bf16.gmra.mxu0 %v414
      %v1219 = vpop.f32.mrf.mxu0
      %v1220 = vadd.f32 %v1161, %v1219
      %v1221 = vpop.f32.mrf.mxu0
      %v1222 = vadd.f32 %v1163, %v1221
      %1223 = vmatmul.bf16.gmra.mxu0 %v416
      %v1224 = vpop.f32.mrf.mxu0
      %v1225 = vadd.f32 %v1166, %v1224
      %v1226 = vpop.f32.mrf.mxu0
      %v1227 = vadd.f32 %v1168, %v1226
      %1228 = vdwg.mxu0
      %1229 = vst [vmem:[%s240] sm:$0xff] %v826
      %1230 = vst [vmem:[%s240 + $0x8] sm:$0xff] %v944
      %1231 = vst [vmem:[%s240 + $0x10] sm:$0xff] %v1062
      %1232 = vst [vmem:[%s240 + $0x18] sm:$0xff] %v1180
      %1233 = vst [vmem:[%s240 + $0x20] sm:$0xff] %v828
      %1234 = vst [vmem:[%s240 + $0x28] sm:$0xff] %v946
      %1235 = vst [vmem:[%s240 + $0x30] sm:$0xff] %v1064
      %1236 = vst [vmem:[%s240 + $0x38] sm:$0xff] %v1182
      %1237 = vst [vmem:[%s240 + $0x40] sm:$0xff] %v831
      %1238 = vst [vmem:[%s240 + $0x48] sm:$0xff] %v949
      %1239 = vst [vmem:[%s240 + $0x50] sm:$0xff] %v1067
      %1240 = vst [vmem:[%s240 + $0x58] sm:$0xff] %v1185
      %1241 = vst [vmem:[%s240 + $0x60] sm:$0xff] %v833
      %1242 = vst [vmem:[%s240 + $0x68] sm:$0xff] %v951
      %1243 = vst [vmem:[%s240 + $0x70] sm:$0xff] %v1069
      %1244 = vst [vmem:[%s240 + $0x78] sm:$0xff] %v1187
      %1245 = vst [vmem:[%s240 + $0x80] sm:$0xff] %v836
      %1246 = vst [vmem:[%s240 + $0x88] sm:$0xff] %v954
      %1247 = vst [vmem:[%s240 + $0x90] sm:$0xff] %v1072
      %1248 = vst [vmem:[%s240 + $0x98] sm:$0xff] %v1190
      %1249 = vst [vmem:[%s240 + $0xa0] sm:$0xff] %v838
      %1250 = vst [vmem:[%s240 + $0xa8] sm:$0xff] %v956
      %1251 = vst [vmem:[%s240 + $0xb0] sm:$0xff] %v1074
      %1252 = vst [vmem:[%s240 + $0xb8] sm:$0xff] %v1192
      %1253 = vst [vmem:[%s240 + $0xc0] sm:$0xff] %v841
      %1254 = vst [vmem:[%s240 + $0xc8] sm:$0xff] %v959
      %1255 = vst [vmem:[%s240 + $0xd0] sm:$0xff] %v1077
      %1256 = vst [vmem:[%s240 + $0xd8] sm:$0xff] %v1195
      %1257 = vst [vmem:[%s240 + $0xe0] sm:$0xff] %v843
      %1258 = vst [vmem:[%s240 + $0xe8] sm:$0xff] %v961
      %1259 = vst [vmem:[%s240 + $0xf0] sm:$0xff] %v1079
      %1260 = vst [vmem:[%s240 + $0xf8] sm:$0xff] %v1197
      %1261 = vst [vmem:[%s240 + $0x100] sm:$0xff] %v846
      %1262 = vst [vmem:[%s240 + $0x108] sm:$0xff] %v964
      %1263 = vst [vmem:[%s240 + $0x110] sm:$0xff] %v1082
      %1264 = vst [vmem:[%s240 + $0x118] sm:$0xff] %v1200
      %1265 = vst [vmem:[%s240 + $0x120] sm:$0xff] %v848
      %1266 = vst [vmem:[%s240 + $0x128] sm:$0xff] %v966
      %1267 = vst [vmem:[%s240 + $0x130] sm:$0xff] %v1084
      %1268 = vst [vmem:[%s240 + $0x138] sm:$0xff] %v1202
      %1269 = vst [vmem:[%s240 + $0x140] sm:$0xff] %v851
      %1270 = vst [vmem:[%s240 + $0x148] sm:$0xff] %v969
      %1271 = vst [vmem:[%s240 + $0x150] sm:$0xff] %v1087
      %1272 = vst [vmem:[%s240 + $0x158] sm:$0xff] %v1205
      %1273 = vst [vmem:[%s240 + $0x160] sm:$0xff] %v853
      %1274 = vst [vmem:[%s240 + $0x168] sm:$0xff] %v971
      %1275 = vst [vmem:[%s240 + $0x170] sm:$0xff] %v1089
      %1276 = vst [vmem:[%s240 + $0x178] sm:$0xff] %v1207
      %1277 = vst [vmem:[%s240 + $0x180] sm:$0xff] %v856
      %1278 = vst [vmem:[%s240 + $0x188] sm:$0xff] %v974
      %1279 = vst [vmem:[%s240 + $0x190] sm:$0xff] %v1092
      %1280 = vst [vmem:[%s240 + $0x198] sm:$0xff] %v1210
      %1281 = vst [vmem:[%s240 + $0x1a0] sm:$0xff] %v858
      %1282 = vst [vmem:[%s240 + $0x1a8] sm:$0xff] %v976
      %1283 = vst [vmem:[%s240 + $0x1b0] sm:$0xff] %v1094
      %1284 = vst [vmem:[%s240 + $0x1b8] sm:$0xff] %v1212
      %1285 = vst [vmem:[%s240 + $0x1c0] sm:$0xff] %v861
      %1286 = vst [vmem:[%s240 + $0x1c8] sm:$0xff] %v979
      %1287 = vst [vmem:[%s240 + $0x1d0] sm:$0xff] %v1097
      %1288 = vst [vmem:[%s240 + $0x1d8] sm:$0xff] %v1215
      %1289 = vst [vmem:[%s240 + $0x1e0] sm:$0xff] %v863
      %1290 = vst [vmem:[%s240 + $0x1e8] sm:$0xff] %v981
      %1291 = vst [vmem:[%s240 + $0x1f0] sm:$0xff] %v1099
      %1292 = vst [vmem:[%s240 + $0x1f8] sm:$0xff] %v1217
      %1293 = vst [vmem:[%s240 + $0x200] sm:$0xff] %v866
      %1294 = vst [vmem:[%s240 + $0x208] sm:$0xff] %v984
      %1295 = vst [vmem:[%s240 + $0x210] sm:$0xff] %v1102
      %1296 = vst [vmem:[%s240 + $0x218] sm:$0xff] %v1220
      %1297 = vst [vmem:[%s240 + $0x220] sm:$0xff] %v868
      %1298 = vst [vmem:[%s240 + $0x228] sm:$0xff] %v986
      %1299 = vst [vmem:[%s240 + $0x230] sm:$0xff] %v1104
      %1300 = vst [vmem:[%s240 + $0x238] sm:$0xff] %v1222
      %1301 = vst [vmem:[%s240 + $0x240] sm:$0xff] %v871
      %1302 = vst [vmem:[%s240 + $0x248] sm:$0xff] %v989
      %1303 = vst [vmem:[%s240 + $0x250] sm:$0xff] %v1107
      %1304 = vst [vmem:[%s240 + $0x258] sm:$0xff] %v1225
      %1305 = vst [vmem:[%s240 + $0x260] sm:$0xff] %v873
      %1306 = vst [vmem:[%s240 + $0x268] sm:$0xff] %v991
      %1307 = vst [vmem:[%s240 + $0x270] sm:$0xff] %v1109
      %1308 = vst [vmem:[%s240 + $0x278] sm:$0xff] %v1227
      %s1309 = smul.u32 20, %s18
      %s1310 = smul.u32 4, %s19
      %p1311 = scmp.lt.s32.totalorder %s1309, 79
      %s1312 = scalar_select %p1311, %s1309, 79
      %p1313 = scmp.lt.s32.totalorder %s1310, 3
      %s1314 = scalar_select %p1313, %s1310, 3
      %s1315 = smul.addr %s1312, 4
      %s1316 = sadd.s32 %s1314, %s1315
      %s1317 = smul.addr %s1316, 8
      %s1318 = scalar_lea.vmem %s3, %s1317
      // Predicated region
      $region33: #{forward.5} parent=31 // pred_check
        %p1319 = pneg %p124
      $region34: #{forward.5} parent=31 // pred_check_branch
        %1321 = sbr.rel (%p1319) target = $region36
      $region35: #{forward.5} parent=31 // pred_region
        %s1322 = smul.u32 20, %s18
        %s1323 = smul.u32 4, %s19
      $region36: #{forward.5} parent=31 // pred_fallthru
        _
    $region32: #{forward.5} parent=5 // pred_fallthru
      _
    %p1324 = scmp.le.s32.totalorder 2, %s9
    // Predicated region
    $region37: #{forward.5} parent=5 // pred_check
      %p1325 = pneg %p1324
    $region38: #{forward.5} parent=5 // pred_check_branch
      %1327 = sbr.rel (%p1325) target = $region40
    $region39: #{forward.5} parent=5 // pred_region
      %s1328 = ssub.s32 %s9, 2
      // Predicated region
      $region41: #{forward.5} parent=39 // pred_check
        %p1329 = pneg %p130
      $region42: #{forward.5} parent=39 // pred_check_branch
        %1331 = sbr.rel (%p1329) target = $region44
      $region43: #{forward.5} parent=39 // pred_region
        %s1332 = smul.u32 20, %s20
        %s1333 = smul.u32 4, %s21
        %p1334 = scmp.lt.s32.totalorder %s1332, 79
        %s1335 = scalar_select %p1334, %s1332, 79
        %p1336 = scmp.lt.s32.totalorder %s1333, 3
        %s1337 = scalar_select %p1336, %s1333, 3
        %s1338 = smul.addr %s1335, 4
        %s1339 = sadd.s32 %s1337, %s1338
        %s1340 = smul.addr %s1339, 8
        %s1341 = scalar_lea.vmem %s3, %s1340
      $region44: #{forward.5} parent=39 // pred_fallthru
        _
    $region40: #{forward.5} parent=5 // pred_fallthru
      _
  $region6: #{forward.5} parent=0 // loop_footer
    %s13 = sadd.s32 1, %s9
  $region7: #{forward.5} parent=0 // loop_footer_branch
    %8 = sbr.rel target = $region3
  $region8: #{forward.5} parent=0 // loop_exit
    _

// kernel: forward.3
$region0: #{forward.3}
  #allocation0 [shape = 'u32[]', space=smem, size = 0x4, offset = 0x4, fixed_abs, tag = 'smem constant byte address 0x4 - core index']
  #allocation1 [shape = 'u32[72,128]{1,0:T(1,128)}', space=vmem, size = 0x9000, scoped, tag = 'internal scratch']
  #allocation2 [shape = 'f32[384,384]{1,0:T(8,128)}', space=vmem, size = 0x90000, scoped, tag = 'scratch operand']
  #allocation3 [shape = 'f32[384,384]{1,0:T(8,128)}', space=vmem, size = 0x90000, scoped, tag = 'scratch operand']
  #allocation4 [shape = 'f32[384,128]{1,0:T(8,128)}', space=vmem, size = 0x30000, scoped, tag = 'scratch operand']
  #allocation5 [shape = 'f32[384,128]{1,0:T(8,128)}', space=vmem, size = 0x30000, scoped, tag = 'scratch operand']
  #allocation6 [shape = 'f32[8,128]{1,0:T(8,128)}', space=vmem, size = 0x1000, scoped, tag = 'scratch operand']
  #allocation7 [shape = 'f32[8,128]{1,0:T(8,128)}', space=vmem, size = 0x1000, scoped, tag = 'scratch operand']
  %s0 = inlined_call_operand.vmem [shape: bf16[768,32], index: 0, kind: input, shape index: {}, may-alias: {0,1}]
  %s1 = inlined_call_operand.vmem [shape: bf16[768,32], index: 1, kind: input, shape index: {}, may-alias: {0,1}]
  %s2 = inlined_call_operand.vmem [shape: s32[8,1], index: 2, kind: input, shape index: {}]
  %s3 = inlined_call_operand.vmem [shape: bf16[32,384], index: 3, kind: input, shape index: {}]
  %s4 = inlined_call_operand.vmem [shape: bf16[32,384], index: 4, kind: input, shape index: {}]
  %s5 = inlined_call_operand.vmem [shape: bf16[128,384], index: 5, kind: input, shape index: {}]
  %s6 = inlined_call_operand.vmem [shape: bf16[128,384], index: 6, kind: input, shape index: {}]
  %s7 = inlined_call_operand.vmem [shape: f32[2,768], index: 7, kind: input, shape index: {}]
  %s8 = inlined_call_operand.vmem [shape: bf16[768,128], index: 8, kind: output, shape index: {0}]
  %s9 = inlined_call_operand.vmem [shape: bf16[768,128], index: 9, kind: output, shape index: {1}]
  %10 = xla_tuple %s8, %s9
  %s11 = sld [smem:[#allocation0]]
  $region84: #{forward.3} parent=0
    _
  %s13 = ssub.s32 1, %s11
  %s14 = scalar_select 0, %s13, %s11
  loop: start=0, step=1, limit=4
  $region2: #{forward.3} parent=0 // loop_pre_header
    _
  $region3: #{forward.3} parent=0 // loop_header
    %s16 = sphi 0, %s20
    %p17 = scmp.ge.s32.totalorder %s16, 4
    %s26 = sphi 0, %s28
    %s29 = sphi 0, %s26
    %s30 = sphi 0, %s29
    %s46 = sphi 0, %s30
    %s54 = sphi 0, %s56
    %s57 = sphi 0, %s54
    %s58 = sphi 0, %s57
    %s74 = sphi 0, %s58
    %s78 = sphi 0, %s78
    %s80 = sphi 0, %s78
    %s81 = sphi 0, %s80
    %s95 = sphi 0, %s81
    %s99 = sphi 0, %s99
    %s101 = sphi 0, %s99
    %s102 = sphi 0, %s101
    %s116 = sphi 0, %s102
    %s120 = sphi 0, %s120
    %s122 = sphi 0, %s120
    %s123 = sphi 0, %s122
    %s137 = sphi 0, %s123
    %s141 = sphi 0, %s141
    %s143 = sphi 0, %s141
    %s144 = sphi 0, %s143
    %s158 = sphi 0, %s144
    %s162 = sphi 0, %s162
    %s164 = sphi 0, %s162
    %s165 = sphi 0, %s164
    %s179 = sphi 0, %s165
    %s183 = sphi 0, %s183
    %s185 = sphi 0, %s183
    %s186 = sphi 0, %s185
    %s200 = sphi 0, %s186
    %s206 = sphi 0, %s208
    %s209 = sphi 0, %s206
    %s210 = sphi 0, %s209
    %s226 = sphi 0, %s210
    %s234 = sphi 0, %s236
    %s237 = sphi 0, %s234
    %s238 = sphi 0, %s237
    %s254 = sphi 0, %s238
  $region4: #{forward.3} parent=0 // loop_header_branch
    %19 = sbr.rel (%p17) target = $region8
  $region5: #{forward.3} parent=0 // loop_body
    %s21 = ssub.s32 %s16, 1
    %s22 = ssub.s32 %s16, 2
    %s23 = sadd.s32 %s16, 1
    %s24 = ssub.s32 %s16, %s23
    %p25 = scmp.eq.s32.totalorder %s24, 0
    %s27 = sadd.s32 %s26, 1
    %s28 = scalar_select %p25, %s26, %s27
    %p31 = pneg %p25
    %p32 = scmp.eq.s32.totalorder %s16, 1
    %p33 = por %p31, %p32
    %p34 = scmp.ne.s32.totalorder %s26, %s29
    %p35 = scmp.eq.s32.totalorder %s16, 0
    %p36 = por %p34, %p35
    %p37 = scmp.ne.s32.totalorder %s26, %s29
    %p38 = scmp.eq.s32.totalorder %s21, 1
    %p39 = por %p37, %p38
    %p40 = scmp.ne.s32.totalorder %s29, %s30
    %p41 = scmp.eq.s32.totalorder %s21, 0
    %p42 = por %p40, %p41
    %p43 = scmp.ne.s32.totalorder %s29, %s30
    %p44 = scmp.eq.s32.totalorder %s22, 1
    %p45 = por %p43, %p44
    %p47 = scmp.ne.s32.totalorder %s30, %s46
    %p48 = scmp.eq.s32.totalorder %s22, 0
    %p49 = por %p47, %p48
    %s50 = ssub.s32 1, %s16
    %s51 = ssub.s32 1, %s23
    %s52 = ssub.s32 %s50, %s51
    %p53 = scmp.eq.s32.totalorder %s52, 0
    %s55 = sadd.s32 %s54, 1
    %s56 = scalar_select %p53, %s54, %s55
    %p59 = pneg %p53
    %p60 = scmp.eq.s32.totalorder %s16, 1
    %p61 = por %p59, %p60
    %p62 = scmp.ne.s32.totalorder %s54, %s57
    %p63 = scmp.eq.s32.totalorder %s16, 0
    %p64 = por %p62, %p63
    %p65 = scmp.ne.s32.totalorder %s54, %s57
    %p66 = scmp.eq.s32.totalorder %s21, 1
    %p67 = por %p65, %p66
    %p68 = scmp.ne.s32.totalorder %s57, %s58
    %p69 = scmp.eq.s32.totalorder %s21, 0
    %p70 = por %p68, %p69
    %p71 = scmp.ne.s32.totalorder %s57, %s58
    %p72 = scmp.eq.s32.totalorder %s22, 1
    %p73 = por %p71, %p72
    %p75 = scmp.ne.s32.totalorder %s58, %s74
    %p76 = scmp.eq.s32.totalorder %s22, 0
    %p77 = por %p75, %p76
    %s79 = sadd.s32 %s78, 1
    %p82 = scmp.eq.s32.totalorder %s16, 1
    %p83 = scmp.ne.s32.totalorder %s78, %s80
    %p84 = scmp.eq.s32.totalorder %s16, 0
    %p85 = por %p83, %p84
    %p86 = scmp.ne.s32.totalorder %s78, %s80
    %p87 = scmp.eq.s32.totalorder %s21, 1
    %p88 = por %p86, %p87
    %p89 = scmp.ne.s32.totalorder %s80, %s81
    %p90 = scmp.eq.s32.totalorder %s21, 0
    %p91 = por %p89, %p90
    %p92 = scmp.ne.s32.totalorder %s80, %s81
    %p93 = scmp.eq.s32.totalorder %s22, 1
    %p94 = por %p92, %p93
    %p96 = scmp.ne.s32.totalorder %s81, %s95
    %p97 = scmp.eq.s32.totalorder %s22, 0
    %p98 = por %p96, %p97
    %s100 = sadd.s32 %s99, 1
    %p103 = scmp.eq.s32.totalorder %s16, 1
    %p104 = scmp.ne.s32.totalorder %s99, %s101
    %p105 = scmp.eq.s32.totalorder %s16, 0
    %p106 = por %p104, %p105
    %p107 = scmp.ne.s32.totalorder %s99, %s101
    %p108 = scmp.eq.s32.totalorder %s21, 1
    %p109 = por %p107, %p108
    %p110 = scmp.ne.s32.totalorder %s101, %s102
    %p111 = scmp.eq.s32.totalorder %s21, 0
    %p112 = por %p110, %p111
    %p113 = scmp.ne.s32.totalorder %s101, %s102
    %p114 = scmp.eq.s32.totalorder %s22, 1
    %p115 = por %p113, %p114
    %p117 = scmp.ne.s32.totalorder %s102, %s116
    %p118 = scmp.eq.s32.totalorder %s22, 0
    %p119 = por %p117, %p118
    %s121 = sadd.s32 %s120, 1
    %p124 = scmp.eq.s32.totalorder %s16, 1
    %p125 = scmp.ne.s32.totalorder %s120, %s122
    %p126 = scmp.eq.s32.totalorder %s16, 0
    %p127 = por %p125, %p126
    %p128 = scmp.ne.s32.totalorder %s120, %s122
    %p129 = scmp.eq.s32.totalorder %s21, 1
    %p130 = por %p128, %p129
    %p131 = scmp.ne.s32.totalorder %s122, %s123
    %p132 = scmp.eq.s32.totalorder %s21, 0
    %p133 = por %p131, %p132
    %p134 = scmp.ne.s32.totalorder %s122, %s123
    %p135 = scmp.eq.s32.totalorder %s22, 1
    %p136 = por %p134, %p135
    %p138 = scmp.ne.s32.totalorder %s123, %s137
    %p139 = scmp.eq.s32.totalorder %s22, 0
    %p140 = por %p138, %p139
    %s142 = sadd.s32 %s141, 1
    %p145 = scmp.eq.s32.totalorder %s16, 1
    %p146 = scmp.ne.s32.totalorder %s141, %s143
    %p147 = scmp.eq.s32.totalorder %s16, 0
    %p148 = por %p146, %p147
    %p149 = scmp.ne.s32.totalorder %s141, %s143
    %p150 = scmp.eq.s32.totalorder %s21, 1
    %p151 = por %p149, %p150
    %p152 = scmp.ne.s32.totalorder %s143, %s144
    %p153 = scmp.eq.s32.totalorder %s21, 0
    %p154 = por %p152, %p153
    %p155 = scmp.ne.s32.totalorder %s143, %s144
    %p156 = scmp.eq.s32.totalorder %s22, 1
    %p157 = por %p155, %p156
    %p159 = scmp.ne.s32.totalorder %s144, %s158
    %p160 = scmp.eq.s32.totalorder %s22, 0
    %p161 = por %p159, %p160
    %s163 = sadd.s32 %s162, 1
    %p166 = scmp.eq.s32.totalorder %s16, 1
    %p167 = scmp.ne.s32.totalorder %s162, %s164
    %p168 = scmp.eq.s32.totalorder %s16, 0
    %p169 = por %p167, %p168
    %p170 = scmp.ne.s32.totalorder %s162, %s164
    %p171 = scmp.eq.s32.totalorder %s21, 1
    %p172 = por %p170, %p171
    %p173 = scmp.ne.s32.totalorder %s164, %s165
    %p174 = scmp.eq.s32.totalorder %s21, 0
    %p175 = por %p173, %p174
    %p176 = scmp.ne.s32.totalorder %s164, %s165
    %p177 = scmp.eq.s32.totalorder %s22, 1
    %p178 = por %p176, %p177
    %p180 = scmp.ne.s32.totalorder %s165, %s179
    %p181 = scmp.eq.s32.totalorder %s22, 0
    %p182 = por %p180, %p181
    %s184 = sadd.s32 %s183, 1
    %p187 = scmp.eq.s32.totalorder %s16, 1
    %p188 = scmp.ne.s32.totalorder %s183, %s185
    %p189 = scmp.eq.s32.totalorder %s16, 0
    %p190 = por %p188, %p189
    %p191 = scmp.ne.s32.totalorder %s183, %s185
    %p192 = scmp.eq.s32.totalorder %s21, 1
    %p193 = por %p191, %p192
    %p194 = scmp.ne.s32.totalorder %s185, %s186
    %p195 = scmp.eq.s32.totalorder %s21, 0
    %p196 = por %p194, %p195
    %p197 = scmp.ne.s32.totalorder %s185, %s186
    %p198 = scmp.eq.s32.totalorder %s22, 1
    %p199 = por %p197, %p198
    %p201 = scmp.ne.s32.totalorder %s186, %s200
    %p202 = scmp.eq.s32.totalorder %s22, 0
    %p203 = por %p201, %p202
    %s204 = ssub.s32 %s16, %s23
    %p205 = scmp.eq.s32.totalorder %s204, 0
    %s207 = sadd.s32 %s206, 1
    %s208 = scalar_select %p205, %s206, %s207
    %p211 = pneg %p205
    %p212 = scmp.eq.s32.totalorder %s16, 1
    %p213 = por %p211, %p212
    %p214 = scmp.ne.s32.totalorder %s206, %s209
    %p215 = scmp.eq.s32.totalorder %s16, 0
    %p216 = por %p214, %p215
    %p217 = scmp.ne.s32.totalorder %s206, %s209
    %p218 = scmp.eq.s32.totalorder %s21, 1
    %p219 = por %p217, %p218
    %p220 = scmp.ne.s32.totalorder %s209, %s210
    %p221 = scmp.eq.s32.totalorder %s21, 0
    %p222 = por %p220, %p221
    %p223 = scmp.ne.s32.totalorder %s209, %s210
    %p224 = scmp.eq.s32.totalorder %s22, 1
    %p225 = por %p223, %p224
    %p227 = scmp.ne.s32.totalorder %s210, %s226
    %p228 = scmp.eq.s32.totalorder %s22, 0
    %p229 = por %p227, %p228
    %s230 = ssub.s32 1, %s16
    %s231 = ssub.s32 1, %s23
    %s232 = ssub.s32 %s230, %s231
    %p233 = scmp.eq.s32.totalorder %s232, 0
    %s235 = sadd.s32 %s234, 1
    %s236 = scalar_select %p233, %s234, %s235
    %p239 = pneg %p233
    %p240 = scmp.eq.s32.totalorder %s16, 1
    %p241 = por %p239, %p240
    %p242 = scmp.ne.s32.totalorder %s234, %s237
    %p243 = scmp.eq.s32.totalorder %s16, 0
    %p244 = por %p242, %p243
    %p245 = scmp.ne.s32.totalorder %s234, %s237
    %p246 = scmp.eq.s32.totalorder %s21, 1
    %p247 = por %p245, %p246
    %p248 = scmp.ne.s32.totalorder %s237, %s238
    %p249 = scmp.eq.s32.totalorder %s21, 0
    %p250 = por %p248, %p249
    %p251 = scmp.ne.s32.totalorder %s237, %s238
    %p252 = scmp.eq.s32.totalorder %s22, 1
    %p253 = por %p251, %p252
    %p255 = scmp.ne.s32.totalorder %s238, %s254
    %p256 = scmp.eq.s32.totalorder %s22, 0
    %p257 = por %p255, %p256
    %p258 = scmp.le.s32.totalorder 1, %s16
    %p259 = scmp.lt.s32.totalorder %s16, 3
    %p260 = pnand %p258, %p259
    %p261 = pneg %p260
    // Predicated region
    $region9: #{forward.3} parent=5 // pred_check
      _
    $region10: #{forward.3} parent=5 // pred_check_branch
      %263 = sbr.rel (%p260) target = $region12
    $region11: #{forward.3} parent=5 // pred_region
      %s264 = ssub.s32 %s16, 1
      // Predicated region
      $region13: #{forward.3} parent=11 // pred_check
        %p265 = pneg %p91
      $region14: #{forward.3} parent=11 // pred_check_branch
        %267 = sbr.rel (%p265) target = $region16
      $region15: #{forward.3} parent=11 // pred_region
        _
      $region16: #{forward.3} parent=11 // pred_fallthru
        _
      // Predicated region
      $region17: #{forward.3} parent=11 // pred_check
        %p268 = pneg %p112
      $region18: #{forward.3} parent=11 // pred_check_branch
        %270 = sbr.rel (%p268) target = $region20
      $region19: #{forward.3} parent=11 // pred_region
        _
      $region20: #{forward.3} parent=11 // pred_fallthru
        _
      // Predicated region
      $region21: #{forward.3} parent=11 // pred_check
        %p271 = pneg %p133
      $region22: #{forward.3} parent=11 // pred_check_branch
        %273 = sbr.rel (%p271) target = $region24
      $region23: #{forward.3} parent=11 // pred_region
        _
      $region24: #{forward.3} parent=11 // pred_fallthru
        _
      // Predicated region
      $region25: #{forward.3} parent=11 // pred_check
        %p274 = pneg %p154
      $region26: #{forward.3} parent=11 // pred_check_branch
        %276 = sbr.rel (%p274) target = $region28
      $region27: #{forward.3} parent=11 // pred_region
        _
      $region28: #{forward.3} parent=11 // pred_fallthru
        _
      // Predicated region
      $region29: #{forward.3} parent=11 // pred_check
        %p277 = pneg %p175
      $region30: #{forward.3} parent=11 // pred_check_branch
        %279 = sbr.rel (%p277) target = $region32
      $region31: #{forward.3} parent=11 // pred_region
        _
      $region32: #{forward.3} parent=11 // pred_fallthru
        _
      // Predicated region
      $region33: #{forward.3} parent=11 // pred_check
        %p280 = pneg %p196
      $region34: #{forward.3} parent=11 // pred_check_branch
        %282 = sbr.rel (%p280) target = $region36
      $region35: #{forward.3} parent=11 // pred_region
        _
      $region36: #{forward.3} parent=11 // pred_fallthru
        _
    $region12: #{forward.3} parent=5 // pred_fallthru
      _
    %p283 = scmp.lt.s32.totalorder %s16, 2
    // Predicated region
    $region37: #{forward.3} parent=5 // pred_check
      %p284 = pneg %p283
    $region38: #{forward.3} parent=5 // pred_check_branch
      %286 = sbr.rel (%p284) target = $region40
    $region39: #{forward.3} parent=5 // pred_region
      // Predicated region
      $region41: #{forward.3} parent=39 // pred_check
        %p287 = pneg %p36
      $region42: #{forward.3} parent=39 // pred_check_branch
        %289 = sbr.rel (%p287) target = $region44
      $region43: #{forward.3} parent=39 // pred_region
        %s290 = smul.u32 48, %s16
        %p291 = scmp.lt.s32.totalorder %s290, 95
        %s292 = scalar_select %p291, %s290, 95
        %s293 = smul.addr %s292, 4
        %s294 = scalar_lea.vmem %s0, %s293
        %s295 = smul.u32 48, %s16
      $region44: #{forward.3} parent=39 // pred_fallthru
        _
      // Predicated region
      $region45: #{forward.3} parent=39 // pred_check
        %p296 = pneg %p64
      $region46: #{forward.3} parent=39 // pred_check_branch
        %298 = sbr.rel (%p296) target = $region48
      $region47: #{forward.3} parent=39 // pred_region
        %s299 = ssub.s32 1, %s16
        %s300 = smul.u32 48, %s299
        %p301 = scmp.lt.s32.totalorder %s300, 95
        %s302 = scalar_select %p301, %s300, 95
        %s303 = smul.addr %s302, 4
        %s304 = scalar_lea.vmem %s1, %s303
        %s305 = ssub.s32 1, %s16
        %s306 = smul.u32 48, %s305
      $region48: #{forward.3} parent=39 // pred_fallthru
        _
    $region40: #{forward.3} parent=5 // pred_fallthru
      _
    %p307 = scmp.le.s32.totalorder 1, %s16
    %p308 = scmp.lt.s32.totalorder %s16, 3
    %p309 = pnand %p307, %p308
    %p310 = pneg %p309
    // Predicated region
    $region49: #{forward.3} parent=5 // pred_check
      _
    $region50: #{forward.3} parent=5 // pred_check_branch
      %312 = sbr.rel (%p309) target = $region52
    $region51: #{forward.3} parent=5 // pred_region
      %s313 = ssub.s32 %s16, 1
      %s314 = smul.u32 48, %s21
      %p315 = scmp.lt.s32.totalorder %s314, 95
      %s316 = scalar_select %p315, %s314, 95
      %s317 = smul.addr %s316, 4
      %s318 = scalar_lea.vmem %s0, %s317
      %p319 = pneg %p42
      %p320 = pneg %p39
      %s321 = ssub.s32 1, %s21
      %s322 = smul.u32 48, %s321
      %p323 = scmp.lt.s32.totalorder %s322, 95
      %s324 = scalar_select %p323, %s322, 95
      %s325 = smul.addr %s324, 4
      %s326 = scalar_lea.vmem %s1, %s325
      %p327 = pneg %p70
      %p328 = pneg %p67
      %p329 = pneg %p91
      %p330 = pneg %p88
      %p331 = pneg %p112
      %p332 = pneg %p109
      %p333 = pneg %p133
      %p334 = pneg %p130
      %p335 = pneg %p154
      %p336 = pneg %p151
      %p337 = pneg %p175
      %p338 = pneg %p172
      %p339 = pneg %p196
      %p340 = pneg %p193
      %p341 = pneg %p222
      %p342 = pneg %p219
      %s343 = smul.u32 48, %s21
      %p344 = scmp.lt.s32.totalorder %s343, 95
      %s345 = scalar_select %p344, %s343, 95
      %s346 = smul.addr %s345, 4
      %s347 = scalar_lea.vmem %s8, %s346
      %p348 = pneg %p250
      %p349 = pneg %p247
      %s350 = ssub.s32 1, %s21
      %s351 = smul.u32 48, %s350
      %p352 = scmp.lt.s32.totalorder %s351, 95
      %s353 = scalar_select %p352, %s351, 95
      %s354 = smul.addr %s353, 4
      %s355 = scalar_lea.vmem %s9, %s354
      %s356 = smul.u32 48, %s21
      %p357 = scmp.lt.s32.totalorder %s356, 95
      %s358 = scalar_select %p357, %s356, 95
      %s359 = smul.addr %s358, 4
      %s360 = scalar_lea.vmem %s0, %s359
      %s361 = smul.u32 48, %s21
      %s362 = ssub.s32 1, %s21
      %s363 = smul.u32 48, %s362
      %p364 = scmp.lt.s32.totalorder %s363, 95
      %s365 = scalar_select %p364, %s363, 95
      %s366 = smul.addr %s365, 4
      %s367 = scalar_lea.vmem %s1, %s366
      %s368 = ssub.s32 1, %s21
      %s369 = smul.u32 48, %s368
      %s370 = smul.u32 48, %s21
      %p371 = scmp.lt.s32.totalorder %s370, 95
      %s372 = scalar_select %p371, %s370, 95
      %s373 = smul.addr %s372, 4
      %s374 = scalar_lea.vmem %s8, %s373
      %s375 = smul.u32 48, %s21
      %s376 = ssub.s32 1, %s21
      %s377 = smul.u32 48, %s376
      %p378 = scmp.lt.s32.totalorder %s377, 95
      %s379 = scalar_select %p378, %s377, 95
      %s380 = smul.addr %s379, 4
      %s381 = scalar_lea.vmem %s9, %s380
      %s382 = ssub.s32 1, %s21
      %s383 = smul.u32 48, %s382
      %p385 = scmp.eq.s32.totalorder %s21, 0
      // Predicated region
      $region53: #{forward.3} parent=51 // pred_check
        %p386 = pneg %p385
      $region54: #{forward.3} parent=51 // pred_check_branch
        %388 = sbr.rel (%p386) target = $region56
      $region55: #{forward.3} parent=51 // pred_region
        %389 = vst [vmem:[#allocation6] sm:$0xff] 0.0
        %390 = vst [vmem:[#allocation7] sm:$0xff] 0.0
      $region56: #{forward.3} parent=51 // pred_fallthru
        _
      %v391 = vld [vmem:[%s360] sm:$0xf]
      %v392 = vld [vmem:[%s360 + $0x4] sm:$0xf]
      %v393 = vld [vmem:[%s360 + $0x8] sm:$0xf]
      %v394 = vld [vmem:[%s360 + $0xc] sm:$0xf]
      %v395 = vld [vmem:[%s360 + $0x10] sm:$0xf]
      %v396 = vld [vmem:[%s360 + $0x14] sm:$0xf]
      %v397 = vld [vmem:[%s360 + $0x18] sm:$0xf]
      %v398 = vld [vmem:[%s360 + $0x1c] sm:$0xf]
      %v399 = vld [vmem:[%s360 + $0x20] sm:$0xf]
      %v400 = vld [vmem:[%s360 + $0x24] sm:$0xf]
      %v401 = vld [vmem:[%s360 + $0x28] sm:$0xf]
      %v402 = vld [vmem:[%s360 + $0x2c] sm:$0xf]
      %v403 = vld [vmem:[%s360 + $0x30] sm:$0xf]
      %v404 = vld [vmem:[%s360 + $0x34] sm:$0xf]
      %v405 = vld [vmem:[%s360 + $0x38] sm:$0xf]
      %v406 = vld [vmem:[%s360 + $0x3c] sm:$0xf]
      %v407 = vld [vmem:[%s360 + $0x40] sm:$0xf]
      %v408 = vld [vmem:[%s360 + $0x44] sm:$0xf]
      %v409 = vld [vmem:[%s360 + $0x48] sm:$0xf]
      %v410 = vld [vmem:[%s360 + $0x4c] sm:$0xf]
      %v411 = vld [vmem:[%s360 + $0x50] sm:$0xf]
      %v412 = vld [vmem:[%s360 + $0x54] sm:$0xf]
      %v413 = vld [vmem:[%s360 + $0x58] sm:$0xf]
      %v414 = vld [vmem:[%s360 + $0x5c] sm:$0xf]
      %v415 = vld [vmem:[%s360 + $0x60] sm:$0xf]
      %v416 = vld [vmem:[%s360 + $0x64] sm:$0xf]
      %v417 = vld [vmem:[%s360 + $0x68] sm:$0xf]
      %v418 = vld [vmem:[%s360 + $0x6c] sm:$0xf]
      %v419 = vld [vmem:[%s360 + $0x70] sm:$0xf]
      %v420 = vld [vmem:[%s360 + $0x74] sm:$0xf]
      %v421 = vld [vmem:[%s360 + $0x78] sm:$0xf]
      %v422 = vld [vmem:[%s360 + $0x7c] sm:$0xf]
      %v423 = vld [vmem:[%s360 + $0x80] sm:$0xf]
      %v424 = vld [vmem:[%s360 + $0x84] sm:$0xf]
      %v425 = vld [vmem:[%s360 + $0x88] sm:$0xf]
      %v426 = vld [vmem:[%s360 + $0x8c] sm:$0xf]
      %v427 = vld [vmem:[%s360 + $0x90] sm:$0xf]
      %v428 = vld [vmem:[%s360 + $0x94] sm:$0xf]
      %v429 = vld [vmem:[%s360 + $0x98] sm:$0xf]
      %v430 = vld [vmem:[%s360 + $0x9c] sm:$0xf]
      %v431 = vld [vmem:[%s360 + $0xa0] sm:$0xf]
      %v432 = vld [vmem:[%s360 + $0xa4] sm:$0xf]
      %v433 = vld [vmem:[%s360 + $0xa8] sm:$0xf]
      %v434 = vld [vmem:[%s360 + $0xac] sm:$0xf]
      %v435 = vld [vmem:[%s360 + $0xb0] sm:$0xf]
      %v436 = vld [vmem:[%s360 + $0xb4] sm:$0xf]
      %v437 = vld [vmem:[%s360 + $0xb8] sm:$0xf]
      %v438 = vld [vmem:[%s360 + $0xbc] sm:$0xf]
      %v439 = vld [vmem:[%s3] sm:$0xff]
      %v440 = vld [vmem:[%s3 + $0x8] sm:$0xf]
      %v441 = vld [vmem:[%s3 + $0xc] sm:$0xff]
      %v442 = vld [vmem:[%s3 + $0x14] sm:$0xf]
      %v443 = vld [vmem:[%s3 + $0x18] sm:$0xff]
      %v444 = vld [vmem:[%s3 + $0x20] sm:$0xf]
      %v445 = vld [vmem:[%s3 + $0x24] sm:$0xff]
      %v446 = vld [vmem:[%s3 + $0x2c] sm:$0xf]
      %v447 = vld [vmem:[%s7] ss:$2 sm:$0x7]
      %v449 = vperm.slane %v447, 0
      %v450 = vperm.slane %v447, 1
      %v451 = vperm.slane %v447, 2
      %v503 = vunpack.c.l.b16 %v391
      %v504 = vunpack.c.l.b16 %v392
      %v505 = vunpack.c.l.b16 %v393
      %v506 = vunpack.c.l.b16 %v394
      %v507 = vunpack.c.l.b16 %v395
      %v508 = vunpack.c.l.b16 %v396
      %v509 = vunpack.c.l.b16 %v397
      %v510 = vunpack.c.l.b16 %v398
      %v511 = vunpack.c.l.b16 %v399
      %v512 = vunpack.c.l.b16 %v400
      %v513 = vunpack.c.l.b16 %v401
      %v514 = vunpack.c.l.b16 %v402
      %v515 = vunpack.c.l.b16 %v403
      %v516 = vunpack.c.l.b16 %v404
      %v517 = vunpack.c.l.b16 %v405
      %v518 = vunpack.c.l.b16 %v406
      %v519 = vunpack.c.l.b16 %v407
      %v520 = vunpack.c.l.b16 %v408
      %v521 = vunpack.c.l.b16 %v409
      %v522 = vunpack.c.l.b16 %v410
      %v523 = vunpack.c.l.b16 %v411
      %v524 = vunpack.c.l.b16 %v412
      %v525 = vunpack.c.l.b16 %v413
      %v526 = vunpack.c.l.b16 %v414
      %v527 = vunpack.c.l.b16 %v415
      %v528 = vunpack.c.l.b16 %v416
      %v529 = vunpack.c.l.b16 %v417
      %v530 = vunpack.c.l.b16 %v418
      %v531 = vunpack.c.l.b16 %v419
      %v532 = vunpack.c.l.b16 %v420
      %v533 = vunpack.c.l.b16 %v421
      %v534 = vunpack.c.l.b16 %v422
      %v535 = vunpack.c.l.b16 %v423
      %v536 = vunpack.c.l.b16 %v424
      %v537 = vunpack.c.l.b16 %v425
      %v538 = vunpack.c.l.b16 %v426
      %v539 = vunpack.c.l.b16 %v427
      %v540 = vunpack.c.l.b16 %v428
      %v541 = vunpack.c.l.b16 %v429
      %v542 = vunpack.c.l.b16 %v430
      %v543 = vunpack.c.l.b16 %v431
      %v544 = vunpack.c.l.b16 %v432
      %v545 = vunpack.c.l.b16 %v433
      %v546 = vunpack.c.l.b16 %v434
      %v547 = vunpack.c.l.b16 %v435
      %v548 = vunpack.c.l.b16 %v436
      %v549 = vunpack.c.l.b16 %v437
      %v550 = vunpack.c.l.b16 %v438
      %v551 = vpack.c.b16 %v504, %v503
      %v552 = vpack.c.b16 %v506, %v505
      %v553 = vpack.c.b16 %v508, %v507
      %v554 = vpack.c.b16 %v510, %v509
      %v555 = vpack.c.b16 %v512, %v511
      %v556 = vpack.c.b16 %v514, %v513
      %v557 = vpack.c.b16 %v516, %v515
      %v558 = vpack.c.b16 %v518, %v517
      %v559 = vpack.c.b16 %v520, %v519
      %v560 = vpack.c.b16 %v522, %v521
      %v561 = vpack.c.b16 %v524, %v523
      %v562 = vpack.c.b16 %v526, %v525
      %v563 = vpack.c.b16 %v528, %v527
      %v564 = vpack.c.b16 %v530, %v529
      %v565 = vpack.c.b16 %v532, %v531
      %v566 = vpack.c.b16 %v534, %v533
      %v567 = vpack.c.b16 %v536, %v535
      %v568 = vpack.c.b16 %v538, %v537
      %v569 = vpack.c.b16 %v540, %v539
      %v570 = vpack.c.b16 %v542, %v541
      %v571 = vpack.c.b16 %v544, %v543
      %v572 = vpack.c.b16 %v546, %v545
      %v573 = vpack.c.b16 %v548, %v547
      %v574 = vpack.c.b16 %v550, %v549
      %v583 = vunpack.c.l.b16 %v439
      %v584 = vunpack.c.h.b16 %v439
      %v585 = vunpack.c.l.b16 %v440
      %v586 = vunpack.c.l.b16 %v441
      %v587 = vunpack.c.h.b16 %v441
      %v588 = vunpack.c.l.b16 %v442
      %v589 = vunpack.c.l.b16 %v443
      %v590 = vunpack.c.h.b16 %v443
      %v591 = vunpack.c.l.b16 %v444
      %v592 = vunpack.c.l.b16 %v445
      %v593 = vunpack.c.h.b16 %v445
      %v594 = vunpack.c.l.b16 %v446
      %v595 = vpack.c.b16 %v586, %v583
      %v596 = vpack.c.b16 %v587, %v584
      %v597 = vpack.c.b16 %v588, %v585
      %v598 = vpack.c.b16 %v592, %v589
      %v599 = vpack.c.b16 %v593, %v590
      %v600 = vpack.c.b16 %v594, %v591
      %vm607 = vcmask 261120
      %v609 = vsel %vm607, %v551, 0
      %v612 = vsel %vm607, %v552, 0
      %v615 = vsel %vm607, %v553, 0
      %v618 = vsel %vm607, %v554, 0
      %v621 = vsel %vm607, %v555, 0
      %v624 = vsel %vm607, %v556, 0
      %v627 = vsel %vm607, %v557, 0
      %v630 = vsel %vm607, %v558, 0
      %v633 = vsel %vm607, %v559, 0
      %v636 = vsel %vm607, %v560, 0
      %v639 = vsel %vm607, %v561, 0
      %v642 = vsel %vm607, %v562, 0
      %v645 = vsel %vm607, %v563, 0
      %v648 = vsel %vm607, %v564, 0
      %v651 = vsel %vm607, %v565, 0
      %v654 = vsel %vm607, %v566, 0
      %v657 = vsel %vm607, %v567, 0
      %v660 = vsel %vm607, %v568, 0
      %v663 = vsel %vm607, %v569, 0
      %v666 = vsel %vm607, %v570, 0
      %v669 = vsel %vm607, %v571, 0
      %v672 = vsel %vm607, %v572, 0
      %v675 = vsel %vm607, %v573, 0
      %v678 = vsel %vm607, %v574, 0
      %680 = vmatpush.bf16.msra.mxu0 0
      %681 = vmatpush.bf16.msra.mxu0 0
      %682 = vmatpush.bf16.msra.mxu0 0
      %683 = vmatpush.bf16.msra.mxu0 0
      %684 = vmatpush.bf16.msra.mxu0 0
      %685 = vmatpush.bf16.msra.mxu0 0
      %686 = vmatpush.bf16.msra.mxu0 %v598
      %687 = vmatpush.bf16.msra.mxu0 %v595
      %688 = vmatmul.bf16.gmra.mxu0 %v609
      %v689 = vpop.f32.mrf.mxu0
      %v690 = vadd.f32 %v449, %v689
      %v691 = vpop.f32.mrf.mxu0
      %v692 = vadd.f32 %v449, %v691
      %693 = vmatmul.bf16.gmra.mxu0 %v612
      %v694 = vpop.f32.mrf.mxu0
      %v695 = vadd.f32 %v449, %v694
      %v696 = vpop.f32.mrf.mxu0
      %v697 = vadd.f32 %v449, %v696
      %698 = vmatmul.bf16.gmra.mxu0 %v615
      %v699 = vpop.f32.mrf.mxu0
      %v700 = vadd.f32 %v449, %v699
      %v701 = vpop.f32.mrf.mxu0
      %v702 = vadd.f32 %v449, %v701
      %703 = vmatmul.bf16.gmra.mxu0 %v618
      %v704 = vpop.f32.mrf.mxu0
      %v705 = vadd.f32 %v449, %v704
      %v706 = vpop.f32.mrf.mxu0
      %v707 = vadd.f32 %v449, %v706
      %708 = vmatmul.bf16.gmra.mxu0 %v621
      %v709 = vpop.f32.mrf.mxu0
      %v710 = vadd.f32 %v449, %v709
      %v711 = vpop.f32.mrf.mxu0
      %v712 = vadd.f32 %v449, %v711
      %713 = vmatmul.bf16.gmra.mxu0 %v624
      %v714 = vpop.f32.mrf.mxu0
      %v715 = vadd.f32 %v449, %v714
      %v716 = vpop.f32.mrf.mxu0
      %v717 = vadd.f32 %v449, %v716
      %718 = vmatmul.bf16.gmra.mxu0 %v627
      %v719 = vpop.f32.mrf.mxu0
      %v720 = vadd.f32 %v449, %v719
      %v721 = vpop.f32.mrf.mxu0
      %v722 = vadd.f32 %v449, %v721
      %723 = vmatmul.bf16.gmra.mxu0 %v630
      %v724 = vpop.f32.mrf.mxu0
      %v725 = vadd.f32 %v449, %v724
      %v726 = vpop.f32.mrf.mxu0
      %v727 = vadd.f32 %v449, %v726
      %728 = vmatmul.bf16.gmra.mxu0 %v633
      %v729 = vpop.f32.mrf.mxu0
      %v730 = vadd.f32 %v449, %v729
      %v731 = vpop.f32.mrf.mxu0
      %v732 = vadd.f32 %v449, %v731
      %733 = vmatmul.bf16.gmra.mxu0 %v636
      %v734 = vpop.f32.mrf.mxu0
      %v735 = vadd.f32 %v449, %v734
      %v736 = vpop.f32.mrf.mxu0
      %v737 = vadd.f32 %v449, %v736
      %738 = vmatmul.bf16.gmra.mxu0 %v639
      %v739 = vpop.f32.mrf.mxu0
      %v740 = vadd.f32 %v449, %v739
      %v741 = vpop.f32.mrf.mxu0
      %v742 = vadd.f32 %v449, %v741
      %743 = vmatmul.bf16.gmra.mxu0 %v642
      %v744 = vpop.f32.mrf.mxu0
      %v745 = vadd.f32 %v449, %v744
      %v746 = vpop.f32.mrf.mxu0
      %v747 = vadd.f32 %v449, %v746
      %748 = vmatmul.bf16.gmra.mxu0 %v645
      %v749 = vpop.f32.mrf.mxu0
      %v750 = vadd.f32 %v449, %v749
      %v751 = vpop.f32.mrf.mxu0
      %v752 = vadd.f32 %v449, %v751
      %753 = vmatmul.bf16.gmra.mxu0 %v648
      %v754 = vpop.f32.mrf.mxu0
      %v755 = vadd.f32 %v449, %v754
      %v756 = vpop.f32.mrf.mxu0
      %v757 = vadd.f32 %v449, %v756
      %758 = vmatmul.bf16.gmra.mxu0 %v651
      %v759 = vpop.f32.mrf.mxu0
      %v760 = vadd.f32 %v449, %v759
      %v761 = vpop.f32.mrf.mxu0
      %v762 = vadd.f32 %v449, %v761
      %763 = vmatmul.bf16.gmra.mxu0 %v654
      %v764 = vpop.f32.mrf.mxu0
      %v765 = vadd.f32 %v449, %v764
      %v766 = vpop.f32.mrf.mxu0
      %v767 = vadd.f32 %v449, %v766
      %768 = vmatmul.bf16.gmra.mxu0 %v657
      %v769 = vpop.f32.mrf.mxu0
      %v770 = vadd.f32 %v449, %v769
      %v771 = vpop.f32.mrf.mxu0
      %v772 = vadd.f32 %v449, %v771
      %773 = vmatmul.bf16.gmra.mxu0 %v660
      %v774 = vpop.f32.mrf.mxu0
      %v775 = vadd.f32 %v449, %v774
      %v776 = vpop.f32.mrf.mxu0
      %v777 = vadd.f32 %v449, %v776
      %778 = vmatmul.bf16.gmra.mxu0 %v663
      %v779 = vpop.f32.mrf.mxu0
      %v780 = vadd.f32 %v449, %v779
      %v781 = vpop.f32.mrf.mxu0
      %v782 = vadd.f32 %v449, %v781
      %783 = vmatmul.bf16.gmra.mxu0 %v666
      %v784 = vpop.f32.mrf.mxu0
      %v785 = vadd.f32 %v449, %v784
      %v786 = vpop.f32.mrf.mxu0
      %v787 = vadd.f32 %v449, %v786
      %788 = vmatmul.bf16.gmra.mxu0 %v669
      %v789 = vpop.f32.mrf.mxu0
      %v790 = vadd.f32 %v449, %v789
      %v791 = vpop.f32.mrf.mxu0
      %v792 = vadd.f32 %v449, %v791
      %793 = vmatmul.bf16.gmra.mxu0 %v672
      %v794 = vpop.f32.mrf.mxu0
      %v795 = vadd.f32 %v449, %v794
      %v796 = vpop.f32.mrf.mxu0
      %v797 = vadd.f32 %v449, %v796
      %798 = vmatmul.bf16.gmra.mxu0 %v675
      %v799 = vpop.f32.mrf.mxu0
      %v800 = vadd.f32 %v449, %v799
      %v801 = vpop.f32.mrf.mxu0
      %v802 = vadd.f32 %v449, %v801
      %803 = vmatmul.bf16.gmra.mxu0 %v678
      %v804 = vpop.f32.mrf.mxu0
      %v805 = vadd.f32 %v449, %v804
      %v806 = vpop.f32.mrf.mxu0
      %v807 = vadd.f32 %v449, %v806
      %808 = vdwg.mxu0
      %809 = vmatpush.bf16.msra.mxu0 0
      %810 = vmatpush.bf16.msra.mxu0 0
      %811 = vmatpush.bf16.msra.mxu0 0
      %812 = vmatpush.bf16.msra.mxu0 0
      %813 = vmatpush.bf16.msra.mxu0 0
      %814 = vmatpush.bf16.msra.mxu0 0
      %815 = vmatpush.bf16.msra.mxu0 %v599
      %816 = vmatpush.bf16.msra.mxu0 %v596
      %817 = vmatmul.bf16.gmra.mxu0 %v609
      %v818 = vpop.f32.mrf.mxu0
      %v819 = vadd.f32 %v450, %v818
      %v820 = vpop.f32.mrf.mxu0
      %v821 = vadd.f32 %v450, %v820
      %822 = vmatmul.bf16.gmra.mxu0 %v612
      %v823 = vpop.f32.mrf.mxu0
      %v824 = vadd.f32 %v450, %v823
      %v825 = vpop.f32.mrf.mxu0
      %v826 = vadd.f32 %v450, %v825
      %827 = vmatmul.bf16.gmra.mxu0 %v615
      %v828 = vpop.f32.mrf.mxu0
      %v829 = vadd.f32 %v450, %v828
      %v830 = vpop.f32.mrf.mxu0
      %v831 = vadd.f32 %v450, %v830
      %832 = vmatmul.bf16.gmra.mxu0 %v618
      %v833 = vpop.f32.mrf.mxu0
      %v834 = vadd.f32 %v450, %v833
      %v835 = vpop.f32.mrf.mxu0
      %v836 = vadd.f32 %v450, %v835
      %837 = vmatmul.bf16.gmra.mxu0 %v621
      %v838 = vpop.f32.mrf.mxu0
      %v839 = vadd.f32 %v450, %v838
      %v840 = vpop.f32.mrf.mxu0
      %v841 = vadd.f32 %v450, %v840
      %842 = vmatmul.bf16.gmra.mxu0 %v624
      %v843 = vpop.f32.mrf.mxu0
      %v844 = vadd.f32 %v450, %v843
      %v845 = vpop.f32.mrf.mxu0
      %v846 = vadd.f32 %v450, %v845
      %847 = vmatmul.bf16.gmra.mxu0 %v627
      %v848 = vpop.f32.mrf.mxu0
      %v849 = vadd.f32 %v450, %v848
      %v850 = vpop.f32.mrf.mxu0
      %v851 = vadd.f32 %v450, %v850
      %852 = vmatmul.bf16.gmra.mxu0 %v630
      %v853 = vpop.f32.mrf.mxu0
      %v854 = vadd.f32 %v450, %v853
      %v855 = vpop.f32.mrf.mxu0
      %v856 = vadd.f32 %v450, %v855
      %857 = vmatmul.bf16.gmra.mxu0 %v633
      %v858 = vpop.f32.mrf.mxu0
      %v859 = vadd.f32 %v450, %v858
      %v860 = vpop.f32.mrf.mxu0
      %v861 = vadd.f32 %v450, %v860
      %862 = vmatmul.bf16.gmra.mxu0 %v636
      %v863 = vpop.f32.mrf.mxu0
      %v864 = vadd.f32 %v450, %v863
      %v865 = vpop.f32.mrf.mxu0
      %v866 = vadd.f32 %v450, %v865
      %867 = vmatmul.bf16.gmra.mxu0 %v639
      %v868 = vpop.f32.mrf.mxu0
      %v869 = vadd.f32 %v450, %v868
      %v870 = vpop.f32.mrf.mxu0
      %v871 = vadd.f32 %v450, %v870
      %872 = vmatmul.bf16.gmra.mxu0 %v642
      %v873 = vpop.f32.mrf.mxu0
      %v874 = vadd.f32 %v450, %v873
      %v875 = vpop.f32.mrf.mxu0
      %v876 = vadd.f32 %v450, %v875
      %877 = vmatmul.bf16.gmra.mxu0 %v645
      %v878 = vpop.f32.mrf.mxu0
      %v879 = vadd.f32 %v450, %v878
      %v880 = vpop.f32.mrf.mxu0
      %v881 = vadd.f32 %v450, %v880
      %882 = vmatmul.bf16.gmra.mxu0 %v648
      %v883 = vpop.f32.mrf.mxu0
      %v884 = vadd.f32 %v450, %v883
      %v885 = vpop.f32.mrf.mxu0
      %v886 = vadd.f32 %v450, %v885
      %887 = vmatmul.bf16.gmra.mxu0 %v651
      %v888 = vpop.f32.mrf.mxu0
      %v889 = vadd.f32 %v450, %v888
      %v890 = vpop.f32.mrf.mxu0
      %v891 = vadd.f32 %v450, %v890
      %892 = vmatmul.bf16.gmra.mxu0 %v654
      %v893 = vpop.f32.mrf.mxu0
      %v894 = vadd.f32 %v450, %v893
      %v895 = vpop.f32.mrf.mxu0
      %v896 = vadd.f32 %v450, %v895
      %897 = vmatmul.bf16.gmra.mxu0 %v657
      %v898 = vpop.f32.mrf.mxu0
      %v899 = vadd.f32 %v450, %v898
      %v900 = vpop.f32.mrf.mxu0
      %v901 = vadd.f32 %v450, %v900
      %902 = vmatmul.bf16.gmra.mxu0 %v660
      %v903 = vpop.f32.mrf.mxu0
      %v904 = vadd.f32 %v450, %v903
      %v905 = vpop.f32.mrf.mxu0
      %v906 = vadd.f32 %v450, %v905
      %907 = vmatmul.bf16.gmra.mxu0 %v663
      %v908 = vpop.f32.mrf.mxu0
      %v909 = vadd.f32 %v450, %v908
      %v910 = vpop.f32.mrf.mxu0
      %v911 = vadd.f32 %v450, %v910
      %912 = vmatmul.bf16.gmra.mxu0 %v666
      %v913 = vpop.f32.mrf.mxu0
      %v914 = vadd.f32 %v450, %v913
      %v915 = vpop.f32.mrf.mxu0
      %v916 = vadd.f32 %v450, %v915
      %917 = vmatmul.bf16.gmra.mxu0 %v669
      %v918 = vpop.f32.mrf.mxu0
      %v919 = vadd.f32 %v450, %v918
      %v920 = vpop.f32.mrf.mxu0
      %v921 = vadd.f32 %v450, %v920
      %922 = vmatmul.bf16.gmra.mxu0 %v672
      %v923 = vpop.f32.mrf.mxu0
      %v924 = vadd.f32 %v450, %v923
      %v925 = vpop.f32.mrf.mxu0
      %v926 = vadd.f32 %v450, %v925
      %927 = vmatmul.bf16.gmra.mxu0 %v675
      %v928 = vpop.f32.mrf.mxu0
      %v929 = vadd.f32 %v450, %v928
      %v930 = vpop.f32.mrf.mxu0
      %v931 = vadd.f32 %v450, %v930
      %932 = vmatmul.bf16.gmra.mxu0 %v678
      %v933 = vpop.f32.mrf.mxu0
      %v934 = vadd.f32 %v450, %v933
      %v935 = vpop.f32.mrf.mxu0
      %v936 = vadd.f32 %v450, %v935
      %937 = vdwg.mxu0
      %938 = vmatpush.bf16.msra.mxu0 0
      %939 = vmatpush.bf16.msra.mxu0 0
      %940 = vmatpush.bf16.msra.mxu0 0
      %941 = vmatpush.bf16.msra.mxu0 0
      %942 = vmatpush.bf16.msra.mxu0 0
      %943 = vmatpush.bf16.msra.mxu0 0
      %944 = vmatpush.bf16.msra.mxu0 %v600
      %945 = vmatpush.bf16.msra.mxu0 %v597
      %946 = vmatmul.bf16.gmra.mxu0 %v609
      %v947 = vpop.f32.mrf.mxu0
      %v948 = vadd.f32 %v451, %v947
      %v949 = vpop.f32.mrf.mxu0
      %v950 = vadd.f32 %v451, %v949
      %951 = vmatmul.bf16.gmra.mxu0 %v612
      %v952 = vpop.f32.mrf.mxu0
      %v953 = vadd.f32 %v451, %v952
      %v954 = vpop.f32.mrf.mxu0
      %v955 = vadd.f32 %v451, %v954
      %956 = vmatmul.bf16.gmra.mxu0 %v615
      %v957 = vpop.f32.mrf.mxu0
      %v958 = vadd.f32 %v451, %v957
      %v959 = vpop.f32.mrf.mxu0
      %v960 = vadd.f32 %v451, %v959
      %961 = vmatmul.bf16.gmra.mxu0 %v618
      %v962 = vpop.f32.mrf.mxu0
      %v963 = vadd.f32 %v451, %v962
      %v964 = vpop.f32.mrf.mxu0
      %v965 = vadd.f32 %v451, %v964
      %966 = vmatmul.bf16.gmra.mxu0 %v621
      %v967 = vpop.f32.mrf.mxu0
      %v968 = vadd.f32 %v451, %v967
      %v969 = vpop.f32.mrf.mxu0
      %v970 = vadd.f32 %v451, %v969
      %971 = vmatmul.bf16.gmra.mxu0 %v624
      %v972 = vpop.f32.mrf.mxu0
      %v973 = vadd.f32 %v451, %v972
      %v974 = vpop.f32.mrf.mxu0
      %v975 = vadd.f32 %v451, %v974
      %976 = vmatmul.bf16.gmra.mxu0 %v627
      %v977 = vpop.f32.mrf.mxu0
      %v978 = vadd.f32 %v451, %v977
      %v979 = vpop.f32.mrf.mxu0
      %v980 = vadd.f32 %v451, %v979
      %981 = vmatmul.bf16.gmra.mxu0 %v630
      %v982 = vpop.f32.mrf.mxu0
      %v983 = vadd.f32 %v451, %v982
      %v984 = vpop.f32.mrf.mxu0
      %v985 = vadd.f32 %v451, %v984
      %986 = vmatmul.bf16.gmra.mxu0 %v633
      %v987 = vpop.f32.mrf.mxu0
      %v988 = vadd.f32 %v451, %v987
      %v989 = vpop.f32.mrf.mxu0
      %v990 = vadd.f32 %v451, %v989
      %991 = vmatmul.bf16.gmra.mxu0 %v636
      %v992 = vpop.f32.mrf.mxu0
      %v993 = vadd.f32 %v451, %v992
      %v994 = vpop.f32.mrf.mxu0
      %v995 = vadd.f32 %v451, %v994
      %996 = vmatmul.bf16.gmra.mxu0 %v639
      %v997 = vpop.f32.mrf.mxu0
      %v998 = vadd.f32 %v451, %v997
      %v999 = vpop.f32.mrf.mxu0
      %v1000 = vadd.f32 %v451, %v999
      %1001 = vmatmul.bf16.gmra.mxu0 %v642
      %v1002 = vpop.f32.mrf.mxu0
      %v1003 = vadd.f32 %v451, %v1002
      %v1004 = vpop.f32.mrf.mxu0
      %v1005 = vadd.f32 %v451, %v1004
      %1006 = vmatmul.bf16.gmra.mxu0 %v645
      %v1007 = vpop.f32.mrf.mxu0
      %v1008 = vadd.f32 %v451, %v1007
      %v1009 = vpop.f32.mrf.mxu0
      %v1010 = vadd.f32 %v451, %v1009
      %1011 = vmatmul.bf16.gmra.mxu0 %v648
      %v1012 = vpop.f32.mrf.mxu0
      %v1013 = vadd.f32 %v451, %v1012
      %v1014 = vpop.f32.mrf.mxu0
      %v1015 = vadd.f32 %v451, %v1014
      %1016 = vmatmul.bf16.gmra.mxu0 %v651
      %v1017 = vpop.f32.mrf.mxu0
      %v1018 = vadd.f32 %v451, %v1017
      %v1019 = vpop.f32.mrf.mxu0
      %v1020 = vadd.f32 %v451, %v1019
      %1021 = vmatmul.bf16.gmra.mxu0 %v654
      %v1022 = vpop.f32.mrf.mxu0
      %v1023 = vadd.f32 %v451, %v1022
      %v1024 = vpop.f32.mrf.mxu0
      %v1025 = vadd.f32 %v451, %v1024
      %1026 = vmatmul.bf16.gmra.mxu0 %v657
      %v1027 = vpop.f32.mrf.mxu0
      %v1028 = vadd.f32 %v451, %v1027
      %v1029 = vpop.f32.mrf.mxu0
      %v1030 = vadd.f32 %v451, %v1029
      %1031 = vmatmul.bf16.gmra.mxu0 %v660
      %v1032 = vpop.f32.mrf.mxu0
      %v1033 = vadd.f32 %v451, %v1032
      %v1034 = vpop.f32.mrf.mxu0
      %v1035 = vadd.f32 %v451, %v1034
      %1036 = vmatmul.bf16.gmra.mxu0 %v663
      %v1037 = vpop.f32.mrf.mxu0
      %v1038 = vadd.f32 %v451, %v1037
      %v1039 = vpop.f32.mrf.mxu0
      %v1040 = vadd.f32 %v451, %v1039
      %1041 = vmatmul.bf16.gmra.mxu0 %v666
      %v1042 = vpop.f32.mrf.mxu0
      %v1043 = vadd.f32 %v451, %v1042
      %v1044 = vpop.f32.mrf.mxu0
      %v1045 = vadd.f32 %v451, %v1044
      %1046 = vmatmul.bf16.gmra.mxu0 %v669
      %v1047 = vpop.f32.mrf.mxu0
      %v1048 = vadd.f32 %v451, %v1047
      %v1049 = vpop.f32.mrf.mxu0
      %v1050 = vadd.f32 %v451, %v1049
      %1051 = vmatmul.bf16.gmra.mxu0 %v672
      %v1052 = vpop.f32.mrf.mxu0
      %v1053 = vadd.f32 %v451, %v1052
      %v1054 = vpop.f32.mrf.mxu0
      %v1055 = vadd.f32 %v451, %v1054
      %1056 = vmatmul.bf16.gmra.mxu0 %v675
      %v1057 = vpop.f32.mrf.mxu0
      %v1058 = vadd.f32 %v451, %v1057
      %v1059 = vpop.f32.mrf.mxu0
      %v1060 = vadd.f32 %v451, %v1059
      %1061 = vmatmul.bf16.gmra.mxu0 %v678
      %v1062 = vpop.f32.mrf.mxu0
      %v1063 = vadd.f32 %v451, %v1062
      %v1064 = vpop.f32.mrf.mxu0
      %v1065 = vadd.f32 %v451, %v1064
      %1066 = vdwg.mxu0
      %1067 = vst [vmem:[#allocation2] sm:$0xff] %v690
      %1068 = vst [vmem:[#allocation2 + $0x8] sm:$0xff] %v819
      %1069 = vst [vmem:[#allocation2 + $0x10] sm:$0xff] %v948
      %1070 = vst [vmem:[#allocation2 + $0x18] sm:$0xff] %v692
      %1071 = vst [vmem:[#allocation2 + $0x20] sm:$0xff] %v821
      %1072 = vst [vmem:[#allocation2 + $0x28] sm:$0xff] %v950
      %1073 = vst [vmem:[#allocation2 + $0x30] sm:$0xff] %v695
      %1074 = vst [vmem:[#allocation2 + $0x38] sm:$0xff] %v824
      %1075 = vst [vmem:[#allocation2 + $0x40] sm:$0xff] %v953
      %1076 = vst [vmem:[#allocation2 + $0x48] sm:$0xff] %v697
      %1077 = vst [vmem:[#allocation2 + $0x50] sm:$0xff] %v826
      %1078 = vst [vmem:[#allocation2 + $0x58] sm:$0xff] %v955
      %1079 = vst [vmem:[#allocation2 + $0x60] sm:$0xff] %v700
      %1080 = vst [vmem:[#allocation2 + $0x68] sm:$0xff] %v829
      %1081 = vst [vmem:[#allocation2 + $0x70] sm:$0xff] %v958
      %1082 = vst [vmem:[#allocation2 + $0x78] sm:$0xff] %v702
      %1083 = vst [vmem:[#allocation2 + $0x80] sm:$0xff] %v831
      %1084 = vst [vmem:[#allocation2 + $0x88] sm:$0xff] %v960
      %1085 = vst [vmem:[#allocation2 + $0x90] sm:$0xff] %v705
      %1086 = vst [vmem:[#allocation2 + $0x98] sm:$0xff] %v834
      %1087 = vst [vmem:[#allocation2 + $0xa0] sm:$0xff] %v963
      %1088 = vst [vmem:[#allocation2 + $0xa8] sm:$0xff] %v707
      %1089 = vst [vmem:[#allocation2 + $0xb0] sm:$0xff] %v836
      %1090 = vst [vmem:[#allocation2 + $0xb8] sm:$0xff] %v965
      %1091 = vst [vmem:[#allocation2 + $0xc0] sm:$0xff] %v710
      %1092 = vst [vmem:[#allocation2 + $0xc8] sm:$0xff] %v839
      %1093 = vst [vmem:[#allocation2 + $0xd0] sm:$0xff] %v968
      %1094 = vst [vmem:[#allocation2 + $0xd8] sm:$0xff] %v712
      %1095 = vst [vmem:[#allocation2 + $0xe0] sm:$0xff] %v841
      %1096 = vst [vmem:[#allocation2 + $0xe8] sm:$0xff] %v970
      %1097 = vst [vmem:[#allocation2 + $0xf0] sm:$0xff] %v715
      %1098 = vst [vmem:[#allocation2 + $0xf8] sm:$0xff] %v844
      %1099 = vst [vmem:[#allocation2 + $0x100] sm:$0xff] %v973
      %1100 = vst [vmem:[#allocation2 + $0x108] sm:$0xff] %v717
      %1101 = vst [vmem:[#allocation2 + $0x110] sm:$0xff] %v846
      %1102 = vst [vmem:[#allocation2 + $0x118] sm:$0xff] %v975
      %1103 = vst [vmem:[#allocation2 + $0x120] sm:$0xff] %v720
      %1104 = vst [vmem:[#allocation2 + $0x128] sm:$0xff] %v849
      %1105 = vst [vmem:[#allocation2 + $0x130] sm:$0xff] %v978
      %1106 = vst [vmem:[#allocation2 + $0x138] sm:$0xff] %v722
      %1107 = vst [vmem:[#allocation2 + $0x140] sm:$0xff] %v851
      %1108 = vst [vmem:[#allocation2 + $0x148] sm:$0xff] %v980
      %1109 = vst [vmem:[#allocation2 + $0x150] sm:$0xff] %v725
      %1110 = vst [vmem:[#allocation2 + $0x158] sm:$0xff] %v854
      %1111 = vst [vmem:[#allocation2 + $0x160] sm:$0xff] %v983
      %1112 = vst [vmem:[#allocation2 + $0x168] sm:$0xff] %v727
      %1113 = vst [vmem:[#allocation2 + $0x170] sm:$0xff] %v856
      %1114 = vst [vmem:[#allocation2 + $0x178] sm:$0xff] %v985
      %1115 = vst [vmem:[#allocation2 + $0x180] sm:$0xff] %v730
      %1116 = vst [vmem:[#allocation2 + $0x188] sm:$0xff] %v859
      %1117 = vst [vmem:[#allocation2 + $0x190] sm:$0xff] %v988
      %1118 = vst [vmem:[#allocation2 + $0x198] sm:$0xff] %v732
      %1119 = vst [vmem:[#allocation2 + $0x1a0] sm:$0xff] %v861
      %1120 = vst [vmem:[#allocation2 + $0x1a8] sm:$0xff] %v990
      %1121 = vst [vmem:[#allocation2 + $0x1b0] sm:$0xff] %v735
      %1122 = vst [vmem:[#allocation2 + $0x1b8] sm:$0xff] %v864
      %1123 = vst [vmem:[#allocation2 + $0x1c0] sm:$0xff] %v993
      %1124 = vst [vmem:[#allocation2 + $0x1c8] sm:$0xff] %v737
      %1125 = vst [vmem:[#allocation2 + $0x1d0] sm:$0xff] %v866
      %1126 = vst [vmem:[#allocation2 + $0x1d8] sm:$0xff] %v995
      %1127 = vst [vmem:[#allocation2 + $0x1e0] sm:$0xff] %v740
      %1128 = vst [vmem:[#allocation2 + $0x1e8] sm:$0xff] %v869
      %1129 = vst [vmem:[#allocation2 + $0x1f0] sm:$0xff] %v998
      %1130 = vst [vmem:[#allocation2 + $0x1f8] sm:$0xff] %v742
      %1131 = vst [vmem:[#allocation2 + $0x200] sm:$0xff] %v871
      %1132 = vst [vmem:[#allocation2 + $0x208] sm:$0xff] %v1000
      %1133 = vst [vmem:[#allocation2 + $0x210] sm:$0xff] %v745
      %1134 = vst [vmem:[#allocation2 + $0x218] sm:$0xff] %v874
      %1135 = vst [vmem:[#allocation2 + $0x220] sm:$0xff] %v1003
      %1136 = vst [vmem:[#allocation2 + $0x228] sm:$0xff] %v747
      %1137 = vst [vmem:[#allocation2 + $0x230] sm:$0xff] %v876
      %1138 = vst [vmem:[#allocation2 + $0x238] sm:$0xff] %v1005
      %1139 = vst [vmem:[#allocation2 + $0x240] sm:$0xff] %v750
      %1140 = vst [vmem:[#allocation2 + $0x248] sm:$0xff] %v879
      %1141 = vst [vmem:[#allocation2 + $0x250] sm:$0xff] %v1008
      %1142 = vst [vmem:[#allocation2 + $0x258] sm:$0xff] %v752
      %1143 = vst [vmem:[#allocation2 + $0x260] sm:$0xff] %v881
      %1144 = vst [vmem:[#allocation2 + $0x268] sm:$0xff] %v1010
      %1145 = vst [vmem:[#allocation2 + $0x270] sm:$0xff] %v755
      %1146 = vst [vmem:[#allocation2 + $0x278] sm:$0xff] %v884
      %1147 = vst [vmem:[#allocation2 + $0x280] sm:$0xff] %v1013
      %1148 = vst [vmem:[#allocation2 + $0x288] sm:$0xff] %v757
      %1149 = vst [vmem:[#allocation2 + $0x290] sm:$0xff] %v886
      %1150 = vst [vmem:[#allocation2 + $0x298] sm:$0xff] %v1015
      %1151 = vst [vmem:[#allocation2 + $0x2a0] sm:$0xff] %v760
      %1152 = vst [vmem:[#allocation2 + $0x2a8] sm:$0xff] %v889
      %1153 = vst [vmem:[#allocation2 + $0x2b0] sm:$0xff] %v1018
      %1154 = vst [vmem:[#allocation2 + $0x2b8] sm:$0xff] %v762
      %1155 = vst [vmem:[#allocation2 + $0x2c0] sm:$0xff] %v891
      %1156 = vst [vmem:[#allocation2 + $0x2c8] sm:$0xff] %v1020
      %1157 = vst [vmem:[#allocation2 + $0x2d0] sm:$0xff] %v765
      %1158 = vst [vmem:[#allocation2 + $0x2d8] sm:$0xff] %v894
      %1159 = vst [vmem:[#allocation2 + $0x2e0] sm:$0xff] %v1023
      %1160 = vst [vmem:[#allocation2 + $0x2e8] sm:$0xff] %v767
      %1161 = vst [vmem:[#allocation2 + $0x2f0] sm:$0xff] %v896
      %1162 = vst [vmem:[#allocation2 + $0x2f8] sm:$0xff] %v1025
      %1163 = vst [vmem:[#allocation2 + $0x300] sm:$0xff] %v770
      %1164 = vst [vmem:[#allocation2 + $0x308] sm:$0xff] %v899
      %1165 = vst [vmem:[#allocation2 + $0x310] sm:$0xff] %v1028
      %1166 = vst [vmem:[#allocation2 + $0x318] sm:$0xff] %v772
      %1167 = vst [vmem:[#allocation2 + $0x320] sm:$0xff] %v901
      %1168 = vst [vmem:[#allocation2 + $0x328] sm:$0xff] %v1030
      %1169 = vst [vmem:[#allocation2 + $0x330] sm:$0xff] %v775
      %1170 = vst [vmem:[#allocation2 + $0x338] sm:$0xff] %v904
      %1171 = vst [vmem:[#allocation2 + $0x340] sm:$0xff] %v1033
      %1172 = vst [vmem:[#allocation2 + $0x348] sm:$0xff] %v777
      %1173 = vst [vmem:[#allocation2 + $0x350] sm:$0xff] %v906
      %1174 = vst [vmem:[#allocation2 + $0x358] sm:$0xff] %v1035
      %1175 = vst [vmem:[#allocation2 + $0x360] sm:$0xff] %v780
      %1176 = vst [vmem:[#allocation2 + $0x368] sm:$0xff] %v909
      %1177 = vst [vmem:[#allocation2 + $0x370] sm:$0xff] %v1038
      %1178 = vst [vmem:[#allocation2 + $0x378] sm:$0xff] %v782
      %1179 = vst [vmem:[#allocation2 + $0x380] sm:$0xff] %v911
      %1180 = vst [vmem:[#allocation2 + $0x388] sm:$0xff] %v1040
      %1181 = vst [vmem:[#allocation2 + $0x390] sm:$0xff] %v785
      %1182 = vst [vmem:[#allocation2 + $0x398] sm:$0xff] %v914
      %1183 = vst [vmem:[#allocation2 + $0x3a0] sm:$0xff] %v1043
      %1184 = vst [vmem:[#allocation2 + $0x3a8] sm:$0xff] %v787
      %1185 = vst [vmem:[#allocation2 + $0x3b0] sm:$0xff] %v916
      %1186 = vst [vmem:[#allocation2 + $0x3b8] sm:$0xff] %v1045
      %1187 = vst [vmem:[#allocation2 + $0x3c0] sm:$0xff] %v790
      %1188 = vst [vmem:[#allocation2 + $0x3c8] sm:$0xff] %v919
      %1189 = vst [vmem:[#allocation2 + $0x3d0] sm:$0xff] %v1048
      %1190 = vst [vmem:[#allocation2 + $0x3d8] sm:$0xff] %v792
      %1191 = vst [vmem:[#allocation2 + $0x3e0] sm:$0xff] %v921
      %1192 = vst [vmem:[#allocation2 + $0x3e8] sm:$0xff] %v1050
      %1193 = vst [vmem:[#allocation2 + $0x3f0] sm:$0xff] %v795
      %1194 = vst [vmem:[#allocation2 + $0x3f8] sm:$0xff] %v924
      %1195 = vst [vmem:[#allocation2 + $0x400] sm:$0xff] %v1053
      %1196 = vst [vmem:[#allocation2 + $0x408] sm:$0xff] %v797
      %1197 = vst [vmem:[#allocation2 + $0x410] sm:$0xff] %v926
      %1198 = vst [vmem:[#allocation2 + $0x418] sm:$0xff] %v1055
      %1199 = vst [vmem:[#allocation2 + $0x420] sm:$0xff] %v800
      %1200 = vst [vmem:[#allocation2 + $0x428] sm:$0xff] %v929
      %1201 = vst [vmem:[#allocation2 + $0x430] sm:$0xff] %v1058
      %1202 = vst [vmem:[#allocation2 + $0x438] sm:$0xff] %v802
      %1203 = vst [vmem:[#allocation2 + $0x440] sm:$0xff] %v931
      %1204 = vst [vmem:[#allocation2 + $0x448] sm:$0xff] %v1060
      %1205 = vst [vmem:[#allocation2 + $0x450] sm:$0xff] %v805
      %1206 = vst [vmem:[#allocation2 + $0x458] sm:$0xff] %v934
      %1207 = vst [vmem:[#allocation2 + $0x460] sm:$0xff] %v1063
      %1208 = vst [vmem:[#allocation2 + $0x468] sm:$0xff] %v807
      %1209 = vst [vmem:[#allocation2 + $0x470] sm:$0xff] %v936
      %1210 = vst [vmem:[#allocation2 + $0x478] sm:$0xff] %v1065
      %v1211 = vld [vmem:[%s367] sm:$0xf]
      %v1212 = vld [vmem:[%s367 + $0x4] sm:$0xf]
      %v1213 = vld [vmem:[%s367 + $0x8] sm:$0xf]
      %v1214 = vld [vmem:[%s367 + $0xc] sm:$0xf]
      %v1215 = vld [vmem:[%s367 + $0x10] sm:$0xf]
      %v1216 = vld [vmem:[%s367 + $0x14] sm:$0xf]
      %v1217 = vld [vmem:[%s367 + $0x18] sm:$0xf]
      %v1218 = vld [vmem:[%s367 + $0x1c] sm:$0xf]
      %v1219 = vld [vmem:[%s367 + $0x20] sm:$0xf]
      %v1220 = vld [vmem:[%s367 + $0x24] sm:$0xf]
      %v1221 = vld [vmem:[%s367 + $0x28] sm:$0xf]
      %v1222 = vld [vmem:[%s367 + $0x2c] sm:$0xf]
      %v1223 = vld [vmem:[%s367 + $0x30] sm:$0xf]
      %v1224 = vld [vmem:[%s367 + $0x34] sm:$0xf]
      %v1225 = vld [vmem:[%s367 + $0x38] sm:$0xf]
      %v1226 = vld [vmem:[%s367 + $0x3c] sm:$0xf]
      %v1227 = vld [vmem:[%s367 + $0x40] sm:$0xf]
      %v1228 = vld [vmem:[%s367 + $0x44] sm:$0xf]
      %v1229 = vld [vmem:[%s367 + $0x48] sm:$0xf]
      %v1230 = vld [vmem:[%s367 + $0x4c] sm:$0xf]
      %v1231 = vld [vmem:[%s367 + $0x50] sm:$0xf]
      %v1232 = vld [vmem:[%s367 + $0x54] sm:$0xf]
      %v1233 = vld [vmem:[%s367 + $0x58] sm:$0xf]
      %v1234 = vld [vmem:[%s367 + $0x5c] sm:$0xf]
      %v1235 = vld [vmem:[%s367 + $0x60] sm:$0xf]
      %v1236 = vld [vmem:[%s367 + $0x64] sm:$0xf]
      %v1237 = vld [vmem:[%s367 + $0x68] sm:$0xf]
      %v1238 = vld [vmem:[%s367 + $0x6c] sm:$0xf]
      %v1239 = vld [vmem:[%s367 + $0x70] sm:$0xf]
      %v1240 = vld [vmem:[%s367 + $0x74] sm:$0xf]
      %v1241 = vld [vmem:[%s367 + $0x78] sm:$0xf]
      %v1242 = vld [vmem:[%s367 + $0x7c] sm:$0xf]
      %v1243 = vld [vmem:[%s367 + $0x80] sm:$0xf]
      %v1244 = vld [vmem:[%s367 + $0x84] sm:$0xf]
      %v1245 = vld [vmem:[%s367 + $0x88] sm:$0xf]
      %v1246 = vld [vmem:[%s367 + $0x8c] sm:$0xf]
      %v1247 = vld [vmem:[%s367 + $0x90] sm:$0xf]
      %v1248 = vld [vmem:[%s367 + $0x94] sm:$0xf]
      %v1249 = vld [vmem:[%s367 + $0x98] sm:$0xf]
      %v1250 = vld [vmem:[%s367 + $0x9c] sm:$0xf]
      %v1251 = vld [vmem:[%s367 + $0xa0] sm:$0xf]
      %v1252 = vld [vmem:[%s367 + $0xa4] sm:$0xf]
      %v1253 = vld [vmem:[%s367 + $0xa8] sm:$0xf]
      %v1254 = vld [vmem:[%s367 + $0xac] sm:$0xf]
      %v1255 = vld [vmem:[%s367 + $0xb0] sm:$0xf]
      %v1256 = vld [vmem:[%s367 + $0xb4] sm:$0xf]
      %v1257 = vld [vmem:[%s367 + $0xb8] sm:$0xf]
      %v1258 = vld [vmem:[%s367 + $0xbc] sm:$0xf]
      %v1259 = vld [vmem:[%s4] sm:$0xff]
      %v1260 = vld [vmem:[%s4 + $0x8] sm:$0xf]
      %v1261 = vld [vmem:[%s4 + $0xc] sm:$0xff]
      %v1262 = vld [vmem:[%s4 + $0x14] sm:$0xf]
      %v1263 = vld [vmem:[%s4 + $0x18] sm:$0xff]
      %v1264 = vld [vmem:[%s4 + $0x20] sm:$0xf]
      %v1265 = vld [vmem:[%s4 + $0x24] sm:$0xff]
      %v1266 = vld [vmem:[%s4 + $0x2c] sm:$0xf]
      %s1267 = scalar_lea.vmem %s7, 6
      %v1268 = vld [vmem:[%s1267] ss:$2 sm:$0x7]
      %v1270 = vperm.slane %v1268, 0
      %v1271 = vperm.slane %v1268, 1
      %v1272 = vperm.slane %v1268, 2
      %v1324 = vunpack.c.l.b16 %v1211
      %v1325 = vunpack.c.l.b16 %v1212
      %v1326 = vunpack.c.l.b16 %v1213
      %v1327 = vunpack.c.l.b16 %v1214
      %v1328 = vunpack.c.l.b16 %v1215
      %v1329 = vunpack.c.l.b16 %v1216
      %v1330 = vunpack.c.l.b16 %v1217
      %v1331 = vunpack.c.l.b16 %v1218
      %v1332 = vunpack.c.l.b16 %v1219
      %v1333 = vunpack.c.l.b16 %v1220
      %v1334 = vunpack.c.l.b16 %v1221
      %v1335 = vunpack.c.l.b16 %v1222
      %v1336 = vunpack.c.l.b16 %v1223
      %v1337 = vunpack.c.l.b16 %v1224
      %v1338 = vunpack.c.l.b16 %v1225
      %v1339 = vunpack.c.l.b16 %v1226
      %v1340 = vunpack.c.l.b16 %v1227
      %v1341 = vunpack.c.l.b16 %v1228
      %v1342 = vunpack.c.l.b16 %v1229
      %v1343 = vunpack.c.l.b16 %v1230
      %v1344 = vunpack.c.l.b16 %v1231
      %v1345 = vunpack.c.l.b16 %v1232
      %v1346 = vunpack.c.l.b16 %v1233
      %v1347 = vunpack.c.l.b16 %v1234
      %v1348 = vunpack.c.l.b16 %v1235
      %v1349 = vunpack.c.l.b16 %v1236
      %v1350 = vunpack.c.l.b16 %v1237
      %v1351 = vunpack.c.l.b16 %v1238
      %v1352 = vunpack.c.l.b16 %v1239
      %v1353 = vunpack.c.l.b16 %v1240
      %v1354 = vunpack.c.l.b16 %v1241
      %v1355 = vunpack.c.l.b16 %v1242
      %v1356 = vunpack.c.l.b16 %v1243
      %v1357 = vunpack.c.l.b16 %v1244
      %v1358 = vunpack.c.l.b16 %v1245
      %v1359 = vunpack.c.l.b16 %v1246
      %v1360 = vunpack.c.l.b16 %v1247
      %v1361 = vunpack.c.l.b16 %v1248
      %v1362 = vunpack.c.l.b16 %v1249
      %v1363 = vunpack.c.l.b16 %v1250
      %v1364 = vunpack.c.l.b16 %v1251
      %v1365 = vunpack.c.l.b16 %v1252
      %v1366 = vunpack.c.l.b16 %v1253
      %v1367 = vunpack.c.l.b16 %v1254
      %v1368 = vunpack.c.l.b16 %v1255
      %v1369 = vunpack.c.l.b16 %v1256
      %v1370 = vunpack.c.l.b16 %v1257
      %v1371 = vunpack.c.l.b16 %v1258
      %v1372 = vpack.c.b16 %v1325, %v1324
      %v1373 = vpack.c.b16 %v1327, %v1326
      %v1374 = vpack.c.b16 %v1329, %v1328
      %v1375 = vpack.c.b16 %v1331, %v1330
      %v1376 = vpack.c.b16 %v1333, %v1332
      %v1377 = vpack.c.b16 %v1335, %v1334
      %v1378 = vpack.c.b16 %v1337, %v1336
      %v1379 = vpack.c.b16 %v1339, %v1338
      %v1380 = vpack.c.b16 %v1341, %v1340
      %v1381 = vpack.c.b16 %v1343, %v1342
      %v1382 = vpack.c.b16 %v1345, %v1344
      %v1383 = vpack.c.b16 %v1347, %v1346
      %v1384 = vpack.c.b16 %v1349, %v1348
      %v1385 = vpack.c.b16 %v1351, %v1350
      %v1386 = vpack.c.b16 %v1353, %v1352
      %v1387 = vpack.c.b16 %v1355, %v1354
      %v1388 = vpack.c.b16 %v1357, %v1356
      %v1389 = vpack.c.b16 %v1359, %v1358
      %v1390 = vpack.c.b16 %v1361, %v1360
      %v1391 = vpack.c.b16 %v1363, %v1362
      %v1392 = vpack.c.b16 %v1365, %v1364
      %v1393 = vpack.c.b16 %v1367, %v1366
      %v1394 = vpack.c.b16 %v1369, %v1368
      %v1395 = vpack.c.b16 %v1371, %v1370
      %v1404 = vunpack.c.l.b16 %v1259
      %v1405 = vunpack.c.h.b16 %v1259
      %v1406 = vunpack.c.l.b16 %v1260
      %v1407 = vunpack.c.l.b16 %v1261
      %v1408 = vunpack.c.h.b16 %v1261
      %v1409 = vunpack.c.l.b16 %v1262
      %v1410 = vunpack.c.l.b16 %v1263
      %v1411 = vunpack.c.h.b16 %v1263
      %v1412 = vunpack.c.l.b16 %v1264
      %v1413 = vunpack.c.l.b16 %v1265
      %v1414 = vunpack.c.h.b16 %v1265
      %v1415 = vunpack.c.l.b16 %v1266
      %v1416 = vpack.c.b16 %v1407, %v1404
      %v1417 = vpack.c.b16 %v1408, %v1405
      %v1418 = vpack.c.b16 %v1409, %v1406
      %v1419 = vpack.c.b16 %v1413, %v1410
      %v1420 = vpack.c.b16 %v1414, %v1411
      %v1421 = vpack.c.b16 %v1415, %v1412
      %v1429 = vsel %vm607, %v1372, 0
      %v1432 = vsel %vm607, %v1373, 0
      %v1435 = vsel %vm607, %v1374, 0
      %v1438 = vsel %vm607, %v1375, 0
      %v1441 = vsel %vm607, %v1376, 0
      %v1444 = vsel %vm607, %v1377, 0
      %v1447 = vsel %vm607, %v1378, 0
      %v1450 = vsel %vm607, %v1379, 0
      %v1453 = vsel %vm607, %v1380, 0
      %v1456 = vsel %vm607, %v1381, 0
      %v1459 = vsel %vm607, %v1382, 0
      %v1462 = vsel %vm607, %v1383, 0
      %v1465 = vsel %vm607, %v1384, 0
      %v1468 = vsel %vm607, %v1385, 0
      %v1471 = vsel %vm607, %v1386, 0
      %v1474 = vsel %vm607, %v1387, 0
      %v1477 = vsel %vm607, %v1388, 0
      %v1480 = vsel %vm607, %v1389, 0
      %v1483 = vsel %vm607, %v1390, 0
      %v1486 = vsel %vm607, %v1391, 0
      %v1489 = vsel %vm607, %v1392, 0
      %v1492 = vsel %vm607, %v1393, 0
      %v1495 = vsel %vm607, %v1394, 0
      %v1498 = vsel %vm607, %v1395, 0
      %1500 = vmatpush.bf16.msra.mxu0 0
      %1501 = vmatpush.bf16.msra.mxu0 0
      %1502 = vmatpush.bf16.msra.mxu0 0
      %1503 = vmatpush.bf16.msra.mxu0 0
      %1504 = vmatpush.bf16.msra.mxu0 0
      %1505 = vmatpush.bf16.msra.mxu0 0
      %1506 = vmatpush.bf16.msra.mxu0 %v1419
      %1507 = vmatpush.bf16.msra.mxu0 %v1416
      %1508 = vmatmul.bf16.gmra.mxu0 %v1429
      %v1509 = vpop.f32.mrf.mxu0
      %v1510 = vadd.f32 %v1270, %v1509
      %v1511 = vpop.f32.mrf.mxu0
      %v1512 = vadd.f32 %v1270, %v1511
      %1513 = vmatmul.bf16.gmra.mxu0 %v1432
      %v1514 = vpop.f32.mrf.mxu0
      %v1515 = vadd.f32 %v1270, %v1514
      %v1516 = vpop.f32.mrf.mxu0
      %v1517 = vadd.f32 %v1270, %v1516
      %1518 = vmatmul.bf16.gmra.mxu0 %v1435
      %v1519 = vpop.f32.mrf.mxu0
      %v1520 = vadd.f32 %v1270, %v1519
      %v1521 = vpop.f32.mrf.mxu0
      %v1522 = vadd.f32 %v1270, %v1521
      %1523 = vmatmul.bf16.gmra.mxu0 %v1438
      %v1524 = vpop.f32.mrf.mxu0
      %v1525 = vadd.f32 %v1270, %v1524
      %v1526 = vpop.f32.mrf.mxu0
      %v1527 = vadd.f32 %v1270, %v1526
      %1528 = vmatmul.bf16.gmra.mxu0 %v1441
      %v1529 = vpop.f32.mrf.mxu0
      %v1530 = vadd.f32 %v1270, %v1529
      %v1531 = vpop.f32.mrf.mxu0
      %v1532 = vadd.f32 %v1270, %v1531
      %1533 = vmatmul.bf16.gmra.mxu0 %v1444
      %v1534 = vpop.f32.mrf.mxu0
      %v1535 = vadd.f32 %v1270, %v1534
      %v1536 = vpop.f32.mrf.mxu0
      %v1537 = vadd.f32 %v1270, %v1536
      %1538 = vmatmul.bf16.gmra.mxu0 %v1447
      %v1539 = vpop.f32.mrf.mxu0
      %v1540 = vadd.f32 %v1270, %v1539
      %v1541 = vpop.f32.mrf.mxu0
      %v1542 = vadd.f32 %v1270, %v1541
      %1543 = vmatmul.bf16.gmra.mxu0 %v1450
      %v1544 = vpop.f32.mrf.mxu0
      %v1545 = vadd.f32 %v1270, %v1544
      %v1546 = vpop.f32.mrf.mxu0
      %v1547 = vadd.f32 %v1270, %v1546
      %1548 = vmatmul.bf16.gmra.mxu0 %v1453
      %v1549 = vpop.f32.mrf.mxu0
      %v1550 = vadd.f32 %v1270, %v1549
      %v1551 = vpop.f32.mrf.mxu0
      %v1552 = vadd.f32 %v1270, %v1551
      %1553 = vmatmul.bf16.gmra.mxu0 %v1456
      %v1554 = vpop.f32.mrf.mxu0
      %v1555 = vadd.f32 %v1270, %v1554
      %v1556 = vpop.f32.mrf.mxu0
      %v1557 = vadd.f32 %v1270, %v1556
      %1558 = vmatmul.bf16.gmra.mxu0 %v1459
      %v1559 = vpop.f32.mrf.mxu0
      %v1560 = vadd.f32 %v1270, %v1559
      %v1561 = vpop.f32.mrf.mxu0
      %v1562 = vadd.f32 %v1270, %v1561
      %1563 = vmatmul.bf16.gmra.mxu0 %v1462
      %v1564 = vpop.f32.mrf.mxu0
      %v1565 = vadd.f32 %v1270, %v1564
      %v1566 = vpop.f32.mrf.mxu0
      %v1567 = vadd.f32 %v1270, %v1566
      %1568 = vmatmul.bf16.gmra.mxu0 %v1465
      %v1569 = vpop.f32.mrf.mxu0
      %v1570 = vadd.f32 %v1270, %v1569
      %v1571 = vpop.f32.mrf.mxu0
      %v1572 = vadd.f32 %v1270, %v1571
      %1573 = vmatmul.bf16.gmra.mxu0 %v1468
      %v1574 = vpop.f32.mrf.mxu0
      %v1575 = vadd.f32 %v1270, %v1574
      %v1576 = vpop.f32.mrf.mxu0
      %v1577 = vadd.f32 %v1270, %v1576
      %1578 = vmatmul.bf16.gmra.mxu0 %v1471
      %v1579 = vpop.f32.mrf.mxu0
      %v1580 = vadd.f32 %v1270, %v1579
      %v1581 = vpop.f32.mrf.mxu0
      %v1582 = vadd.f32 %v1270, %v1581
      %1583 = vmatmul.bf16.gmra.mxu0 %v1474
      %v1584 = vpop.f32.mrf.mxu0
      %v1585 = vadd.f32 %v1270, %v1584
      %v1586 = vpop.f32.mrf.mxu0
      %v1587 = vadd.f32 %v1270, %v1586
      %1588 = vmatmul.bf16.gmra.mxu0 %v1477
      %v1589 = vpop.f32.mrf.mxu0
      %v1590 = vadd.f32 %v1270, %v1589
      %v1591 = vpop.f32.mrf.mxu0
      %v1592 = vadd.f32 %v1270, %v1591
      %1593 = vmatmul.bf16.gmra.mxu0 %v1480
      %v1594 = vpop.f32.mrf.mxu0
      %v1595 = vadd.f32 %v1270, %v1594
      %v1596 = vpop.f32.mrf.mxu0
      %v1597 = vadd.f32 %v1270, %v1596
      %1598 = vmatmul.bf16.gmra.mxu0 %v1483
      %v1599 = vpop.f32.mrf.mxu0
      %v1600 = vadd.f32 %v1270, %v1599
      %v1601 = vpop.f32.mrf.mxu0
      %v1602 = vadd.f32 %v1270, %v1601
      %1603 = vmatmul.bf16.gmra.mxu0 %v1486
      %v1604 = vpop.f32.mrf.mxu0
      %v1605 = vadd.f32 %v1270, %v1604
      %v1606 = vpop.f32.mrf.mxu0
      %v1607 = vadd.f32 %v1270, %v1606
      %1608 = vmatmul.bf16.gmra.mxu0 %v1489
      %v1609 = vpop.f32.mrf.mxu0
      %v1610 = vadd.f32 %v1270, %v1609
      %v1611 = vpop.f32.mrf.mxu0
      %v1612 = vadd.f32 %v1270, %v1611
      %1613 = vmatmul.bf16.gmra.mxu0 %v1492
      %v1614 = vpop.f32.mrf.mxu0
      %v1615 = vadd.f32 %v1270, %v1614
      %v1616 = vpop.f32.mrf.mxu0
      %v1617 = vadd.f32 %v1270, %v1616
      %1618 = vmatmul.bf16.gmra.mxu0 %v1495
      %v1619 = vpop.f32.mrf.mxu0
      %v1620 = vadd.f32 %v1270, %v1619
      %v1621 = vpop.f32.mrf.mxu0
      %v1622 = vadd.f32 %v1270, %v1621
      %1623 = vmatmul.bf16.gmra.mxu0 %v1498
      %v1624 = vpop.f32.mrf.mxu0
      %v1625 = vadd.f32 %v1270, %v1624
      %v1626 = vpop.f32.mrf.mxu0
      %v1627 = vadd.f32 %v1270, %v1626
      %1628 = vdwg.mxu0
      %1629 = vmatpush.bf16.msra.mxu0 0
      %1630 = vmatpush.bf16.msra.mxu0 0
      %1631 = vmatpush.bf16.msra.mxu0 0
      %1632 = vmatpush.bf16.msra.mxu0 0
      %1633 = vmatpush.bf16.msra.mxu0 0
      %1634 = vmatpush.bf16.msra.mxu0 0
      %1635 = vmatpush.bf16.msra.mxu0 %v1420
      %1636 = vmatpush.bf16.msra.mxu0 %v1417
      %1637 = vmatmul.bf16.gmra.mxu0 %v1429
      %v1638 = vpop.f32.mrf.mxu0
      %v1639 = vadd.f32 %v1271, %v1638
      %v1640 = vpop.f32.mrf.mxu0
      %v1641 = vadd.f32 %v1271, %v1640
      %1642 = vmatmul.bf16.gmra.mxu0 %v1432
      %v1643 = vpop.f32.mrf.mxu0
      %v1644 = vadd.f32 %v1271, %v1643
      %v1645 = vpop.f32.mrf.mxu0
      %v1646 = vadd.f32 %v1271, %v1645
      %1647 = vmatmul.bf16.gmra.mxu0 %v1435
      %v1648 = vpop.f32.mrf.mxu0
      %v1649 = vadd.f32 %v1271, %v1648
      %v1650 = vpop.f32.mrf.mxu0
      %v1651 = vadd.f32 %v1271, %v1650
      %1652 = vmatmul.bf16.gmra.mxu0 %v1438
      %v1653 = vpop.f32.mrf.mxu0
      %v1654 = vadd.f32 %v1271, %v1653
      %v1655 = vpop.f32.mrf.mxu0
      %v1656 = vadd.f32 %v1271, %v1655
      %1657 = vmatmul.bf16.gmra.mxu0 %v1441
      %v1658 = vpop.f32.mrf.mxu0
      %v1659 = vadd.f32 %v1271, %v1658
      %v1660 = vpop.f32.mrf.mxu0
      %v1661 = vadd.f32 %v1271, %v1660
      %1662 = vmatmul.bf16.gmra.mxu0 %v1444
      %v1663 = vpop.f32.mrf.mxu0
      %v1664 = vadd.f32 %v1271, %v1663
      %v1665 = vpop.f32.mrf.mxu0
      %v1666 = vadd.f32 %v1271, %v1665
      %1667 = vmatmul.bf16.gmra.mxu0 %v1447
      %v1668 = vpop.f32.mrf.mxu0
      %v1669 = vadd.f32 %v1271, %v1668
      %v1670 = vpop.f32.mrf.mxu0
      %v1671 = vadd.f32 %v1271, %v1670
      %1672 = vmatmul.bf16.gmra.mxu0 %v1450
      %v1673 = vpop.f32.mrf.mxu0
      %v1674 = vadd.f32 %v1271, %v1673
      %v1675 = vpop.f32.mrf.mxu0
      %v1676 = vadd.f32 %v1271, %v1675
      %1677 = vmatmul.bf16.gmra.mxu0 %v1453
      %v1678 = vpop.f32.mrf.mxu0
      %v1679 = vadd.f32 %v1271, %v1678
      %v1680 = vpop.f32.mrf.mxu0
      %v1681 = vadd.f32 %v1271, %v1680
      %1682 = vmatmul.bf16.gmra.mxu0 %v1456
      %v1683 = vpop.f32.mrf.mxu0
      %v1684 = vadd.f32 %v1271, %v1683
      %v1685 = vpop.f32.mrf.mxu0
      %v1686 = vadd.f32 %v1271, %v1685
      %1687 = vmatmul.bf16.gmra.mxu0 %v1459
      %v1688 = vpop.f32.mrf.mxu0
      %v1689 = vadd.f32 %v1271, %v1688
      %v1690 = vpop.f32.mrf.mxu0
      %v1691 = vadd.f32 %v1271, %v1690
      %1692 = vmatmul.bf16.gmra.mxu0 %v1462
      %v1693 = vpop.f32.mrf.mxu0
      %v1694 = vadd.f32 %v1271, %v1693
      %v1695 = vpop.f32.mrf.mxu0
      %v1696 = vadd.f32 %v1271, %v1695
      %1697 = vmatmul.bf16.gmra.mxu0 %v1465
      %v1698 = vpop.f32.mrf.mxu0
      %v1699 = vadd.f32 %v1271, %v1698
      %v1700 = vpop.f32.mrf.mxu0
      %v1701 = vadd.f32 %v1271, %v1700
      %1702 = vmatmul.bf16.gmra.mxu0 %v1468
      %v1703 = vpop.f32.mrf.mxu0
      %v1704 = vadd.f32 %v1271, %v1703
      %v1705 = vpop.f32.mrf.mxu0
      %v1706 = vadd.f32 %v1271, %v1705
      %1707 = vmatmul.bf16.gmra.mxu0 %v1471
      %v1708 = vpop.f32.mrf.mxu0
      %v1709 = vadd.f32 %v1271, %v1708
      %v1710 = vpop.f32.mrf.mxu0
      %v1711 = vadd.f32 %v1271, %v1710
      %1712 = vmatmul.bf16.gmra.mxu0 %v1474
      %v1713 = vpop.f32.mrf.mxu0
      %v1714 = vadd.f32 %v1271, %v1713
      %v1715 = vpop.f32.mrf.mxu0
      %v1716 = vadd.f32 %v1271, %v1715
      %1717 = vmatmul.bf16.gmra.mxu0 %v1477
      %v1718 = vpop.f32.mrf.mxu0
      %v1719 = vadd.f32 %v1271, %v1718
      %v1720 = vpop.f32.mrf.mxu0
      %v1721 = vadd.f32 %v1271, %v1720
      %1722 = vmatmul.bf16.gmra.mxu0 %v1480
      %v1723 = vpop.f32.mrf.mxu0
      %v1724 = vadd.f32 %v1271, %v1723
      %v1725 = vpop.f32.mrf.mxu0
      %v1726 = vadd.f32 %v1271, %v1725
      %1727 = vmatmul.bf16.gmra.mxu0 %v1483
      %v1728 = vpop.f32.mrf.mxu0
      %v1729 = vadd.f32 %v1271, %v1728
      %v1730 = vpop.f32.mrf.mxu0
      %v1731 = vadd.f32 %v1271, %v1730
      %1732 = vmatmul.bf16.gmra.mxu0 %v1486
      %v1733 = vpop.f32.mrf.mxu0
      %v1734 = vadd.f32 %v1271, %v1733
      %v1735 = vpop.f32.mrf.mxu0
      %v1736 = vadd.f32 %v1271, %v1735
      %1737 = vmatmul.bf16.gmra.mxu0 %v1489
      %v1738 = vpop.f32.mrf.mxu0
      %v1739 = vadd.f32 %v1271, %v1738
      %v1740 = vpop.f32.mrf.mxu0
      %v1741 = vadd.f32 %v1271, %v1740
      %1742 = vmatmul.bf16.gmra.mxu0 %v1492
      %v1743 = vpop.f32.mrf.mxu0
      %v1744 = vadd.f32 %v1271, %v1743
      %v1745 = vpop.f32.mrf.mxu0
      %v1746 = vadd.f32 %v1271, %v1745
      %1747 = vmatmul.bf16.gmra.mxu0 %v1495
      %v1748 = vpop.f32.mrf.mxu0
      %v1749 = vadd.f32 %v1271, %v1748
      %v1750 = vpop.f32.mrf.mxu0
      %v1751 = vadd.f32 %v1271, %v1750
      %1752 = vmatmul.bf16.gmra.mxu0 %v1498
      %v1753 = vpop.f32.mrf.mxu0
      %v1754 = vadd.f32 %v1271, %v1753
      %v1755 = vpop.f32.mrf.mxu0
      %v1756 = vadd.f32 %v1271, %v1755
      %1757 = vdwg.mxu0
      %1758 = vmatpush.bf16.msra.mxu0 0
      %1759 = vmatpush.bf16.msra.mxu0 0
      %1760 = vmatpush.bf16.msra.mxu0 0
      %1761 = vmatpush.bf16.msra.mxu0 0
      %1762 = vmatpush.bf16.msra.mxu0 0
      %1763 = vmatpush.bf16.msra.mxu0 0
      %1764 = vmatpush.bf16.msra.mxu0 %v1421
      %1765 = vmatpush.bf16.msra.mxu0 %v1418
      %1766 = vmatmul.bf16.gmra.mxu0 %v1429
      %v1767 = vpop.f32.mrf.mxu0
      %v1768 = vadd.f32 %v1272, %v1767
      %v1769 = vpop.f32.mrf.mxu0
      %v1770 = vadd.f32 %v1272, %v1769
      %1771 = vmatmul.bf16.gmra.mxu0 %v1432
      %v1772 = vpop.f32.mrf.mxu0
      %v1773 = vadd.f32 %v1272, %v1772
      %v1774 = vpop.f32.mrf.mxu0
      %v1775 = vadd.f32 %v1272, %v1774
      %1776 = vmatmul.bf16.gmra.mxu0 %v1435
      %v1777 = vpop.f32.mrf.mxu0
      %v1778 = vadd.f32 %v1272, %v1777
      %v1779 = vpop.f32.mrf.mxu0
      %v1780 = vadd.f32 %v1272, %v1779
      %1781 = vmatmul.bf16.gmra.mxu0 %v1438
      %v1782 = vpop.f32.mrf.mxu0
      %v1783 = vadd.f32 %v1272, %v1782
      %v1784 = vpop.f32.mrf.mxu0
      %v1785 = vadd.f32 %v1272, %v1784
      %1786 = vmatmul.bf16.gmra.mxu0 %v1441
      %v1787 = vpop.f32.mrf.mxu0
      %v1788 = vadd.f32 %v1272, %v1787
      %v1789 = vpop.f32.mrf.mxu0
      %v1790 = vadd.f32 %v1272, %v1789
      %1791 = vmatmul.bf16.gmra.mxu0 %v1444
      %v1792 = vpop.f32.mrf.mxu0
      %v1793 = vadd.f32 %v1272, %v1792
      %v1794 = vpop.f32.mrf.mxu0
      %v1795 = vadd.f32 %v1272, %v1794
      %1796 = vmatmul.bf16.gmra.mxu0 %v1447
      %v1797 = vpop.f32.mrf.mxu0
      %v1798 = vadd.f32 %v1272, %v1797
      %v1799 = vpop.f32.mrf.mxu0
      %v1800 = vadd.f32 %v1272, %v1799
      %1801 = vmatmul.bf16.gmra.mxu0 %v1450
      %v1802 = vpop.f32.mrf.mxu0
      %v1803 = vadd.f32 %v1272, %v1802
      %v1804 = vpop.f32.mrf.mxu0
      %v1805 = vadd.f32 %v1272, %v1804
      %1806 = vmatmul.bf16.gmra.mxu0 %v1453
      %v1807 = vpop.f32.mrf.mxu0
      %v1808 = vadd.f32 %v1272, %v1807
      %v1809 = vpop.f32.mrf.mxu0
      %v1810 = vadd.f32 %v1272, %v1809
      %1811 = vmatmul.bf16.gmra.mxu0 %v1456
      %v1812 = vpop.f32.mrf.mxu0
      %v1813 = vadd.f32 %v1272, %v1812
      %v1814 = vpop.f32.mrf.mxu0
      %v1815 = vadd.f32 %v1272, %v1814
      %1816 = vmatmul.bf16.gmra.mxu0 %v1459
      %v1817 = vpop.f32.mrf.mxu0
      %v1818 = vadd.f32 %v1272, %v1817
      %v1819 = vpop.f32.mrf.mxu0
      %v1820 = vadd.f32 %v1272, %v1819
      %1821 = vmatmul.bf16.gmra.mxu0 %v1462
      %v1822 = vpop.f32.mrf.mxu0
      %v1823 = vadd.f32 %v1272, %v1822
      %v1824 = vpop.f32.mrf.mxu0
      %v1825 = vadd.f32 %v1272, %v1824
      %1826 = vmatmul.bf16.gmra.mxu0 %v1465
      %v1827 = vpop.f32.mrf.mxu0
      %v1828 = vadd.f32 %v1272, %v1827
      %v1829 = vpop.f32.mrf.mxu0
      %v1830 = vadd.f32 %v1272, %v1829
      %1831 = vmatmul.bf16.gmra.mxu0 %v1468
      %v1832 = vpop.f32.mrf.mxu0
      %v1833 = vadd.f32 %v1272, %v1832
      %v1834 = vpop.f32.mrf.mxu0
      %v1835 = vadd.f32 %v1272, %v1834
      %1836 = vmatmul.bf16.gmra.mxu0 %v1471
      %v1837 = vpop.f32.mrf.mxu0
      %v1838 = vadd.f32 %v1272, %v1837
      %v1839 = vpop.f32.mrf.mxu0
      %v1840 = vadd.f32 %v1272, %v1839
      %1841 = vmatmul.bf16.gmra.mxu0 %v1474
      %v1842 = vpop.f32.mrf.mxu0
      %v1843 = vadd.f32 %v1272, %v1842
      %v1844 = vpop.f32.mrf.mxu0
      %v1845 = vadd.f32 %v1272, %v1844
      %1846 = vmatmul.bf16.gmra.mxu0 %v1477
      %v1847 = vpop.f32.mrf.mxu0
      %v1848 = vadd.f32 %v1272, %v1847
      %v1849 = vpop.f32.mrf.mxu0
      %v1850 = vadd.f32 %v1272, %v1849
      %1851 = vmatmul.bf16.gmra.mxu0 %v1480
      %v1852 = vpop.f32.mrf.mxu0
      %v1853 = vadd.f32 %v1272, %v1852
      %v1854 = vpop.f32.mrf.mxu0
      %v1855 = vadd.f32 %v1272, %v1854
      %1856 = vmatmul.bf16.gmra.mxu0 %v1483
      %v1857 = vpop.f32.mrf.mxu0
      %v1858 = vadd.f32 %v1272, %v1857
      %v1859 = vpop.f32.mrf.mxu0
      %v1860 = vadd.f32 %v1272, %v1859
      %1861 = vmatmul.bf16.gmra.mxu0 %v1486
      %v1862 = vpop.f32.mrf.mxu0
      %v1863 = vadd.f32 %v1272, %v1862
      %v1864 = vpop.f32.mrf.mxu0
      %v1865 = vadd.f32 %v1272, %v1864
      %1866 = vmatmul.bf16.gmra.mxu0 %v1489
      %v1867 = vpop.f32.mrf.mxu0
      %v1868 = vadd.f32 %v1272, %v1867
      %v1869 = vpop.f32.mrf.mxu0
      %v1870 = vadd.f32 %v1272, %v1869
      %1871 = vmatmul.bf16.gmra.mxu0 %v1492
      %v1872 = vpop.f32.mrf.mxu0
      %v1873 = vadd.f32 %v1272, %v1872
      %v1874 = vpop.f32.mrf.mxu0
      %v1875 = vadd.f32 %v1272, %v1874
      %1876 = vmatmul.bf16.gmra.mxu0 %v1495
      %v1877 = vpop.f32.mrf.mxu0
      %v1878 = vadd.f32 %v1272, %v1877
      %v1879 = vpop.f32.mrf.mxu0
      %v1880 = vadd.f32 %v1272, %v1879
      %1881 = vmatmul.bf16.gmra.mxu0 %v1498
      %v1882 = vpop.f32.mrf.mxu0
      %v1883 = vadd.f32 %v1272, %v1882
      %v1884 = vpop.f32.mrf.mxu0
      %v1885 = vadd.f32 %v1272, %v1884
      %1886 = vdwg.mxu0
      %1887 = vst [vmem:[#allocation3] sm:$0xff] %v1510
      %1888 = vst [vmem:[#allocation3 + $0x8] sm:$0xff] %v1639
      %1889 = vst [vmem:[#allocation3 + $0x10] sm:$0xff] %v1768
      %1890 = vst [vmem:[#allocation3 + $0x18] sm:$0xff] %v1512
      %1891 = vst [vmem:[#allocation3 + $0x20] sm:$0xff] %v1641
      %1892 = vst [vmem:[#allocation3 + $0x28] sm:$0xff] %v1770
      %1893 = vst [vmem:[#allocation3 + $0x30] sm:$0xff] %v1515
      %1894 = vst [vmem:[#allocation3 + $0x38] sm:$0xff] %v1644
      %1895 = vst [vmem:[#allocation3 + $0x40] sm:$0xff] %v1773
      %1896 = vst [vmem:[#allocation3 + $0x48] sm:$0xff] %v1517
      %1897 = vst [vmem:[#allocation3 + $0x50] sm:$0xff] %v1646
      %1898 = vst [vmem:[#allocation3 + $0x58] sm:$0xff] %v1775
      %1899 = vst [vmem:[#allocation3 + $0x60] sm:$0xff] %v1520
      %1900 = vst [vmem:[#allocation3 + $0x68] sm:$0xff] %v1649
      %1901 = vst [vmem:[#allocation3 + $0x70] sm:$0xff] %v1778
      %1902 = vst [vmem:[#allocation3 + $0x78] sm:$0xff] %v1522
      %1903 = vst [vmem:[#allocation3 + $0x80] sm:$0xff] %v1651
      %1904 = vst [vmem:[#allocation3 + $0x88] sm:$0xff] %v1780
      %1905 = vst [vmem:[#allocation3 + $0x90] sm:$0xff] %v1525
      %1906 = vst [vmem:[#allocation3 + $0x98] sm:$0xff] %v1654
      %1907 = vst [vmem:[#allocation3 + $0xa0] sm:$0xff] %v1783
      %1908 = vst [vmem:[#allocation3 + $0xa8] sm:$0xff] %v1527
      %1909 = vst [vmem:[#allocation3 + $0xb0] sm:$0xff] %v1656
      %1910 = vst [vmem:[#allocation3 + $0xb8] sm:$0xff] %v1785
      %1911 = vst [vmem:[#allocation3 + $0xc0] sm:$0xff] %v1530
      %1912 = vst [vmem:[#allocation3 + $0xc8] sm:$0xff] %v1659
      %1913 = vst [vmem:[#allocation3 + $0xd0] sm:$0xff] %v1788
      %1914 = vst [vmem:[#allocation3 + $0xd8] sm:$0xff] %v1532
      %1915 = vst [vmem:[#allocation3 + $0xe0] sm:$0xff] %v1661
      %1916 = vst [vmem:[#allocation3 + $0xe8] sm:$0xff] %v1790
      %1917 = vst [vmem:[#allocation3 + $0xf0] sm:$0xff] %v1535
      %1918 = vst [vmem:[#allocation3 + $0xf8] sm:$0xff] %v1664
      %1919 = vst [vmem:[#allocation3 + $0x100] sm:$0xff] %v1793
      %1920 = vst [vmem:[#allocation3 + $0x108] sm:$0xff] %v1537
      %1921 = vst [vmem:[#allocation3 + $0x110] sm:$0xff] %v1666
      %1922 = vst [vmem:[#allocation3 + $0x118] sm:$0xff] %v1795
      %1923 = vst [vmem:[#allocation3 + $0x120] sm:$0xff] %v1540
      %1924 = vst [vmem:[#allocation3 + $0x128] sm:$0xff] %v1669
      %1925 = vst [vmem:[#allocation3 + $0x130] sm:$0xff] %v1798
      %1926 = vst [vmem:[#allocation3 + $0x138] sm:$0xff] %v1542
      %1927 = vst [vmem:[#allocation3 + $0x140] sm:$0xff] %v1671
      %1928 = vst [vmem:[#allocation3 + $0x148] sm:$0xff] %v1800
      %1929 = vst [vmem:[#allocation3 + $0x150] sm:$0xff] %v1545
      %1930 = vst [vmem:[#allocation3 + $0x158] sm:$0xff] %v1674
      %1931 = vst [vmem:[#allocation3 + $0x160] sm:$0xff] %v1803
      %1932 = vst [vmem:[#allocation3 + $0x168] sm:$0xff] %v1547
      %1933 = vst [vmem:[#allocation3 + $0x170] sm:$0xff] %v1676
      %1934 = vst [vmem:[#allocation3 + $0x178] sm:$0xff] %v1805
      %1935 = vst [vmem:[#allocation3 + $0x180] sm:$0xff] %v1550
      %1936 = vst [vmem:[#allocation3 + $0x188] sm:$0xff] %v1679
      %1937 = vst [vmem:[#allocation3 + $0x190] sm:$0xff] %v1808
      %1938 = vst [vmem:[#allocation3 + $0x198] sm:$0xff] %v1552
      %1939 = vst [vmem:[#allocation3 + $0x1a0] sm:$0xff] %v1681
      %1940 = vst [vmem:[#allocation3 + $0x1a8] sm:$0xff] %v1810
      %1941 = vst [vmem:[#allocation3 + $0x1b0] sm:$0xff] %v1555
      %1942 = vst [vmem:[#allocation3 + $0x1b8] sm:$0xff] %v1684
      %1943 = vst [vmem:[#allocation3 + $0x1c0] sm:$0xff] %v1813
      %1944 = vst [vmem:[#allocation3 + $0x1c8] sm:$0xff] %v1557
      %1945 = vst [vmem:[#allocation3 + $0x1d0] sm:$0xff] %v1686
      %1946 = vst [vmem:[#allocation3 + $0x1d8] sm:$0xff] %v1815
      %1947 = vst [vmem:[#allocation3 + $0x1e0] sm:$0xff] %v1560
      %1948 = vst [vmem:[#allocation3 + $0x1e8] sm:$0xff] %v1689
      %1949 = vst [vmem:[#allocation3 + $0x1f0] sm:$0xff] %v1818
      %1950 = vst [vmem:[#allocation3 + $0x1f8] sm:$0xff] %v1562
      %1951 = vst [vmem:[#allocation3 + $0x200] sm:$0xff] %v1691
      %1952 = vst [vmem:[#allocation3 + $0x208] sm:$0xff] %v1820
      %1953 = vst [vmem:[#allocation3 + $0x210] sm:$0xff] %v1565
      %1954 = vst [vmem:[#allocation3 + $0x218] sm:$0xff] %v1694
      %1955 = vst [vmem:[#allocation3 + $0x220] sm:$0xff] %v1823
      %1956 = vst [vmem:[#allocation3 + $0x228] sm:$0xff] %v1567
      %1957 = vst [vmem:[#allocation3 + $0x230] sm:$0xff] %v1696
      %1958 = vst [vmem:[#allocation3 + $0x238] sm:$0xff] %v1825
      %1959 = vst [vmem:[#allocation3 + $0x240] sm:$0xff] %v1570
      %1960 = vst [vmem:[#allocation3 + $0x248] sm:$0xff] %v1699
      %1961 = vst [vmem:[#allocation3 + $0x250] sm:$0xff] %v1828
      %1962 = vst [vmem:[#allocation3 + $0x258] sm:$0xff] %v1572
      %1963 = vst [vmem:[#allocation3 + $0x260] sm:$0xff] %v1701
      %1964 = vst [vmem:[#allocation3 + $0x268] sm:$0xff] %v1830
      %1965 = vst [vmem:[#allocation3 + $0x270] sm:$0xff] %v1575
      %1966 = vst [vmem:[#allocation3 + $0x278] sm:$0xff] %v1704
      %1967 = vst [vmem:[#allocation3 + $0x280] sm:$0xff] %v1833
      %1968 = vst [vmem:[#allocation3 + $0x288] sm:$0xff] %v1577
      %1969 = vst [vmem:[#allocation3 + $0x290] sm:$0xff] %v1706
      %1970 = vst [vmem:[#allocation3 + $0x298] sm:$0xff] %v1835
      %1971 = vst [vmem:[#allocation3 + $0x2a0] sm:$0xff] %v1580
      %1972 = vst [vmem:[#allocation3 + $0x2a8] sm:$0xff] %v1709
      %1973 = vst [vmem:[#allocation3 + $0x2b0] sm:$0xff] %v1838
      %1974 = vst [vmem:[#allocation3 + $0x2b8] sm:$0xff] %v1582
      %1975 = vst [vmem:[#allocation3 + $0x2c0] sm:$0xff] %v1711
      %1976 = vst [vmem:[#allocation3 + $0x2c8] sm:$0xff] %v1840
      %1977 = vst [vmem:[#allocation3 + $0x2d0] sm:$0xff] %v1585
      %1978 = vst [vmem:[#allocation3 + $0x2d8] sm:$0xff] %v1714
      %1979 = vst [vmem:[#allocation3 + $0x2e0] sm:$0xff] %v1843
      %1980 = vst [vmem:[#allocation3 + $0x2e8] sm:$0xff] %v1587
      %1981 = vst [vmem:[#allocation3 + $0x2f0] sm:$0xff] %v1716
      %1982 = vst [vmem:[#allocation3 + $0x2f8] sm:$0xff] %v1845
      %1983 = vst [vmem:[#allocation3 + $0x300] sm:$0xff] %v1590
      %1984 = vst [vmem:[#allocation3 + $0x308] sm:$0xff] %v1719
      %1985 = vst [vmem:[#allocation3 + $0x310] sm:$0xff] %v1848
      %1986 = vst [vmem:[#allocation3 + $0x318] sm:$0xff] %v1592
      %1987 = vst [vmem:[#allocation3 + $0x320] sm:$0xff] %v1721
      %1988 = vst [vmem:[#allocation3 + $0x328] sm:$0xff] %v1850
      %1989 = vst [vmem:[#allocation3 + $0x330] sm:$0xff] %v1595
      %1990 = vst [vmem:[#allocation3 + $0x338] sm:$0xff] %v1724
      %1991 = vst [vmem:[#allocation3 + $0x340] sm:$0xff] %v1853
      %1992 = vst [vmem:[#allocation3 + $0x348] sm:$0xff] %v1597
      %1993 = vst [vmem:[#allocation3 + $0x350] sm:$0xff] %v1726
      %1994 = vst [vmem:[#allocation3 + $0x358] sm:$0xff] %v1855
      %1995 = vst [vmem:[#allocation3 + $0x360] sm:$0xff] %v1600
      %1996 = vst [vmem:[#allocation3 + $0x368] sm:$0xff] %v1729
      %1997 = vst [vmem:[#allocation3 + $0x370] sm:$0xff] %v1858
      %1998 = vst [vmem:[#allocation3 + $0x378] sm:$0xff] %v1602
      %1999 = vst [vmem:[#allocation3 + $0x380] sm:$0xff] %v1731
      %2000 = vst [vmem:[#allocation3 + $0x388] sm:$0xff] %v1860
      %2001 = vst [vmem:[#allocation3 + $0x390] sm:$0xff] %v1605
      %2002 = vst [vmem:[#allocation3 + $0x398] sm:$0xff] %v1734
      %2003 = vst [vmem:[#allocation3 + $0x3a0] sm:$0xff] %v1863
      %2004 = vst [vmem:[#allocation3 + $0x3a8] sm:$0xff] %v1607
      %2005 = vst [vmem:[#allocation3 + $0x3b0] sm:$0xff] %v1736
      %2006 = vst [vmem:[#allocation3 + $0x3b8] sm:$0xff] %v1865
      %2007 = vst [vmem:[#allocation3 + $0x3c0] sm:$0xff] %v1610
      %2008 = vst [vmem:[#allocation3 + $0x3c8] sm:$0xff] %v1739
      %2009 = vst [vmem:[#allocation3 + $0x3d0] sm:$0xff] %v1868
      %2010 = vst [vmem:[#allocation3 + $0x3d8] sm:$0xff] %v1612
      %2011 = vst [vmem:[#allocation3 + $0x3e0] sm:$0xff] %v1741
      %2012 = vst [vmem:[#allocation3 + $0x3e8] sm:$0xff] %v1870
      %2013 = vst [vmem:[#allocation3 + $0x3f0] sm:$0xff] %v1615
      %2014 = vst [vmem:[#allocation3 + $0x3f8] sm:$0xff] %v1744
      %2015 = vst [vmem:[#allocation3 + $0x400] sm:$0xff] %v1873
      %2016 = vst [vmem:[#allocation3 + $0x408] sm:$0xff] %v1617
      %2017 = vst [vmem:[#allocation3 + $0x410] sm:$0xff] %v1746
      %2018 = vst [vmem:[#allocation3 + $0x418] sm:$0xff] %v1875
      %2019 = vst [vmem:[#allocation3 + $0x420] sm:$0xff] %v1620
      %2020 = vst [vmem:[#allocation3 + $0x428] sm:$0xff] %v1749
      %2021 = vst [vmem:[#allocation3 + $0x430] sm:$0xff] %v1878
      %2022 = vst [vmem:[#allocation3 + $0x438] sm:$0xff] %v1622
      %2023 = vst [vmem:[#allocation3 + $0x440] sm:$0xff] %v1751
      %2024 = vst [vmem:[#allocation3 + $0x448] sm:$0xff] %v1880
      %2025 = vst [vmem:[#allocation3 + $0x450] sm:$0xff] %v1625
      %2026 = vst [vmem:[#allocation3 + $0x458] sm:$0xff] %v1754
      %2027 = vst [vmem:[#allocation3 + $0x460] sm:$0xff] %v1883
      %2028 = vst [vmem:[#allocation3 + $0x468] sm:$0xff] %v1627
      %2029 = vst [vmem:[#allocation3 + $0x470] sm:$0xff] %v1756
      %2030 = vst [vmem:[#allocation3 + $0x478] sm:$0xff] %v1885
      %v2031 = vld [vmem:[%s2] sm:$0xff]
      %v2032 = vld [vmem:[%s5] sm:$0xff]
      %v2033 = vld [vmem:[%s5 + $0x8] sm:$0xf]
      %v2034 = vld [vmem:[%s5 + $0xc] sm:$0xff]
      %v2035 = vld [vmem:[%s5 + $0x14] sm:$0xf]
      %v2036 = vld [vmem:[%s5 + $0x18] sm:$0xff]
      %v2037 = vld [vmem:[%s5 + $0x20] sm:$0xf]
      %v2038 = vld [vmem:[%s5 + $0x24] sm:$0xff]
      %v2039 = vld [vmem:[%s5 + $0x2c] sm:$0xf]
      %v2040 = vld [vmem:[%s5 + $0x30] sm:$0xff]
      %v2041 = vld [vmem:[%s5 + $0x38] sm:$0xf]
      %v2042 = vld [vmem:[%s5 + $0x3c] sm:$0xff]
      %v2043 = vld [vmem:[%s5 + $0x44] sm:$0xf]
      %v2044 = vld [vmem:[%s5 + $0x48] sm:$0xff]
      %v2045 = vld [vmem:[%s5 + $0x50] sm:$0xf]
      %v2046 = vld [vmem:[%s5 + $0x54] sm:$0xff]
      %v2047 = vld [vmem:[%s5 + $0x5c] sm:$0xf]
      %v2048 = vld [vmem:[%s5 + $0x60] sm:$0xff]
      %v2049 = vld [vmem:[%s5 + $0x68] sm:$0xf]
      %v2050 = vld [vmem:[%s5 + $0x6c] sm:$0xff]
      %v2051 = vld [vmem:[%s5 + $0x74] sm:$0xf]
      %v2052 = vld [vmem:[%s5 + $0x78] sm:$0xff]
      %v2053 = vld [vmem:[%s5 + $0x80] sm:$0xf]
      %v2054 = vld [vmem:[%s5 + $0x84] sm:$0xff]
      %v2055 = vld [vmem:[%s5 + $0x8c] sm:$0xf]
      %v2056 = vld [vmem:[%s5 + $0x90] sm:$0xff]
      %v2057 = vld [vmem:[%s5 + $0x98] sm:$0xf]
      %v2058 = vld [vmem:[%s5 + $0x9c] sm:$0xff]
      %v2059 = vld [vmem:[%s5 + $0xa4] sm:$0xf]
      %v2060 = vld [vmem:[%s5 + $0xa8] sm:$0xff]
      %v2061 = vld [vmem:[%s5 + $0xb0] sm:$0xf]
      %v2062 = vld [vmem:[%s5 + $0xb4] sm:$0xff]
      %v2063 = vld [vmem:[%s5 + $0xbc] sm:$0xf]
      %v2064 = vld [vmem:[%s6] sm:$0xff]
      %v2065 = vld [vmem:[%s6 + $0x8] sm:$0xf]
      %v2066 = vld [vmem:[%s6 + $0xc] sm:$0xff]
      %v2067 = vld [vmem:[%s6 + $0x14] sm:$0xf]
      %v2068 = vld [vmem:[%s6 + $0x18] sm:$0xff]
      %v2069 = vld [vmem:[%s6 + $0x20] sm:$0xf]
      %v2070 = vld [vmem:[%s6 + $0x24] sm:$0xff]
      %v2071 = vld [vmem:[%s6 + $0x2c] sm:$0xf]
      %v2072 = vld [vmem:[%s6 + $0x30] sm:$0xff]
      %v2073 = vld [vmem:[%s6 + $0x38] sm:$0xf]
      %v2074 = vld [vmem:[%s6 + $0x3c] sm:$0xff]
      %v2075 = vld [vmem:[%s6 + $0x44] sm:$0xf]
      %v2076 = vld [vmem:[%s6 + $0x48] sm:$0xff]
      %v2077 = vld [vmem:[%s6 + $0x50] sm:$0xf]
      %v2078 = vld [vmem:[%s6 + $0x54] sm:$0xff]
      %v2079 = vld [vmem:[%s6 + $0x5c] sm:$0xf]
      %v2080 = vld [vmem:[%s6 + $0x60] sm:$0xff]
      %v2081 = vld [vmem:[%s6 + $0x68] sm:$0xf]
      %v2082 = vld [vmem:[%s6 + $0x6c] sm:$0xff]
      %v2083 = vld [vmem:[%s6 + $0x74] sm:$0xf]
      %v2084 = vld [vmem:[%s6 + $0x78] sm:$0xff]
      %v2085 = vld [vmem:[%s6 + $0x80] sm:$0xf]
      %v2086 = vld [vmem:[%s6 + $0x84] sm:$0xff]
      %v2087 = vld [vmem:[%s6 + $0x8c] sm:$0xf]
      %v2088 = vld [vmem:[%s6 + $0x90] sm:$0xff]
      %v2089 = vld [vmem:[%s6 + $0x98] sm:$0xf]
      %v2090 = vld [vmem:[%s6 + $0x9c] sm:$0xff]
      %v2091 = vld [vmem:[%s6 + $0xa4] sm:$0xf]
      %v2092 = vld [vmem:[%s6 + $0xa8] sm:$0xff]
      %v2093 = vld [vmem:[%s6 + $0xb0] sm:$0xf]
      %v2094 = vld [vmem:[%s6 + $0xb4] sm:$0xff]
      %v2095 = vld [vmem:[%s6 + $0xbc] sm:$0xf]
      %s2096 = scalar_lea.vmem %s7, 1
      %v2097 = vld [vmem:[%s2096] ss:$2 sm:$0x7]
      %v2099 = vperm.slane %v2097, 0
      %v2100 = vperm.slane %v2097, 1
      %v2101 = vperm.slane %v2097, 2
      %s2105 = scalar_lea.vmem %s7, 7
      %v2106 = vld [vmem:[%s2105] ss:$2 sm:$0x7]
      %v2108 = vperm.slane %v2106, 0
      %v2109 = vperm.slane %v2106, 1
      %v2110 = vperm.slane %v2106, 2
      %s2114 = smul.u32 %s21, 48
      %s2115 = ssub.s32 1, %s21
      %s2116 = smul.u32 %s2115, 48
      %v2117 = vld [vmem:[#allocation6] sm:$0xff]
      %v2118 = vld [vmem:[#allocation7] sm:$0xff]
      loop: start=0, step=1, limit=48
      $region57: #{forward.3} parent=51 // loop_pre_header
        _
      $region58: #{forward.3} parent=51 // loop_header
        %s2120 = sphi 0, %s2124
        %p2121 = scmp.ge.s32.totalorder %s2120, 48
        %v2125 = vphi %v2117, %v2528
        %v2126 = vphi %v2118, %v2587
      $region59: #{forward.3} parent=51 // loop_header_branch
        %2123 = sbr.rel (%p2121) target = $region63
      $region60: #{forward.3} parent=51 // loop_body
        %s2127 = ssub.s32 47, %s2120
        %s2128 = smul.u32 %s2120, 8
        %s2129 = smul.u32 %s2127, 8
        %s2130 = sshra.s32 %s2128, 3
        %s2131 = sand.u32 %s2128, 7
        %s2132 = smul.u32 %s2130, 3
        %s2133 = smul.addr %s2132, 8
        %s2134 = scalar_lea.vmem [#allocation2], %s2133
        %v2135 = vld [vmem:[%s2134] sm:$0xff]
        %v2136 = vld [vmem:[%s2134 + $0x8] sm:$0xff]
        %v2137 = vld [vmem:[%s2134 + $0x10] sm:$0xff]
        %s2138 = sshra.s32 %s2129, 3
        %s2139 = sand.u32 %s2129, 7
        %s2140 = smul.u32 %s2138, 3
        %s2141 = smul.addr %s2140, 8
        %s2142 = scalar_lea.vmem [#allocation3], %s2141
        %v2143 = vld [vmem:[%s2142] sm:$0xff]
        %v2144 = vld [vmem:[%s2142 + $0x8] sm:$0xff]
        %v2145 = vld [vmem:[%s2142 + $0x10] sm:$0xff]
        %v2146 = vpack.c.bf16 %v2125, %v2125
        %v2179 = vunpack.c.l.b16 %v2032
        %v2180 = vunpack.c.h.b16 %v2032
        %v2181 = vunpack.c.l.b16 %v2033
        %v2182 = vunpack.c.l.b16 %v2034
        %v2183 = vunpack.c.h.b16 %v2034
        %v2184 = vunpack.c.l.b16 %v2035
        %v2185 = vunpack.c.l.b16 %v2036
        %v2186 = vunpack.c.h.b16 %v2036
        %v2187 = vunpack.c.l.b16 %v2037
        %v2188 = vunpack.c.l.b16 %v2038
        %v2189 = vunpack.c.h.b16 %v2038
        %v2190 = vunpack.c.l.b16 %v2039
        %v2191 = vunpack.c.l.b16 %v2040
        %v2192 = vunpack.c.h.b16 %v2040
        %v2193 = vunpack.c.l.b16 %v2041
        %v2194 = vunpack.c.l.b16 %v2042
        %v2195 = vunpack.c.h.b16 %v2042
        %v2196 = vunpack.c.l.b16 %v2043
        %v2197 = vunpack.c.l.b16 %v2044
        %v2198 = vunpack.c.h.b16 %v2044
        %v2199 = vunpack.c.l.b16 %v2045
        %v2200 = vunpack.c.l.b16 %v2046
        %v2201 = vunpack.c.h.b16 %v2046
        %v2202 = vunpack.c.l.b16 %v2047
        %v2203 = vunpack.c.l.b16 %v2048
        %v2204 = vunpack.c.h.b16 %v2048
        %v2205 = vunpack.c.l.b16 %v2049
        %v2206 = vunpack.c.l.b16 %v2050
        %v2207 = vunpack.c.h.b16 %v2050
        %v2208 = vunpack.c.l.b16 %v2051
        %v2209 = vunpack.c.l.b16 %v2052
        %v2210 = vunpack.c.h.b16 %v2052
        %v2211 = vunpack.c.l.b16 %v2053
        %v2212 = vunpack.c.l.b16 %v2054
        %v2213 = vunpack.c.h.b16 %v2054
        %v2214 = vunpack.c.l.b16 %v2055
        %v2215 = vunpack.c.l.b16 %v2056
        %v2216 = vunpack.c.h.b16 %v2056
        %v2217 = vunpack.c.l.b16 %v2057
        %v2218 = vunpack.c.l.b16 %v2058
        %v2219 = vunpack.c.h.b16 %v2058
        %v2220 = vunpack.c.l.b16 %v2059
        %v2221 = vunpack.c.l.b16 %v2060
        %v2222 = vunpack.c.h.b16 %v2060
        %v2223 = vunpack.c.l.b16 %v2061
        %v2224 = vunpack.c.l.b16 %v2062
        %v2225 = vunpack.c.h.b16 %v2062
        %v2226 = vunpack.c.l.b16 %v2063
        %v2227 = vpack.c.b16 %v2182, %v2179
        %v2228 = vpack.c.b16 %v2183, %v2180
        %v2229 = vpack.c.b16 %v2184, %v2181
        %v2230 = vpack.c.b16 %v2188, %v2185
        %v2231 = vpack.c.b16 %v2189, %v2186
        %v2232 = vpack.c.b16 %v2190, %v2187
        %v2233 = vpack.c.b16 %v2194, %v2191
        %v2234 = vpack.c.b16 %v2195, %v2192
        %v2235 = vpack.c.b16 %v2196, %v2193
        %v2236 = vpack.c.b16 %v2200, %v2197
        %v2237 = vpack.c.b16 %v2201, %v2198
        %v2238 = vpack.c.b16 %v2202, %v2199
        %v2239 = vpack.c.b16 %v2206, %v2203
        %v2240 = vpack.c.b16 %v2207, %v2204
        %v2241 = vpack.c.b16 %v2208, %v2205
        %v2242 = vpack.c.b16 %v2212, %v2209
        %v2243 = vpack.c.b16 %v2213, %v2210
        %v2244 = vpack.c.b16 %v2214, %v2211
        %v2245 = vpack.c.b16 %v2218, %v2215
        %v2246 = vpack.c.b16 %v2219, %v2216
        %v2247 = vpack.c.b16 %v2220, %v2217
        %v2248 = vpack.c.b16 %v2224, %v2221
        %v2249 = vpack.c.b16 %v2225, %v2222
        %v2250 = vpack.c.b16 %v2226, %v2223
        %2275 = vmatpush.bf16.msra.mxu0 %v2248
        %2276 = vmatpush.bf16.msra.mxu0 %v2245
        %2277 = vmatpush.bf16.msra.mxu0 %v2242
        %2278 = vmatpush.bf16.msra.mxu0 %v2239
        %2279 = vmatpush.bf16.msra.mxu0 %v2236
        %2280 = vmatpush.bf16.msra.mxu0 %v2233
        %2281 = vmatpush.bf16.msra.mxu0 %v2230
        %2282 = vmatpush.bf16.msra.mxu0 %v2227
        %2283 = vmatmul.bf16.gmra.mxu0 %v2146
        %v2284 = vpop.f32.mrf.mxu0
        %v2285 = vadd.f32 %v2099, %v2284
        %v2286 = vpop.f32.mrf.mxu0
        %2287 = vdwg.mxu0
        %2288 = vmatpush.bf16.msra.mxu0 %v2249
        %2289 = vmatpush.bf16.msra.mxu0 %v2246
        %2290 = vmatpush.bf16.msra.mxu0 %v2243
        %2291 = vmatpush.bf16.msra.mxu0 %v2240
        %2292 = vmatpush.bf16.msra.mxu0 %v2237
        %2293 = vmatpush.bf16.msra.mxu0 %v2234
        %2294 = vmatpush.bf16.msra.mxu0 %v2231
        %2295 = vmatpush.bf16.msra.mxu0 %v2228
        %2296 = vmatmul.bf16.gmra.mxu0 %v2146
        %v2297 = vpop.f32.mrf.mxu0
        %v2298 = vadd.f32 %v2100, %v2297
        %v2299 = vpop.f32.mrf.mxu0
        %2300 = vdwg.mxu0
        %2301 = vmatpush.bf16.msra.mxu0 %v2250
        %2302 = vmatpush.bf16.msra.mxu0 %v2247
        %2303 = vmatpush.bf16.msra.mxu0 %v2244
        %2304 = vmatpush.bf16.msra.mxu0 %v2241
        %2305 = vmatpush.bf16.msra.mxu0 %v2238
        %2306 = vmatpush.bf16.msra.mxu0 %v2235
        %2307 = vmatpush.bf16.msra.mxu0 %v2232
        %2308 = vmatpush.bf16.msra.mxu0 %v2229
        %2309 = vmatmul.bf16.gmra.mxu0 %v2146
        %v2310 = vpop.f32.mrf.mxu0
        %v2311 = vadd.f32 %v2101, %v2310
        %v2312 = vpop.f32.mrf.mxu0
        %2313 = vdwg.mxu0
        %v2314 = vpack.c.bf16 %v2126, %v2126
        %v2347 = vunpack.c.l.b16 %v2064
        %v2348 = vunpack.c.h.b16 %v2064
        %v2349 = vunpack.c.l.b16 %v2065
        %v2350 = vunpack.c.l.b16 %v2066
        %v2351 = vunpack.c.h.b16 %v2066
        %v2352 = vunpack.c.l.b16 %v2067
        %v2353 = vunpack.c.l.b16 %v2068
        %v2354 = vunpack.c.h.b16 %v2068
        %v2355 = vunpack.c.l.b16 %v2069
        %v2356 = vunpack.c.l.b16 %v2070
        %v2357 = vunpack.c.h.b16 %v2070
        %v2358 = vunpack.c.l.b16 %v2071
        %v2359 = vunpack.c.l.b16 %v2072
        %v2360 = vunpack.c.h.b16 %v2072
        %v2361 = vunpack.c.l.b16 %v2073
        %v2362 = vunpack.c.l.b16 %v2074
        %v2363 = vunpack.c.h.b16 %v2074
        %v2364 = vunpack.c.l.b16 %v2075
        %v2365 = vunpack.c.l.b16 %v2076
        %v2366 = vunpack.c.h.b16 %v2076
        %v2367 = vunpack.c.l.b16 %v2077
        %v2368 = vunpack.c.l.b16 %v2078
        %v2369 = vunpack.c.h.b16 %v2078
        %v2370 = vunpack.c.l.b16 %v2079
        %v2371 = vunpack.c.l.b16 %v2080
        %v2372 = vunpack.c.h.b16 %v2080
        %v2373 = vunpack.c.l.b16 %v2081
        %v2374 = vunpack.c.l.b16 %v2082
        %v2375 = vunpack.c.h.b16 %v2082
        %v2376 = vunpack.c.l.b16 %v2083
        %v2377 = vunpack.c.l.b16 %v2084
        %v2378 = vunpack.c.h.b16 %v2084
        %v2379 = vunpack.c.l.b16 %v2085
        %v2380 = vunpack.c.l.b16 %v2086
        %v2381 = vunpack.c.h.b16 %v2086
        %v2382 = vunpack.c.l.b16 %v2087
        %v2383 = vunpack.c.l.b16 %v2088
        %v2384 = vunpack.c.h.b16 %v2088
        %v2385 = vunpack.c.l.b16 %v2089
        %v2386 = vunpack.c.l.b16 %v2090
        %v2387 = vunpack.c.h.b16 %v2090
        %v2388 = vunpack.c.l.b16 %v2091
        %v2389 = vunpack.c.l.b16 %v2092
        %v2390 = vunpack.c.h.b16 %v2092
        %v2391 = vunpack.c.l.b16 %v2093
        %v2392 = vunpack.c.l.b16 %v2094
        %v2393 = vunpack.c.h.b16 %v2094
        %v2394 = vunpack.c.l.b16 %v2095
        %v2395 = vpack.c.b16 %v2350, %v2347
        %v2396 = vpack.c.b16 %v2351, %v2348
        %v2397 = vpack.c.b16 %v2352, %v2349
        %v2398 = vpack.c.b16 %v2356, %v2353
        %v2399 = vpack.c.b16 %v2357, %v2354
        %v2400 = vpack.c.b16 %v2358, %v2355
        %v2401 = vpack.c.b16 %v2362, %v2359
        %v2402 = vpack.c.b16 %v2363, %v2360
        %v2403 = vpack.c.b16 %v2364, %v2361
        %v2404 = vpack.c.b16 %v2368, %v2365
        %v2405 = vpack.c.b16 %v2369, %v2366
        %v2406 = vpack.c.b16 %v2370, %v2367
        %v2407 = vpack.c.b16 %v2374, %v2371
        %v2408 = vpack.c.b16 %v2375, %v2372
        %v2409 = vpack.c.b16 %v2376, %v2373
        %v2410 = vpack.c.b16 %v2380, %v2377
        %v2411 = vpack.c.b16 %v2381, %v2378
        %v2412 = vpack.c.b16 %v2382, %v2379
        %v2413 = vpack.c.b16 %v2386, %v2383
        %v2414 = vpack.c.b16 %v2387, %v2384
        %v2415 = vpack.c.b16 %v2388, %v2385
        %v2416 = vpack.c.b16 %v2392, %v2389
        %v2417 = vpack.c.b16 %v2393, %v2390
        %v2418 = vpack.c.b16 %v2394, %v2391
        %2443 = vmatpush.bf16.msra.mxu0 %v2416
        %2444 = vmatpush.bf16.msra.mxu0 %v2413
        %2445 = vmatpush.bf16.msra.mxu0 %v2410
        %2446 = vmatpush.bf16.msra.mxu0 %v2407
        %2447 = vmatpush.bf16.msra.mxu0 %v2404
        %2448 = vmatpush.bf16.msra.mxu0 %v2401
        %2449 = vmatpush.bf16.msra.mxu0 %v2398
        %2450 = vmatpush.bf16.msra.mxu0 %v2395
        %2451 = vmatmul.bf16.gmra.mxu0 %v2314
        %v2452 = vpop.f32.mrf.mxu0
        %v2453 = vadd.f32 %v2108, %v2452
        %v2454 = vpop.f32.mrf.mxu0
        %2455 = vdwg.mxu0
        %2456 = vmatpush.bf16.msra.mxu0 %v2417
        %2457 = vmatpush.bf16.msra.mxu0 %v2414
        %2458 = vmatpush.bf16.msra.mxu0 %v2411
        %2459 = vmatpush.bf16.msra.mxu0 %v2408
        %2460 = vmatpush.bf16.msra.mxu0 %v2405
        %2461 = vmatpush.bf16.msra.mxu0 %v2402
        %2462 = vmatpush.bf16.msra.mxu0 %v2399
        %2463 = vmatpush.bf16.msra.mxu0 %v2396
        %2464 = vmatmul.bf16.gmra.mxu0 %v2314
        %v2465 = vpop.f32.mrf.mxu0
        %v2466 = vadd.f32 %v2109, %v2465
        %v2467 = vpop.f32.mrf.mxu0
        %2468 = vdwg.mxu0
        %2469 = vmatpush.bf16.msra.mxu0 %v2418
        %2470 = vmatpush.bf16.msra.mxu0 %v2415
        %2471 = vmatpush.bf16.msra.mxu0 %v2412
        %2472 = vmatpush.bf16.msra.mxu0 %v2409
        %2473 = vmatpush.bf16.msra.mxu0 %v2406
        %2474 = vmatpush.bf16.msra.mxu0 %v2403
        %2475 = vmatpush.bf16.msra.mxu0 %v2400
        %2476 = vmatpush.bf16.msra.mxu0 %v2397
        %2477 = vmatmul.bf16.gmra.mxu0 %v2314
        %v2478 = vpop.f32.mrf.mxu0
        %v2479 = vadd.f32 %v2110, %v2478
        %v2480 = vpop.f32.mrf.mxu0
        %2481 = vdwg.mxu0
        %v2482 = vadd.f32 %v2135, %v2285
        %v2483 = vxor.u32 %v2482, 2147483648
        %v2484 = vmul.f32 %v2483, 1.442695
        %v2485 = vpow.pop %v2484
        %v2486 = vadd.f32 %v2485, 1.0
        %v2487 = vrcp.pop %v2486
        %v2488 = vmul.f32 %v2486, %v2487
        %v2489 = vsub.f32 1.0, %v2488
        %v2490 = vmul.f32 %v2487, %v2489
        %v2491 = vadd.f32 %v2487, %v2490
        %vm2492 = vweird.f32 %v2486
        %vm2493 = vweird.f32 %v2487
        %vm2494 = vmor %vm2492, %vm2493
        %v2495 = vsel %vm2494, %v2487, %v2491
        %v2496 = vand.u32 2147483647, %v2486
        %vm2497 = vcmp.eq.f32.partialorder %v2496, 8.507059e+37
        %v2498 = vand.u32 %v2486, 2147483648
        %v2499 = vor.u32 1.1754944e-38, %v2498
        %v2500 = vsel %vm2497, %v2499, %v2495
        %v2501 = vmul.f32 1.0, %v2500
        %v2502 = vadd.f32 %v2136, %v2298
        %v2503 = vxor.u32 %v2502, 2147483648
        %v2504 = vmul.f32 %v2503, 1.442695
        %v2505 = vpow.pop %v2504
        %v2506 = vadd.f32 %v2505, 1.0
        %v2507 = vrcp.pop %v2506
        %v2508 = vmul.f32 %v2506, %v2507
        %v2509 = vsub.f32 1.0, %v2508
        %v2510 = vmul.f32 %v2507, %v2509
        %v2511 = vadd.f32 %v2507, %v2510
        %vm2512 = vweird.f32 %v2506
        %vm2513 = vweird.f32 %v2507
        %vm2514 = vmor %vm2512, %vm2513
        %v2515 = vsel %vm2514, %v2507, %v2511
        %v2516 = vand.u32 2147483647, %v2506
        %vm2517 = vcmp.eq.f32.partialorder %v2516, 8.507059e+37
        %v2518 = vand.u32 %v2506, 2147483648
        %v2519 = vor.u32 1.1754944e-38, %v2518
        %v2520 = vsel %vm2517, %v2519, %v2515
        %v2521 = vmul.f32 1.0, %v2520
        %v2522 = vmul.f32 %v2501, %v2311
        %v2523 = vadd.f32 %v2137, %v2522
        %v2524 = vtanh.pop %v2523
        %v2525 = vsub.f32 1.0, %v2521
        %v2526 = vmul.f32 %v2525, %v2524
        %v2527 = vmul.f32 %v2521, %v2125
        %v2528 = vadd.f32 %v2526, %v2527
        %v2529 = vadd.f32 %v2143, %v2453
        %v2530 = vxor.u32 %v2529, 2147483648
        %v2531 = vmul.f32 %v2530, 1.442695
        %v2532 = vpow.pop %v2531
        %v2533 = vadd.f32 %v2532, 1.0
        %v2534 = vrcp.pop %v2533
        %v2535 = vmul.f32 %v2533, %v2534
        %v2536 = vsub.f32 1.0, %v2535
        %v2537 = vmul.f32 %v2534, %v2536
        %v2538 = vadd.f32 %v2534, %v2537
        %vm2539 = vweird.f32 %v2533
        %vm2540 = vweird.f32 %v2534
        %vm2541 = vmor %vm2539, %vm2540
        %v2542 = vsel %vm2541, %v2534, %v2538
        %v2543 = vand.u32 2147483647, %v2533
        %vm2544 = vcmp.eq.f32.partialorder %v2543, 8.507059e+37
        %v2545 = vand.u32 %v2533, 2147483648
        %v2546 = vor.u32 1.1754944e-38, %v2545
        %v2547 = vsel %vm2544, %v2546, %v2542
        %v2548 = vmul.f32 1.0, %v2547
        %v2549 = vadd.f32 %v2144, %v2466
        %v2550 = vxor.u32 %v2549, 2147483648
        %v2551 = vmul.f32 %v2550, 1.442695
        %v2552 = vpow.pop %v2551
        %v2553 = vadd.f32 %v2552, 1.0
        %v2554 = vrcp.pop %v2553
        %v2555 = vmul.f32 %v2553, %v2554
        %v2556 = vsub.f32 1.0, %v2555
        %v2557 = vmul.f32 %v2554, %v2556
        %v2558 = vadd.f32 %v2554, %v2557
        %vm2559 = vweird.f32 %v2553
        %vm2560 = vweird.f32 %v2554
        %vm2561 = vmor %vm2559, %vm2560
        %v2562 = vsel %vm2561, %v2554, %v2558
        %v2563 = vand.u32 2147483647, %v2553
        %vm2564 = vcmp.eq.f32.partialorder %v2563, 8.507059e+37
        %v2565 = vand.u32 %v2553, 2147483648
        %v2566 = vor.u32 1.1754944e-38, %v2565
        %v2567 = vsel %vm2564, %v2566, %v2562
        %v2568 = vmul.f32 1.0, %v2567
        %v2569 = vmul.f32 %v2548, %v2479
        %v2570 = vadd.f32 %v2145, %v2569
        %v2571 = vtanh.pop %v2570
        %v2572 = vsub.f32 1.0, %v2568
        %v2573 = vmul.f32 %v2572, %v2571
        %v2574 = vmul.f32 %v2568, %v2126
        %v2575 = vadd.f32 %v2573, %v2574
        %s2576 = sadd.s32 %s2114, %s2120
        %v2577 = vstv %s2576
        %vm2578 = vcmp.lt.s32.totalorder %v2577, %v2031
        %s2579 = sadd.s32 %s2116, %s2127
        %v2580 = vstv %s2579
        %vm2581 = vcmp.lt.s32.totalorder %v2580, %v2031
        %v2582 = vsel %vm2581, 1, 0
        %2583 = vset.pattern.permute.xlu0 0
        %2584 = vperm.xlu0 %2583, %v2582
        %v2585 = vpop.permute.xlu0 %2584
        %vm2586 = vcmp.eq.s32.totalorder %v2585, 1
        %v2587 = vsel %vm2586, %v2575, 0.0
        %v2588 = vsel %vm2578, 1, 0
        %2589 = vset.pattern.permute.xlu0 0
        %2590 = vperm.xlu0 %2589, %v2588
        %v2591 = vpop.permute.xlu0 %2590
        %vm2592 = vcmp.eq.s32.totalorder %v2591, 1
        %v2593 = vsel %vm2592, %v2528, 0.0
        %s2594 = scalar_lea.vmem [#allocation4], %s2128
        %2595 = vst [vmem:[%s2594] sm:$0xff] %v2593
        %s2596 = scalar_lea.vmem [#allocation5], %s2129
        %2597 = vst [vmem:[%s2596] sm:$0xff] %v2587
      $region61: #{forward.3} parent=51 // loop_footer
        %s2124 = sadd.s32 1, %s2120
      $region62: #{forward.3} parent=51 // loop_footer_branch
        %2119 = sbr.rel target = $region58
      $region63: #{forward.3} parent=51 // loop_exit
        _
      %2598 = vst [vmem:[#allocation6] sm:$0xff] %v2125
      %2599 = vst [vmem:[#allocation7] sm:$0xff] %v2126
      %v2600 = vld [vmem:[#allocation4] sm:$0xff]
      %v2601 = vld [vmem:[#allocation4 + $0x8] sm:$0xff]
      %v2602 = vld [vmem:[#allocation4 + $0x10] sm:$0xff]
      %v2603 = vld [vmem:[#allocation4 + $0x18] sm:$0xff]
      %v2604 = vld [vmem:[#allocation4 + $0x20] sm:$0xff]
      %v2605 = vld [vmem:[#allocation4 + $0x28] sm:$0xff]
      %v2606 = vld [vmem:[#allocation4 + $0x30] sm:$0xff]
      %v2607 = vld [vmem:[#allocation4 + $0x38] sm:$0xff]
      %v2608 = vld [vmem:[#allocation4 + $0x40] sm:$0xff]
      %v2609 = vld [vmem:[#allocation4 + $0x48] sm:$0xff]
      %v2610 = vld [vmem:[#allocation4 + $0x50] sm:$0xff]
      %v2611 = vld [vmem:[#allocation4 + $0x58] sm:$0xff]
      %v2612 = vld [vmem:[#allocation4 + $0x60] sm:$0xff]
      %v2613 = vld [vmem:[#allocation4 + $0x68] sm:$0xff]
      %v2614 = vld [vmem:[#allocation4 + $0x70] sm:$0xff]
      %v2615 = vld [vmem:[#allocation4 + $0x78] sm:$0xff]
      %v2616 = vld [vmem:[#allocation4 + $0x80] sm:$0xff]
      %v2617 = vld [vmem:[#allocation4 + $0x88] sm:$0xff]
      %v2618 = vld [vmem:[#allocation4 + $0x90] sm:$0xff]
      %v2619 = vld [vmem:[#allocation4 + $0x98] sm:$0xff]
      %v2620 = vld [vmem:[#allocation4 + $0xa0] sm:$0xff]
      %v2621 = vld [vmem:[#allocation4 + $0xa8] sm:$0xff]
      %v2622 = vld [vmem:[#allocation4 + $0xb0] sm:$0xff]
      %v2623 = vld [vmem:[#allocation4 + $0xb8] sm:$0xff]
      %v2624 = vld [vmem:[#allocation4 + $0xc0] sm:$0xff]
      %v2625 = vld [vmem:[#allocation4 + $0xc8] sm:$0xff]
      %v2626 = vld [vmem:[#allocation4 + $0xd0] sm:$0xff]
      %v2627 = vld [vmem:[#allocation4 + $0xd8] sm:$0xff]
      %v2628 = vld [vmem:[#allocation4 + $0xe0] sm:$0xff]
      %v2629 = vld [vmem:[#allocation4 + $0xe8] sm:$0xff]
      %v2630 = vld [vmem:[#allocation4 + $0xf0] sm:$0xff]
      %v2631 = vld [vmem:[#allocation4 + $0xf8] sm:$0xff]
      %v2632 = vld [vmem:[#allocation4 + $0x100] sm:$0xff]
      %v2633 = vld [vmem:[#allocation4 + $0x108] sm:$0xff]
      %v2634 = vld [vmem:[#allocation4 + $0x110] sm:$0xff]
      %v2635 = vld [vmem:[#allocation4 + $0x118] sm:$0xff]
      %v2636 = vld [vmem:[#allocation4 + $0x120] sm:$0xff]
      %v2637 = vld [vmem:[#allocation4 + $0x128] sm:$0xff]
      %v2638 = vld [vmem:[#allocation4 + $0x130] sm:$0xff]
      %v2639 = vld [vmem:[#allocation4 + $0x138] sm:$0xff]
      %v2640 = vld [vmem:[#allocation4 + $0x140] sm:$0xff]
      %v2641 = vld [vmem:[#allocation4 + $0x148] sm:$0xff]
      %v2642 = vld [vmem:[#allocation4 + $0x150] sm:$0xff]
      %v2643 = vld [vmem:[#allocation4 + $0x158] sm:$0xff]
      %v2644 = vld [vmem:[#allocation4 + $0x160] sm:$0xff]
      %v2645 = vld [vmem:[#allocation4 + $0x168] sm:$0xff]
      %v2646 = vld [vmem:[#allocation4 + $0x170] sm:$0xff]
      %v2647 = vld [vmem:[#allocation4 + $0x178] sm:$0xff]
      %v2648 = vpack.c.bf16 %v2600, %v2600
      %v2649 = vpack.c.bf16 %v2601, %v2601
      %v2650 = vpack.c.bf16 %v2602, %v2602
      %v2651 = vpack.c.bf16 %v2603, %v2603
      %v2652 = vpack.c.bf16 %v2604, %v2604
      %v2653 = vpack.c.bf16 %v2605, %v2605
      %v2654 = vpack.c.bf16 %v2606, %v2606
      %v2655 = vpack.c.bf16 %v2607, %v2607
      %v2656 = vpack.c.bf16 %v2608, %v2608
      %v2657 = vpack.c.bf16 %v2609, %v2609
      %v2658 = vpack.c.bf16 %v2610, %v2610
      %v2659 = vpack.c.bf16 %v2611, %v2611
      %v2660 = vpack.c.bf16 %v2612, %v2612
      %v2661 = vpack.c.bf16 %v2613, %v2613
      %v2662 = vpack.c.bf16 %v2614, %v2614
      %v2663 = vpack.c.bf16 %v2615, %v2615
      %v2664 = vpack.c.bf16 %v2616, %v2616
      %v2665 = vpack.c.bf16 %v2617, %v2617
      %v2666 = vpack.c.bf16 %v2618, %v2618
      %v2667 = vpack.c.bf16 %v2619, %v2619
      %v2668 = vpack.c.bf16 %v2620, %v2620
      %v2669 = vpack.c.bf16 %v2621, %v2621
      %v2670 = vpack.c.bf16 %v2622, %v2622
      %v2671 = vpack.c.bf16 %v2623, %v2623
      %v2672 = vpack.c.bf16 %v2624, %v2624
      %v2673 = vpack.c.bf16 %v2625, %v2625
      %v2674 = vpack.c.bf16 %v2626, %v2626
      %v2675 = vpack.c.bf16 %v2627, %v2627
      %v2676 = vpack.c.bf16 %v2628, %v2628
      %v2677 = vpack.c.bf16 %v2629, %v2629
      %v2678 = vpack.c.bf16 %v2630, %v2630
      %v2679 = vpack.c.bf16 %v2631, %v2631
      %v2680 = vpack.c.bf16 %v2632, %v2632
      %v2681 = vpack.c.bf16 %v2633, %v2633
      %v2682 = vpack.c.bf16 %v2634, %v2634
      %v2683 = vpack.c.bf16 %v2635, %v2635
      %v2684 = vpack.c.bf16 %v2636, %v2636
      %v2685 = vpack.c.bf16 %v2637, %v2637
      %v2686 = vpack.c.bf16 %v2638, %v2638
      %v2687 = vpack.c.bf16 %v2639, %v2639
      %v2688 = vpack.c.bf16 %v2640, %v2640
      %v2689 = vpack.c.bf16 %v2641, %v2641
      %v2690 = vpack.c.bf16 %v2642, %v2642
      %v2691 = vpack.c.bf16 %v2643, %v2643
      %v2692 = vpack.c.bf16 %v2644, %v2644
      %v2693 = vpack.c.bf16 %v2645, %v2645
      %v2694 = vpack.c.bf16 %v2646, %v2646
      %v2695 = vpack.c.bf16 %v2647, %v2647
      %2696 = vst [vmem:[%s374] sm:$0xf] %v2648
      %2697 = vst [vmem:[%s374 + $0x4] sm:$0xf] %v2649
      %2698 = vst [vmem:[%s374 + $0x8] sm:$0xf] %v2650
      %2699 = vst [vmem:[%s374 + $0xc] sm:$0xf] %v2651
      %2700 = vst [vmem:[%s374 + $0x10] sm:$0xf] %v2652
      %2701 = vst [vmem:[%s374 + $0x14] sm:$0xf] %v2653
      %2702 = vst [vmem:[%s374 + $0x18] sm:$0xf] %v2654
      %2703 = vst [vmem:[%s374 + $0x1c] sm:$0xf] %v2655
      %2704 = vst [vmem:[%s374 + $0x20] sm:$0xf] %v2656
      %2705 = vst [vmem:[%s374 + $0x24] sm:$0xf] %v2657
      %2706 = vst [vmem:[%s374 + $0x28] sm:$0xf] %v2658
      %2707 = vst [vmem:[%s374 + $0x2c] sm:$0xf] %v2659
      %2708 = vst [vmem:[%s374 + $0x30] sm:$0xf] %v2660
      %2709 = vst [vmem:[%s374 + $0x34] sm:$0xf] %v2661
      %2710 = vst [vmem:[%s374 + $0x38] sm:$0xf] %v2662
      %2711 = vst [vmem:[%s374 + $0x3c] sm:$0xf] %v2663
      %2712 = vst [vmem:[%s374 + $0x40] sm:$0xf] %v2664
      %2713 = vst [vmem:[%s374 + $0x44] sm:$0xf] %v2665
      %2714 = vst [vmem:[%s374 + $0x48] sm:$0xf] %v2666
      %2715 = vst [vmem:[%s374 + $0x4c] sm:$0xf] %v2667
      %2716 = vst [vmem:[%s374 + $0x50] sm:$0xf] %v2668
      %2717 = vst [vmem:[%s374 + $0x54] sm:$0xf] %v2669
      %2718 = vst [vmem:[%s374 + $0x58] sm:$0xf] %v2670
      %2719 = vst [vmem:[%s374 + $0x5c] sm:$0xf] %v2671
      %2720 = vst [vmem:[%s374 + $0x60] sm:$0xf] %v2672
      %2721 = vst [vmem:[%s374 + $0x64] sm:$0xf] %v2673
      %2722 = vst [vmem:[%s374 + $0x68] sm:$0xf] %v2674
      %2723 = vst [vmem:[%s374 + $0x6c] sm:$0xf] %v2675
      %2724 = vst [vmem:[%s374 + $0x70] sm:$0xf] %v2676
      %2725 = vst [vmem:[%s374 + $0x74] sm:$0xf] %v2677
      %2726 = vst [vmem:[%s374 + $0x78] sm:$0xf] %v2678
      %2727 = vst [vmem:[%s374 + $0x7c] sm:$0xf] %v2679
      %2728 = vst [vmem:[%s374 + $0x80] sm:$0xf] %v2680
      %2729 = vst [vmem:[%s374 + $0x84] sm:$0xf] %v2681
      %2730 = vst [vmem:[%s374 + $0x88] sm:$0xf] %v2682
      %2731 = vst [vmem:[%s374 + $0x8c] sm:$0xf] %v2683
      %2732 = vst [vmem:[%s374 + $0x90] sm:$0xf] %v2684
      %2733 = vst [vmem:[%s374 + $0x94] sm:$0xf] %v2685
      %2734 = vst [vmem:[%s374 + $0x98] sm:$0xf] %v2686
      %2735 = vst [vmem:[%s374 + $0x9c] sm:$0xf] %v2687
      %2736 = vst [vmem:[%s374 + $0xa0] sm:$0xf] %v2688
      %2737 = vst [vmem:[%s374 + $0xa4] sm:$0xf] %v2689
      %2738 = vst [vmem:[%s374 + $0xa8] sm:$0xf] %v2690
      %2739 = vst [vmem:[%s374 + $0xac] sm:$0xf] %v2691
      %2740 = vst [vmem:[%s374 + $0xb0] sm:$0xf] %v2692
      %2741 = vst [vmem:[%s374 + $0xb4] sm:$0xf] %v2693
      %2742 = vst [vmem:[%s374 + $0xb8] sm:$0xf] %v2694
      %2743 = vst [vmem:[%s374 + $0xbc] sm:$0xf] %v2695
      %v2744 = vld [vmem:[#allocation5] sm:$0xff]
      %v2745 = vld [vmem:[#allocation5 + $0x8] sm:$0xff]
      %v2746 = vld [vmem:[#allocation5 + $0x10] sm:$0xff]
      %v2747 = vld [vmem:[#allocation5 + $0x18] sm:$0xff]
      %v2748 = vld [vmem:[#allocation5 + $0x20] sm:$0xff]
      %v2749 = vld [vmem:[#allocation5 + $0x28] sm:$0xff]
      %v2750 = vld [vmem:[#allocation5 + $0x30] sm:$0xff]
      %v2751 = vld [vmem:[#allocation5 + $0x38] sm:$0xff]
      %v2752 = vld [vmem:[#allocation5 + $0x40] sm:$0xff]
      %v2753 = vld [vmem:[#allocation5 + $0x48] sm:$0xff]
      %v2754 = vld [vmem:[#allocation5 + $0x50] sm:$0xff]
      %v2755 = vld [vmem:[#allocation5 + $0x58] sm:$0xff]
      %v2756 = vld [vmem:[#allocation5 + $0x60] sm:$0xff]
      %v2757 = vld [vmem:[#allocation5 + $0x68] sm:$0xff]
      %v2758 = vld [vmem:[#allocation5 + $0x70] sm:$0xff]
      %v2759 = vld [vmem:[#allocation5 + $0x78] sm:$0xff]
      %v2760 = vld [vmem:[#allocation5 + $0x80] sm:$0xff]
      %v2761 = vld [vmem:[#allocation5 + $0x88] sm:$0xff]
      %v2762 = vld [vmem:[#allocation5 + $0x90] sm:$0xff]
      %v2763 = vld [vmem:[#allocation5 + $0x98] sm:$0xff]
      %v2764 = vld [vmem:[#allocation5 + $0xa0] sm:$0xff]
      %v2765 = vld [vmem:[#allocation5 + $0xa8] sm:$0xff]
      %v2766 = vld [vmem:[#allocation5 + $0xb0] sm:$0xff]
      %v2767 = vld [vmem:[#allocation5 + $0xb8] sm:$0xff]
      %v2768 = vld [vmem:[#allocation5 + $0xc0] sm:$0xff]
      %v2769 = vld [vmem:[#allocation5 + $0xc8] sm:$0xff]
      %v2770 = vld [vmem:[#allocation5 + $0xd0] sm:$0xff]
      %v2771 = vld [vmem:[#allocation5 + $0xd8] sm:$0xff]
      %v2772 = vld [vmem:[#allocation5 + $0xe0] sm:$0xff]
      %v2773 = vld [vmem:[#allocation5 + $0xe8] sm:$0xff]
      %v2774 = vld [vmem:[#allocation5 + $0xf0] sm:$0xff]
      %v2775 = vld [vmem:[#allocation5 + $0xf8] sm:$0xff]
      %v2776 = vld [vmem:[#allocation5 + $0x100] sm:$0xff]
      %v2777 = vld [vmem:[#allocation5 + $0x108] sm:$0xff]
      %v2778 = vld [vmem:[#allocation5 + $0x110] sm:$0xff]
      %v2779 = vld [vmem:[#allocation5 + $0x118] sm:$0xff]
      %v2780 = vld [vmem:[#allocation5 + $0x120] sm:$0xff]
      %v2781 = vld [vmem:[#allocation5 + $0x128] sm:$0xff]
      %v2782 = vld [vmem:[#allocation5 + $0x130] sm:$0xff]
      %v2783 = vld [vmem:[#allocation5 + $0x138] sm:$0xff]
      %v2784 = vld [vmem:[#allocation5 + $0x140] sm:$0xff]
      %v2785 = vld [vmem:[#allocation5 + $0x148] sm:$0xff]
      %v2786 = vld [vmem:[#allocation5 + $0x150] sm:$0xff]
      %v2787 = vld [vmem:[#allocation5 + $0x158] sm:$0xff]
      %v2788 = vld [vmem:[#allocation5 + $0x160] sm:$0xff]
      %v2789 = vld [vmem:[#allocation5 + $0x168] sm:$0xff]
      %v2790 = vld [vmem:[#allocation5 + $0x170] sm:$0xff]
      %v2791 = vld [vmem:[#allocation5 + $0x178] sm:$0xff]
      %v2792 = vpack.c.bf16 %v2744, %v2744
      %v2793 = vpack.c.bf16 %v2745, %v2745
      %v2794 = vpack.c.bf16 %v2746, %v2746
      %v2795 = vpack.c.bf16 %v2747, %v2747
      %v2796 = vpack.c.bf16 %v2748, %v2748
      %v2797 = vpack.c.bf16 %v2749, %v2749
      %v2798 = vpack.c.bf16 %v2750, %v2750
      %v2799 = vpack.c.bf16 %v2751, %v2751
      %v2800 = vpack.c.bf16 %v2752, %v2752
      %v2801 = vpack.c.bf16 %v2753, %v2753
      %v2802 = vpack.c.bf16 %v2754, %v2754
      %v2803 = vpack.c.bf16 %v2755, %v2755
      %v2804 = vpack.c.bf16 %v2756, %v2756
      %v2805 = vpack.c.bf16 %v2757, %v2757
      %v2806 = vpack.c.bf16 %v2758, %v2758
      %v2807 = vpack.c.bf16 %v2759, %v2759
      %v2808 = vpack.c.bf16 %v2760, %v2760
      %v2809 = vpack.c.bf16 %v2761, %v2761
      %v2810 = vpack.c.bf16 %v2762, %v2762
      %v2811 = vpack.c.bf16 %v2763, %v2763
      %v2812 = vpack.c.bf16 %v2764, %v2764
      %v2813 = vpack.c.bf16 %v2765, %v2765
      %v2814 = vpack.c.bf16 %v2766, %v2766
      %v2815 = vpack.c.bf16 %v2767, %v2767
      %v2816 = vpack.c.bf16 %v2768, %v2768
      %v2817 = vpack.c.bf16 %v2769, %v2769
      %v2818 = vpack.c.bf16 %v2770, %v2770
      %v2819 = vpack.c.bf16 %v2771, %v2771
      %v2820 = vpack.c.bf16 %v2772, %v2772
      %v2821 = vpack.c.bf16 %v2773, %v2773
      %v2822 = vpack.c.bf16 %v2774, %v2774
      %v2823 = vpack.c.bf16 %v2775, %v2775
      %v2824 = vpack.c.bf16 %v2776, %v2776
      %v2825 = vpack.c.bf16 %v2777, %v2777
      %v2826 = vpack.c.bf16 %v2778, %v2778
      %v2827 = vpack.c.bf16 %v2779, %v2779
      %v2828 = vpack.c.bf16 %v2780, %v2780
      %v2829 = vpack.c.bf16 %v2781, %v2781
      %v2830 = vpack.c.bf16 %v2782, %v2782
      %v2831 = vpack.c.bf16 %v2783, %v2783
      %v2832 = vpack.c.bf16 %v2784, %v2784
      %v2833 = vpack.c.bf16 %v2785, %v2785
      %v2834 = vpack.c.bf16 %v2786, %v2786
      %v2835 = vpack.c.bf16 %v2787, %v2787
      %v2836 = vpack.c.bf16 %v2788, %v2788
      %v2837 = vpack.c.bf16 %v2789, %v2789
      %v2838 = vpack.c.bf16 %v2790, %v2790
      %v2839 = vpack.c.bf16 %v2791, %v2791
      %2840 = vst [vmem:[%s381] sm:$0xf] %v2792
      %2841 = vst [vmem:[%s381 + $0x4] sm:$0xf] %v2793
      %2842 = vst [vmem:[%s381 + $0x8] sm:$0xf] %v2794
      %2843 = vst [vmem:[%s381 + $0xc] sm:$0xf] %v2795
      %2844 = vst [vmem:[%s381 + $0x10] sm:$0xf] %v2796
      %2845 = vst [vmem:[%s381 + $0x14] sm:$0xf] %v2797
      %2846 = vst [vmem:[%s381 + $0x18] sm:$0xf] %v2798
      %2847 = vst [vmem:[%s381 + $0x1c] sm:$0xf] %v2799
      %2848 = vst [vmem:[%s381 + $0x20] sm:$0xf] %v2800
      %2849 = vst [vmem:[%s381 + $0x24] sm:$0xf] %v2801
      %2850 = vst [vmem:[%s381 + $0x28] sm:$0xf] %v2802
      %2851 = vst [vmem:[%s381 + $0x2c] sm:$0xf] %v2803
      %2852 = vst [vmem:[%s381 + $0x30] sm:$0xf] %v2804
      %2853 = vst [vmem:[%s381 + $0x34] sm:$0xf] %v2805
      %2854 = vst [vmem:[%s381 + $0x38] sm:$0xf] %v2806
      %2855 = vst [vmem:[%s381 + $0x3c] sm:$0xf] %v2807
      %2856 = vst [vmem:[%s381 + $0x40] sm:$0xf] %v2808
      %2857 = vst [vmem:[%s381 + $0x44] sm:$0xf] %v2809
      %2858 = vst [vmem:[%s381 + $0x48] sm:$0xf] %v2810
      %2859 = vst [vmem:[%s381 + $0x4c] sm:$0xf] %v2811
      %2860 = vst [vmem:[%s381 + $0x50] sm:$0xf] %v2812
      %2861 = vst [vmem:[%s381 + $0x54] sm:$0xf] %v2813
      %2862 = vst [vmem:[%s381 + $0x58] sm:$0xf] %v2814
      %2863 = vst [vmem:[%s381 + $0x5c] sm:$0xf] %v2815
      %2864 = vst [vmem:[%s381 + $0x60] sm:$0xf] %v2816
      %2865 = vst [vmem:[%s381 + $0x64] sm:$0xf] %v2817
      %2866 = vst [vmem:[%s381 + $0x68] sm:$0xf] %v2818
      %2867 = vst [vmem:[%s381 + $0x6c] sm:$0xf] %v2819
      %2868 = vst [vmem:[%s381 + $0x70] sm:$0xf] %v2820
      %2869 = vst [vmem:[%s381 + $0x74] sm:$0xf] %v2821
      %2870 = vst [vmem:[%s381 + $0x78] sm:$0xf] %v2822
      %2871 = vst [vmem:[%s381 + $0x7c] sm:$0xf] %v2823
      %2872 = vst [vmem:[%s381 + $0x80] sm:$0xf] %v2824
      %2873 = vst [vmem:[%s381 + $0x84] sm:$0xf] %v2825
      %2874 = vst [vmem:[%s381 + $0x88] sm:$0xf] %v2826
      %2875 = vst [vmem:[%s381 + $0x8c] sm:$0xf] %v2827
      %2876 = vst [vmem:[%s381 + $0x90] sm:$0xf] %v2828
      %2877 = vst [vmem:[%s381 + $0x94] sm:$0xf] %v2829
      %2878 = vst [vmem:[%s381 + $0x98] sm:$0xf] %v2830
      %2879 = vst [vmem:[%s381 + $0x9c] sm:$0xf] %v2831
      %2880 = vst [vmem:[%s381 + $0xa0] sm:$0xf] %v2832
      %2881 = vst [vmem:[%s381 + $0xa4] sm:$0xf] %v2833
      %2882 = vst [vmem:[%s381 + $0xa8] sm:$0xf] %v2834
      %2883 = vst [vmem:[%s381 + $0xac] sm:$0xf] %v2835
      %2884 = vst [vmem:[%s381 + $0xb0] sm:$0xf] %v2836
      %2885 = vst [vmem:[%s381 + $0xb4] sm:$0xf] %v2837
      %2886 = vst [vmem:[%s381 + $0xb8] sm:$0xf] %v2838
      %2887 = vst [vmem:[%s381 + $0xbc] sm:$0xf] %v2839
      %s2888 = smul.u32 48, %s21
      %p2889 = scmp.lt.s32.totalorder %s2888, 95
      %s2890 = scalar_select %p2889, %s2888, 95
      %s2891 = smul.addr %s2890, 4
      %s2892 = scalar_lea.vmem %s8, %s2891
      %s2893 = ssub.s32 1, %s21
      %s2894 = smul.u32 48, %s2893
      %p2895 = scmp.lt.s32.totalorder %s2894, 95
      %s2896 = scalar_select %p2895, %s2894, 95
      %s2897 = smul.addr %s2896, 4
      %s2898 = scalar_lea.vmem %s9, %s2897
      // Predicated region
      $region64: #{forward.3} parent=51 // pred_check
        %p2899 = pneg %p219
      $region65: #{forward.3} parent=51 // pred_check_branch
        %2901 = sbr.rel (%p2899) target = $region67
      $region66: #{forward.3} parent=51 // pred_region
        %s2902 = smul.u32 48, %s21
      $region67: #{forward.3} parent=51 // pred_fallthru
        _
      // Predicated region
      $region68: #{forward.3} parent=51 // pred_check
        %p2903 = pneg %p247
      $region69: #{forward.3} parent=51 // pred_check_branch
        %2905 = sbr.rel (%p2903) target = $region71
      $region70: #{forward.3} parent=51 // pred_region
        %s2906 = ssub.s32 1, %s21
        %s2907 = smul.u32 48, %s2906
      $region71: #{forward.3} parent=51 // pred_fallthru
        _
    $region52: #{forward.3} parent=5 // pred_fallthru
      _
    %p2908 = scmp.le.s32.totalorder 2, %s16
    // Predicated region
    $region72: #{forward.3} parent=5 // pred_check
      %p2909 = pneg %p2908
    $region73: #{forward.3} parent=5 // pred_check_branch
      %2911 = sbr.rel (%p2909) target = $region75
    $region74: #{forward.3} parent=5 // pred_region
      %s2912 = ssub.s32 %s16, 2
      // Predicated region
      $region76: #{forward.3} parent=74 // pred_check
        %p2913 = pneg %p225
      $region77: #{forward.3} parent=74 // pred_check_branch
        %2915 = sbr.rel (%p2913) target = $region79
      $region78: #{forward.3} parent=74 // pred_region
        %s2916 = smul.u32 48, %s22
        %p2917 = scmp.lt.s32.totalorder %s2916, 95
        %s2918 = scalar_select %p2917, %s2916, 95
        %s2919 = smul.addr %s2918, 4
        %s2920 = scalar_lea.vmem %s8, %s2919
      $region79: #{forward.3} parent=74 // pred_fallthru
        _
      // Predicated region
      $region80: #{forward.3} parent=74 // pred_check
        %p2921 = pneg %p253
      $region81: #{forward.3} parent=74 // pred_check_branch
        %2923 = sbr.rel (%p2921) target = $region83
      $region82: #{forward.3} parent=74 // pred_region
        %s2924 = ssub.s32 1, %s22
        %s2925 = smul.u32 48, %s2924
        %p2926 = scmp.lt.s32.totalorder %s2925, 95
        %s2927 = scalar_select %p2926, %s2925, 95
        %s2928 = smul.addr %s2927, 4
        %s2929 = scalar_lea.vmem %s9, %s2928
      $region83: #{forward.3} parent=74 // pred_fallthru
        _
    $region75: #{forward.3} parent=5 // pred_fallthru
      _
  $region6: #{forward.3} parent=0 // loop_footer
    %s20 = sadd.s32 1, %s16
  $region7: #{forward.3} parent=0 // loop_footer_branch
    %15 = sbr.rel target = $region3
  $region8: #{forward.3} parent=0 // loop_exit
    _

// kernel: forward.4
$region0: #{forward.4}
  #allocation0 [shape = 'u32[]', space=smem, size = 0x4, offset = 0x4, fixed_abs, tag = 'smem constant byte address 0x4 - core index']
  #allocation1 [shape = 'u32[72,128]{1,0:T(1,128)}', space=vmem, size = 0x9000, scoped, tag = 'internal scratch']
  #allocation2 [shape = 'f32[384,384]{1,0:T(8,128)}', space=vmem, size = 0x90000, scoped, tag = 'scratch operand']
  #allocation3 [shape = 'f32[384,384]{1,0:T(8,128)}', space=vmem, size = 0x90000, scoped, tag = 'scratch operand']
  #allocation4 [shape = 'f32[384,128]{1,0:T(8,128)}', space=vmem, size = 0x30000, scoped, tag = 'scratch operand']
  #allocation5 [shape = 'f32[384,128]{1,0:T(8,128)}', space=vmem, size = 0x30000, scoped, tag = 'scratch operand']
  #allocation6 [shape = 'f32[8,128]{1,0:T(8,128)}', space=vmem, size = 0x1000, scoped, tag = 'scratch operand']
  #allocation7 [shape = 'f32[8,128]{1,0:T(8,128)}', space=vmem, size = 0x1000, scoped, tag = 'scratch operand']
  %s0 = inlined_call_operand.vmem [shape: bf16[768,256], index: 0, kind: input, shape index: {}, may-alias: {0,1}]
  %s1 = inlined_call_operand.vmem [shape: bf16[768,256], index: 1, kind: input, shape index: {}, may-alias: {0,1}]
  %s2 = inlined_call_operand.vmem [shape: s32[8,1], index: 2, kind: input, shape index: {}]
  %s3 = inlined_call_operand.vmem [shape: bf16[256,384], index: 3, kind: input, shape index: {}]
  %s4 = inlined_call_operand.vmem [shape: bf16[256,384], index: 4, kind: input, shape index: {}]
  %s5 = inlined_call_operand.vmem [shape: bf16[128,384], index: 5, kind: input, shape index: {}]
  %s6 = inlined_call_operand.vmem [shape: bf16[128,384], index: 6, kind: input, shape index: {}]
  %s7 = inlined_call_operand.vmem [shape: f32[2,768], index: 7, kind: input, shape index: {}]
  %s8 = inlined_call_operand.vmem [shape: bf16[768,128], index: 8, kind: output, shape index: {0}]
  %s9 = inlined_call_operand.vmem [shape: bf16[768,128], index: 9, kind: output, shape index: {1}]
  %10 = xla_tuple %s8, %s9
  %s11 = sld [smem:[#allocation0]]
  $region84: #{forward.4} parent=0
    _
  %s13 = ssub.s32 1, %s11
  %s14 = scalar_select 0, %s13, %s11
  loop: start=0, step=1, limit=4
  $region2: #{forward.4} parent=0 // loop_pre_header
    _
  $region3: #{forward.4} parent=0 // loop_header
    %s16 = sphi 0, %s20
    %p17 = scmp.ge.s32.totalorder %s16, 4
    %s26 = sphi 0, %s28
    %s29 = sphi 0, %s26
    %s30 = sphi 0, %s29
    %s46 = sphi 0, %s30
    %s54 = sphi 0, %s56
    %s57 = sphi 0, %s54
    %s58 = sphi 0, %s57
    %s74 = sphi 0, %s58
    %s78 = sphi 0, %s78
    %s80 = sphi 0, %s78
    %s81 = sphi 0, %s80
    %s95 = sphi 0, %s81
    %s99 = sphi 0, %s99
    %s101 = sphi 0, %s99
    %s102 = sphi 0, %s101
    %s116 = sphi 0, %s102
    %s120 = sphi 0, %s120
    %s122 = sphi 0, %s120
    %s123 = sphi 0, %s122
    %s137 = sphi 0, %s123
    %s141 = sphi 0, %s141
    %s143 = sphi 0, %s141
    %s144 = sphi 0, %s143
    %s158 = sphi 0, %s144
    %s162 = sphi 0, %s162
    %s164 = sphi 0, %s162
    %s165 = sphi 0, %s164
    %s179 = sphi 0, %s165
    %s183 = sphi 0, %s183
    %s185 = sphi 0, %s183
    %s186 = sphi 0, %s185
    %s200 = sphi 0, %s186
    %s206 = sphi 0, %s208
    %s209 = sphi 0, %s206
    %s210 = sphi 0, %s209
    %s226 = sphi 0, %s210
    %s234 = sphi 0, %s236
    %s237 = sphi 0, %s234
    %s238 = sphi 0, %s237
    %s254 = sphi 0, %s238
  $region4: #{forward.4} parent=0 // loop_header_branch
    %19 = sbr.rel (%p17) target = $region8
  $region5: #{forward.4} parent=0 // loop_body
    %s21 = ssub.s32 %s16, 1
    %s22 = ssub.s32 %s16, 2
    %s23 = sadd.s32 %s16, 1
    %s24 = ssub.s32 %s16, %s23
    %p25 = scmp.eq.s32.totalorder %s24, 0
    %s27 = sadd.s32 %s26, 1
    %s28 = scalar_select %p25, %s26, %s27
    %p31 = pneg %p25
    %p32 = scmp.eq.s32.totalorder %s16, 1
    %p33 = por %p31, %p32
    %p34 = scmp.ne.s32.totalorder %s26, %s29
    %p35 = scmp.eq.s32.totalorder %s16, 0
    %p36 = por %p34, %p35
    %p37 = scmp.ne.s32.totalorder %s26, %s29
    %p38 = scmp.eq.s32.totalorder %s21, 1
    %p39 = por %p37, %p38
    %p40 = scmp.ne.s32.totalorder %s29, %s30
    %p41 = scmp.eq.s32.totalorder %s21, 0
    %p42 = por %p40, %p41
    %p43 = scmp.ne.s32.totalorder %s29, %s30
    %p44 = scmp.eq.s32.totalorder %s22, 1
    %p45 = por %p43, %p44
    %p47 = scmp.ne.s32.totalorder %s30, %s46
    %p48 = scmp.eq.s32.totalorder %s22, 0
    %p49 = por %p47, %p48
    %s50 = ssub.s32 1, %s16
    %s51 = ssub.s32 1, %s23
    %s52 = ssub.s32 %s50, %s51
    %p53 = scmp.eq.s32.totalorder %s52, 0
    %s55 = sadd.s32 %s54, 1
    %s56 = scalar_select %p53, %s54, %s55
    %p59 = pneg %p53
    %p60 = scmp.eq.s32.totalorder %s16, 1
    %p61 = por %p59, %p60
    %p62 = scmp.ne.s32.totalorder %s54, %s57
    %p63 = scmp.eq.s32.totalorder %s16, 0
    %p64 = por %p62, %p63
    %p65 = scmp.ne.s32.totalorder %s54, %s57
    %p66 = scmp.eq.s32.totalorder %s21, 1
    %p67 = por %p65, %p66
    %p68 = scmp.ne.s32.totalorder %s57, %s58
    %p69 = scmp.eq.s32.totalorder %s21, 0
    %p70 = por %p68, %p69
    %p71 = scmp.ne.s32.totalorder %s57, %s58
    %p72 = scmp.eq.s32.totalorder %s22, 1
    %p73 = por %p71, %p72
    %p75 = scmp.ne.s32.totalorder %s58, %s74
    %p76 = scmp.eq.s32.totalorder %s22, 0
    %p77 = por %p75, %p76
    %s79 = sadd.s32 %s78, 1
    %p82 = scmp.eq.s32.totalorder %s16, 1
    %p83 = scmp.ne.s32.totalorder %s78, %s80
    %p84 = scmp.eq.s32.totalorder %s16, 0
    %p85 = por %p83, %p84
    %p86 = scmp.ne.s32.totalorder %s78, %s80
    %p87 = scmp.eq.s32.totalorder %s21, 1
    %p88 = por %p86, %p87
    %p89 = scmp.ne.s32.totalorder %s80, %s81
    %p90 = scmp.eq.s32.totalorder %s21, 0
    %p91 = por %p89, %p90
    %p92 = scmp.ne.s32.totalorder %s80, %s81
    %p93 = scmp.eq.s32.totalorder %s22, 1
    %p94 = por %p92, %p93
    %p96 = scmp.ne.s32.totalorder %s81, %s95
    %p97 = scmp.eq.s32.totalorder %s22, 0
    %p98 = por %p96, %p97
    %s100 = sadd.s32 %s99, 1
    %p103 = scmp.eq.s32.totalorder %s16, 1
    %p104 = scmp.ne.s32.totalorder %s99, %s101
    %p105 = scmp.eq.s32.totalorder %s16, 0
    %p106 = por %p104, %p105
    %p107 = scmp.ne.s32.totalorder %s99, %s101
    %p108 = scmp.eq.s32.totalorder %s21, 1
    %p109 = por %p107, %p108
    %p110 = scmp.ne.s32.totalorder %s101, %s102
    %p111 = scmp.eq.s32.totalorder %s21, 0
    %p112 = por %p110, %p111
    %p113 = scmp.ne.s32.totalorder %s101, %s102
    %p114 = scmp.eq.s32.totalorder %s22, 1
    %p115 = por %p113, %p114
    %p117 = scmp.ne.s32.totalorder %s102, %s116
    %p118 = scmp.eq.s32.totalorder %s22, 0
    %p119 = por %p117, %p118
    %s121 = sadd.s32 %s120, 1
    %p124 = scmp.eq.s32.totalorder %s16, 1
    %p125 = scmp.ne.s32.totalorder %s120, %s122
    %p126 = scmp.eq.s32.totalorder %s16, 0
    %p127 = por %p125, %p126
    %p128 = scmp.ne.s32.totalorder %s120, %s122
    %p129 = scmp.eq.s32.totalorder %s21, 1
    %p130 = por %p128, %p129
    %p131 = scmp.ne.s32.totalorder %s122, %s123
    %p132 = scmp.eq.s32.totalorder %s21, 0
    %p133 = por %p131, %p132
    %p134 = scmp.ne.s32.totalorder %s122, %s123
    %p135 = scmp.eq.s32.totalorder %s22, 1
    %p136 = por %p134, %p135
    %p138 = scmp.ne.s32.totalorder %s123, %s137
    %p139 = scmp.eq.s32.totalorder %s22, 0
    %p140 = por %p138, %p139
    %s142 = sadd.s32 %s141, 1
    %p145 = scmp.eq.s32.totalorder %s16, 1
    %p146 = scmp.ne.s32.totalorder %s141, %s143
    %p147 = scmp.eq.s32.totalorder %s16, 0
    %p148 = por %p146, %p147
    %p149 = scmp.ne.s32.totalorder %s141, %s143
    %p150 = scmp.eq.s32.totalorder %s21, 1
    %p151 = por %p149, %p150
    %p152 = scmp.ne.s32.totalorder %s143, %s144
    %p153 = scmp.eq.s32.totalorder %s21, 0
    %p154 = por %p152, %p153
    %p155 = scmp.ne.s32.totalorder %s143, %s144
    %p156 = scmp.eq.s32.totalorder %s22, 1
    %p157 = por %p155, %p156
    %p159 = scmp.ne.s32.totalorder %s144, %s158
    %p160 = scmp.eq.s32.totalorder %s22, 0
    %p161 = por %p159, %p160
    %s163 = sadd.s32 %s162, 1
    %p166 = scmp.eq.s32.totalorder %s16, 1
    %p167 = scmp.ne.s32.totalorder %s162, %s164
    %p168 = scmp.eq.s32.totalorder %s16, 0
    %p169 = por %p167, %p168
    %p170 = scmp.ne.s32.totalorder %s162, %s164
    %p171 = scmp.eq.s32.totalorder %s21, 1
    %p172 = por %p170, %p171
    %p173 = scmp.ne.s32.totalorder %s164, %s165
    %p174 = scmp.eq.s32.totalorder %s21, 0
    %p175 = por %p173, %p174
    %p176 = scmp.ne.s32.totalorder %s164, %s165
    %p177 = scmp.eq.s32.totalorder %s22, 1
    %p178 = por %p176, %p177
    %p180 = scmp.ne.s32.totalorder %s165, %s179
    %p181 = scmp.eq.s32.totalorder %s22, 0
    %p182 = por %p180, %p181
    %s184 = sadd.s32 %s183, 1
    %p187 = scmp.eq.s32.totalorder %s16, 1
    %p188 = scmp.ne.s32.totalorder %s183, %s185
    %p189 = scmp.eq.s32.totalorder %s16, 0
    %p190 = por %p188, %p189
    %p191 = scmp.ne.s32.totalorder %s183, %s185
    %p192 = scmp.eq.s32.totalorder %s21, 1
    %p193 = por %p191, %p192
    %p194 = scmp.ne.s32.totalorder %s185, %s186
    %p195 = scmp.eq.s32.totalorder %s21, 0
    %p196 = por %p194, %p195
    %p197 = scmp.ne.s32.totalorder %s185, %s186
    %p198 = scmp.eq.s32.totalorder %s22, 1
    %p199 = por %p197, %p198
    %p201 = scmp.ne.s32.totalorder %s186, %s200
    %p202 = scmp.eq.s32.totalorder %s22, 0
    %p203 = por %p201, %p202
    %s204 = ssub.s32 %s16, %s23
    %p205 = scmp.eq.s32.totalorder %s204, 0
    %s207 = sadd.s32 %s206, 1
    %s208 = scalar_select %p205, %s206, %s207
    %p211 = pneg %p205
    %p212 = scmp.eq.s32.totalorder %s16, 1
    %p213 = por %p211, %p212
    %p214 = scmp.ne.s32.totalorder %s206, %s209
    %p215 = scmp.eq.s32.totalorder %s16, 0
    %p216 = por %p214, %p215
    %p217 = scmp.ne.s32.totalorder %s206, %s209
    %p218 = scmp.eq.s32.totalorder %s21, 1
    %p219 = por %p217, %p218
    %p220 = scmp.ne.s32.totalorder %s209, %s210
    %p221 = scmp.eq.s32.totalorder %s21, 0
    %p222 = por %p220, %p221
    %p223 = scmp.ne.s32.totalorder %s209, %s210
    %p224 = scmp.eq.s32.totalorder %s22, 1
    %p225 = por %p223, %p224
    %p227 = scmp.ne.s32.totalorder %s210, %s226
    %p228 = scmp.eq.s32.totalorder %s22, 0
    %p229 = por %p227, %p228
    %s230 = ssub.s32 1, %s16
    %s231 = ssub.s32 1, %s23
    %s232 = ssub.s32 %s230, %s231
    %p233 = scmp.eq.s32.totalorder %s232, 0
    %s235 = sadd.s32 %s234, 1
    %s236 = scalar_select %p233, %s234, %s235
    %p239 = pneg %p233
    %p240 = scmp.eq.s32.totalorder %s16, 1
    %p241 = por %p239, %p240
    %p242 = scmp.ne.s32.totalorder %s234, %s237
    %p243 = scmp.eq.s32.totalorder %s16, 0
    %p244 = por %p242, %p243
    %p245 = scmp.ne.s32.totalorder %s234, %s237
    %p246 = scmp.eq.s32.totalorder %s21, 1
    %p247 = por %p245, %p246
    %p248 = scmp.ne.s32.totalorder %s237, %s238
    %p249 = scmp.eq.s32.totalorder %s21, 0
    %p250 = por %p248, %p249
    %p251 = scmp.ne.s32.totalorder %s237, %s238
    %p252 = scmp.eq.s32.totalorder %s22, 1
    %p253 = por %p251, %p252
    %p255 = scmp.ne.s32.totalorder %s238, %s254
    %p256 = scmp.eq.s32.totalorder %s22, 0
    %p257 = por %p255, %p256
    %p258 = scmp.le.s32.totalorder 1, %s16
    %p259 = scmp.lt.s32.totalorder %s16, 3
    %p260 = pnand %p258, %p259
    %p261 = pneg %p260
    // Predicated region
    $region9: #{forward.4} parent=5 // pred_check
      _
    $region10: #{forward.4} parent=5 // pred_check_branch
      %263 = sbr.rel (%p260) target = $region12
    $region11: #{forward.4} parent=5 // pred_region
      %s264 = ssub.s32 %s16, 1
      // Predicated region
      $region13: #{forward.4} parent=11 // pred_check
        %p265 = pneg %p91
      $region14: #{forward.4} parent=11 // pred_check_branch
        %267 = sbr.rel (%p265) target = $region16
      $region15: #{forward.4} parent=11 // pred_region
        _
      $region16: #{forward.4} parent=11 // pred_fallthru
        _
      // Predicated region
      $region17: #{forward.4} parent=11 // pred_check
        %p268 = pneg %p112
      $region18: #{forward.4} parent=11 // pred_check_branch
        %270 = sbr.rel (%p268) target = $region20
      $region19: #{forward.4} parent=11 // pred_region
        _
      $region20: #{forward.4} parent=11 // pred_fallthru
        _
      // Predicated region
      $region21: #{forward.4} parent=11 // pred_check
        %p271 = pneg %p133
      $region22: #{forward.4} parent=11 // pred_check_branch
        %273 = sbr.rel (%p271) target = $region24
      $region23: #{forward.4} parent=11 // pred_region
        _
      $region24: #{forward.4} parent=11 // pred_fallthru
        _
      // Predicated region
      $region25: #{forward.4} parent=11 // pred_check
        %p274 = pneg %p154
      $region26: #{forward.4} parent=11 // pred_check_branch
        %276 = sbr.rel (%p274) target = $region28
      $region27: #{forward.4} parent=11 // pred_region
        _
      $region28: #{forward.4} parent=11 // pred_fallthru
        _
      // Predicated region
      $region29: #{forward.4} parent=11 // pred_check
        %p277 = pneg %p175
      $region30: #{forward.4} parent=11 // pred_check_branch
        %279 = sbr.rel (%p277) target = $region32
      $region31: #{forward.4} parent=11 // pred_region
        _
      $region32: #{forward.4} parent=11 // pred_fallthru
        _
      // Predicated region
      $region33: #{forward.4} parent=11 // pred_check
        %p280 = pneg %p196
      $region34: #{forward.4} parent=11 // pred_check_branch
        %282 = sbr.rel (%p280) target = $region36
      $region35: #{forward.4} parent=11 // pred_region
        _
      $region36: #{forward.4} parent=11 // pred_fallthru
        _
    $region12: #{forward.4} parent=5 // pred_fallthru
      _
    %p283 = scmp.lt.s32.totalorder %s16, 2
    // Predicated region
    $region37: #{forward.4} parent=5 // pred_check
      %p284 = pneg %p283
    $region38: #{forward.4} parent=5 // pred_check_branch
      %286 = sbr.rel (%p284) target = $region40
    $region39: #{forward.4} parent=5 // pred_region
      // Predicated region
      $region41: #{forward.4} parent=39 // pred_check
        %p287 = pneg %p36
      $region42: #{forward.4} parent=39 // pred_check_branch
        %289 = sbr.rel (%p287) target = $region44
      $region43: #{forward.4} parent=39 // pred_region
        %s290 = smul.u32 48, %s16
        %p291 = scmp.lt.s32.totalorder %s290, 95
        %s292 = scalar_select %p291, %s290, 95
        %s293 = smul.addr %s292, 2
        %s294 = smul.addr %s293, 4
        %s295 = scalar_lea.vmem %s0, %s294
        %s296 = smul.u32 48, %s16
      $region44: #{forward.4} parent=39 // pred_fallthru
        _
      // Predicated region
      $region45: #{forward.4} parent=39 // pred_check
        %p297 = pneg %p64
      $region46: #{forward.4} parent=39 // pred_check_branch
        %299 = sbr.rel (%p297) target = $region48
      $region47: #{forward.4} parent=39 // pred_region
        %s300 = ssub.s32 1, %s16
        %s301 = smul.u32 48, %s300
        %p302 = scmp.lt.s32.totalorder %s301, 95
        %s303 = scalar_select %p302, %s301, 95
        %s304 = smul.addr %s303, 2
        %s305 = smul.addr %s304, 4
        %s306 = scalar_lea.vmem %s1, %s305
        %s307 = ssub.s32 1, %s16
        %s308 = smul.u32 48, %s307
      $region48: #{forward.4} parent=39 // pred_fallthru
        _
    $region40: #{forward.4} parent=5 // pred_fallthru
      _
    %p309 = scmp.le.s32.totalorder 1, %s16
    %p310 = scmp.lt.s32.totalorder %s16, 3
    %p311 = pnand %p309, %p310
    %p312 = pneg %p311
    // Predicated region
    $region49: #{forward.4} parent=5 // pred_check
      _
    $region50: #{forward.4} parent=5 // pred_check_branch
      %314 = sbr.rel (%p311) target = $region52
    $region51: #{forward.4} parent=5 // pred_region
      %s315 = ssub.s32 %s16, 1
      %s316 = smul.u32 48, %s21
      %p317 = scmp.lt.s32.totalorder %s316, 95
      %s318 = scalar_select %p317, %s316, 95
      %s319 = smul.addr %s318, 2
      %s320 = smul.addr %s319, 4
      %s321 = scalar_lea.vmem %s0, %s320
      %p322 = pneg %p42
      %p323 = pneg %p39
      %s324 = ssub.s32 1, %s21
      %s325 = smul.u32 48, %s324
      %p326 = scmp.lt.s32.totalorder %s325, 95
      %s327 = scalar_select %p326, %s325, 95
      %s328 = smul.addr %s327, 2
      %s329 = smul.addr %s328, 4
      %s330 = scalar_lea.vmem %s1, %s329
      %p331 = pneg %p70
      %p332 = pneg %p67
      %p333 = pneg %p91
      %p334 = pneg %p88
      %p335 = pneg %p112
      %p336 = pneg %p109
      %p337 = pneg %p133
      %p338 = pneg %p130
      %p339 = pneg %p154
      %p340 = pneg %p151
      %p341 = pneg %p175
      %p342 = pneg %p172
      %p343 = pneg %p196
      %p344 = pneg %p193
      %p345 = pneg %p222
      %p346 = pneg %p219
      %s347 = smul.u32 48, %s21
      %p348 = scmp.lt.s32.totalorder %s347, 95
      %s349 = scalar_select %p348, %s347, 95
      %s350 = smul.addr %s349, 4
      %s351 = scalar_lea.vmem %s8, %s350
      %p352 = pneg %p250
      %p353 = pneg %p247
      %s354 = ssub.s32 1, %s21
      %s355 = smul.u32 48, %s354
      %p356 = scmp.lt.s32.totalorder %s355, 95
      %s357 = scalar_select %p356, %s355, 95
      %s358 = smul.addr %s357, 4
      %s359 = scalar_lea.vmem %s9, %s358
      %s360 = smul.u32 48, %s21
      %p361 = scmp.lt.s32.totalorder %s360, 95
      %s362 = scalar_select %p361, %s360, 95
      %s363 = smul.addr %s362, 2
      %s364 = smul.addr %s363, 4
      %s365 = scalar_lea.vmem %s0, %s364
      %s366 = smul.u32 48, %s21
      %s367 = ssub.s32 1, %s21
      %s368 = smul.u32 48, %s367
      %p369 = scmp.lt.s32.totalorder %s368, 95
      %s370 = scalar_select %p369, %s368, 95
      %s371 = smul.addr %s370, 2
      %s372 = smul.addr %s371, 4
      %s373 = scalar_lea.vmem %s1, %s372
      %s374 = ssub.s32 1, %s21
      %s375 = smul.u32 48, %s374
      %s376 = smul.u32 48, %s21
      %p377 = scmp.lt.s32.totalorder %s376, 95
      %s378 = scalar_select %p377, %s376, 95
      %s379 = smul.addr %s378, 4
      %s380 = scalar_lea.vmem %s8, %s379
      %s381 = smul.u32 48, %s21
      %s382 = ssub.s32 1, %s21
      %s383 = smul.u32 48, %s382
      %p384 = scmp.lt.s32.totalorder %s383, 95
      %s385 = scalar_select %p384, %s383, 95
      %s386 = smul.addr %s385, 4
      %s387 = scalar_lea.vmem %s9, %s386
      %s388 = ssub.s32 1, %s21
      %s389 = smul.u32 48, %s388
      %p390 = scmp.eq.s32.totalorder %s21, 0
      // Predicated region
      $region53: #{forward.4} parent=51 // pred_check
        %p391 = pneg %p390
      $region54: #{forward.4} parent=51 // pred_check_branch
        %393 = sbr.rel (%p391) target = $region56
      $region55: #{forward.4} parent=51 // pred_region
        %394 = vst [vmem:[#allocation6] sm:$0xff] 0.0
        %395 = vst [vmem:[#allocation7] sm:$0xff] 0.0
      $region56: #{forward.4} parent=51 // pred_fallthru
        _
      %v396 = vld [vmem:[%s365] sm:$0xff]
      %v397 = vld [vmem:[%s365 + $0x8] sm:$0xff]
      %v398 = vld [vmem:[%s365 + $0x10] sm:$0xff]
      %v399 = vld [vmem:[%s365 + $0x18] sm:$0xff]
      %v400 = vld [vmem:[%s365 + $0x20] sm:$0xff]
      %v401 = vld [vmem:[%s365 + $0x28] sm:$0xff]
      %v402 = vld [vmem:[%s365 + $0x30] sm:$0xff]
      %v403 = vld [vmem:[%s365 + $0x38] sm:$0xff]
      %v404 = vld [vmem:[%s365 + $0x40] sm:$0xff]
      %v405 = vld [vmem:[%s365 + $0x48] sm:$0xff]
      %v406 = vld [vmem:[%s365 + $0x50] sm:$0xff]
      %v407 = vld [vmem:[%s365 + $0x58] sm:$0xff]
      %v408 = vld [vmem:[%s365 + $0x60] sm:$0xff]
      %v409 = vld [vmem:[%s365 + $0x68] sm:$0xff]
      %v410 = vld [vmem:[%s365 + $0x70] sm:$0xff]
      %v411 = vld [vmem:[%s365 + $0x78] sm:$0xff]
      %v412 = vld [vmem:[%s365 + $0x80] sm:$0xff]
      %v413 = vld [vmem:[%s365 + $0x88] sm:$0xff]
      %v414 = vld [vmem:[%s365 + $0x90] sm:$0xff]
      %v415 = vld [vmem:[%s365 + $0x98] sm:$0xff]
      %v416 = vld [vmem:[%s365 + $0xa0] sm:$0xff]
      %v417 = vld [vmem:[%s365 + $0xa8] sm:$0xff]
      %v418 = vld [vmem:[%s365 + $0xb0] sm:$0xff]
      %v419 = vld [vmem:[%s365 + $0xb8] sm:$0xff]
      %v420 = vld [vmem:[%s365 + $0xc0] sm:$0xff]
      %v421 = vld [vmem:[%s365 + $0xc8] sm:$0xff]
      %v422 = vld [vmem:[%s365 + $0xd0] sm:$0xff]
      %v423 = vld [vmem:[%s365 + $0xd8] sm:$0xff]
      %v424 = vld [vmem:[%s365 + $0xe0] sm:$0xff]
      %v425 = vld [vmem:[%s365 + $0xe8] sm:$0xff]
      %v426 = vld [vmem:[%s365 + $0xf0] sm:$0xff]
      %v427 = vld [vmem:[%s365 + $0xf8] sm:$0xff]
      %v428 = vld [vmem:[%s365 + $0x100] sm:$0xff]
      %v429 = vld [vmem:[%s365 + $0x108] sm:$0xff]
      %v430 = vld [vmem:[%s365 + $0x110] sm:$0xff]
      %v431 = vld [vmem:[%s365 + $0x118] sm:$0xff]
      %v432 = vld [vmem:[%s365 + $0x120] sm:$0xff]
      %v433 = vld [vmem:[%s365 + $0x128] sm:$0xff]
      %v434 = vld [vmem:[%s365 + $0x130] sm:$0xff]
      %v435 = vld [vmem:[%s365 + $0x138] sm:$0xff]
      %v436 = vld [vmem:[%s365 + $0x140] sm:$0xff]
      %v437 = vld [vmem:[%s365 + $0x148] sm:$0xff]
      %v438 = vld [vmem:[%s365 + $0x150] sm:$0xff]
      %v439 = vld [vmem:[%s365 + $0x158] sm:$0xff]
      %v440 = vld [vmem:[%s365 + $0x160] sm:$0xff]
      %v441 = vld [vmem:[%s365 + $0x168] sm:$0xff]
      %v442 = vld [vmem:[%s365 + $0x170] sm:$0xff]
      %v443 = vld [vmem:[%s365 + $0x178] sm:$0xff]
      %v444 = vld [vmem:[%s3] sm:$0xff]
      %v445 = vld [vmem:[%s3 + $0x8] sm:$0xf]
      %v446 = vld [vmem:[%s3 + $0xc] sm:$0xff]
      %v447 = vld [vmem:[%s3 + $0x14] sm:$0xf]
      %v448 = vld [vmem:[%s3 + $0x18] sm:$0xff]
      %v449 = vld [vmem:[%s3 + $0x20] sm:$0xf]
      %v450 = vld [vmem:[%s3 + $0x24] sm:$0xff]
      %v451 = vld [vmem:[%s3 + $0x2c] sm:$0xf]
      %v452 = vld [vmem:[%s3 + $0x30] sm:$0xff]
      %v453 = vld [vmem:[%s3 + $0x38] sm:$0xf]
      %v454 = vld [vmem:[%s3 + $0x3c] sm:$0xff]
      %v455 = vld [vmem:[%s3 + $0x44] sm:$0xf]
      %v456 = vld [vmem:[%s3 + $0x48] sm:$0xff]
      %v457 = vld [vmem:[%s3 + $0x50] sm:$0xf]
      %v458 = vld [vmem:[%s3 + $0x54] sm:$0xff]
      %v459 = vld [vmem:[%s3 + $0x5c] sm:$0xf]
      %v460 = vld [vmem:[%s3 + $0x60] sm:$0xff]
      %v461 = vld [vmem:[%s3 + $0x68] sm:$0xf]
      %v462 = vld [vmem:[%s3 + $0x6c] sm:$0xff]
      %v463 = vld [vmem:[%s3 + $0x74] sm:$0xf]
      %v464 = vld [vmem:[%s3 + $0x78] sm:$0xff]
      %v465 = vld [vmem:[%s3 + $0x80] sm:$0xf]
      %v466 = vld [vmem:[%s3 + $0x84] sm:$0xff]
      %v467 = vld [vmem:[%s3 + $0x8c] sm:$0xf]
      %v468 = vld [vmem:[%s3 + $0x90] sm:$0xff]
      %v469 = vld [vmem:[%s3 + $0x98] sm:$0xf]
      %v470 = vld [vmem:[%s3 + $0x9c] sm:$0xff]
      %v471 = vld [vmem:[%s3 + $0xa4] sm:$0xf]
      %v472 = vld [vmem:[%s3 + $0xa8] sm:$0xff]
      %v473 = vld [vmem:[%s3 + $0xb0] sm:$0xf]
      %v474 = vld [vmem:[%s3 + $0xb4] sm:$0xff]
      %v475 = vld [vmem:[%s3 + $0xbc] sm:$0xf]
      %v476 = vld [vmem:[%s3 + $0xc0] sm:$0xff]
      %v477 = vld [vmem:[%s3 + $0xc8] sm:$0xf]
      %v478 = vld [vmem:[%s3 + $0xcc] sm:$0xff]
      %v479 = vld [vmem:[%s3 + $0xd4] sm:$0xf]
      %v480 = vld [vmem:[%s3 + $0xd8] sm:$0xff]
      %v481 = vld [vmem:[%s3 + $0xe0] sm:$0xf]
      %v482 = vld [vmem:[%s3 + $0xe4] sm:$0xff]
      %v483 = vld [vmem:[%s3 + $0xec] sm:$0xf]
      %v484 = vld [vmem:[%s3 + $0xf0] sm:$0xff]
      %v485 = vld [vmem:[%s3 + $0xf8] sm:$0xf]
      %v486 = vld [vmem:[%s3 + $0xfc] sm:$0xff]
      %v487 = vld [vmem:[%s3 + $0x104] sm:$0xf]
      %v488 = vld [vmem:[%s3 + $0x108] sm:$0xff]
      %v489 = vld [vmem:[%s3 + $0x110] sm:$0xf]
      %v490 = vld [vmem:[%s3 + $0x114] sm:$0xff]
      %v491 = vld [vmem:[%s3 + $0x11c] sm:$0xf]
      %v492 = vld [vmem:[%s3 + $0x120] sm:$0xff]
      %v493 = vld [vmem:[%s3 + $0x128] sm:$0xf]
      %v494 = vld [vmem:[%s3 + $0x12c] sm:$0xff]
      %v495 = vld [vmem:[%s3 + $0x134] sm:$0xf]
      %v496 = vld [vmem:[%s3 + $0x138] sm:$0xff]
      %v497 = vld [vmem:[%s3 + $0x140] sm:$0xf]
      %v498 = vld [vmem:[%s3 + $0x144] sm:$0xff]
      %v499 = vld [vmem:[%s3 + $0x14c] sm:$0xf]
      %v500 = vld [vmem:[%s3 + $0x150] sm:$0xff]
      %v501 = vld [vmem:[%s3 + $0x158] sm:$0xf]
      %v502 = vld [vmem:[%s3 + $0x15c] sm:$0xff]
      %v503 = vld [vmem:[%s3 + $0x164] sm:$0xf]
      %v504 = vld [vmem:[%s3 + $0x168] sm:$0xff]
      %v505 = vld [vmem:[%s3 + $0x170] sm:$0xf]
      %v506 = vld [vmem:[%s3 + $0x174] sm:$0xff]
      %v507 = vld [vmem:[%s3 + $0x17c] sm:$0xf]
      %v508 = vld [vmem:[%s7] ss:$2 sm:$0x7]
      %v510 = vperm.slane %v508, 0
      %v511 = vperm.slane %v508, 1
      %v512 = vperm.slane %v508, 2
      %v564 = vunpack.c.l.b16 %v396
      %v565 = vunpack.c.h.b16 %v396
      %v566 = vunpack.c.l.b16 %v397
      %v567 = vunpack.c.h.b16 %v397
      %v568 = vunpack.c.l.b16 %v398
      %v569 = vunpack.c.h.b16 %v398
      %v570 = vunpack.c.l.b16 %v399
      %v571 = vunpack.c.h.b16 %v399
      %v572 = vunpack.c.l.b16 %v400
      %v573 = vunpack.c.h.b16 %v400
      %v574 = vunpack.c.l.b16 %v401
      %v575 = vunpack.c.h.b16 %v401
      %v576 = vunpack.c.l.b16 %v402
      %v577 = vunpack.c.h.b16 %v402
      %v578 = vunpack.c.l.b16 %v403
      %v579 = vunpack.c.h.b16 %v403
      %v580 = vunpack.c.l.b16 %v404
      %v581 = vunpack.c.h.b16 %v404
      %v582 = vunpack.c.l.b16 %v405
      %v583 = vunpack.c.h.b16 %v405
      %v584 = vunpack.c.l.b16 %v406
      %v585 = vunpack.c.h.b16 %v406
      %v586 = vunpack.c.l.b16 %v407
      %v587 = vunpack.c.h.b16 %v407
      %v588 = vunpack.c.l.b16 %v408
      %v589 = vunpack.c.h.b16 %v408
      %v590 = vunpack.c.l.b16 %v409
      %v591 = vunpack.c.h.b16 %v409
      %v592 = vunpack.c.l.b16 %v410
      %v593 = vunpack.c.h.b16 %v410
      %v594 = vunpack.c.l.b16 %v411
      %v595 = vunpack.c.h.b16 %v411
      %v596 = vunpack.c.l.b16 %v412
      %v597 = vunpack.c.h.b16 %v412
      %v598 = vunpack.c.l.b16 %v413
      %v599 = vunpack.c.h.b16 %v413
      %v600 = vunpack.c.l.b16 %v414
      %v601 = vunpack.c.h.b16 %v414
      %v602 = vunpack.c.l.b16 %v415
      %v603 = vunpack.c.h.b16 %v415
      %v604 = vunpack.c.l.b16 %v416
      %v605 = vunpack.c.h.b16 %v416
      %v606 = vunpack.c.l.b16 %v417
      %v607 = vunpack.c.h.b16 %v417
      %v608 = vunpack.c.l.b16 %v418
      %v609 = vunpack.c.h.b16 %v418
      %v610 = vunpack.c.l.b16 %v419
      %v611 = vunpack.c.h.b16 %v419
      %v612 = vunpack.c.l.b16 %v420
      %v613 = vunpack.c.h.b16 %v420
      %v614 = vunpack.c.l.b16 %v421
      %v615 = vunpack.c.h.b16 %v421
      %v616 = vunpack.c.l.b16 %v422
      %v617 = vunpack.c.h.b16 %v422
      %v618 = vunpack.c.l.b16 %v423
      %v619 = vunpack.c.h.b16 %v423
      %v620 = vunpack.c.l.b16 %v424
      %v621 = vunpack.c.h.b16 %v424
      %v622 = vunpack.c.l.b16 %v425
      %v623 = vunpack.c.h.b16 %v425
      %v624 = vunpack.c.l.b16 %v426
      %v625 = vunpack.c.h.b16 %v426
      %v626 = vunpack.c.l.b16 %v427
      %v627 = vunpack.c.h.b16 %v427
      %v628 = vunpack.c.l.b16 %v428
      %v629 = vunpack.c.h.b16 %v428
      %v630 = vunpack.c.l.b16 %v429
      %v631 = vunpack.c.h.b16 %v429
      %v632 = vunpack.c.l.b16 %v430
      %v633 = vunpack.c.h.b16 %v430
      %v634 = vunpack.c.l.b16 %v431
      %v635 = vunpack.c.h.b16 %v431
      %v636 = vunpack.c.l.b16 %v432
      %v637 = vunpack.c.h.b16 %v432
      %v638 = vunpack.c.l.b16 %v433
      %v639 = vunpack.c.h.b16 %v433
      %v640 = vunpack.c.l.b16 %v434
      %v641 = vunpack.c.h.b16 %v434
      %v642 = vunpack.c.l.b16 %v435
      %v643 = vunpack.c.h.b16 %v435
      %v644 = vunpack.c.l.b16 %v436
      %v645 = vunpack.c.h.b16 %v436
      %v646 = vunpack.c.l.b16 %v437
      %v647 = vunpack.c.h.b16 %v437
      %v648 = vunpack.c.l.b16 %v438
      %v649 = vunpack.c.h.b16 %v438
      %v650 = vunpack.c.l.b16 %v439
      %v651 = vunpack.c.h.b16 %v439
      %v652 = vunpack.c.l.b16 %v440
      %v653 = vunpack.c.h.b16 %v440
      %v654 = vunpack.c.l.b16 %v441
      %v655 = vunpack.c.h.b16 %v441
      %v656 = vunpack.c.l.b16 %v442
      %v657 = vunpack.c.h.b16 %v442
      %v658 = vunpack.c.l.b16 %v443
      %v659 = vunpack.c.h.b16 %v443
      %v660 = vpack.c.b16 %v566, %v564
      %v661 = vpack.c.b16 %v567, %v565
      %v662 = vpack.c.b16 %v570, %v568
      %v663 = vpack.c.b16 %v571, %v569
      %v664 = vpack.c.b16 %v574, %v572
      %v665 = vpack.c.b16 %v575, %v573
      %v666 = vpack.c.b16 %v578, %v576
      %v667 = vpack.c.b16 %v579, %v577
      %v668 = vpack.c.b16 %v582, %v580
      %v669 = vpack.c.b16 %v583, %v581
      %v670 = vpack.c.b16 %v586, %v584
      %v671 = vpack.c.b16 %v587, %v585
      %v672 = vpack.c.b16 %v590, %v588
      %v673 = vpack.c.b16 %v591, %v589
      %v674 = vpack.c.b16 %v594, %v592
      %v675 = vpack.c.b16 %v595, %v593
      %v676 = vpack.c.b16 %v598, %v596
      %v677 = vpack.c.b16 %v599, %v597
      %v678 = vpack.c.b16 %v602, %v600
      %v679 = vpack.c.b16 %v603, %v601
      %v680 = vpack.c.b16 %v606, %v604
      %v681 = vpack.c.b16 %v607, %v605
      %v682 = vpack.c.b16 %v610, %v608
      %v683 = vpack.c.b16 %v611, %v609
      %v684 = vpack.c.b16 %v614, %v612
      %v685 = vpack.c.b16 %v615, %v613
      %v686 = vpack.c.b16 %v618, %v616
      %v687 = vpack.c.b16 %v619, %v617
      %v688 = vpack.c.b16 %v622, %v620
      %v689 = vpack.c.b16 %v623, %v621
      %v690 = vpack.c.b16 %v626, %v624
      %v691 = vpack.c.b16 %v627, %v625
      %v692 = vpack.c.b16 %v630, %v628
      %v693 = vpack.c.b16 %v631, %v629
      %v694 = vpack.c.b16 %v634, %v632
      %v695 = vpack.c.b16 %v635, %v633
      %v696 = vpack.c.b16 %v638, %v636
      %v697 = vpack.c.b16 %v639, %v637
      %v698 = vpack.c.b16 %v642, %v640
      %v699 = vpack.c.b16 %v643, %v641
      %v700 = vpack.c.b16 %v646, %v644
      %v701 = vpack.c.b16 %v647, %v645
      %v702 = vpack.c.b16 %v650, %v648
      %v703 = vpack.c.b16 %v651, %v649
      %v704 = vpack.c.b16 %v654, %v652
      %v705 = vpack.c.b16 %v655, %v653
      %v706 = vpack.c.b16 %v658, %v656
      %v707 = vpack.c.b16 %v659, %v657
      %v820 = vunpack.c.l.b16 %v444
      %v821 = vunpack.c.h.b16 %v444
      %v822 = vunpack.c.l.b16 %v445
      %v823 = vunpack.c.l.b16 %v446
      %v824 = vunpack.c.h.b16 %v446
      %v825 = vunpack.c.l.b16 %v447
      %v826 = vunpack.c.l.b16 %v448
      %v827 = vunpack.c.h.b16 %v448
      %v828 = vunpack.c.l.b16 %v449
      %v829 = vunpack.c.l.b16 %v450
      %v830 = vunpack.c.h.b16 %v450
      %v831 = vunpack.c.l.b16 %v451
      %v832 = vunpack.c.l.b16 %v452
      %v833 = vunpack.c.h.b16 %v452
      %v834 = vunpack.c.l.b16 %v453
      %v835 = vunpack.c.l.b16 %v454
      %v836 = vunpack.c.h.b16 %v454
      %v837 = vunpack.c.l.b16 %v455
      %v838 = vunpack.c.l.b16 %v456
      %v839 = vunpack.c.h.b16 %v456
      %v840 = vunpack.c.l.b16 %v457
      %v841 = vunpack.c.l.b16 %v458
      %v842 = vunpack.c.h.b16 %v458
      %v843 = vunpack.c.l.b16 %v459
      %v844 = vunpack.c.l.b16 %v460
      %v845 = vunpack.c.h.b16 %v460
      %v846 = vunpack.c.l.b16 %v461
      %v847 = vunpack.c.l.b16 %v462
      %v848 = vunpack.c.h.b16 %v462
      %v849 = vunpack.c.l.b16 %v463
      %v850 = vunpack.c.l.b16 %v464
      %v851 = vunpack.c.h.b16 %v464
      %v852 = vunpack.c.l.b16 %v465
      %v853 = vunpack.c.l.b16 %v466
      %v854 = vunpack.c.h.b16 %v466
      %v855 = vunpack.c.l.b16 %v467
      %v856 = vunpack.c.l.b16 %v468
      %v857 = vunpack.c.h.b16 %v468
      %v858 = vunpack.c.l.b16 %v469
      %v859 = vunpack.c.l.b16 %v470
      %v860 = vunpack.c.h.b16 %v470
      %v861 = vunpack.c.l.b16 %v471
      %v862 = vunpack.c.l.b16 %v472
      %v863 = vunpack.c.h.b16 %v472
      %v864 = vunpack.c.l.b16 %v473
      %v865 = vunpack.c.l.b16 %v474
      %v866 = vunpack.c.h.b16 %v474
      %v867 = vunpack.c.l.b16 %v475
      %v868 = vunpack.c.l.b16 %v476
      %v869 = vunpack.c.h.b16 %v476
      %v870 = vunpack.c.l.b16 %v477
      %v871 = vunpack.c.l.b16 %v478
      %v872 = vunpack.c.h.b16 %v478
      %v873 = vunpack.c.l.b16 %v479
      %v874 = vunpack.c.l.b16 %v480
      %v875 = vunpack.c.h.b16 %v480
      %v876 = vunpack.c.l.b16 %v481
      %v877 = vunpack.c.l.b16 %v482
      %v878 = vunpack.c.h.b16 %v482
      %v879 = vunpack.c.l.b16 %v483
      %v880 = vunpack.c.l.b16 %v484
      %v881 = vunpack.c.h.b16 %v484
      %v882 = vunpack.c.l.b16 %v485
      %v883 = vunpack.c.l.b16 %v486
      %v884 = vunpack.c.h.b16 %v486
      %v885 = vunpack.c.l.b16 %v487
      %v886 = vunpack.c.l.b16 %v488
      %v887 = vunpack.c.h.b16 %v488
      %v888 = vunpack.c.l.b16 %v489
      %v889 = vunpack.c.l.b16 %v490
      %v890 = vunpack.c.h.b16 %v490
      %v891 = vunpack.c.l.b16 %v491
      %v892 = vunpack.c.l.b16 %v492
      %v893 = vunpack.c.h.b16 %v492
      %v894 = vunpack.c.l.b16 %v493
      %v895 = vunpack.c.l.b16 %v494
      %v896 = vunpack.c.h.b16 %v494
      %v897 = vunpack.c.l.b16 %v495
      %v898 = vunpack.c.l.b16 %v496
      %v899 = vunpack.c.h.b16 %v496
      %v900 = vunpack.c.l.b16 %v497
      %v901 = vunpack.c.l.b16 %v498
      %v902 = vunpack.c.h.b16 %v498
      %v903 = vunpack.c.l.b16 %v499
      %v904 = vunpack.c.l.b16 %v500
      %v905 = vunpack.c.h.b16 %v500
      %v906 = vunpack.c.l.b16 %v501
      %v907 = vunpack.c.l.b16 %v502
      %v908 = vunpack.c.h.b16 %v502
      %v909 = vunpack.c.l.b16 %v503
      %v910 = vunpack.c.l.b16 %v504
      %v911 = vunpack.c.h.b16 %v504
      %v912 = vunpack.c.l.b16 %v505
      %v913 = vunpack.c.l.b16 %v506
      %v914 = vunpack.c.h.b16 %v506
      %v915 = vunpack.c.l.b16 %v507
      %v916 = vpack.c.b16 %v823, %v820
      %v917 = vpack.c.b16 %v824, %v821
      %v918 = vpack.c.b16 %v825, %v822
      %v919 = vpack.c.b16 %v829, %v826
      %v920 = vpack.c.b16 %v830, %v827
      %v921 = vpack.c.b16 %v831, %v828
      %v922 = vpack.c.b16 %v835, %v832
      %v923 = vpack.c.b16 %v836, %v833
      %v924 = vpack.c.b16 %v837, %v834
      %v925 = vpack.c.b16 %v841, %v838
      %v926 = vpack.c.b16 %v842, %v839
      %v927 = vpack.c.b16 %v843, %v840
      %v928 = vpack.c.b16 %v847, %v844
      %v929 = vpack.c.b16 %v848, %v845
      %v930 = vpack.c.b16 %v849, %v846
      %v931 = vpack.c.b16 %v853, %v850
      %v932 = vpack.c.b16 %v854, %v851
      %v933 = vpack.c.b16 %v855, %v852
      %v934 = vpack.c.b16 %v859, %v856
      %v935 = vpack.c.b16 %v860, %v857
      %v936 = vpack.c.b16 %v861, %v858
      %v937 = vpack.c.b16 %v865, %v862
      %v938 = vpack.c.b16 %v866, %v863
      %v939 = vpack.c.b16 %v867, %v864
      %v940 = vpack.c.b16 %v871, %v868
      %v941 = vpack.c.b16 %v872, %v869
      %v942 = vpack.c.b16 %v873, %v870
      %v943 = vpack.c.b16 %v877, %v874
      %v944 = vpack.c.b16 %v878, %v875
      %v945 = vpack.c.b16 %v879, %v876
      %v946 = vpack.c.b16 %v883, %v880
      %v947 = vpack.c.b16 %v884, %v881
      %v948 = vpack.c.b16 %v885, %v882
      %v949 = vpack.c.b16 %v889, %v886
      %v950 = vpack.c.b16 %v890, %v887
      %v951 = vpack.c.b16 %v891, %v888
      %v952 = vpack.c.b16 %v895, %v892
      %v953 = vpack.c.b16 %v896, %v893
      %v954 = vpack.c.b16 %v897, %v894
      %v955 = vpack.c.b16 %v901, %v898
      %v956 = vpack.c.b16 %v902, %v899
      %v957 = vpack.c.b16 %v903, %v900
      %v958 = vpack.c.b16 %v907, %v904
      %v959 = vpack.c.b16 %v908, %v905
      %v960 = vpack.c.b16 %v909, %v906
      %v961 = vpack.c.b16 %v913, %v910
      %v962 = vpack.c.b16 %v914, %v911
      %v963 = vpack.c.b16 %v915, %v912
      %1012 = vmatpush.bf16.msra.mxu0 %v937
      %1013 = vmatpush.bf16.msra.mxu0 %v934
      %1014 = vmatpush.bf16.msra.mxu0 %v931
      %1015 = vmatpush.bf16.msra.mxu0 %v928
      %1016 = vmatpush.bf16.msra.mxu0 %v925
      %1017 = vmatpush.bf16.msra.mxu0 %v922
      %1018 = vmatpush.bf16.msra.mxu0 %v919
      %1019 = vmatpush.bf16.msra.mxu0 %v916
      %1020 = vmatmul.bf16.gmra.mxu0 %v660
      %v1021 = vpop.f32.mrf.mxu0
      %v1022 = vadd.f32 %v510, %v1021
      %v1023 = vpop.f32.mrf.mxu0
      %v1024 = vadd.f32 %v510, %v1023
      %1025 = vmatmul.bf16.gmra.mxu0 %v662
      %v1026 = vpop.f32.mrf.mxu0
      %v1027 = vadd.f32 %v510, %v1026
      %v1028 = vpop.f32.mrf.mxu0
      %v1029 = vadd.f32 %v510, %v1028
      %1030 = vmatmul.bf16.gmra.mxu0 %v664
      %v1031 = vpop.f32.mrf.mxu0
      %v1032 = vadd.f32 %v510, %v1031
      %v1033 = vpop.f32.mrf.mxu0
      %v1034 = vadd.f32 %v510, %v1033
      %1035 = vmatmul.bf16.gmra.mxu0 %v666
      %v1036 = vpop.f32.mrf.mxu0
      %v1037 = vadd.f32 %v510, %v1036
      %v1038 = vpop.f32.mrf.mxu0
      %v1039 = vadd.f32 %v510, %v1038
      %1040 = vmatmul.bf16.gmra.mxu0 %v668
      %v1041 = vpop.f32.mrf.mxu0
      %v1042 = vadd.f32 %v510, %v1041
      %v1043 = vpop.f32.mrf.mxu0
      %v1044 = vadd.f32 %v510, %v1043
      %1045 = vmatmul.bf16.gmra.mxu0 %v670
      %v1046 = vpop.f32.mrf.mxu0
      %v1047 = vadd.f32 %v510, %v1046
      %v1048 = vpop.f32.mrf.mxu0
      %v1049 = vadd.f32 %v510, %v1048
      %1050 = vmatmul.bf16.gmra.mxu0 %v672
      %v1051 = vpop.f32.mrf.mxu0
      %v1052 = vadd.f32 %v510, %v1051
      %v1053 = vpop.f32.mrf.mxu0
      %v1054 = vadd.f32 %v510, %v1053
      %1055 = vmatmul.bf16.gmra.mxu0 %v674
      %v1056 = vpop.f32.mrf.mxu0
      %v1057 = vadd.f32 %v510, %v1056
      %v1058 = vpop.f32.mrf.mxu0
      %v1059 = vadd.f32 %v510, %v1058
      %1060 = vmatmul.bf16.gmra.mxu0 %v676
      %v1061 = vpop.f32.mrf.mxu0
      %v1062 = vadd.f32 %v510, %v1061
      %v1063 = vpop.f32.mrf.mxu0
      %v1064 = vadd.f32 %v510, %v1063
      %1065 = vmatmul.bf16.gmra.mxu0 %v678
      %v1066 = vpop.f32.mrf.mxu0
      %v1067 = vadd.f32 %v510, %v1066
      %v1068 = vpop.f32.mrf.mxu0
      %v1069 = vadd.f32 %v510, %v1068
      %1070 = vmatmul.bf16.gmra.mxu0 %v680
      %v1071 = vpop.f32.mrf.mxu0
      %v1072 = vadd.f32 %v510, %v1071
      %v1073 = vpop.f32.mrf.mxu0
      %v1074 = vadd.f32 %v510, %v1073
      %1075 = vmatmul.bf16.gmra.mxu0 %v682
      %v1076 = vpop.f32.mrf.mxu0
      %v1077 = vadd.f32 %v510, %v1076
      %v1078 = vpop.f32.mrf.mxu0
      %v1079 = vadd.f32 %v510, %v1078
      %1080 = vmatmul.bf16.gmra.mxu0 %v684
      %v1081 = vpop.f32.mrf.mxu0
      %v1082 = vadd.f32 %v510, %v1081
      %v1083 = vpop.f32.mrf.mxu0
      %v1084 = vadd.f32 %v510, %v1083
      %1085 = vmatmul.bf16.gmra.mxu0 %v686
      %v1086 = vpop.f32.mrf.mxu0
      %v1087 = vadd.f32 %v510, %v1086
      %v1088 = vpop.f32.mrf.mxu0
      %v1089 = vadd.f32 %v510, %v1088
      %1090 = vmatmul.bf16.gmra.mxu0 %v688
      %v1091 = vpop.f32.mrf.mxu0
      %v1092 = vadd.f32 %v510, %v1091
      %v1093 = vpop.f32.mrf.mxu0
      %v1094 = vadd.f32 %v510, %v1093
      %1095 = vmatmul.bf16.gmra.mxu0 %v690
      %v1096 = vpop.f32.mrf.mxu0
      %v1097 = vadd.f32 %v510, %v1096
      %v1098 = vpop.f32.mrf.mxu0
      %v1099 = vadd.f32 %v510, %v1098
      %1100 = vmatmul.bf16.gmra.mxu0 %v692
      %v1101 = vpop.f32.mrf.mxu0
      %v1102 = vadd.f32 %v510, %v1101
      %v1103 = vpop.f32.mrf.mxu0
      %v1104 = vadd.f32 %v510, %v1103
      %1105 = vmatmul.bf16.gmra.mxu0 %v694
      %v1106 = vpop.f32.mrf.mxu0
      %v1107 = vadd.f32 %v510, %v1106
      %v1108 = vpop.f32.mrf.mxu0
      %v1109 = vadd.f32 %v510, %v1108
      %1110 = vmatmul.bf16.gmra.mxu0 %v696
      %v1111 = vpop.f32.mrf.mxu0
      %v1112 = vadd.f32 %v510, %v1111
      %v1113 = vpop.f32.mrf.mxu0
      %v1114 = vadd.f32 %v510, %v1113
      %1115 = vmatmul.bf16.gmra.mxu0 %v698
      %v1116 = vpop.f32.mrf.mxu0
      %v1117 = vadd.f32 %v510, %v1116
      %v1118 = vpop.f32.mrf.mxu0
      %v1119 = vadd.f32 %v510, %v1118
      %1120 = vmatmul.bf16.gmra.mxu0 %v700
      %v1121 = vpop.f32.mrf.mxu0
      %v1122 = vadd.f32 %v510, %v1121
      %v1123 = vpop.f32.mrf.mxu0
      %v1124 = vadd.f32 %v510, %v1123
      %1125 = vmatmul.bf16.gmra.mxu0 %v702
      %v1126 = vpop.f32.mrf.mxu0
      %v1127 = vadd.f32 %v510, %v1126
      %v1128 = vpop.f32.mrf.mxu0
      %v1129 = vadd.f32 %v510, %v1128
      %1130 = vmatmul.bf16.gmra.mxu0 %v704
      %v1131 = vpop.f32.mrf.mxu0
      %v1132 = vadd.f32 %v510, %v1131
      %v1133 = vpop.f32.mrf.mxu0
      %v1134 = vadd.f32 %v510, %v1133
      %1135 = vmatmul.bf16.gmra.mxu0 %v706
      %v1136 = vpop.f32.mrf.mxu0
      %v1137 = vadd.f32 %v510, %v1136
      %v1138 = vpop.f32.mrf.mxu0
      %v1139 = vadd.f32 %v510, %v1138
      %1140 = vdwg.mxu0
      %1141 = vmatpush.bf16.msra.mxu0 %v961
      %1142 = vmatpush.bf16.msra.mxu0 %v958
      %1143 = vmatpush.bf16.msra.mxu0 %v955
      %1144 = vmatpush.bf16.msra.mxu0 %v952
      %1145 = vmatpush.bf16.msra.mxu0 %v949
      %1146 = vmatpush.bf16.msra.mxu0 %v946
      %1147 = vmatpush.bf16.msra.mxu0 %v943
      %1148 = vmatpush.bf16.msra.mxu0 %v940
      %1149 = vmatmul.bf16.gmra.mxu0 %v661
      %v1150 = vpop.f32.mrf.mxu0
      %v1151 = vadd.f32 %v1022, %v1150
      %v1152 = vpop.f32.mrf.mxu0
      %v1153 = vadd.f32 %v1024, %v1152
      %1154 = vmatmul.bf16.gmra.mxu0 %v663
      %v1155 = vpop.f32.mrf.mxu0
      %v1156 = vadd.f32 %v1027, %v1155
      %v1157 = vpop.f32.mrf.mxu0
      %v1158 = vadd.f32 %v1029, %v1157
      %1159 = vmatmul.bf16.gmra.mxu0 %v665
      %v1160 = vpop.f32.mrf.mxu0
      %v1161 = vadd.f32 %v1032, %v1160
      %v1162 = vpop.f32.mrf.mxu0
      %v1163 = vadd.f32 %v1034, %v1162
      %1164 = vmatmul.bf16.gmra.mxu0 %v667
      %v1165 = vpop.f32.mrf.mxu0
      %v1166 = vadd.f32 %v1037, %v1165
      %v1167 = vpop.f32.mrf.mxu0
      %v1168 = vadd.f32 %v1039, %v1167
      %1169 = vmatmul.bf16.gmra.mxu0 %v669
      %v1170 = vpop.f32.mrf.mxu0
      %v1171 = vadd.f32 %v1042, %v1170
      %v1172 = vpop.f32.mrf.mxu0
      %v1173 = vadd.f32 %v1044, %v1172
      %1174 = vmatmul.bf16.gmra.mxu0 %v671
      %v1175 = vpop.f32.mrf.mxu0
      %v1176 = vadd.f32 %v1047, %v1175
      %v1177 = vpop.f32.mrf.mxu0
      %v1178 = vadd.f32 %v1049, %v1177
      %1179 = vmatmul.bf16.gmra.mxu0 %v673
      %v1180 = vpop.f32.mrf.mxu0
      %v1181 = vadd.f32 %v1052, %v1180
      %v1182 = vpop.f32.mrf.mxu0
      %v1183 = vadd.f32 %v1054, %v1182
      %1184 = vmatmul.bf16.gmra.mxu0 %v675
      %v1185 = vpop.f32.mrf.mxu0
      %v1186 = vadd.f32 %v1057, %v1185
      %v1187 = vpop.f32.mrf.mxu0
      %v1188 = vadd.f32 %v1059, %v1187
      %1189 = vmatmul.bf16.gmra.mxu0 %v677
      %v1190 = vpop.f32.mrf.mxu0
      %v1191 = vadd.f32 %v1062, %v1190
      %v1192 = vpop.f32.mrf.mxu0
      %v1193 = vadd.f32 %v1064, %v1192
      %1194 = vmatmul.bf16.gmra.mxu0 %v679
      %v1195 = vpop.f32.mrf.mxu0
      %v1196 = vadd.f32 %v1067, %v1195
      %v1197 = vpop.f32.mrf.mxu0
      %v1198 = vadd.f32 %v1069, %v1197
      %1199 = vmatmul.bf16.gmra.mxu0 %v681
      %v1200 = vpop.f32.mrf.mxu0
      %v1201 = vadd.f32 %v1072, %v1200
      %v1202 = vpop.f32.mrf.mxu0
      %v1203 = vadd.f32 %v1074, %v1202
      %1204 = vmatmul.bf16.gmra.mxu0 %v683
      %v1205 = vpop.f32.mrf.mxu0
      %v1206 = vadd.f32 %v1077, %v1205
      %v1207 = vpop.f32.mrf.mxu0
      %v1208 = vadd.f32 %v1079, %v1207
      %1209 = vmatmul.bf16.gmra.mxu0 %v685
      %v1210 = vpop.f32.mrf.mxu0
      %v1211 = vadd.f32 %v1082, %v1210
      %v1212 = vpop.f32.mrf.mxu0
      %v1213 = vadd.f32 %v1084, %v1212
      %1214 = vmatmul.bf16.gmra.mxu0 %v687
      %v1215 = vpop.f32.mrf.mxu0
      %v1216 = vadd.f32 %v1087, %v1215
      %v1217 = vpop.f32.mrf.mxu0
      %v1218 = vadd.f32 %v1089, %v1217
      %1219 = vmatmul.bf16.gmra.mxu0 %v689
      %v1220 = vpop.f32.mrf.mxu0
      %v1221 = vadd.f32 %v1092, %v1220
      %v1222 = vpop.f32.mrf.mxu0
      %v1223 = vadd.f32 %v1094, %v1222
      %1224 = vmatmul.bf16.gmra.mxu0 %v691
      %v1225 = vpop.f32.mrf.mxu0
      %v1226 = vadd.f32 %v1097, %v1225
      %v1227 = vpop.f32.mrf.mxu0
      %v1228 = vadd.f32 %v1099, %v1227
      %1229 = vmatmul.bf16.gmra.mxu0 %v693
      %v1230 = vpop.f32.mrf.mxu0
      %v1231 = vadd.f32 %v1102, %v1230
      %v1232 = vpop.f32.mrf.mxu0
      %v1233 = vadd.f32 %v1104, %v1232
      %1234 = vmatmul.bf16.gmra.mxu0 %v695
      %v1235 = vpop.f32.mrf.mxu0
      %v1236 = vadd.f32 %v1107, %v1235
      %v1237 = vpop.f32.mrf.mxu0
      %v1238 = vadd.f32 %v1109, %v1237
      %1239 = vmatmul.bf16.gmra.mxu0 %v697
      %v1240 = vpop.f32.mrf.mxu0
      %v1241 = vadd.f32 %v1112, %v1240
      %v1242 = vpop.f32.mrf.mxu0
      %v1243 = vadd.f32 %v1114, %v1242
      %1244 = vmatmul.bf16.gmra.mxu0 %v699
      %v1245 = vpop.f32.mrf.mxu0
      %v1246 = vadd.f32 %v1117, %v1245
      %v1247 = vpop.f32.mrf.mxu0
      %v1248 = vadd.f32 %v1119, %v1247
      %1249 = vmatmul.bf16.gmra.mxu0 %v701
      %v1250 = vpop.f32.mrf.mxu0
      %v1251 = vadd.f32 %v1122, %v1250
      %v1252 = vpop.f32.mrf.mxu0
      %v1253 = vadd.f32 %v1124, %v1252
      %1254 = vmatmul.bf16.gmra.mxu0 %v703
      %v1255 = vpop.f32.mrf.mxu0
      %v1256 = vadd.f32 %v1127, %v1255
      %v1257 = vpop.f32.mrf.mxu0
      %v1258 = vadd.f32 %v1129, %v1257
      %1259 = vmatmul.bf16.gmra.mxu0 %v705
      %v1260 = vpop.f32.mrf.mxu0
      %v1261 = vadd.f32 %v1132, %v1260
      %v1262 = vpop.f32.mrf.mxu0
      %v1263 = vadd.f32 %v1134, %v1262
      %1264 = vmatmul.bf16.gmra.mxu0 %v707
      %v1265 = vpop.f32.mrf.mxu0
      %v1266 = vadd.f32 %v1137, %v1265
      %v1267 = vpop.f32.mrf.mxu0
      %v1268 = vadd.f32 %v1139, %v1267
      %1269 = vdwg.mxu0
      %1270 = vmatpush.bf16.msra.mxu0 %v938
      %1271 = vmatpush.bf16.msra.mxu0 %v935
      %1272 = vmatpush.bf16.msra.mxu0 %v932
      %1273 = vmatpush.bf16.msra.mxu0 %v929
      %1274 = vmatpush.bf16.msra.mxu0 %v926
      %1275 = vmatpush.bf16.msra.mxu0 %v923
      %1276 = vmatpush.bf16.msra.mxu0 %v920
      %1277 = vmatpush.bf16.msra.mxu0 %v917
      %1278 = vmatmul.bf16.gmra.mxu0 %v660
      %v1279 = vpop.f32.mrf.mxu0
      %v1280 = vadd.f32 %v511, %v1279
      %v1281 = vpop.f32.mrf.mxu0
      %v1282 = vadd.f32 %v511, %v1281
      %1283 = vmatmul.bf16.gmra.mxu0 %v662
      %v1284 = vpop.f32.mrf.mxu0
      %v1285 = vadd.f32 %v511, %v1284
      %v1286 = vpop.f32.mrf.mxu0
      %v1287 = vadd.f32 %v511, %v1286
      %1288 = vmatmul.bf16.gmra.mxu0 %v664
      %v1289 = vpop.f32.mrf.mxu0
      %v1290 = vadd.f32 %v511, %v1289
      %v1291 = vpop.f32.mrf.mxu0
      %v1292 = vadd.f32 %v511, %v1291
      %1293 = vmatmul.bf16.gmra.mxu0 %v666
      %v1294 = vpop.f32.mrf.mxu0
      %v1295 = vadd.f32 %v511, %v1294
      %v1296 = vpop.f32.mrf.mxu0
      %v1297 = vadd.f32 %v511, %v1296
      %1298 = vmatmul.bf16.gmra.mxu0 %v668
      %v1299 = vpop.f32.mrf.mxu0
      %v1300 = vadd.f32 %v511, %v1299
      %v1301 = vpop.f32.mrf.mxu0
      %v1302 = vadd.f32 %v511, %v1301
      %1303 = vmatmul.bf16.gmra.mxu0 %v670
      %v1304 = vpop.f32.mrf.mxu0
      %v1305 = vadd.f32 %v511, %v1304
      %v1306 = vpop.f32.mrf.mxu0
      %v1307 = vadd.f32 %v511, %v1306
      %1308 = vmatmul.bf16.gmra.mxu0 %v672
      %v1309 = vpop.f32.mrf.mxu0
      %v1310 = vadd.f32 %v511, %v1309
      %v1311 = vpop.f32.mrf.mxu0
      %v1312 = vadd.f32 %v511, %v1311
      %1313 = vmatmul.bf16.gmra.mxu0 %v674
      %v1314 = vpop.f32.mrf.mxu0
      %v1315 = vadd.f32 %v511, %v1314
      %v1316 = vpop.f32.mrf.mxu0
      %v1317 = vadd.f32 %v511, %v1316
      %1318 = vmatmul.bf16.gmra.mxu0 %v676
      %v1319 = vpop.f32.mrf.mxu0
      %v1320 = vadd.f32 %v511, %v1319
      %v1321 = vpop.f32.mrf.mxu0
      %v1322 = vadd.f32 %v511, %v1321
      %1323 = vmatmul.bf16.gmra.mxu0 %v678
      %v1324 = vpop.f32.mrf.mxu0
      %v1325 = vadd.f32 %v511, %v1324
      %v1326 = vpop.f32.mrf.mxu0
      %v1327 = vadd.f32 %v511, %v1326
      %1328 = vmatmul.bf16.gmra.mxu0 %v680
      %v1329 = vpop.f32.mrf.mxu0
      %v1330 = vadd.f32 %v511, %v1329
      %v1331 = vpop.f32.mrf.mxu0
      %v1332 = vadd.f32 %v511, %v1331
      %1333 = vmatmul.bf16.gmra.mxu0 %v682
      %v1334 = vpop.f32.mrf.mxu0
      %v1335 = vadd.f32 %v511, %v1334
      %v1336 = vpop.f32.mrf.mxu0
      %v1337 = vadd.f32 %v511, %v1336
      %1338 = vmatmul.bf16.gmra.mxu0 %v684
      %v1339 = vpop.f32.mrf.mxu0
      %v1340 = vadd.f32 %v511, %v1339
      %v1341 = vpop.f32.mrf.mxu0
      %v1342 = vadd.f32 %v511, %v1341
      %1343 = vmatmul.bf16.gmra.mxu0 %v686
      %v1344 = vpop.f32.mrf.mxu0
      %v1345 = vadd.f32 %v511, %v1344
      %v1346 = vpop.f32.mrf.mxu0
      %v1347 = vadd.f32 %v511, %v1346
      %1348 = vmatmul.bf16.gmra.mxu0 %v688
      %v1349 = vpop.f32.mrf.mxu0
      %v1350 = vadd.f32 %v511, %v1349
      %v1351 = vpop.f32.mrf.mxu0
      %v1352 = vadd.f32 %v511, %v1351
      %1353 = vmatmul.bf16.gmra.mxu0 %v690
      %v1354 = vpop.f32.mrf.mxu0
      %v1355 = vadd.f32 %v511, %v1354
      %v1356 = vpop.f32.mrf.mxu0
      %v1357 = vadd.f32 %v511, %v1356
      %1358 = vmatmul.bf16.gmra.mxu0 %v692
      %v1359 = vpop.f32.mrf.mxu0
      %v1360 = vadd.f32 %v511, %v1359
      %v1361 = vpop.f32.mrf.mxu0
      %v1362 = vadd.f32 %v511, %v1361
      %1363 = vmatmul.bf16.gmra.mxu0 %v694
      %v1364 = vpop.f32.mrf.mxu0
      %v1365 = vadd.f32 %v511, %v1364
      %v1366 = vpop.f32.mrf.mxu0
      %v1367 = vadd.f32 %v511, %v1366
      %1368 = vmatmul.bf16.gmra.mxu0 %v696
      %v1369 = vpop.f32.mrf.mxu0
      %v1370 = vadd.f32 %v511, %v1369
      %v1371 = vpop.f32.mrf.mxu0
      %v1372 = vadd.f32 %v511, %v1371
      %1373 = vmatmul.bf16.gmra.mxu0 %v698
      %v1374 = vpop.f32.mrf.mxu0
      %v1375 = vadd.f32 %v511, %v1374
      %v1376 = vpop.f32.mrf.mxu0
      %v1377 = vadd.f32 %v511, %v1376
      %1378 = vmatmul.bf16.gmra.mxu0 %v700
      %v1379 = vpop.f32.mrf.mxu0
      %v1380 = vadd.f32 %v511, %v1379
      %v1381 = vpop.f32.mrf.mxu0
      %v1382 = vadd.f32 %v511, %v1381
      %1383 = vmatmul.bf16.gmra.mxu0 %v702
      %v1384 = vpop.f32.mrf.mxu0
      %v1385 = vadd.f32 %v511, %v1384
      %v1386 = vpop.f32.mrf.mxu0
      %v1387 = vadd.f32 %v511, %v1386
      %1388 = vmatmul.bf16.gmra.mxu0 %v704
      %v1389 = vpop.f32.mrf.mxu0
      %v1390 = vadd.f32 %v511, %v1389
      %v1391 = vpop.f32.mrf.mxu0
      %v1392 = vadd.f32 %v511, %v1391
      %1393 = vmatmul.bf16.gmra.mxu0 %v706
      %v1394 = vpop.f32.mrf.mxu0
      %v1395 = vadd.f32 %v511, %v1394
      %v1396 = vpop.f32.mrf.mxu0
      %v1397 = vadd.f32 %v511, %v1396
      %1398 = vdwg.mxu0
      %1399 = vmatpush.bf16.msra.mxu0 %v962
      %1400 = vmatpush.bf16.msra.mxu0 %v959
      %1401 = vmatpush.bf16.msra.mxu0 %v956
      %1402 = vmatpush.bf16.msra.mxu0 %v953
      %1403 = vmatpush.bf16.msra.mxu0 %v950
      %1404 = vmatpush.bf16.msra.mxu0 %v947
      %1405 = vmatpush.bf16.msra.mxu0 %v944
      %1406 = vmatpush.bf16.msra.mxu0 %v941
      %1407 = vmatmul.bf16.gmra.mxu0 %v661
      %v1408 = vpop.f32.mrf.mxu0
      %v1409 = vadd.f32 %v1280, %v1408
      %v1410 = vpop.f32.mrf.mxu0
      %v1411 = vadd.f32 %v1282, %v1410
      %1412 = vmatmul.bf16.gmra.mxu0 %v663
      %v1413 = vpop.f32.mrf.mxu0
      %v1414 = vadd.f32 %v1285, %v1413
      %v1415 = vpop.f32.mrf.mxu0
      %v1416 = vadd.f32 %v1287, %v1415
      %1417 = vmatmul.bf16.gmra.mxu0 %v665
      %v1418 = vpop.f32.mrf.mxu0
      %v1419 = vadd.f32 %v1290, %v1418
      %v1420 = vpop.f32.mrf.mxu0
      %v1421 = vadd.f32 %v1292, %v1420
      %1422 = vmatmul.bf16.gmra.mxu0 %v667
      %v1423 = vpop.f32.mrf.mxu0
      %v1424 = vadd.f32 %v1295, %v1423
      %v1425 = vpop.f32.mrf.mxu0
      %v1426 = vadd.f32 %v1297, %v1425
      %1427 = vmatmul.bf16.gmra.mxu0 %v669
      %v1428 = vpop.f32.mrf.mxu0
      %v1429 = vadd.f32 %v1300, %v1428
      %v1430 = vpop.f32.mrf.mxu0
      %v1431 = vadd.f32 %v1302, %v1430
      %1432 = vmatmul.bf16.gmra.mxu0 %v671
      %v1433 = vpop.f32.mrf.mxu0
      %v1434 = vadd.f32 %v1305, %v1433
      %v1435 = vpop.f32.mrf.mxu0
      %v1436 = vadd.f32 %v1307, %v1435
      %1437 = vmatmul.bf16.gmra.mxu0 %v673
      %v1438 = vpop.f32.mrf.mxu0
      %v1439 = vadd.f32 %v1310, %v1438
      %v1440 = vpop.f32.mrf.mxu0
      %v1441 = vadd.f32 %v1312, %v1440
      %1442 = vmatmul.bf16.gmra.mxu0 %v675
      %v1443 = vpop.f32.mrf.mxu0
      %v1444 = vadd.f32 %v1315, %v1443
      %v1445 = vpop.f32.mrf.mxu0
      %v1446 = vadd.f32 %v1317, %v1445
      %1447 = vmatmul.bf16.gmra.mxu0 %v677
      %v1448 = vpop.f32.mrf.mxu0
      %v1449 = vadd.f32 %v1320, %v1448
      %v1450 = vpop.f32.mrf.mxu0
      %v1451 = vadd.f32 %v1322, %v1450
      %1452 = vmatmul.bf16.gmra.mxu0 %v679
      %v1453 = vpop.f32.mrf.mxu0
      %v1454 = vadd.f32 %v1325, %v1453
      %v1455 = vpop.f32.mrf.mxu0
      %v1456 = vadd.f32 %v1327, %v1455
      %1457 = vmatmul.bf16.gmra.mxu0 %v681
      %v1458 = vpop.f32.mrf.mxu0
      %v1459 = vadd.f32 %v1330, %v1458
      %v1460 = vpop.f32.mrf.mxu0
      %v1461 = vadd.f32 %v1332, %v1460
      %1462 = vmatmul.bf16.gmra.mxu0 %v683
      %v1463 = vpop.f32.mrf.mxu0
      %v1464 = vadd.f32 %v1335, %v1463
      %v1465 = vpop.f32.mrf.mxu0
      %v1466 = vadd.f32 %v1337, %v1465
      %1467 = vmatmul.bf16.gmra.mxu0 %v685
      %v1468 = vpop.f32.mrf.mxu0
      %v1469 = vadd.f32 %v1340, %v1468
      %v1470 = vpop.f32.mrf.mxu0
      %v1471 = vadd.f32 %v1342, %v1470
      %1472 = vmatmul.bf16.gmra.mxu0 %v687
      %v1473 = vpop.f32.mrf.mxu0
      %v1474 = vadd.f32 %v1345, %v1473
      %v1475 = vpop.f32.mrf.mxu0
      %v1476 = vadd.f32 %v1347, %v1475
      %1477 = vmatmul.bf16.gmra.mxu0 %v689
      %v1478 = vpop.f32.mrf.mxu0
      %v1479 = vadd.f32 %v1350, %v1478
      %v1480 = vpop.f32.mrf.mxu0
      %v1481 = vadd.f32 %v1352, %v1480
      %1482 = vmatmul.bf16.gmra.mxu0 %v691
      %v1483 = vpop.f32.mrf.mxu0
      %v1484 = vadd.f32 %v1355, %v1483
      %v1485 = vpop.f32.mrf.mxu0
      %v1486 = vadd.f32 %v1357, %v1485
      %1487 = vmatmul.bf16.gmra.mxu0 %v693
      %v1488 = vpop.f32.mrf.mxu0
      %v1489 = vadd.f32 %v1360, %v1488
      %v1490 = vpop.f32.mrf.mxu0
      %v1491 = vadd.f32 %v1362, %v1490
      %1492 = vmatmul.bf16.gmra.mxu0 %v695
      %v1493 = vpop.f32.mrf.mxu0
      %v1494 = vadd.f32 %v1365, %v1493
      %v1495 = vpop.f32.mrf.mxu0
      %v1496 = vadd.f32 %v1367, %v1495
      %1497 = vmatmul.bf16.gmra.mxu0 %v697
      %v1498 = vpop.f32.mrf.mxu0
      %v1499 = vadd.f32 %v1370, %v1498
      %v1500 = vpop.f32.mrf.mxu0
      %v1501 = vadd.f32 %v1372, %v1500
      %1502 = vmatmul.bf16.gmra.mxu0 %v699
      %v1503 = vpop.f32.mrf.mxu0
      %v1504 = vadd.f32 %v1375, %v1503
      %v1505 = vpop.f32.mrf.mxu0
      %v1506 = vadd.f32 %v1377, %v1505
      %1507 = vmatmul.bf16.gmra.mxu0 %v701
      %v1508 = vpop.f32.mrf.mxu0
      %v1509 = vadd.f32 %v1380, %v1508
      %v1510 = vpop.f32.mrf.mxu0
      %v1511 = vadd.f32 %v1382, %v1510
      %1512 = vmatmul.bf16.gmra.mxu0 %v703
      %v1513 = vpop.f32.mrf.mxu0
      %v1514 = vadd.f32 %v1385, %v1513
      %v1515 = vpop.f32.mrf.mxu0
      %v1516 = vadd.f32 %v1387, %v1515
      %1517 = vmatmul.bf16.gmra.mxu0 %v705
      %v1518 = vpop.f32.mrf.mxu0
      %v1519 = vadd.f32 %v1390, %v1518
      %v1520 = vpop.f32.mrf.mxu0
      %v1521 = vadd.f32 %v1392, %v1520
      %1522 = vmatmul.bf16.gmra.mxu0 %v707
      %v1523 = vpop.f32.mrf.mxu0
      %v1524 = vadd.f32 %v1395, %v1523
      %v1525 = vpop.f32.mrf.mxu0
      %v1526 = vadd.f32 %v1397, %v1525
      %1527 = vdwg.mxu0
      %1528 = vmatpush.bf16.msra.mxu0 %v939
      %1529 = vmatpush.bf16.msra.mxu0 %v936
      %1530 = vmatpush.bf16.msra.mxu0 %v933
      %1531 = vmatpush.bf16.msra.mxu0 %v930
      %1532 = vmatpush.bf16.msra.mxu0 %v927
      %1533 = vmatpush.bf16.msra.mxu0 %v924
      %1534 = vmatpush.bf16.msra.mxu0 %v921
      %1535 = vmatpush.bf16.msra.mxu0 %v918
      %1536 = vmatmul.bf16.gmra.mxu0 %v660
      %v1537 = vpop.f32.mrf.mxu0
      %v1538 = vadd.f32 %v512, %v1537
      %v1539 = vpop.f32.mrf.mxu0
      %v1540 = vadd.f32 %v512, %v1539
      %1541 = vmatmul.bf16.gmra.mxu0 %v662
      %v1542 = vpop.f32.mrf.mxu0
      %v1543 = vadd.f32 %v512, %v1542
      %v1544 = vpop.f32.mrf.mxu0
      %v1545 = vadd.f32 %v512, %v1544
      %1546 = vmatmul.bf16.gmra.mxu0 %v664
      %v1547 = vpop.f32.mrf.mxu0
      %v1548 = vadd.f32 %v512, %v1547
      %v1549 = vpop.f32.mrf.mxu0
      %v1550 = vadd.f32 %v512, %v1549
      %1551 = vmatmul.bf16.gmra.mxu0 %v666
      %v1552 = vpop.f32.mrf.mxu0
      %v1553 = vadd.f32 %v512, %v1552
      %v1554 = vpop.f32.mrf.mxu0
      %v1555 = vadd.f32 %v512, %v1554
      %1556 = vmatmul.bf16.gmra.mxu0 %v668
      %v1557 = vpop.f32.mrf.mxu0
      %v1558 = vadd.f32 %v512, %v1557
      %v1559 = vpop.f32.mrf.mxu0
      %v1560 = vadd.f32 %v512, %v1559
      %1561 = vmatmul.bf16.gmra.mxu0 %v670
      %v1562 = vpop.f32.mrf.mxu0
      %v1563 = vadd.f32 %v512, %v1562
      %v1564 = vpop.f32.mrf.mxu0
      %v1565 = vadd.f32 %v512, %v1564
      %1566 = vmatmul.bf16.gmra.mxu0 %v672
      %v1567 = vpop.f32.mrf.mxu0
      %v1568 = vadd.f32 %v512, %v1567
      %v1569 = vpop.f32.mrf.mxu0
      %v1570 = vadd.f32 %v512, %v1569
      %1571 = vmatmul.bf16.gmra.mxu0 %v674
      %v1572 = vpop.f32.mrf.mxu0
      %v1573 = vadd.f32 %v512, %v1572
      %v1574 = vpop.f32.mrf.mxu0
      %v1575 = vadd.f32 %v512, %v1574
      %1576 = vmatmul.bf16.gmra.mxu0 %v676
      %v1577 = vpop.f32.mrf.mxu0
      %v1578 = vadd.f32 %v512, %v1577
      %v1579 = vpop.f32.mrf.mxu0
      %v1580 = vadd.f32 %v512, %v1579
      %1581 = vmatmul.bf16.gmra.mxu0 %v678
      %v1582 = vpop.f32.mrf.mxu0
      %v1583 = vadd.f32 %v512, %v1582
      %v1584 = vpop.f32.mrf.mxu0
      %v1585 = vadd.f32 %v512, %v1584
      %1586 = vmatmul.bf16.gmra.mxu0 %v680
      %v1587 = vpop.f32.mrf.mxu0
      %v1588 = vadd.f32 %v512, %v1587
      %v1589 = vpop.f32.mrf.mxu0
      %v1590 = vadd.f32 %v512, %v1589
      %1591 = vmatmul.bf16.gmra.mxu0 %v682
      %v1592 = vpop.f32.mrf.mxu0
      %v1593 = vadd.f32 %v512, %v1592
      %v1594 = vpop.f32.mrf.mxu0
      %v1595 = vadd.f32 %v512, %v1594
      %1596 = vmatmul.bf16.gmra.mxu0 %v684
      %v1597 = vpop.f32.mrf.mxu0
      %v1598 = vadd.f32 %v512, %v1597
      %v1599 = vpop.f32.mrf.mxu0
      %v1600 = vadd.f32 %v512, %v1599
      %1601 = vmatmul.bf16.gmra.mxu0 %v686
      %v1602 = vpop.f32.mrf.mxu0
      %v1603 = vadd.f32 %v512, %v1602
      %v1604 = vpop.f32.mrf.mxu0
      %v1605 = vadd.f32 %v512, %v1604
      %1606 = vmatmul.bf16.gmra.mxu0 %v688
      %v1607 = vpop.f32.mrf.mxu0
      %v1608 = vadd.f32 %v512, %v1607
      %v1609 = vpop.f32.mrf.mxu0
      %v1610 = vadd.f32 %v512, %v1609
      %1611 = vmatmul.bf16.gmra.mxu0 %v690
      %v1612 = vpop.f32.mrf.mxu0
      %v1613 = vadd.f32 %v512, %v1612
      %v1614 = vpop.f32.mrf.mxu0
      %v1615 = vadd.f32 %v512, %v1614
      %1616 = vmatmul.bf16.gmra.mxu0 %v692
      %v1617 = vpop.f32.mrf.mxu0
      %v1618 = vadd.f32 %v512, %v1617
      %v1619 = vpop.f32.mrf.mxu0
      %v1620 = vadd.f32 %v512, %v1619
      %1621 = vmatmul.bf16.gmra.mxu0 %v694
      %v1622 = vpop.f32.mrf.mxu0
      %v1623 = vadd.f32 %v512, %v1622
      %v1624 = vpop.f32.mrf.mxu0
      %v1625 = vadd.f32 %v512, %v1624
      %1626 = vmatmul.bf16.gmra.mxu0 %v696
      %v1627 = vpop.f32.mrf.mxu0
      %v1628 = vadd.f32 %v512, %v1627
      %v1629 = vpop.f32.mrf.mxu0
      %v1630 = vadd.f32 %v512, %v1629
      %1631 = vmatmul.bf16.gmra.mxu0 %v698
      %v1632 = vpop.f32.mrf.mxu0
      %v1633 = vadd.f32 %v512, %v1632
      %v1634 = vpop.f32.mrf.mxu0
      %v1635 = vadd.f32 %v512, %v1634
      %1636 = vmatmul.bf16.gmra.mxu0 %v700
      %v1637 = vpop.f32.mrf.mxu0
      %v1638 = vadd.f32 %v512, %v1637
      %v1639 = vpop.f32.mrf.mxu0
      %v1640 = vadd.f32 %v512, %v1639
      %1641 = vmatmul.bf16.gmra.mxu0 %v702
      %v1642 = vpop.f32.mrf.mxu0
      %v1643 = vadd.f32 %v512, %v1642
      %v1644 = vpop.f32.mrf.mxu0
      %v1645 = vadd.f32 %v512, %v1644
      %1646 = vmatmul.bf16.gmra.mxu0 %v704
      %v1647 = vpop.f32.mrf.mxu0
      %v1648 = vadd.f32 %v512, %v1647
      %v1649 = vpop.f32.mrf.mxu0
      %v1650 = vadd.f32 %v512, %v1649
      %1651 = vmatmul.bf16.gmra.mxu0 %v706
      %v1652 = vpop.f32.mrf.mxu0
      %v1653 = vadd.f32 %v512, %v1652
      %v1654 = vpop.f32.mrf.mxu0
      %v1655 = vadd.f32 %v512, %v1654
      %1656 = vdwg.mxu0
      %1657 = vmatpush.bf16.msra.mxu0 %v963
      %1658 = vmatpush.bf16.msra.mxu0 %v960
      %1659 = vmatpush.bf16.msra.mxu0 %v957
      %1660 = vmatpush.bf16.msra.mxu0 %v954
      %1661 = vmatpush.bf16.msra.mxu0 %v951
      %1662 = vmatpush.bf16.msra.mxu0 %v948
      %1663 = vmatpush.bf16.msra.mxu0 %v945
      %1664 = vmatpush.bf16.msra.mxu0 %v942
      %1665 = vmatmul.bf16.gmra.mxu0 %v661
      %v1666 = vpop.f32.mrf.mxu0
      %v1667 = vadd.f32 %v1538, %v1666
      %v1668 = vpop.f32.mrf.mxu0
      %v1669 = vadd.f32 %v1540, %v1668
      %1670 = vmatmul.bf16.gmra.mxu0 %v663
      %v1671 = vpop.f32.mrf.mxu0
      %v1672 = vadd.f32 %v1543, %v1671
      %v1673 = vpop.f32.mrf.mxu0
      %v1674 = vadd.f32 %v1545, %v1673
      %1675 = vmatmul.bf16.gmra.mxu0 %v665
      %v1676 = vpop.f32.mrf.mxu0
      %v1677 = vadd.f32 %v1548, %v1676
      %v1678 = vpop.f32.mrf.mxu0
      %v1679 = vadd.f32 %v1550, %v1678
      %1680 = vmatmul.bf16.gmra.mxu0 %v667
      %v1681 = vpop.f32.mrf.mxu0
      %v1682 = vadd.f32 %v1553, %v1681
      %v1683 = vpop.f32.mrf.mxu0
      %v1684 = vadd.f32 %v1555, %v1683
      %1685 = vmatmul.bf16.gmra.mxu0 %v669
      %v1686 = vpop.f32.mrf.mxu0
      %v1687 = vadd.f32 %v1558, %v1686
      %v1688 = vpop.f32.mrf.mxu0
      %v1689 = vadd.f32 %v1560, %v1688
      %1690 = vmatmul.bf16.gmra.mxu0 %v671
      %v1691 = vpop.f32.mrf.mxu0
      %v1692 = vadd.f32 %v1563, %v1691
      %v1693 = vpop.f32.mrf.mxu0
      %v1694 = vadd.f32 %v1565, %v1693
      %1695 = vmatmul.bf16.gmra.mxu0 %v673
      %v1696 = vpop.f32.mrf.mxu0
      %v1697 = vadd.f32 %v1568, %v1696
      %v1698 = vpop.f32.mrf.mxu0
      %v1699 = vadd.f32 %v1570, %v1698
      %1700 = vmatmul.bf16.gmra.mxu0 %v675
      %v1701 = vpop.f32.mrf.mxu0
      %v1702 = vadd.f32 %v1573, %v1701
      %v1703 = vpop.f32.mrf.mxu0
      %v1704 = vadd.f32 %v1575, %v1703
      %1705 = vmatmul.bf16.gmra.mxu0 %v677
      %v1706 = vpop.f32.mrf.mxu0
      %v1707 = vadd.f32 %v1578, %v1706
      %v1708 = vpop.f32.mrf.mxu0
      %v1709 = vadd.f32 %v1580, %v1708
      %1710 = vmatmul.bf16.gmra.mxu0 %v679
      %v1711 = vpop.f32.mrf.mxu0
      %v1712 = vadd.f32 %v1583, %v1711
      %v1713 = vpop.f32.mrf.mxu0
      %v1714 = vadd.f32 %v1585, %v1713
      %1715 = vmatmul.bf16.gmra.mxu0 %v681
      %v1716 = vpop.f32.mrf.mxu0
      %v1717 = vadd.f32 %v1588, %v1716
      %v1718 = vpop.f32.mrf.mxu0
      %v1719 = vadd.f32 %v1590, %v1718
      %1720 = vmatmul.bf16.gmra.mxu0 %v683
      %v1721 = vpop.f32.mrf.mxu0
      %v1722 = vadd.f32 %v1593, %v1721
      %v1723 = vpop.f32.mrf.mxu0
      %v1724 = vadd.f32 %v1595, %v1723
      %1725 = vmatmul.bf16.gmra.mxu0 %v685
      %v1726 = vpop.f32.mrf.mxu0
      %v1727 = vadd.f32 %v1598, %v1726
      %v1728 = vpop.f32.mrf.mxu0
      %v1729 = vadd.f32 %v1600, %v1728
      %1730 = vmatmul.bf16.gmra.mxu0 %v687
      %v1731 = vpop.f32.mrf.mxu0
      %v1732 = vadd.f32 %v1603, %v1731
      %v1733 = vpop.f32.mrf.mxu0
      %v1734 = vadd.f32 %v1605, %v1733
      %1735 = vmatmul.bf16.gmra.mxu0 %v689
      %v1736 = vpop.f32.mrf.mxu0
      %v1737 = vadd.f32 %v1608, %v1736
      %v1738 = vpop.f32.mrf.mxu0
      %v1739 = vadd.f32 %v1610, %v1738
      %1740 = vmatmul.bf16.gmra.mxu0 %v691
      %v1741 = vpop.f32.mrf.mxu0
      %v1742 = vadd.f32 %v1613, %v1741
      %v1743 = vpop.f32.mrf.mxu0
      %v1744 = vadd.f32 %v1615, %v1743
      %1745 = vmatmul.bf16.gmra.mxu0 %v693
      %v1746 = vpop.f32.mrf.mxu0
      %v1747 = vadd.f32 %v1618, %v1746
      %v1748 = vpop.f32.mrf.mxu0
      %v1749 = vadd.f32 %v1620, %v1748
      %1750 = vmatmul.bf16.gmra.mxu0 %v695
      %v1751 = vpop.f32.mrf.mxu0
      %v1752 = vadd.f32 %v1623, %v1751
      %v1753 = vpop.f32.mrf.mxu0
      %v1754 = vadd.f32 %v1625, %v1753
      %1755 = vmatmul.bf16.gmra.mxu0 %v697
      %v1756 = vpop.f32.mrf.mxu0
      %v1757 = vadd.f32 %v1628, %v1756
      %v1758 = vpop.f32.mrf.mxu0
      %v1759 = vadd.f32 %v1630, %v1758
      %1760 = vmatmul.bf16.gmra.mxu0 %v699
      %v1761 = vpop.f32.mrf.mxu0
      %v1762 = vadd.f32 %v1633, %v1761
      %v1763 = vpop.f32.mrf.mxu0
      %v1764 = vadd.f32 %v1635, %v1763
      %1765 = vmatmul.bf16.gmra.mxu0 %v701
      %v1766 = vpop.f32.mrf.mxu0
      %v1767 = vadd.f32 %v1638, %v1766
      %v1768 = vpop.f32.mrf.mxu0
      %v1769 = vadd.f32 %v1640, %v1768
      %1770 = vmatmul.bf16.gmra.mxu0 %v703
      %v1771 = vpop.f32.mrf.mxu0
      %v1772 = vadd.f32 %v1643, %v1771
      %v1773 = vpop.f32.mrf.mxu0
      %v1774 = vadd.f32 %v1645, %v1773
      %1775 = vmatmul.bf16.gmra.mxu0 %v705
      %v1776 = vpop.f32.mrf.mxu0
      %v1777 = vadd.f32 %v1648, %v1776
      %v1778 = vpop.f32.mrf.mxu0
      %v1779 = vadd.f32 %v1650, %v1778
      %1780 = vmatmul.bf16.gmra.mxu0 %v707
      %v1781 = vpop.f32.mrf.mxu0
      %v1782 = vadd.f32 %v1653, %v1781
      %v1783 = vpop.f32.mrf.mxu0
      %v1784 = vadd.f32 %v1655, %v1783
      %1785 = vdwg.mxu0
      %1786 = vst [vmem:[#allocation2] sm:$0xff] %v1151
      %1787 = vst [vmem:[#allocation2 + $0x8] sm:$0xff] %v1409
      %1788 = vst [vmem:[#allocation2 + $0x10] sm:$0xff] %v1667
      %1789 = vst [vmem:[#allocation2 + $0x18] sm:$0xff] %v1153
      %1790 = vst [vmem:[#allocation2 + $0x20] sm:$0xff] %v1411
      %1791 = vst [vmem:[#allocation2 + $0x28] sm:$0xff] %v1669
      %1792 = vst [vmem:[#allocation2 + $0x30] sm:$0xff] %v1156
      %1793 = vst [vmem:[#allocation2 + $0x38] sm:$0xff] %v1414
      %1794 = vst [vmem:[#allocation2 + $0x40] sm:$0xff] %v1672
      %1795 = vst [vmem:[#allocation2 + $0x48] sm:$0xff] %v1158
      %1796 = vst [vmem:[#allocation2 + $0x50] sm:$0xff] %v1416
      %1797 = vst [vmem:[#allocation2 + $0x58] sm:$0xff] %v1674
      %1798 = vst [vmem:[#allocation2 + $0x60] sm:$0xff] %v1161
      %1799 = vst [vmem:[#allocation2 + $0x68] sm:$0xff] %v1419
      %1800 = vst [vmem:[#allocation2 + $0x70] sm:$0xff] %v1677
      %1801 = vst [vmem:[#allocation2 + $0x78] sm:$0xff] %v1163
      %1802 = vst [vmem:[#allocation2 + $0x80] sm:$0xff] %v1421
      %1803 = vst [vmem:[#allocation2 + $0x88] sm:$0xff] %v1679
      %1804 = vst [vmem:[#allocation2 + $0x90] sm:$0xff] %v1166
      %1805 = vst [vmem:[#allocation2 + $0x98] sm:$0xff] %v1424
      %1806 = vst [vmem:[#allocation2 + $0xa0] sm:$0xff] %v1682
      %1807 = vst [vmem:[#allocation2 + $0xa8] sm:$0xff] %v1168
      %1808 = vst [vmem:[#allocation2 + $0xb0] sm:$0xff] %v1426
      %1809 = vst [vmem:[#allocation2 + $0xb8] sm:$0xff] %v1684
      %1810 = vst [vmem:[#allocation2 + $0xc0] sm:$0xff] %v1171
      %1811 = vst [vmem:[#allocation2 + $0xc8] sm:$0xff] %v1429
      %1812 = vst [vmem:[#allocation2 + $0xd0] sm:$0xff] %v1687
      %1813 = vst [vmem:[#allocation2 + $0xd8] sm:$0xff] %v1173
      %1814 = vst [vmem:[#allocation2 + $0xe0] sm:$0xff] %v1431
      %1815 = vst [vmem:[#allocation2 + $0xe8] sm:$0xff] %v1689
      %1816 = vst [vmem:[#allocation2 + $0xf0] sm:$0xff] %v1176
      %1817 = vst [vmem:[#allocation2 + $0xf8] sm:$0xff] %v1434
      %1818 = vst [vmem:[#allocation2 + $0x100] sm:$0xff] %v1692
      %1819 = vst [vmem:[#allocation2 + $0x108] sm:$0xff] %v1178
      %1820 = vst [vmem:[#allocation2 + $0x110] sm:$0xff] %v1436
      %1821 = vst [vmem:[#allocation2 + $0x118] sm:$0xff] %v1694
      %1822 = vst [vmem:[#allocation2 + $0x120] sm:$0xff] %v1181
      %1823 = vst [vmem:[#allocation2 + $0x128] sm:$0xff] %v1439
      %1824 = vst [vmem:[#allocation2 + $0x130] sm:$0xff] %v1697
      %1825 = vst [vmem:[#allocation2 + $0x138] sm:$0xff] %v1183
      %1826 = vst [vmem:[#allocation2 + $0x140] sm:$0xff] %v1441
      %1827 = vst [vmem:[#allocation2 + $0x148] sm:$0xff] %v1699
      %1828 = vst [vmem:[#allocation2 + $0x150] sm:$0xff] %v1186
      %1829 = vst [vmem:[#allocation2 + $0x158] sm:$0xff] %v1444
      %1830 = vst [vmem:[#allocation2 + $0x160] sm:$0xff] %v1702
      %1831 = vst [vmem:[#allocation2 + $0x168] sm:$0xff] %v1188
      %1832 = vst [vmem:[#allocation2 + $0x170] sm:$0xff] %v1446
      %1833 = vst [vmem:[#allocation2 + $0x178] sm:$0xff] %v1704
      %1834 = vst [vmem:[#allocation2 + $0x180] sm:$0xff] %v1191
      %1835 = vst [vmem:[#allocation2 + $0x188] sm:$0xff] %v1449
      %1836 = vst [vmem:[#allocation2 + $0x190] sm:$0xff] %v1707
      %1837 = vst [vmem:[#allocation2 + $0x198] sm:$0xff] %v1193
      %1838 = vst [vmem:[#allocation2 + $0x1a0] sm:$0xff] %v1451
      %1839 = vst [vmem:[#allocation2 + $0x1a8] sm:$0xff] %v1709
      %1840 = vst [vmem:[#allocation2 + $0x1b0] sm:$0xff] %v1196
      %1841 = vst [vmem:[#allocation2 + $0x1b8] sm:$0xff] %v1454
      %1842 = vst [vmem:[#allocation2 + $0x1c0] sm:$0xff] %v1712
      %1843 = vst [vmem:[#allocation2 + $0x1c8] sm:$0xff] %v1198
      %1844 = vst [vmem:[#allocation2 + $0x1d0] sm:$0xff] %v1456
      %1845 = vst [vmem:[#allocation2 + $0x1d8] sm:$0xff] %v1714
      %1846 = vst [vmem:[#allocation2 + $0x1e0] sm:$0xff] %v1201
      %1847 = vst [vmem:[#allocation2 + $0x1e8] sm:$0xff] %v1459
      %1848 = vst [vmem:[#allocation2 + $0x1f0] sm:$0xff] %v1717
      %1849 = vst [vmem:[#allocation2 + $0x1f8] sm:$0xff] %v1203
      %1850 = vst [vmem:[#allocation2 + $0x200] sm:$0xff] %v1461
      %1851 = vst [vmem:[#allocation2 + $0x208] sm:$0xff] %v1719
      %1852 = vst [vmem:[#allocation2 + $0x210] sm:$0xff] %v1206
      %1853 = vst [vmem:[#allocation2 + $0x218] sm:$0xff] %v1464
      %1854 = vst [vmem:[#allocation2 + $0x220] sm:$0xff] %v1722
      %1855 = vst [vmem:[#allocation2 + $0x228] sm:$0xff] %v1208
      %1856 = vst [vmem:[#allocation2 + $0x230] sm:$0xff] %v1466
      %1857 = vst [vmem:[#allocation2 + $0x238] sm:$0xff] %v1724
      %1858 = vst [vmem:[#allocation2 + $0x240] sm:$0xff] %v1211
      %1859 = vst [vmem:[#allocation2 + $0x248] sm:$0xff] %v1469
      %1860 = vst [vmem:[#allocation2 + $0x250] sm:$0xff] %v1727
      %1861 = vst [vmem:[#allocation2 + $0x258] sm:$0xff] %v1213
      %1862 = vst [vmem:[#allocation2 + $0x260] sm:$0xff] %v1471
      %1863 = vst [vmem:[#allocation2 + $0x268] sm:$0xff] %v1729
      %1864 = vst [vmem:[#allocation2 + $0x270] sm:$0xff] %v1216
      %1865 = vst [vmem:[#allocation2 + $0x278] sm:$0xff] %v1474
      %1866 = vst [vmem:[#allocation2 + $0x280] sm:$0xff] %v1732
      %1867 = vst [vmem:[#allocation2 + $0x288] sm:$0xff] %v1218
      %1868 = vst [vmem:[#allocation2 + $0x290] sm:$0xff] %v1476
      %1869 = vst [vmem:[#allocation2 + $0x298] sm:$0xff] %v1734
      %1870 = vst [vmem:[#allocation2 + $0x2a0] sm:$0xff] %v1221
      %1871 = vst [vmem:[#allocation2 + $0x2a8] sm:$0xff] %v1479
      %1872 = vst [vmem:[#allocation2 + $0x2b0] sm:$0xff] %v1737
      %1873 = vst [vmem:[#allocation2 + $0x2b8] sm:$0xff] %v1223
      %1874 = vst [vmem:[#allocation2 + $0x2c0] sm:$0xff] %v1481
      %1875 = vst [vmem:[#allocation2 + $0x2c8] sm:$0xff] %v1739
      %1876 = vst [vmem:[#allocation2 + $0x2d0] sm:$0xff] %v1226
      %1877 = vst [vmem:[#allocation2 + $0x2d8] sm:$0xff] %v1484
      %1878 = vst [vmem:[#allocation2 + $0x2e0] sm:$0xff] %v1742
      %1879 = vst [vmem:[#allocation2 + $0x2e8] sm:$0xff] %v1228
      %1880 = vst [vmem:[#allocation2 + $0x2f0] sm:$0xff] %v1486
      %1881 = vst [vmem:[#allocation2 + $0x2f8] sm:$0xff] %v1744
      %1882 = vst [vmem:[#allocation2 + $0x300] sm:$0xff] %v1231
      %1883 = vst [vmem:[#allocation2 + $0x308] sm:$0xff] %v1489
      %1884 = vst [vmem:[#allocation2 + $0x310] sm:$0xff] %v1747
      %1885 = vst [vmem:[#allocation2 + $0x318] sm:$0xff] %v1233
      %1886 = vst [vmem:[#allocation2 + $0x320] sm:$0xff] %v1491
      %1887 = vst [vmem:[#allocation2 + $0x328] sm:$0xff] %v1749
      %1888 = vst [vmem:[#allocation2 + $0x330] sm:$0xff] %v1236
      %1889 = vst [vmem:[#allocation2 + $0x338] sm:$0xff] %v1494
      %1890 = vst [vmem:[#allocation2 + $0x340] sm:$0xff] %v1752
      %1891 = vst [vmem:[#allocation2 + $0x348] sm:$0xff] %v1238
      %1892 = vst [vmem:[#allocation2 + $0x350] sm:$0xff] %v1496
      %1893 = vst [vmem:[#allocation2 + $0x358] sm:$0xff] %v1754
      %1894 = vst [vmem:[#allocation2 + $0x360] sm:$0xff] %v1241
      %1895 = vst [vmem:[#allocation2 + $0x368] sm:$0xff] %v1499
      %1896 = vst [vmem:[#allocation2 + $0x370] sm:$0xff] %v1757
      %1897 = vst [vmem:[#allocation2 + $0x378] sm:$0xff] %v1243
      %1898 = vst [vmem:[#allocation2 + $0x380] sm:$0xff] %v1501
      %1899 = vst [vmem:[#allocation2 + $0x388] sm:$0xff] %v1759
      %1900 = vst [vmem:[#allocation2 + $0x390] sm:$0xff] %v1246
      %1901 = vst [vmem:[#allocation2 + $0x398] sm:$0xff] %v1504
      %1902 = vst [vmem:[#allocation2 + $0x3a0] sm:$0xff] %v1762
      %1903 = vst [vmem:[#allocation2 + $0x3a8] sm:$0xff] %v1248
      %1904 = vst [vmem:[#allocation2 + $0x3b0] sm:$0xff] %v1506
      %1905 = vst [vmem:[#allocation2 + $0x3b8] sm:$0xff] %v1764
      %1906 = vst [vmem:[#allocation2 + $0x3c0] sm:$0xff] %v1251
      %1907 = vst [vmem:[#allocation2 + $0x3c8] sm:$0xff] %v1509
      %1908 = vst [vmem:[#allocation2 + $0x3d0] sm:$0xff] %v1767
      %1909 = vst [vmem:[#allocation2 + $0x3d8] sm:$0xff] %v1253
      %1910 = vst [vmem:[#allocation2 + $0x3e0] sm:$0xff] %v1511
      %1911 = vst [vmem:[#allocation2 + $0x3e8] sm:$0xff] %v1769
      %1912 = vst [vmem:[#allocation2 + $0x3f0] sm:$0xff] %v1256
      %1913 = vst [vmem:[#allocation2 + $0x3f8] sm:$0xff] %v1514
      %1914 = vst [vmem:[#allocation2 + $0x400] sm:$0xff] %v1772
      %1915 = vst [vmem:[#allocation2 + $0x408] sm:$0xff] %v1258
      %1916 = vst [vmem:[#allocation2 + $0x410] sm:$0xff] %v1516
      %1917 = vst [vmem:[#allocation2 + $0x418] sm:$0xff] %v1774
      %1918 = vst [vmem:[#allocation2 + $0x420] sm:$0xff] %v1261
      %1919 = vst [vmem:[#allocation2 + $0x428] sm:$0xff] %v1519
      %1920 = vst [vmem:[#allocation2 + $0x430] sm:$0xff] %v1777
      %1921 = vst [vmem:[#allocation2 + $0x438] sm:$0xff] %v1263
      %1922 = vst [vmem:[#allocation2 + $0x440] sm:$0xff] %v1521
      %1923 = vst [vmem:[#allocation2 + $0x448] sm:$0xff] %v1779
      %1924 = vst [vmem:[#allocation2 + $0x450] sm:$0xff] %v1266
      %1925 = vst [vmem:[#allocation2 + $0x458] sm:$0xff] %v1524
      %1926 = vst [vmem:[#allocation2 + $0x460] sm:$0xff] %v1782
      %1927 = vst [vmem:[#allocation2 + $0x468] sm:$0xff] %v1268
      %1928 = vst [vmem:[#allocation2 + $0x470] sm:$0xff] %v1526
      %1929 = vst [vmem:[#allocation2 + $0x478] sm:$0xff] %v1784
      %v1930 = vld [vmem:[%s373] sm:$0xff]
      %v1931 = vld [vmem:[%s373 + $0x8] sm:$0xff]
      %v1932 = vld [vmem:[%s373 + $0x10] sm:$0xff]
      %v1933 = vld [vmem:[%s373 + $0x18] sm:$0xff]
      %v1934 = vld [vmem:[%s373 + $0x20] sm:$0xff]
      %v1935 = vld [vmem:[%s373 + $0x28] sm:$0xff]
      %v1936 = vld [vmem:[%s373 + $0x30] sm:$0xff]
      %v1937 = vld [vmem:[%s373 + $0x38] sm:$0xff]
      %v1938 = vld [vmem:[%s373 + $0x40] sm:$0xff]
      %v1939 = vld [vmem:[%s373 + $0x48] sm:$0xff]
      %v1940 = vld [vmem:[%s373 + $0x50] sm:$0xff]
      %v1941 = vld [vmem:[%s373 + $0x58] sm:$0xff]
      %v1942 = vld [vmem:[%s373 + $0x60] sm:$0xff]
      %v1943 = vld [vmem:[%s373 + $0x68] sm:$0xff]
      %v1944 = vld [vmem:[%s373 + $0x70] sm:$0xff]
      %v1945 = vld [vmem:[%s373 + $0x78] sm:$0xff]
      %v1946 = vld [vmem:[%s373 + $0x80] sm:$0xff]
      %v1947 = vld [vmem:[%s373 + $0x88] sm:$0xff]
      %v1948 = vld [vmem:[%s373 + $0x90] sm:$0xff]
      %v1949 = vld [vmem:[%s373 + $0x98] sm:$0xff]
      %v1950 = vld [vmem:[%s373 + $0xa0] sm:$0xff]
      %v1951 = vld [vmem:[%s373 + $0xa8] sm:$0xff]
      %v1952 = vld [vmem:[%s373 + $0xb0] sm:$0xff]
      %v1953 = vld [vmem:[%s373 + $0xb8] sm:$0xff]
      %v1954 = vld [vmem:[%s373 + $0xc0] sm:$0xff]
      %v1955 = vld [vmem:[%s373 + $0xc8] sm:$0xff]
      %v1956 = vld [vmem:[%s373 + $0xd0] sm:$0xff]
      %v1957 = vld [vmem:[%s373 + $0xd8] sm:$0xff]
      %v1958 = vld [vmem:[%s373 + $0xe0] sm:$0xff]
      %v1959 = vld [vmem:[%s373 + $0xe8] sm:$0xff]
      %v1960 = vld [vmem:[%s373 + $0xf0] sm:$0xff]
      %v1961 = vld [vmem:[%s373 + $0xf8] sm:$0xff]
      %v1962 = vld [vmem:[%s373 + $0x100] sm:$0xff]
      %v1963 = vld [vmem:[%s373 + $0x108] sm:$0xff]
      %v1964 = vld [vmem:[%s373 + $0x110] sm:$0xff]
      %v1965 = vld [vmem:[%s373 + $0x118] sm:$0xff]
      %v1966 = vld [vmem:[%s373 + $0x120] sm:$0xff]
      %v1967 = vld [vmem:[%s373 + $0x128] sm:$0xff]
      %v1968 = vld [vmem:[%s373 + $0x130] sm:$0xff]
      %v1969 = vld [vmem:[%s373 + $0x138] sm:$0xff]
      %v1970 = vld [vmem:[%s373 + $0x140] sm:$0xff]
      %v1971 = vld [vmem:[%s373 + $0x148] sm:$0xff]
      %v1972 = vld [vmem:[%s373 + $0x150] sm:$0xff]
      %v1973 = vld [vmem:[%s373 + $0x158] sm:$0xff]
      %v1974 = vld [vmem:[%s373 + $0x160] sm:$0xff]
      %v1975 = vld [vmem:[%s373 + $0x168] sm:$0xff]
      %v1976 = vld [vmem:[%s373 + $0x170] sm:$0xff]
      %v1977 = vld [vmem:[%s373 + $0x178] sm:$0xff]
      %v1978 = vld [vmem:[%s4] sm:$0xff]
      %v1979 = vld [vmem:[%s4 + $0x8] sm:$0xf]
      %v1980 = vld [vmem:[%s4 + $0xc] sm:$0xff]
      %v1981 = vld [vmem:[%s4 + $0x14] sm:$0xf]
      %v1982 = vld [vmem:[%s4 + $0x18] sm:$0xff]
      %v1983 = vld [vmem:[%s4 + $0x20] sm:$0xf]
      %v1984 = vld [vmem:[%s4 + $0x24] sm:$0xff]
      %v1985 = vld [vmem:[%s4 + $0x2c] sm:$0xf]
      %v1986 = vld [vmem:[%s4 + $0x30] sm:$0xff]
      %v1987 = vld [vmem:[%s4 + $0x38] sm:$0xf]
      %v1988 = vld [vmem:[%s4 + $0x3c] sm:$0xff]
      %v1989 = vld [vmem:[%s4 + $0x44] sm:$0xf]
      %v1990 = vld [vmem:[%s4 + $0x48] sm:$0xff]
      %v1991 = vld [vmem:[%s4 + $0x50] sm:$0xf]
      %v1992 = vld [vmem:[%s4 + $0x54] sm:$0xff]
      %v1993 = vld [vmem:[%s4 + $0x5c] sm:$0xf]
      %v1994 = vld [vmem:[%s4 + $0x60] sm:$0xff]
      %v1995 = vld [vmem:[%s4 + $0x68] sm:$0xf]
      %v1996 = vld [vmem:[%s4 + $0x6c] sm:$0xff]
      %v1997 = vld [vmem:[%s4 + $0x74] sm:$0xf]
      %v1998 = vld [vmem:[%s4 + $0x78] sm:$0xff]
      %v1999 = vld [vmem:[%s4 + $0x80] sm:$0xf]
      %v2000 = vld [vmem:[%s4 + $0x84] sm:$0xff]
      %v2001 = vld [vmem:[%s4 + $0x8c] sm:$0xf]
      %v2002 = vld [vmem:[%s4 + $0x90] sm:$0xff]
      %v2003 = vld [vmem:[%s4 + $0x98] sm:$0xf]
      %v2004 = vld [vmem:[%s4 + $0x9c] sm:$0xff]
      %v2005 = vld [vmem:[%s4 + $0xa4] sm:$0xf]
      %v2006 = vld [vmem:[%s4 + $0xa8] sm:$0xff]
      %v2007 = vld [vmem:[%s4 + $0xb0] sm:$0xf]
      %v2008 = vld [vmem:[%s4 + $0xb4] sm:$0xff]
      %v2009 = vld [vmem:[%s4 + $0xbc] sm:$0xf]
      %v2010 = vld [vmem:[%s4 + $0xc0] sm:$0xff]
      %v2011 = vld [vmem:[%s4 + $0xc8] sm:$0xf]
      %v2012 = vld [vmem:[%s4 + $0xcc] sm:$0xff]
      %v2013 = vld [vmem:[%s4 + $0xd4] sm:$0xf]
      %v2014 = vld [vmem:[%s4 + $0xd8] sm:$0xff]
      %v2015 = vld [vmem:[%s4 + $0xe0] sm:$0xf]
      %v2016 = vld [vmem:[%s4 + $0xe4] sm:$0xff]
      %v2017 = vld [vmem:[%s4 + $0xec] sm:$0xf]
      %v2018 = vld [vmem:[%s4 + $0xf0] sm:$0xff]
      %v2019 = vld [vmem:[%s4 + $0xf8] sm:$0xf]
      %v2020 = vld [vmem:[%s4 + $0xfc] sm:$0xff]
      %v2021 = vld [vmem:[%s4 + $0x104] sm:$0xf]
      %v2022 = vld [vmem:[%s4 + $0x108] sm:$0xff]
      %v2023 = vld [vmem:[%s4 + $0x110] sm:$0xf]
      %v2024 = vld [vmem:[%s4 + $0x114] sm:$0xff]
      %v2025 = vld [vmem:[%s4 + $0x11c] sm:$0xf]
      %v2026 = vld [vmem:[%s4 + $0x120] sm:$0xff]
      %v2027 = vld [vmem:[%s4 + $0x128] sm:$0xf]
      %v2028 = vld [vmem:[%s4 + $0x12c] sm:$0xff]
      %v2029 = vld [vmem:[%s4 + $0x134] sm:$0xf]
      %v2030 = vld [vmem:[%s4 + $0x138] sm:$0xff]
      %v2031 = vld [vmem:[%s4 + $0x140] sm:$0xf]
      %v2032 = vld [vmem:[%s4 + $0x144] sm:$0xff]
      %v2033 = vld [vmem:[%s4 + $0x14c] sm:$0xf]
      %v2034 = vld [vmem:[%s4 + $0x150] sm:$0xff]
      %v2035 = vld [vmem:[%s4 + $0x158] sm:$0xf]
      %v2036 = vld [vmem:[%s4 + $0x15c] sm:$0xff]
      %v2037 = vld [vmem:[%s4 + $0x164] sm:$0xf]
      %v2038 = vld [vmem:[%s4 + $0x168] sm:$0xff]
      %v2039 = vld [vmem:[%s4 + $0x170] sm:$0xf]
      %v2040 = vld [vmem:[%s4 + $0x174] sm:$0xff]
      %v2041 = vld [vmem:[%s4 + $0x17c] sm:$0xf]
      %s2042 = scalar_lea.vmem %s7, 6
      %v2043 = vld [vmem:[%s2042] ss:$2 sm:$0x7]
      %v2045 = vperm.slane %v2043, 0
      %v2046 = vperm.slane %v2043, 1
      %v2047 = vperm.slane %v2043, 2
      %v2099 = vunpack.c.l.b16 %v1930
      %v2100 = vunpack.c.h.b16 %v1930
      %v2101 = vunpack.c.l.b16 %v1931
      %v2102 = vunpack.c.h.b16 %v1931
      %v2103 = vunpack.c.l.b16 %v1932
      %v2104 = vunpack.c.h.b16 %v1932
      %v2105 = vunpack.c.l.b16 %v1933
      %v2106 = vunpack.c.h.b16 %v1933
      %v2107 = vunpack.c.l.b16 %v1934
      %v2108 = vunpack.c.h.b16 %v1934
      %v2109 = vunpack.c.l.b16 %v1935
      %v2110 = vunpack.c.h.b16 %v1935
      %v2111 = vunpack.c.l.b16 %v1936
      %v2112 = vunpack.c.h.b16 %v1936
      %v2113 = vunpack.c.l.b16 %v1937
      %v2114 = vunpack.c.h.b16 %v1937
      %v2115 = vunpack.c.l.b16 %v1938
      %v2116 = vunpack.c.h.b16 %v1938
      %v2117 = vunpack.c.l.b16 %v1939
      %v2118 = vunpack.c.h.b16 %v1939
      %v2119 = vunpack.c.l.b16 %v1940
      %v2120 = vunpack.c.h.b16 %v1940
      %v2121 = vunpack.c.l.b16 %v1941
      %v2122 = vunpack.c.h.b16 %v1941
      %v2123 = vunpack.c.l.b16 %v1942
      %v2124 = vunpack.c.h.b16 %v1942
      %v2125 = vunpack.c.l.b16 %v1943
      %v2126 = vunpack.c.h.b16 %v1943
      %v2127 = vunpack.c.l.b16 %v1944
      %v2128 = vunpack.c.h.b16 %v1944
      %v2129 = vunpack.c.l.b16 %v1945
      %v2130 = vunpack.c.h.b16 %v1945
      %v2131 = vunpack.c.l.b16 %v1946
      %v2132 = vunpack.c.h.b16 %v1946
      %v2133 = vunpack.c.l.b16 %v1947
      %v2134 = vunpack.c.h.b16 %v1947
      %v2135 = vunpack.c.l.b16 %v1948
      %v2136 = vunpack.c.h.b16 %v1948
      %v2137 = vunpack.c.l.b16 %v1949
      %v2138 = vunpack.c.h.b16 %v1949
      %v2139 = vunpack.c.l.b16 %v1950
      %v2140 = vunpack.c.h.b16 %v1950
      %v2141 = vunpack.c.l.b16 %v1951
      %v2142 = vunpack.c.h.b16 %v1951
      %v2143 = vunpack.c.l.b16 %v1952
      %v2144 = vunpack.c.h.b16 %v1952
      %v2145 = vunpack.c.l.b16 %v1953
      %v2146 = vunpack.c.h.b16 %v1953
      %v2147 = vunpack.c.l.b16 %v1954
      %v2148 = vunpack.c.h.b16 %v1954
      %v2149 = vunpack.c.l.b16 %v1955
      %v2150 = vunpack.c.h.b16 %v1955
      %v2151 = vunpack.c.l.b16 %v1956
      %v2152 = vunpack.c.h.b16 %v1956
      %v2153 = vunpack.c.l.b16 %v1957
      %v2154 = vunpack.c.h.b16 %v1957
      %v2155 = vunpack.c.l.b16 %v1958
      %v2156 = vunpack.c.h.b16 %v1958
      %v2157 = vunpack.c.l.b16 %v1959
      %v2158 = vunpack.c.h.b16 %v1959
      %v2159 = vunpack.c.l.b16 %v1960
      %v2160 = vunpack.c.h.b16 %v1960
      %v2161 = vunpack.c.l.b16 %v1961
      %v2162 = vunpack.c.h.b16 %v1961
      %v2163 = vunpack.c.l.b16 %v1962
      %v2164 = vunpack.c.h.b16 %v1962
      %v2165 = vunpack.c.l.b16 %v1963
      %v2166 = vunpack.c.h.b16 %v1963
      %v2167 = vunpack.c.l.b16 %v1964
      %v2168 = vunpack.c.h.b16 %v1964
      %v2169 = vunpack.c.l.b16 %v1965
      %v2170 = vunpack.c.h.b16 %v1965
      %v2171 = vunpack.c.l.b16 %v1966
      %v2172 = vunpack.c.h.b16 %v1966
      %v2173 = vunpack.c.l.b16 %v1967
      %v2174 = vunpack.c.h.b16 %v1967
      %v2175 = vunpack.c.l.b16 %v1968
      %v2176 = vunpack.c.h.b16 %v1968
      %v2177 = vunpack.c.l.b16 %v1969
      %v2178 = vunpack.c.h.b16 %v1969
      %v2179 = vunpack.c.l.b16 %v1970
      %v2180 = vunpack.c.h.b16 %v1970
      %v2181 = vunpack.c.l.b16 %v1971
      %v2182 = vunpack.c.h.b16 %v1971
      %v2183 = vunpack.c.l.b16 %v1972
      %v2184 = vunpack.c.h.b16 %v1972
      %v2185 = vunpack.c.l.b16 %v1973
      %v2186 = vunpack.c.h.b16 %v1973
      %v2187 = vunpack.c.l.b16 %v1974
      %v2188 = vunpack.c.h.b16 %v1974
      %v2189 = vunpack.c.l.b16 %v1975
      %v2190 = vunpack.c.h.b16 %v1975
      %v2191 = vunpack.c.l.b16 %v1976
      %v2192 = vunpack.c.h.b16 %v1976
      %v2193 = vunpack.c.l.b16 %v1977
      %v2194 = vunpack.c.h.b16 %v1977
      %v2195 = vpack.c.b16 %v2101, %v2099
      %v2196 = vpack.c.b16 %v2102, %v2100
      %v2197 = vpack.c.b16 %v2105, %v2103
      %v2198 = vpack.c.b16 %v2106, %v2104
      %v2199 = vpack.c.b16 %v2109, %v2107
      %v2200 = vpack.c.b16 %v2110, %v2108
      %v2201 = vpack.c.b16 %v2113, %v2111
      %v2202 = vpack.c.b16 %v2114, %v2112
      %v2203 = vpack.c.b16 %v2117, %v2115
      %v2204 = vpack.c.b16 %v2118, %v2116
      %v2205 = vpack.c.b16 %v2121, %v2119
      %v2206 = vpack.c.b16 %v2122, %v2120
      %v2207 = vpack.c.b16 %v2125, %v2123
      %v2208 = vpack.c.b16 %v2126, %v2124
      %v2209 = vpack.c.b16 %v2129, %v2127
      %v2210 = vpack.c.b16 %v2130, %v2128
      %v2211 = vpack.c.b16 %v2133, %v2131
      %v2212 = vpack.c.b16 %v2134, %v2132
      %v2213 = vpack.c.b16 %v2137, %v2135
      %v2214 = vpack.c.b16 %v2138, %v2136
      %v2215 = vpack.c.b16 %v2141, %v2139
      %v2216 = vpack.c.b16 %v2142, %v2140
      %v2217 = vpack.c.b16 %v2145, %v2143
      %v2218 = vpack.c.b16 %v2146, %v2144
      %v2219 = vpack.c.b16 %v2149, %v2147
      %v2220 = vpack.c.b16 %v2150, %v2148
      %v2221 = vpack.c.b16 %v2153, %v2151
      %v2222 = vpack.c.b16 %v2154, %v2152
      %v2223 = vpack.c.b16 %v2157, %v2155
      %v2224 = vpack.c.b16 %v2158, %v2156
      %v2225 = vpack.c.b16 %v2161, %v2159
      %v2226 = vpack.c.b16 %v2162, %v2160
      %v2227 = vpack.c.b16 %v2165, %v2163
      %v2228 = vpack.c.b16 %v2166, %v2164
      %v2229 = vpack.c.b16 %v2169, %v2167
      %v2230 = vpack.c.b16 %v2170, %v2168
      %v2231 = vpack.c.b16 %v2173, %v2171
      %v2232 = vpack.c.b16 %v2174, %v2172
      %v2233 = vpack.c.b16 %v2177, %v2175
      %v2234 = vpack.c.b16 %v2178, %v2176
      %v2235 = vpack.c.b16 %v2181, %v2179
      %v2236 = vpack.c.b16 %v2182, %v2180
      %v2237 = vpack.c.b16 %v2185, %v2183
      %v2238 = vpack.c.b16 %v2186, %v2184
      %v2239 = vpack.c.b16 %v2189, %v2187
      %v2240 = vpack.c.b16 %v2190, %v2188
      %v2241 = vpack.c.b16 %v2193, %v2191
      %v2242 = vpack.c.b16 %v2194, %v2192
      %v2355 = vunpack.c.l.b16 %v1978
      %v2356 = vunpack.c.h.b16 %v1978
      %v2357 = vunpack.c.l.b16 %v1979
      %v2358 = vunpack.c.l.b16 %v1980
      %v2359 = vunpack.c.h.b16 %v1980
      %v2360 = vunpack.c.l.b16 %v1981
      %v2361 = vunpack.c.l.b16 %v1982
      %v2362 = vunpack.c.h.b16 %v1982
      %v2363 = vunpack.c.l.b16 %v1983
      %v2364 = vunpack.c.l.b16 %v1984
      %v2365 = vunpack.c.h.b16 %v1984
      %v2366 = vunpack.c.l.b16 %v1985
      %v2367 = vunpack.c.l.b16 %v1986
      %v2368 = vunpack.c.h.b16 %v1986
      %v2369 = vunpack.c.l.b16 %v1987
      %v2370 = vunpack.c.l.b16 %v1988
      %v2371 = vunpack.c.h.b16 %v1988
      %v2372 = vunpack.c.l.b16 %v1989
      %v2373 = vunpack.c.l.b16 %v1990
      %v2374 = vunpack.c.h.b16 %v1990
      %v2375 = vunpack.c.l.b16 %v1991
      %v2376 = vunpack.c.l.b16 %v1992
      %v2377 = vunpack.c.h.b16 %v1992
      %v2378 = vunpack.c.l.b16 %v1993
      %v2379 = vunpack.c.l.b16 %v1994
      %v2380 = vunpack.c.h.b16 %v1994
      %v2381 = vunpack.c.l.b16 %v1995
      %v2382 = vunpack.c.l.b16 %v1996
      %v2383 = vunpack.c.h.b16 %v1996
      %v2384 = vunpack.c.l.b16 %v1997
      %v2385 = vunpack.c.l.b16 %v1998
      %v2386 = vunpack.c.h.b16 %v1998
      %v2387 = vunpack.c.l.b16 %v1999
      %v2388 = vunpack.c.l.b16 %v2000
      %v2389 = vunpack.c.h.b16 %v2000
      %v2390 = vunpack.c.l.b16 %v2001
      %v2391 = vunpack.c.l.b16 %v2002
      %v2392 = vunpack.c.h.b16 %v2002
      %v2393 = vunpack.c.l.b16 %v2003
      %v2394 = vunpack.c.l.b16 %v2004
      %v2395 = vunpack.c.h.b16 %v2004
      %v2396 = vunpack.c.l.b16 %v2005
      %v2397 = vunpack.c.l.b16 %v2006
      %v2398 = vunpack.c.h.b16 %v2006
      %v2399 = vunpack.c.l.b16 %v2007
      %v2400 = vunpack.c.l.b16 %v2008
      %v2401 = vunpack.c.h.b16 %v2008
      %v2402 = vunpack.c.l.b16 %v2009
      %v2403 = vunpack.c.l.b16 %v2010
      %v2404 = vunpack.c.h.b16 %v2010
      %v2405 = vunpack.c.l.b16 %v2011
      %v2406 = vunpack.c.l.b16 %v2012
      %v2407 = vunpack.c.h.b16 %v2012
      %v2408 = vunpack.c.l.b16 %v2013
      %v2409 = vunpack.c.l.b16 %v2014
      %v2410 = vunpack.c.h.b16 %v2014
      %v2411 = vunpack.c.l.b16 %v2015
      %v2412 = vunpack.c.l.b16 %v2016
      %v2413 = vunpack.c.h.b16 %v2016
      %v2414 = vunpack.c.l.b16 %v2017
      %v2415 = vunpack.c.l.b16 %v2018
      %v2416 = vunpack.c.h.b16 %v2018
      %v2417 = vunpack.c.l.b16 %v2019
      %v2418 = vunpack.c.l.b16 %v2020
      %v2419 = vunpack.c.h.b16 %v2020
      %v2420 = vunpack.c.l.b16 %v2021
      %v2421 = vunpack.c.l.b16 %v2022
      %v2422 = vunpack.c.h.b16 %v2022
      %v2423 = vunpack.c.l.b16 %v2023
      %v2424 = vunpack.c.l.b16 %v2024
      %v2425 = vunpack.c.h.b16 %v2024
      %v2426 = vunpack.c.l.b16 %v2025
      %v2427 = vunpack.c.l.b16 %v2026
      %v2428 = vunpack.c.h.b16 %v2026
      %v2429 = vunpack.c.l.b16 %v2027
      %v2430 = vunpack.c.l.b16 %v2028
      %v2431 = vunpack.c.h.b16 %v2028
      %v2432 = vunpack.c.l.b16 %v2029
      %v2433 = vunpack.c.l.b16 %v2030
      %v2434 = vunpack.c.h.b16 %v2030
      %v2435 = vunpack.c.l.b16 %v2031
      %v2436 = vunpack.c.l.b16 %v2032
      %v2437 = vunpack.c.h.b16 %v2032
      %v2438 = vunpack.c.l.b16 %v2033
      %v2439 = vunpack.c.l.b16 %v2034
      %v2440 = vunpack.c.h.b16 %v2034
      %v2441 = vunpack.c.l.b16 %v2035
      %v2442 = vunpack.c.l.b16 %v2036
      %v2443 = vunpack.c.h.b16 %v2036
      %v2444 = vunpack.c.l.b16 %v2037
      %v2445 = vunpack.c.l.b16 %v2038
      %v2446 = vunpack.c.h.b16 %v2038
      %v2447 = vunpack.c.l.b16 %v2039
      %v2448 = vunpack.c.l.b16 %v2040
      %v2449 = vunpack.c.h.b16 %v2040
      %v2450 = vunpack.c.l.b16 %v2041
      %v2451 = vpack.c.b16 %v2358, %v2355
      %v2452 = vpack.c.b16 %v2359, %v2356
      %v2453 = vpack.c.b16 %v2360, %v2357
      %v2454 = vpack.c.b16 %v2364, %v2361
      %v2455 = vpack.c.b16 %v2365, %v2362
      %v2456 = vpack.c.b16 %v2366, %v2363
      %v2457 = vpack.c.b16 %v2370, %v2367
      %v2458 = vpack.c.b16 %v2371, %v2368
      %v2459 = vpack.c.b16 %v2372, %v2369
      %v2460 = vpack.c.b16 %v2376, %v2373
      %v2461 = vpack.c.b16 %v2377, %v2374
      %v2462 = vpack.c.b16 %v2378, %v2375
      %v2463 = vpack.c.b16 %v2382, %v2379
      %v2464 = vpack.c.b16 %v2383, %v2380
      %v2465 = vpack.c.b16 %v2384, %v2381
      %v2466 = vpack.c.b16 %v2388, %v2385
      %v2467 = vpack.c.b16 %v2389, %v2386
      %v2468 = vpack.c.b16 %v2390, %v2387
      %v2469 = vpack.c.b16 %v2394, %v2391
      %v2470 = vpack.c.b16 %v2395, %v2392
      %v2471 = vpack.c.b16 %v2396, %v2393
      %v2472 = vpack.c.b16 %v2400, %v2397
      %v2473 = vpack.c.b16 %v2401, %v2398
      %v2474 = vpack.c.b16 %v2402, %v2399
      %v2475 = vpack.c.b16 %v2406, %v2403
      %v2476 = vpack.c.b16 %v2407, %v2404
      %v2477 = vpack.c.b16 %v2408, %v2405
      %v2478 = vpack.c.b16 %v2412, %v2409
      %v2479 = vpack.c.b16 %v2413, %v2410
      %v2480 = vpack.c.b16 %v2414, %v2411
      %v2481 = vpack.c.b16 %v2418, %v2415
      %v2482 = vpack.c.b16 %v2419, %v2416
      %v2483 = vpack.c.b16 %v2420, %v2417
      %v2484 = vpack.c.b16 %v2424, %v2421
      %v2485 = vpack.c.b16 %v2425, %v2422
      %v2486 = vpack.c.b16 %v2426, %v2423
      %v2487 = vpack.c.b16 %v2430, %v2427
      %v2488 = vpack.c.b16 %v2431, %v2428
      %v2489 = vpack.c.b16 %v2432, %v2429
      %v2490 = vpack.c.b16 %v2436, %v2433
      %v2491 = vpack.c.b16 %v2437, %v2434
      %v2492 = vpack.c.b16 %v2438, %v2435
      %v2493 = vpack.c.b16 %v2442, %v2439
      %v2494 = vpack.c.b16 %v2443, %v2440
      %v2495 = vpack.c.b16 %v2444, %v2441
      %v2496 = vpack.c.b16 %v2448, %v2445
      %v2497 = vpack.c.b16 %v2449, %v2446
      %v2498 = vpack.c.b16 %v2450, %v2447
      %2547 = vmatpush.bf16.msra.mxu0 %v2472
      %2548 = vmatpush.bf16.msra.mxu0 %v2469
      %2549 = vmatpush.bf16.msra.mxu0 %v2466
      %2550 = vmatpush.bf16.msra.mxu0 %v2463
      %2551 = vmatpush.bf16.msra.mxu0 %v2460
      %2552 = vmatpush.bf16.msra.mxu0 %v2457
      %2553 = vmatpush.bf16.msra.mxu0 %v2454
      %2554 = vmatpush.bf16.msra.mxu0 %v2451
      %2555 = vmatmul.bf16.gmra.mxu0 %v2195
      %v2556 = vpop.f32.mrf.mxu0
      %v2557 = vadd.f32 %v2045, %v2556
      %v2558 = vpop.f32.mrf.mxu0
      %v2559 = vadd.f32 %v2045, %v2558
      %2560 = vmatmul.bf16.gmra.mxu0 %v2197
      %v2561 = vpop.f32.mrf.mxu0
      %v2562 = vadd.f32 %v2045, %v2561
      %v2563 = vpop.f32.mrf.mxu0
      %v2564 = vadd.f32 %v2045, %v2563
      %2565 = vmatmul.bf16.gmra.mxu0 %v2199
      %v2566 = vpop.f32.mrf.mxu0
      %v2567 = vadd.f32 %v2045, %v2566
      %v2568 = vpop.f32.mrf.mxu0
      %v2569 = vadd.f32 %v2045, %v2568
      %2570 = vmatmul.bf16.gmra.mxu0 %v2201
      %v2571 = vpop.f32.mrf.mxu0
      %v2572 = vadd.f32 %v2045, %v2571
      %v2573 = vpop.f32.mrf.mxu0
      %v2574 = vadd.f32 %v2045, %v2573
      %2575 = vmatmul.bf16.gmra.mxu0 %v2203
      %v2576 = vpop.f32.mrf.mxu0
      %v2577 = vadd.f32 %v2045, %v2576
      %v2578 = vpop.f32.mrf.mxu0
      %v2579 = vadd.f32 %v2045, %v2578
      %2580 = vmatmul.bf16.gmra.mxu0 %v2205
      %v2581 = vpop.f32.mrf.mxu0
      %v2582 = vadd.f32 %v2045, %v2581
      %v2583 = vpop.f32.mrf.mxu0
      %v2584 = vadd.f32 %v2045, %v2583
      %2585 = vmatmul.bf16.gmra.mxu0 %v2207
      %v2586 = vpop.f32.mrf.mxu0
      %v2587 = vadd.f32 %v2045, %v2586
      %v2588 = vpop.f32.mrf.mxu0
      %v2589 = vadd.f32 %v2045, %v2588
      %2590 = vmatmul.bf16.gmra.mxu0 %v2209
      %v2591 = vpop.f32.mrf.mxu0
      %v2592 = vadd.f32 %v2045, %v2591
      %v2593 = vpop.f32.mrf.mxu0
      %v2594 = vadd.f32 %v2045, %v2593
      %2595 = vmatmul.bf16.gmra.mxu0 %v2211
      %v2596 = vpop.f32.mrf.mxu0
      %v2597 = vadd.f32 %v2045, %v2596
      %v2598 = vpop.f32.mrf.mxu0
      %v2599 = vadd.f32 %v2045, %v2598
      %2600 = vmatmul.bf16.gmra.mxu0 %v2213
      %v2601 = vpop.f32.mrf.mxu0
      %v2602 = vadd.f32 %v2045, %v2601
      %v2603 = vpop.f32.mrf.mxu0
      %v2604 = vadd.f32 %v2045, %v2603
      %2605 = vmatmul.bf16.gmra.mxu0 %v2215
      %v2606 = vpop.f32.mrf.mxu0
      %v2607 = vadd.f32 %v2045, %v2606
      %v2608 = vpop.f32.mrf.mxu0
      %v2609 = vadd.f32 %v2045, %v2608
      %2610 = vmatmul.bf16.gmra.mxu0 %v2217
      %v2611 = vpop.f32.mrf.mxu0
      %v2612 = vadd.f32 %v2045, %v2611
      %v2613 = vpop.f32.mrf.mxu0
      %v2614 = vadd.f32 %v2045, %v2613
      %2615 = vmatmul.bf16.gmra.mxu0 %v2219
      %v2616 = vpop.f32.mrf.mxu0
      %v2617 = vadd.f32 %v2045, %v2616
      %v2618 = vpop.f32.mrf.mxu0
      %v2619 = vadd.f32 %v2045, %v2618
      %2620 = vmatmul.bf16.gmra.mxu0 %v2221
      %v2621 = vpop.f32.mrf.mxu0
      %v2622 = vadd.f32 %v2045, %v2621
      %v2623 = vpop.f32.mrf.mxu0
      %v2624 = vadd.f32 %v2045, %v2623
      %2625 = vmatmul.bf16.gmra.mxu0 %v2223
      %v2626 = vpop.f32.mrf.mxu0
      %v2627 = vadd.f32 %v2045, %v2626
      %v2628 = vpop.f32.mrf.mxu0
      %v2629 = vadd.f32 %v2045, %v2628
      %2630 = vmatmul.bf16.gmra.mxu0 %v2225
      %v2631 = vpop.f32.mrf.mxu0
      %v2632 = vadd.f32 %v2045, %v2631
      %v2633 = vpop.f32.mrf.mxu0
      %v2634 = vadd.f32 %v2045, %v2633
      %2635 = vmatmul.bf16.gmra.mxu0 %v2227
      %v2636 = vpop.f32.mrf.mxu0
      %v2637 = vadd.f32 %v2045, %v2636
      %v2638 = vpop.f32.mrf.mxu0
      %v2639 = vadd.f32 %v2045, %v2638
      %2640 = vmatmul.bf16.gmra.mxu0 %v2229
      %v2641 = vpop.f32.mrf.mxu0
      %v2642 = vadd.f32 %v2045, %v2641
      %v2643 = vpop.f32.mrf.mxu0
      %v2644 = vadd.f32 %v2045, %v2643
      %2645 = vmatmul.bf16.gmra.mxu0 %v2231
      %v2646 = vpop.f32.mrf.mxu0
      %v2647 = vadd.f32 %v2045, %v2646
      %v2648 = vpop.f32.mrf.mxu0
      %v2649 = vadd.f32 %v2045, %v2648
      %2650 = vmatmul.bf16.gmra.mxu0 %v2233
      %v2651 = vpop.f32.mrf.mxu0
      %v2652 = vadd.f32 %v2045, %v2651
      %v2653 = vpop.f32.mrf.mxu0
      %v2654 = vadd.f32 %v2045, %v2653
      %2655 = vmatmul.bf16.gmra.mxu0 %v2235
      %v2656 = vpop.f32.mrf.mxu0
      %v2657 = vadd.f32 %v2045, %v2656
      %v2658 = vpop.f32.mrf.mxu0
      %v2659 = vadd.f32 %v2045, %v2658
      %2660 = vmatmul.bf16.gmra.mxu0 %v2237
      %v2661 = vpop.f32.mrf.mxu0
      %v2662 = vadd.f32 %v2045, %v2661
      %v2663 = vpop.f32.mrf.mxu0
      %v2664 = vadd.f32 %v2045, %v2663
      %2665 = vmatmul.bf16.gmra.mxu0 %v2239
      %v2666 = vpop.f32.mrf.mxu0
      %v2667 = vadd.f32 %v2045, %v2666
      %v2668 = vpop.f32.mrf.mxu0
      %v2669 = vadd.f32 %v2045, %v2668
      %2670 = vmatmul.bf16.gmra.mxu0 %v2241
      %v2671 = vpop.f32.mrf.mxu0
      %v2672 = vadd.f32 %v2045, %v2671
      %v2673 = vpop.f32.mrf.mxu0
      %v2674 = vadd.f32 %v2045, %v2673
      %2675 = vdwg.mxu0
      %2676 = vmatpush.bf16.msra.mxu0 %v2496
      %2677 = vmatpush.bf16.msra.mxu0 %v2493
      %2678 = vmatpush.bf16.msra.mxu0 %v2490
      %2679 = vmatpush.bf16.msra.mxu0 %v2487
      %2680 = vmatpush.bf16.msra.mxu0 %v2484
      %2681 = vmatpush.bf16.msra.mxu0 %v2481
      %2682 = vmatpush.bf16.msra.mxu0 %v2478
      %2683 = vmatpush.bf16.msra.mxu0 %v2475
      %2684 = vmatmul.bf16.gmra.mxu0 %v2196
      %v2685 = vpop.f32.mrf.mxu0
      %v2686 = vadd.f32 %v2557, %v2685
      %v2687 = vpop.f32.mrf.mxu0
      %v2688 = vadd.f32 %v2559, %v2687
      %2689 = vmatmul.bf16.gmra.mxu0 %v2198
      %v2690 = vpop.f32.mrf.mxu0
      %v2691 = vadd.f32 %v2562, %v2690
      %v2692 = vpop.f32.mrf.mxu0
      %v2693 = vadd.f32 %v2564, %v2692
      %2694 = vmatmul.bf16.gmra.mxu0 %v2200
      %v2695 = vpop.f32.mrf.mxu0
      %v2696 = vadd.f32 %v2567, %v2695
      %v2697 = vpop.f32.mrf.mxu0
      %v2698 = vadd.f32 %v2569, %v2697
      %2699 = vmatmul.bf16.gmra.mxu0 %v2202
      %v2700 = vpop.f32.mrf.mxu0
      %v2701 = vadd.f32 %v2572, %v2700
      %v2702 = vpop.f32.mrf.mxu0
      %v2703 = vadd.f32 %v2574, %v2702
      %2704 = vmatmul.bf16.gmra.mxu0 %v2204
      %v2705 = vpop.f32.mrf.mxu0
      %v2706 = vadd.f32 %v2577, %v2705
      %v2707 = vpop.f32.mrf.mxu0
      %v2708 = vadd.f32 %v2579, %v2707
      %2709 = vmatmul.bf16.gmra.mxu0 %v2206
      %v2710 = vpop.f32.mrf.mxu0
      %v2711 = vadd.f32 %v2582, %v2710
      %v2712 = vpop.f32.mrf.mxu0
      %v2713 = vadd.f32 %v2584, %v2712
      %2714 = vmatmul.bf16.gmra.mxu0 %v2208
      %v2715 = vpop.f32.mrf.mxu0
      %v2716 = vadd.f32 %v2587, %v2715
      %v2717 = vpop.f32.mrf.mxu0
      %v2718 = vadd.f32 %v2589, %v2717
      %2719 = vmatmul.bf16.gmra.mxu0 %v2210
      %v2720 = vpop.f32.mrf.mxu0
      %v2721 = vadd.f32 %v2592, %v2720
      %v2722 = vpop.f32.mrf.mxu0
      %v2723 = vadd.f32 %v2594, %v2722
      %2724 = vmatmul.bf16.gmra.mxu0 %v2212
      %v2725 = vpop.f32.mrf.mxu0
      %v2726 = vadd.f32 %v2597, %v2725
      %v2727 = vpop.f32.mrf.mxu0
      %v2728 = vadd.f32 %v2599, %v2727
      %2729 = vmatmul.bf16.gmra.mxu0 %v2214
      %v2730 = vpop.f32.mrf.mxu0
      %v2731 = vadd.f32 %v2602, %v2730
      %v2732 = vpop.f32.mrf.mxu0
      %v2733 = vadd.f32 %v2604, %v2732
      %2734 = vmatmul.bf16.gmra.mxu0 %v2216
      %v2735 = vpop.f32.mrf.mxu0
      %v2736 = vadd.f32 %v2607, %v2735
      %v2737 = vpop.f32.mrf.mxu0
      %v2738 = vadd.f32 %v2609, %v2737
      %2739 = vmatmul.bf16.gmra.mxu0 %v2218
      %v2740 = vpop.f32.mrf.mxu0
      %v2741 = vadd.f32 %v2612, %v2740
      %v2742 = vpop.f32.mrf.mxu0
      %v2743 = vadd.f32 %v2614, %v2742
      %2744 = vmatmul.bf16.gmra.mxu0 %v2220
      %v2745 = vpop.f32.mrf.mxu0
      %v2746 = vadd.f32 %v2617, %v2745
      %v2747 = vpop.f32.mrf.mxu0
      %v2748 = vadd.f32 %v2619, %v2747
      %2749 = vmatmul.bf16.gmra.mxu0 %v2222
      %v2750 = vpop.f32.mrf.mxu0
      %v2751 = vadd.f32 %v2622, %v2750
      %v2752 = vpop.f32.mrf.mxu0
      %v2753 = vadd.f32 %v2624, %v2752
      %2754 = vmatmul.bf16.gmra.mxu0 %v2224
      %v2755 = vpop.f32.mrf.mxu0
      %v2756 = vadd.f32 %v2627, %v2755
      %v2757 = vpop.f32.mrf.mxu0
      %v2758 = vadd.f32 %v2629, %v2757
      %2759 = vmatmul.bf16.gmra.mxu0 %v2226
      %v2760 = vpop.f32.mrf.mxu0
      %v2761 = vadd.f32 %v2632, %v2760
      %v2762 = vpop.f32.mrf.mxu0
      %v2763 = vadd.f32 %v2634, %v2762
      %2764 = vmatmul.bf16.gmra.mxu0 %v2228
      %v2765 = vpop.f32.mrf.mxu0
      %v2766 = vadd.f32 %v2637, %v2765
      %v2767 = vpop.f32.mrf.mxu0
      %v2768 = vadd.f32 %v2639, %v2767
      %2769 = vmatmul.bf16.gmra.mxu0 %v2230
      %v2770 = vpop.f32.mrf.mxu0
      %v2771 = vadd.f32 %v2642, %v2770
      %v2772 = vpop.f32.mrf.mxu0
      %v2773 = vadd.f32 %v2644, %v2772
      %2774 = vmatmul.bf16.gmra.mxu0 %v2232
      %v2775 = vpop.f32.mrf.mxu0
      %v2776 = vadd.f32 %v2647, %v2775
      %v2777 = vpop.f32.mrf.mxu0
      %v2778 = vadd.f32 %v2649, %v2777
      %2779 = vmatmul.bf16.gmra.mxu0 %v2234
      %v2780 = vpop.f32.mrf.mxu0
      %v2781 = vadd.f32 %v2652, %v2780
      %v2782 = vpop.f32.mrf.mxu0
      %v2783 = vadd.f32 %v2654, %v2782
      %2784 = vmatmul.bf16.gmra.mxu0 %v2236
      %v2785 = vpop.f32.mrf.mxu0
      %v2786 = vadd.f32 %v2657, %v2785
      %v2787 = vpop.f32.mrf.mxu0
      %v2788 = vadd.f32 %v2659, %v2787
      %2789 = vmatmul.bf16.gmra.mxu0 %v2238
      %v2790 = vpop.f32.mrf.mxu0
      %v2791 = vadd.f32 %v2662, %v2790
      %v2792 = vpop.f32.mrf.mxu0
      %v2793 = vadd.f32 %v2664, %v2792
      %2794 = vmatmul.bf16.gmra.mxu0 %v2240
      %v2795 = vpop.f32.mrf.mxu0
      %v2796 = vadd.f32 %v2667, %v2795
      %v2797 = vpop.f32.mrf.mxu0
      %v2798 = vadd.f32 %v2669, %v2797
      %2799 = vmatmul.bf16.gmra.mxu0 %v2242
      %v2800 = vpop.f32.mrf.mxu0
      %v2801 = vadd.f32 %v2672, %v2800
      %v2802 = vpop.f32.mrf.mxu0
      %v2803 = vadd.f32 %v2674, %v2802
      %2804 = vdwg.mxu0
      %2805 = vmatpush.bf16.msra.mxu0 %v2473
      %2806 = vmatpush.bf16.msra.mxu0 %v2470
      %2807 = vmatpush.bf16.msra.mxu0 %v2467
      %2808 = vmatpush.bf16.msra.mxu0 %v2464
      %2809 = vmatpush.bf16.msra.mxu0 %v2461
      %2810 = vmatpush.bf16.msra.mxu0 %v2458
      %2811 = vmatpush.bf16.msra.mxu0 %v2455
      %2812 = vmatpush.bf16.msra.mxu0 %v2452
      %2813 = vmatmul.bf16.gmra.mxu0 %v2195
      %v2814 = vpop.f32.mrf.mxu0
      %v2815 = vadd.f32 %v2046, %v2814
      %v2816 = vpop.f32.mrf.mxu0
      %v2817 = vadd.f32 %v2046, %v2816
      %2818 = vmatmul.bf16.gmra.mxu0 %v2197
      %v2819 = vpop.f32.mrf.mxu0
      %v2820 = vadd.f32 %v2046, %v2819
      %v2821 = vpop.f32.mrf.mxu0
      %v2822 = vadd.f32 %v2046, %v2821
      %2823 = vmatmul.bf16.gmra.mxu0 %v2199
      %v2824 = vpop.f32.mrf.mxu0
      %v2825 = vadd.f32 %v2046, %v2824
      %v2826 = vpop.f32.mrf.mxu0
      %v2827 = vadd.f32 %v2046, %v2826
      %2828 = vmatmul.bf16.gmra.mxu0 %v2201
      %v2829 = vpop.f32.mrf.mxu0
      %v2830 = vadd.f32 %v2046, %v2829
      %v2831 = vpop.f32.mrf.mxu0
      %v2832 = vadd.f32 %v2046, %v2831
      %2833 = vmatmul.bf16.gmra.mxu0 %v2203
      %v2834 = vpop.f32.mrf.mxu0
      %v2835 = vadd.f32 %v2046, %v2834
      %v2836 = vpop.f32.mrf.mxu0
      %v2837 = vadd.f32 %v2046, %v2836
      %2838 = vmatmul.bf16.gmra.mxu0 %v2205
      %v2839 = vpop.f32.mrf.mxu0
      %v2840 = vadd.f32 %v2046, %v2839
      %v2841 = vpop.f32.mrf.mxu0
      %v2842 = vadd.f32 %v2046, %v2841
      %2843 = vmatmul.bf16.gmra.mxu0 %v2207
      %v2844 = vpop.f32.mrf.mxu0
      %v2845 = vadd.f32 %v2046, %v2844
      %v2846 = vpop.f32.mrf.mxu0
      %v2847 = vadd.f32 %v2046, %v2846
      %2848 = vmatmul.bf16.gmra.mxu0 %v2209
      %v2849 = vpop.f32.mrf.mxu0
      %v2850 = vadd.f32 %v2046, %v2849
      %v2851 = vpop.f32.mrf.mxu0
      %v2852 = vadd.f32 %v2046, %v2851
      %2853 = vmatmul.bf16.gmra.mxu0 %v2211
      %v2854 = vpop.f32.mrf.mxu0
      %v2855 = vadd.f32 %v2046, %v2854
      %v2856 = vpop.f32.mrf.mxu0
      %v2857 = vadd.f32 %v2046, %v2856
      %2858 = vmatmul.bf16.gmra.mxu0 %v2213
      %v2859 = vpop.f32.mrf.mxu0
      %v2860 = vadd.f32 %v2046, %v2859
      %v2861 = vpop.f32.mrf.mxu0
      %v2862 = vadd.f32 %v2046, %v2861
      %2863 = vmatmul.bf16.gmra.mxu0 %v2215
      %v2864 = vpop.f32.mrf.mxu0
      %v2865 = vadd.f32 %v2046, %v2864
      %v2866 = vpop.f32.mrf.mxu0
      %v2867 = vadd.f32 %v2046, %v2866
      %2868 = vmatmul.bf16.gmra.mxu0 %v2217
      %v2869 = vpop.f32.mrf.mxu0
      %v2870 = vadd.f32 %v2046, %v2869
      %v2871 = vpop.f32.mrf.mxu0
      %v2872 = vadd.f32 %v2046, %v2871
      %2873 = vmatmul.bf16.gmra.mxu0 %v2219
      %v2874 = vpop.f32.mrf.mxu0
      %v2875 = vadd.f32 %v2046, %v2874
      %v2876 = vpop.f32.mrf.mxu0
      %v2877 = vadd.f32 %v2046, %v2876
      %2878 = vmatmul.bf16.gmra.mxu0 %v2221
      %v2879 = vpop.f32.mrf.mxu0
      %v2880 = vadd.f32 %v2046, %v2879
      %v2881 = vpop.f32.mrf.mxu0
      %v2882 = vadd.f32 %v2046, %v2881
      %2883 = vmatmul.bf16.gmra.mxu0 %v2223
      %v2884 = vpop.f32.mrf.mxu0
      %v2885 = vadd.f32 %v2046, %v2884
      %v2886 = vpop.f32.mrf.mxu0
      %v2887 = vadd.f32 %v2046, %v2886
      %2888 = vmatmul.bf16.gmra.mxu0 %v2225
      %v2889 = vpop.f32.mrf.mxu0
      %v2890 = vadd.f32 %v2046, %v2889
      %v2891 = vpop.f32.mrf.mxu0
      %v2892 = vadd.f32 %v2046, %v2891
      %2893 = vmatmul.bf16.gmra.mxu0 %v2227
      %v2894 = vpop.f32.mrf.mxu0
      %v2895 = vadd.f32 %v2046, %v2894
      %v2896 = vpop.f32.mrf.mxu0
      %v2897 = vadd.f32 %v2046, %v2896
      %2898 = vmatmul.bf16.gmra.mxu0 %v2229
      %v2899 = vpop.f32.mrf.mxu0
      %v2900 = vadd.f32 %v2046, %v2899
      %v2901 = vpop.f32.mrf.mxu0
      %v2902 = vadd.f32 %v2046, %v2901
      %2903 = vmatmul.bf16.gmra.mxu0 %v2231
      %v2904 = vpop.f32.mrf.mxu0
      %v2905 = vadd.f32 %v2046, %v2904
      %v2906 = vpop.f32.mrf.mxu0
      %v2907 = vadd.f32 %v2046, %v2906
      %2908 = vmatmul.bf16.gmra.mxu0 %v2233
      %v2909 = vpop.f32.mrf.mxu0
      %v2910 = vadd.f32 %v2046, %v2909
      %v2911 = vpop.f32.mrf.mxu0
      %v2912 = vadd.f32 %v2046, %v2911
      %2913 = vmatmul.bf16.gmra.mxu0 %v2235
      %v2914 = vpop.f32.mrf.mxu0
      %v2915 = vadd.f32 %v2046, %v2914
      %v2916 = vpop.f32.mrf.mxu0
      %v2917 = vadd.f32 %v2046, %v2916
      %2918 = vmatmul.bf16.gmra.mxu0 %v2237
      %v2919 = vpop.f32.mrf.mxu0
      %v2920 = vadd.f32 %v2046, %v2919
      %v2921 = vpop.f32.mrf.mxu0
      %v2922 = vadd.f32 %v2046, %v2921
      %2923 = vmatmul.bf16.gmra.mxu0 %v2239
      %v2924 = vpop.f32.mrf.mxu0
      %v2925 = vadd.f32 %v2046, %v2924
      %v2926 = vpop.f32.mrf.mxu0
      %v2927 = vadd.f32 %v2046, %v2926
      %2928 = vmatmul.bf16.gmra.mxu0 %v2241
      %v2929 = vpop.f32.mrf.mxu0
      %v2930 = vadd.f32 %v2046, %v2929
      %v2931 = vpop.f32.mrf.mxu0
      %v2932 = vadd.f32 %v2046, %v2931
      %2933 = vdwg.mxu0
      %2934 = vmatpush.bf16.msra.mxu0 %v2497
      %2935 = vmatpush.bf16.msra.mxu0 %v2494
      %2936 = vmatpush.bf16.msra.mxu0 %v2491
      %2937 = vmatpush.bf16.msra.mxu0 %v2488
      %2938 = vmatpush.bf16.msra.mxu0 %v2485
      %2939 = vmatpush.bf16.msra.mxu0 %v2482
      %2940 = vmatpush.bf16.msra.mxu0 %v2479
      %2941 = vmatpush.bf16.msra.mxu0 %v2476
      %2942 = vmatmul.bf16.gmra.mxu0 %v2196
      %v2943 = vpop.f32.mrf.mxu0
      %v2944 = vadd.f32 %v2815, %v2943
      %v2945 = vpop.f32.mrf.mxu0
      %v2946 = vadd.f32 %v2817, %v2945
      %2947 = vmatmul.bf16.gmra.mxu0 %v2198
      %v2948 = vpop.f32.mrf.mxu0
      %v2949 = vadd.f32 %v2820, %v2948
      %v2950 = vpop.f32.mrf.mxu0
      %v2951 = vadd.f32 %v2822, %v2950
      %2952 = vmatmul.bf16.gmra.mxu0 %v2200
      %v2953 = vpop.f32.mrf.mxu0
      %v2954 = vadd.f32 %v2825, %v2953
      %v2955 = vpop.f32.mrf.mxu0
      %v2956 = vadd.f32 %v2827, %v2955
      %2957 = vmatmul.bf16.gmra.mxu0 %v2202
      %v2958 = vpop.f32.mrf.mxu0
      %v2959 = vadd.f32 %v2830, %v2958
      %v2960 = vpop.f32.mrf.mxu0
      %v2961 = vadd.f32 %v2832, %v2960
      %2962 = vmatmul.bf16.gmra.mxu0 %v2204
      %v2963 = vpop.f32.mrf.mxu0
      %v2964 = vadd.f32 %v2835, %v2963
      %v2965 = vpop.f32.mrf.mxu0
      %v2966 = vadd.f32 %v2837, %v2965
      %2967 = vmatmul.bf16.gmra.mxu0 %v2206
      %v2968 = vpop.f32.mrf.mxu0
      %v2969 = vadd.f32 %v2840, %v2968
      %v2970 = vpop.f32.mrf.mxu0
      %v2971 = vadd.f32 %v2842, %v2970
      %2972 = vmatmul.bf16.gmra.mxu0 %v2208
      %v2973 = vpop.f32.mrf.mxu0
      %v2974 = vadd.f32 %v2845, %v2973
      %v2975 = vpop.f32.mrf.mxu0
      %v2976 = vadd.f32 %v2847, %v2975
      %2977 = vmatmul.bf16.gmra.mxu0 %v2210
      %v2978 = vpop.f32.mrf.mxu0
      %v2979 = vadd.f32 %v2850, %v2978
      %v2980 = vpop.f32.mrf.mxu0
      %v2981 = vadd.f32 %v2852, %v2980
      %2982 = vmatmul.bf16.gmra.mxu0 %v2212
      %v2983 = vpop.f32.mrf.mxu0
      %v2984 = vadd.f32 %v2855, %v2983
      %v2985 = vpop.f32.mrf.mxu0
      %v2986 = vadd.f32 %v2857, %v2985
      %2987 = vmatmul.bf16.gmra.mxu0 %v2214
      %v2988 = vpop.f32.mrf.mxu0
      %v2989 = vadd.f32 %v2860, %v2988
      %v2990 = vpop.f32.mrf.mxu0
      %v2991 = vadd.f32 %v2862, %v2990
      %2992 = vmatmul.bf16.gmra.mxu0 %v2216
      %v2993 = vpop.f32.mrf.mxu0
      %v2994 = vadd.f32 %v2865, %v2993
      %v2995 = vpop.f32.mrf.mxu0
      %v2996 = vadd.f32 %v2867, %v2995
      %2997 = vmatmul.bf16.gmra.mxu0 %v2218
      %v2998 = vpop.f32.mrf.mxu0
      %v2999 = vadd.f32 %v2870, %v2998
      %v3000 = vpop.f32.mrf.mxu0
      %v3001 = vadd.f32 %v2872, %v3000
      %3002 = vmatmul.bf16.gmra.mxu0 %v2220
      %v3003 = vpop.f32.mrf.mxu0
      %v3004 = vadd.f32 %v2875, %v3003
      %v3005 = vpop.f32.mrf.mxu0
      %v3006 = vadd.f32 %v2877, %v3005
      %3007 = vmatmul.bf16.gmra.mxu0 %v2222
      %v3008 = vpop.f32.mrf.mxu0
      %v3009 = vadd.f32 %v2880, %v3008
      %v3010 = vpop.f32.mrf.mxu0
      %v3011 = vadd.f32 %v2882, %v3010
      %3012 = vmatmul.bf16.gmra.mxu0 %v2224
      %v3013 = vpop.f32.mrf.mxu0
      %v3014 = vadd.f32 %v2885, %v3013
      %v3015 = vpop.f32.mrf.mxu0
      %v3016 = vadd.f32 %v2887, %v3015
      %3017 = vmatmul.bf16.gmra.mxu0 %v2226
      %v3018 = vpop.f32.mrf.mxu0
      %v3019 = vadd.f32 %v2890, %v3018
      %v3020 = vpop.f32.mrf.mxu0
      %v3021 = vadd.f32 %v2892, %v3020
      %3022 = vmatmul.bf16.gmra.mxu0 %v2228
      %v3023 = vpop.f32.mrf.mxu0
      %v3024 = vadd.f32 %v2895, %v3023
      %v3025 = vpop.f32.mrf.mxu0
      %v3026 = vadd.f32 %v2897, %v3025
      %3027 = vmatmul.bf16.gmra.mxu0 %v2230
      %v3028 = vpop.f32.mrf.mxu0
      %v3029 = vadd.f32 %v2900, %v3028
      %v3030 = vpop.f32.mrf.mxu0
      %v3031 = vadd.f32 %v2902, %v3030
      %3032 = vmatmul.bf16.gmra.mxu0 %v2232
      %v3033 = vpop.f32.mrf.mxu0
      %v3034 = vadd.f32 %v2905, %v3033
      %v3035 = vpop.f32.mrf.mxu0
      %v3036 = vadd.f32 %v2907, %v3035
      %3037 = vmatmul.bf16.gmra.mxu0 %v2234
      %v3038 = vpop.f32.mrf.mxu0
      %v3039 = vadd.f32 %v2910, %v3038
      %v3040 = vpop.f32.mrf.mxu0
      %v3041 = vadd.f32 %v2912, %v3040
      %3042 = vmatmul.bf16.gmra.mxu0 %v2236
      %v3043 = vpop.f32.mrf.mxu0
      %v3044 = vadd.f32 %v2915, %v3043
      %v3045 = vpop.f32.mrf.mxu0
      %v3046 = vadd.f32 %v2917, %v3045
      %3047 = vmatmul.bf16.gmra.mxu0 %v2238
      %v3048 = vpop.f32.mrf.mxu0
      %v3049 = vadd.f32 %v2920, %v3048
      %v3050 = vpop.f32.mrf.mxu0
      %v3051 = vadd.f32 %v2922, %v3050
      %3052 = vmatmul.bf16.gmra.mxu0 %v2240
      %v3053 = vpop.f32.mrf.mxu0
      %v3054 = vadd.f32 %v2925, %v3053
      %v3055 = vpop.f32.mrf.mxu0
      %v3056 = vadd.f32 %v2927, %v3055
      %3057 = vmatmul.bf16.gmra.mxu0 %v2242
      %v3058 = vpop.f32.mrf.mxu0
      %v3059 = vadd.f32 %v2930, %v3058
      %v3060 = vpop.f32.mrf.mxu0
      %v3061 = vadd.f32 %v2932, %v3060
      %3062 = vdwg.mxu0
      %3063 = vmatpush.bf16.msra.mxu0 %v2474
      %3064 = vmatpush.bf16.msra.mxu0 %v2471
      %3065 = vmatpush.bf16.msra.mxu0 %v2468
      %3066 = vmatpush.bf16.msra.mxu0 %v2465
      %3067 = vmatpush.bf16.msra.mxu0 %v2462
      %3068 = vmatpush.bf16.msra.mxu0 %v2459
      %3069 = vmatpush.bf16.msra.mxu0 %v2456
      %3070 = vmatpush.bf16.msra.mxu0 %v2453
      %3071 = vmatmul.bf16.gmra.mxu0 %v2195
      %v3072 = vpop.f32.mrf.mxu0
      %v3073 = vadd.f32 %v2047, %v3072
      %v3074 = vpop.f32.mrf.mxu0
      %v3075 = vadd.f32 %v2047, %v3074
      %3076 = vmatmul.bf16.gmra.mxu0 %v2197
      %v3077 = vpop.f32.mrf.mxu0
      %v3078 = vadd.f32 %v2047, %v3077
      %v3079 = vpop.f32.mrf.mxu0
      %v3080 = vadd.f32 %v2047, %v3079
      %3081 = vmatmul.bf16.gmra.mxu0 %v2199
      %v3082 = vpop.f32.mrf.mxu0
      %v3083 = vadd.f32 %v2047, %v3082
      %v3084 = vpop.f32.mrf.mxu0
      %v3085 = vadd.f32 %v2047, %v3084
      %3086 = vmatmul.bf16.gmra.mxu0 %v2201
      %v3087 = vpop.f32.mrf.mxu0
      %v3088 = vadd.f32 %v2047, %v3087
      %v3089 = vpop.f32.mrf.mxu0
      %v3090 = vadd.f32 %v2047, %v3089
      %3091 = vmatmul.bf16.gmra.mxu0 %v2203
      %v3092 = vpop.f32.mrf.mxu0
      %v3093 = vadd.f32 %v2047, %v3092
      %v3094 = vpop.f32.mrf.mxu0
      %v3095 = vadd.f32 %v2047, %v3094
      %3096 = vmatmul.bf16.gmra.mxu0 %v2205
      %v3097 = vpop.f32.mrf.mxu0
      %v3098 = vadd.f32 %v2047, %v3097
      %v3099 = vpop.f32.mrf.mxu0
      %v3100 = vadd.f32 %v2047, %v3099
      %3101 = vmatmul.bf16.gmra.mxu0 %v2207
      %v3102 = vpop.f32.mrf.mxu0
      %v3103 = vadd.f32 %v2047, %v3102
      %v3104 = vpop.f32.mrf.mxu0
      %v3105 = vadd.f32 %v2047, %v3104
      %3106 = vmatmul.bf16.gmra.mxu0 %v2209
      %v3107 = vpop.f32.mrf.mxu0
      %v3108 = vadd.f32 %v2047, %v3107
      %v3109 = vpop.f32.mrf.mxu0
      %v3110 = vadd.f32 %v2047, %v3109
      %3111 = vmatmul.bf16.gmra.mxu0 %v2211
      %v3112 = vpop.f32.mrf.mxu0
      %v3113 = vadd.f32 %v2047, %v3112
      %v3114 = vpop.f32.mrf.mxu0
      %v3115 = vadd.f32 %v2047, %v3114
      %3116 = vmatmul.bf16.gmra.mxu0 %v2213
      %v3117 = vpop.f32.mrf.mxu0
      %v3118 = vadd.f32 %v2047, %v3117
      %v3119 = vpop.f32.mrf.mxu0
      %v3120 = vadd.f32 %v2047, %v3119
      %3121 = vmatmul.bf16.gmra.mxu0 %v2215
      %v3122 = vpop.f32.mrf.mxu0
      %v3123 = vadd.f32 %v2047, %v3122
      %v3124 = vpop.f32.mrf.mxu0
      %v3125 = vadd.f32 %v2047, %v3124
      %3126 = vmatmul.bf16.gmra.mxu0 %v2217
      %v3127 = vpop.f32.mrf.mxu0
      %v3128 = vadd.f32 %v2047, %v3127
      %v3129 = vpop.f32.mrf.mxu0
      %v3130 = vadd.f32 %v2047, %v3129
      %3131 = vmatmul.bf16.gmra.mxu0 %v2219
      %v3132 = vpop.f32.mrf.mxu0
      %v3133 = vadd.f32 %v2047, %v3132
      %v3134 = vpop.f32.mrf.mxu0
      %v3135 = vadd.f32 %v2047, %v3134
      %3136 = vmatmul.bf16.gmra.mxu0 %v2221
      %v3137 = vpop.f32.mrf.mxu0
      %v3138 = vadd.f32 %v2047, %v3137
      %v3139 = vpop.f32.mrf.mxu0
      %v3140 = vadd.f32 %v2047, %v3139
      %3141 = vmatmul.bf16.gmra.mxu0 %v2223
      %v3142 = vpop.f32.mrf.mxu0
      %v3143 = vadd.f32 %v2047, %v3142
      %v3144 = vpop.f32.mrf.mxu0
      %v3145 = vadd.f32 %v2047, %v3144
      %3146 = vmatmul.bf16.gmra.mxu0 %v2225
      %v3147 = vpop.f32.mrf.mxu0
      %v3148 = vadd.f32 %v2047, %v3147
      %v3149 = vpop.f32.mrf.mxu0
      %v3150 = vadd.f32 %v2047, %v3149
      %3151 = vmatmul.bf16.gmra.mxu0 %v2227
      %v3152 = vpop.f32.mrf.mxu0
      %v3153 = vadd.f32 %v2047, %v3152
      %v3154 = vpop.f32.mrf.mxu0
      %v3155 = vadd.f32 %v2047, %v3154
      %3156 = vmatmul.bf16.gmra.mxu0 %v2229
      %v3157 = vpop.f32.mrf.mxu0
      %v3158 = vadd.f32 %v2047, %v3157
      %v3159 = vpop.f32.mrf.mxu0
      %v3160 = vadd.f32 %v2047, %v3159
      %3161 = vmatmul.bf16.gmra.mxu0 %v2231
      %v3162 = vpop.f32.mrf.mxu0
      %v3163 = vadd.f32 %v2047, %v3162
      %v3164 = vpop.f32.mrf.mxu0
      %v3165 = vadd.f32 %v2047, %v3164
      %3166 = vmatmul.bf16.gmra.mxu0 %v2233
      %v3167 = vpop.f32.mrf.mxu0
      %v3168 = vadd.f32 %v2047, %v3167
      %v3169 = vpop.f32.mrf.mxu0
      %v3170 = vadd.f32 %v2047, %v3169
      %3171 = vmatmul.bf16.gmra.mxu0 %v2235
      %v3172 = vpop.f32.mrf.mxu0
      %v3173 = vadd.f32 %v2047, %v3172
      %v3174 = vpop.f32.mrf.mxu0
      %v3175 = vadd.f32 %v2047, %v3174
      %3176 = vmatmul.bf16.gmra.mxu0 %v2237
      %v3177 = vpop.f32.mrf.mxu0
      %v3178 = vadd.f32 %v2047, %v3177
      %v3179 = vpop.f32.mrf.mxu0
      %v3180 = vadd.f32 %v2047, %v3179
      %3181 = vmatmul.bf16.gmra.mxu0 %v2239
      %v3182 = vpop.f32.mrf.mxu0
      %v3183 = vadd.f32 %v2047, %v3182
      %v3184 = vpop.f32.mrf.mxu0
      %v3185 = vadd.f32 %v2047, %v3184
      %3186 = vmatmul.bf16.gmra.mxu0 %v2241
      %v3187 = vpop.f32.mrf.mxu0
      %v3188 = vadd.f32 %v2047, %v3187
      %v3189 = vpop.f32.mrf.mxu0
      %v3190 = vadd.f32 %v2047, %v3189
      %3191 = vdwg.mxu0
      %3192 = vmatpush.bf16.msra.mxu0 %v2498
      %3193 = vmatpush.bf16.msra.mxu0 %v2495
      %3194 = vmatpush.bf16.msra.mxu0 %v2492
      %3195 = vmatpush.bf16.msra.mxu0 %v2489
      %3196 = vmatpush.bf16.msra.mxu0 %v2486
      %3197 = vmatpush.bf16.msra.mxu0 %v2483
      %3198 = vmatpush.bf16.msra.mxu0 %v2480
      %3199 = vmatpush.bf16.msra.mxu0 %v2477
      %3200 = vmatmul.bf16.gmra.mxu0 %v2196
      %v3201 = vpop.f32.mrf.mxu0
      %v3202 = vadd.f32 %v3073, %v3201
      %v3203 = vpop.f32.mrf.mxu0
      %v3204 = vadd.f32 %v3075, %v3203
      %3205 = vmatmul.bf16.gmra.mxu0 %v2198
      %v3206 = vpop.f32.mrf.mxu0
      %v3207 = vadd.f32 %v3078, %v3206
      %v3208 = vpop.f32.mrf.mxu0
      %v3209 = vadd.f32 %v3080, %v3208
      %3210 = vmatmul.bf16.gmra.mxu0 %v2200
      %v3211 = vpop.f32.mrf.mxu0
      %v3212 = vadd.f32 %v3083, %v3211
      %v3213 = vpop.f32.mrf.mxu0
      %v3214 = vadd.f32 %v3085, %v3213
      %3215 = vmatmul.bf16.gmra.mxu0 %v2202
      %v3216 = vpop.f32.mrf.mxu0
      %v3217 = vadd.f32 %v3088, %v3216
      %v3218 = vpop.f32.mrf.mxu0
      %v3219 = vadd.f32 %v3090, %v3218
      %3220 = vmatmul.bf16.gmra.mxu0 %v2204
      %v3221 = vpop.f32.mrf.mxu0
      %v3222 = vadd.f32 %v3093, %v3221
      %v3223 = vpop.f32.mrf.mxu0
      %v3224 = vadd.f32 %v3095, %v3223
      %3225 = vmatmul.bf16.gmra.mxu0 %v2206
      %v3226 = vpop.f32.mrf.mxu0
      %v3227 = vadd.f32 %v3098, %v3226
      %v3228 = vpop.f32.mrf.mxu0
      %v3229 = vadd.f32 %v3100, %v3228
      %3230 = vmatmul.bf16.gmra.mxu0 %v2208
      %v3231 = vpop.f32.mrf.mxu0
      %v3232 = vadd.f32 %v3103, %v3231
      %v3233 = vpop.f32.mrf.mxu0
      %v3234 = vadd.f32 %v3105, %v3233
      %3235 = vmatmul.bf16.gmra.mxu0 %v2210
      %v3236 = vpop.f32.mrf.mxu0
      %v3237 = vadd.f32 %v3108, %v3236
      %v3238 = vpop.f32.mrf.mxu0
      %v3239 = vadd.f32 %v3110, %v3238
      %3240 = vmatmul.bf16.gmra.mxu0 %v2212
      %v3241 = vpop.f32.mrf.mxu0
      %v3242 = vadd.f32 %v3113, %v3241
      %v3243 = vpop.f32.mrf.mxu0
      %v3244 = vadd.f32 %v3115, %v3243
      %3245 = vmatmul.bf16.gmra.mxu0 %v2214
      %v3246 = vpop.f32.mrf.mxu0
      %v3247 = vadd.f32 %v3118, %v3246
      %v3248 = vpop.f32.mrf.mxu0
      %v3249 = vadd.f32 %v3120, %v3248
      %3250 = vmatmul.bf16.gmra.mxu0 %v2216
      %v3251 = vpop.f32.mrf.mxu0
      %v3252 = vadd.f32 %v3123, %v3251
      %v3253 = vpop.f32.mrf.mxu0
      %v3254 = vadd.f32 %v3125, %v3253
      %3255 = vmatmul.bf16.gmra.mxu0 %v2218
      %v3256 = vpop.f32.mrf.mxu0
      %v3257 = vadd.f32 %v3128, %v3256
      %v3258 = vpop.f32.mrf.mxu0
      %v3259 = vadd.f32 %v3130, %v3258
      %3260 = vmatmul.bf16.gmra.mxu0 %v2220
      %v3261 = vpop.f32.mrf.mxu0
      %v3262 = vadd.f32 %v3133, %v3261
      %v3263 = vpop.f32.mrf.mxu0
      %v3264 = vadd.f32 %v3135, %v3263
      %3265 = vmatmul.bf16.gmra.mxu0 %v2222
      %v3266 = vpop.f32.mrf.mxu0
      %v3267 = vadd.f32 %v3138, %v3266
      %v3268 = vpop.f32.mrf.mxu0
      %v3269 = vadd.f32 %v3140, %v3268
      %3270 = vmatmul.bf16.gmra.mxu0 %v2224
      %v3271 = vpop.f32.mrf.mxu0
      %v3272 = vadd.f32 %v3143, %v3271
      %v3273 = vpop.f32.mrf.mxu0
      %v3274 = vadd.f32 %v3145, %v3273
      %3275 = vmatmul.bf16.gmra.mxu0 %v2226
      %v3276 = vpop.f32.mrf.mxu0
      %v3277 = vadd.f32 %v3148, %v3276
      %v3278 = vpop.f32.mrf.mxu0
      %v3279 = vadd.f32 %v3150, %v3278
      %3280 = vmatmul.bf16.gmra.mxu0 %v2228
      %v3281 = vpop.f32.mrf.mxu0
      %v3282 = vadd.f32 %v3153, %v3281
      %v3283 = vpop.f32.mrf.mxu0
      %v3284 = vadd.f32 %v3155, %v3283
      %3285 = vmatmul.bf16.gmra.mxu0 %v2230
      %v3286 = vpop.f32.mrf.mxu0
      %v3287 = vadd.f32 %v3158, %v3286
      %v3288 = vpop.f32.mrf.mxu0
      %v3289 = vadd.f32 %v3160, %v3288
      %3290 = vmatmul.bf16.gmra.mxu0 %v2232
      %v3291 = vpop.f32.mrf.mxu0
      %v3292 = vadd.f32 %v3163, %v3291
      %v3293 = vpop.f32.mrf.mxu0
      %v3294 = vadd.f32 %v3165, %v3293
      %3295 = vmatmul.bf16.gmra.mxu0 %v2234
      %v3296 = vpop.f32.mrf.mxu0
      %v3297 = vadd.f32 %v3168, %v3296
      %v3298 = vpop.f32.mrf.mxu0
      %v3299 = vadd.f32 %v3170, %v3298
      %3300 = vmatmul.bf16.gmra.mxu0 %v2236
      %v3301 = vpop.f32.mrf.mxu0
      %v3302 = vadd.f32 %v3173, %v3301
      %v3303 = vpop.f32.mrf.mxu0
      %v3304 = vadd.f32 %v3175, %v3303
      %3305 = vmatmul.bf16.gmra.mxu0 %v2238
      %v3306 = vpop.f32.mrf.mxu0
      %v3307 = vadd.f32 %v3178, %v3306
      %v3308 = vpop.f32.mrf.mxu0
      %v3309 = vadd.f32 %v3180, %v3308
      %3310 = vmatmul.bf16.gmra.mxu0 %v2240
      %v3311 = vpop.f32.mrf.mxu0
      %v3312 = vadd.f32 %v3183, %v3311
      %v3313 = vpop.f32.mrf.mxu0
      %v3314 = vadd.f32 %v3185, %v3313
      %3315 = vmatmul.bf16.gmra.mxu0 %v2242
      %v3316 = vpop.f32.mrf.mxu0
      %v3317 = vadd.f32 %v3188, %v3316
      %v3318 = vpop.f32.mrf.mxu0
      %v3319 = vadd.f32 %v3190, %v3318
      %3320 = vdwg.mxu0
      %3321 = vst [vmem:[#allocation3] sm:$0xff] %v2686
      %3322 = vst [vmem:[#allocation3 + $0x8] sm:$0xff] %v2944
      %3323 = vst [vmem:[#allocation3 + $0x10] sm:$0xff] %v3202
      %3324 = vst [vmem:[#allocation3 + $0x18] sm:$0xff] %v2688
      %3325 = vst [vmem:[#allocation3 + $0x20] sm:$0xff] %v2946
      %3326 = vst [vmem:[#allocation3 + $0x28] sm:$0xff] %v3204
      %3327 = vst [vmem:[#allocation3 + $0x30] sm:$0xff] %v2691
      %3328 = vst [vmem:[#allocation3 + $0x38] sm:$0xff] %v2949
      %3329 = vst [vmem:[#allocation3 + $0x40] sm:$0xff] %v3207
      %3330 = vst [vmem:[#allocation3 + $0x48] sm:$0xff] %v2693
      %3331 = vst [vmem:[#allocation3 + $0x50] sm:$0xff] %v2951
      %3332 = vst [vmem:[#allocation3 + $0x58] sm:$0xff] %v3209
      %3333 = vst [vmem:[#allocation3 + $0x60] sm:$0xff] %v2696
      %3334 = vst [vmem:[#allocation3 + $0x68] sm:$0xff] %v2954
      %3335 = vst [vmem:[#allocation3 + $0x70] sm:$0xff] %v3212
      %3336 = vst [vmem:[#allocation3 + $0x78] sm:$0xff] %v2698
      %3337 = vst [vmem:[#allocation3 + $0x80] sm:$0xff] %v2956
      %3338 = vst [vmem:[#allocation3 + $0x88] sm:$0xff] %v3214
      %3339 = vst [vmem:[#allocation3 + $0x90] sm:$0xff] %v2701
      %3340 = vst [vmem:[#allocation3 + $0x98] sm:$0xff] %v2959
      %3341 = vst [vmem:[#allocation3 + $0xa0] sm:$0xff] %v3217
      %3342 = vst [vmem:[#allocation3 + $0xa8] sm:$0xff] %v2703
      %3343 = vst [vmem:[#allocation3 + $0xb0] sm:$0xff] %v2961
      %3344 = vst [vmem:[#allocation3 + $0xb8] sm:$0xff] %v3219
      %3345 = vst [vmem:[#allocation3 + $0xc0] sm:$0xff] %v2706
      %3346 = vst [vmem:[#allocation3 + $0xc8] sm:$0xff] %v2964
      %3347 = vst [vmem:[#allocation3 + $0xd0] sm:$0xff] %v3222
      %3348 = vst [vmem:[#allocation3 + $0xd8] sm:$0xff] %v2708
      %3349 = vst [vmem:[#allocation3 + $0xe0] sm:$0xff] %v2966
      %3350 = vst [vmem:[#allocation3 + $0xe8] sm:$0xff] %v3224
      %3351 = vst [vmem:[#allocation3 + $0xf0] sm:$0xff] %v2711
      %3352 = vst [vmem:[#allocation3 + $0xf8] sm:$0xff] %v2969
      %3353 = vst [vmem:[#allocation3 + $0x100] sm:$0xff] %v3227
      %3354 = vst [vmem:[#allocation3 + $0x108] sm:$0xff] %v2713
      %3355 = vst [vmem:[#allocation3 + $0x110] sm:$0xff] %v2971
      %3356 = vst [vmem:[#allocation3 + $0x118] sm:$0xff] %v3229
      %3357 = vst [vmem:[#allocation3 + $0x120] sm:$0xff] %v2716
      %3358 = vst [vmem:[#allocation3 + $0x128] sm:$0xff] %v2974
      %3359 = vst [vmem:[#allocation3 + $0x130] sm:$0xff] %v3232
      %3360 = vst [vmem:[#allocation3 + $0x138] sm:$0xff] %v2718
      %3361 = vst [vmem:[#allocation3 + $0x140] sm:$0xff] %v2976
      %3362 = vst [vmem:[#allocation3 + $0x148] sm:$0xff] %v3234
      %3363 = vst [vmem:[#allocation3 + $0x150] sm:$0xff] %v2721
      %3364 = vst [vmem:[#allocation3 + $0x158] sm:$0xff] %v2979
      %3365 = vst [vmem:[#allocation3 + $0x160] sm:$0xff] %v3237
      %3366 = vst [vmem:[#allocation3 + $0x168] sm:$0xff] %v2723
      %3367 = vst [vmem:[#allocation3 + $0x170] sm:$0xff] %v2981
      %3368 = vst [vmem:[#allocation3 + $0x178] sm:$0xff] %v3239
      %3369 = vst [vmem:[#allocation3 + $0x180] sm:$0xff] %v2726
      %3370 = vst [vmem:[#allocation3 + $0x188] sm:$0xff] %v2984
      %3371 = vst [vmem:[#allocation3 + $0x190] sm:$0xff] %v3242
      %3372 = vst [vmem:[#allocation3 + $0x198] sm:$0xff] %v2728
      %3373 = vst [vmem:[#allocation3 + $0x1a0] sm:$0xff] %v2986
      %3374 = vst [vmem:[#allocation3 + $0x1a8] sm:$0xff] %v3244
      %3375 = vst [vmem:[#allocation3 + $0x1b0] sm:$0xff] %v2731
      %3376 = vst [vmem:[#allocation3 + $0x1b8] sm:$0xff] %v2989
      %3377 = vst [vmem:[#allocation3 + $0x1c0] sm:$0xff] %v3247
      %3378 = vst [vmem:[#allocation3 + $0x1c8] sm:$0xff] %v2733
      %3379 = vst [vmem:[#allocation3 + $0x1d0] sm:$0xff] %v2991
      %3380 = vst [vmem:[#allocation3 + $0x1d8] sm:$0xff] %v3249
      %3381 = vst [vmem:[#allocation3 + $0x1e0] sm:$0xff] %v2736
      %3382 = vst [vmem:[#allocation3 + $0x1e8] sm:$0xff] %v2994
      %3383 = vst [vmem:[#allocation3 + $0x1f0] sm:$0xff] %v3252
      %3384 = vst [vmem:[#allocation3 + $0x1f8] sm:$0xff] %v2738
      %3385 = vst [vmem:[#allocation3 + $0x200] sm:$0xff] %v2996
      %3386 = vst [vmem:[#allocation3 + $0x208] sm:$0xff] %v3254
      %3387 = vst [vmem:[#allocation3 + $0x210] sm:$0xff] %v2741
      %3388 = vst [vmem:[#allocation3 + $0x218] sm:$0xff] %v2999
      %3389 = vst [vmem:[#allocation3 + $0x220] sm:$0xff] %v3257
      %3390 = vst [vmem:[#allocation3 + $0x228] sm:$0xff] %v2743
      %3391 = vst [vmem:[#allocation3 + $0x230] sm:$0xff] %v3001
      %3392 = vst [vmem:[#allocation3 + $0x238] sm:$0xff] %v3259
      %3393 = vst [vmem:[#allocation3 + $0x240] sm:$0xff] %v2746
      %3394 = vst [vmem:[#allocation3 + $0x248] sm:$0xff] %v3004
      %3395 = vst [vmem:[#allocation3 + $0x250] sm:$0xff] %v3262
      %3396 = vst [vmem:[#allocation3 + $0x258] sm:$0xff] %v2748
      %3397 = vst [vmem:[#allocation3 + $0x260] sm:$0xff] %v3006
      %3398 = vst [vmem:[#allocation3 + $0x268] sm:$0xff] %v3264
      %3399 = vst [vmem:[#allocation3 + $0x270] sm:$0xff] %v2751
      %3400 = vst [vmem:[#allocation3 + $0x278] sm:$0xff] %v3009
      %3401 = vst [vmem:[#allocation3 + $0x280] sm:$0xff] %v3267
      %3402 = vst [vmem:[#allocation3 + $0x288] sm:$0xff] %v2753
      %3403 = vst [vmem:[#allocation3 + $0x290] sm:$0xff] %v3011
      %3404 = vst [vmem:[#allocation3 + $0x298] sm:$0xff] %v3269
      %3405 = vst [vmem:[#allocation3 + $0x2a0] sm:$0xff] %v2756
      %3406 = vst [vmem:[#allocation3 + $0x2a8] sm:$0xff] %v3014
      %3407 = vst [vmem:[#allocation3 + $0x2b0] sm:$0xff] %v3272
      %3408 = vst [vmem:[#allocation3 + $0x2b8] sm:$0xff] %v2758
      %3409 = vst [vmem:[#allocation3 + $0x2c0] sm:$0xff] %v3016
      %3410 = vst [vmem:[#allocation3 + $0x2c8] sm:$0xff] %v3274
      %3411 = vst [vmem:[#allocation3 + $0x2d0] sm:$0xff] %v2761
      %3412 = vst [vmem:[#allocation3 + $0x2d8] sm:$0xff] %v3019
      %3413 = vst [vmem:[#allocation3 + $0x2e0] sm:$0xff] %v3277
      %3414 = vst [vmem:[#allocation3 + $0x2e8] sm:$0xff] %v2763
      %3415 = vst [vmem:[#allocation3 + $0x2f0] sm:$0xff] %v3021
      %3416 = vst [vmem:[#allocation3 + $0x2f8] sm:$0xff] %v3279
      %3417 = vst [vmem:[#allocation3 + $0x300] sm:$0xff] %v2766
      %3418 = vst [vmem:[#allocation3 + $0x308] sm:$0xff] %v3024
      %3419 = vst [vmem:[#allocation3 + $0x310] sm:$0xff] %v3282
      %3420 = vst [vmem:[#allocation3 + $0x318] sm:$0xff] %v2768
      %3421 = vst [vmem:[#allocation3 + $0x320] sm:$0xff] %v3026
      %3422 = vst [vmem:[#allocation3 + $0x328] sm:$0xff] %v3284
      %3423 = vst [vmem:[#allocation3 + $0x330] sm:$0xff] %v2771
      %3424 = vst [vmem:[#allocation3 + $0x338] sm:$0xff] %v3029
      %3425 = vst [vmem:[#allocation3 + $0x340] sm:$0xff] %v3287
      %3426 = vst [vmem:[#allocation3 + $0x348] sm:$0xff] %v2773
      %3427 = vst [vmem:[#allocation3 + $0x350] sm:$0xff] %v3031
      %3428 = vst [vmem:[#allocation3 + $0x358] sm:$0xff] %v3289
      %3429 = vst [vmem:[#allocation3 + $0x360] sm:$0xff] %v2776
      %3430 = vst [vmem:[#allocation3 + $0x368] sm:$0xff] %v3034
      %3431 = vst [vmem:[#allocation3 + $0x370] sm:$0xff] %v3292
      %3432 = vst [vmem:[#allocation3 + $0x378] sm:$0xff] %v2778
      %3433 = vst [vmem:[#allocation3 + $0x380] sm:$0xff] %v3036
      %3434 = vst [vmem:[#allocation3 + $0x388] sm:$0xff] %v3294
      %3435 = vst [vmem:[#allocation3 + $0x390] sm:$0xff] %v2781
      %3436 = vst [vmem:[#allocation3 + $0x398] sm:$0xff] %v3039
      %3437 = vst [vmem:[#allocation3 + $0x3a0] sm:$0xff] %v3297
      %3438 = vst [vmem:[#allocation3 + $0x3a8] sm:$0xff] %v2783
      %3439 = vst [vmem:[#allocation3 + $0x3b0] sm:$0xff] %v3041
      %3440 = vst [vmem:[#allocation3 + $0x3b8] sm:$0xff] %v3299
      %3441 = vst [vmem:[#allocation3 + $0x3c0] sm:$0xff] %v2786
      %3442 = vst [vmem:[#allocation3 + $0x3c8] sm:$0xff] %v3044
      %3443 = vst [vmem:[#allocation3 + $0x3d0] sm:$0xff] %v3302
      %3444 = vst [vmem:[#allocation3 + $0x3d8] sm:$0xff] %v2788
      %3445 = vst [vmem:[#allocation3 + $0x3e0] sm:$0xff] %v3046
      %3446 = vst [vmem:[#allocation3 + $0x3e8] sm:$0xff] %v3304
      %3447 = vst [vmem:[#allocation3 + $0x3f0] sm:$0xff] %v2791
      %3448 = vst [vmem:[#allocation3 + $0x3f8] sm:$0xff] %v3049
      %3449 = vst [vmem:[#allocation3 + $0x400] sm:$0xff] %v3307
      %3450 = vst [vmem:[#allocation3 + $0x408] sm:$0xff] %v2793
      %3451 = vst [vmem:[#allocation3 + $0x410] sm:$0xff] %v3051
      %3452 = vst [vmem:[#allocation3 + $0x418] sm:$0xff] %v3309
      %3453 = vst [vmem:[#allocation3 + $0x420] sm:$0xff] %v2796
      %3454 = vst [vmem:[#allocation3 + $0x428] sm:$0xff] %v3054
      %3455 = vst [vmem:[#allocation3 + $0x430] sm:$0xff] %v3312
      %3456 = vst [vmem:[#allocation3 + $0x438] sm:$0xff] %v2798
      %3457 = vst [vmem:[#allocation3 + $0x440] sm:$0xff] %v3056
      %3458 = vst [vmem:[#allocation3 + $0x448] sm:$0xff] %v3314
      %3459 = vst [vmem:[#allocation3 + $0x450] sm:$0xff] %v2801
      %3460 = vst [vmem:[#allocation3 + $0x458] sm:$0xff] %v3059
      %3461 = vst [vmem:[#allocation3 + $0x460] sm:$0xff] %v3317
      %3462 = vst [vmem:[#allocation3 + $0x468] sm:$0xff] %v2803
      %3463 = vst [vmem:[#allocation3 + $0x470] sm:$0xff] %v3061
      %3464 = vst [vmem:[#allocation3 + $0x478] sm:$0xff] %v3319
      %v3465 = vld [vmem:[%s2] sm:$0xff]
      %v3466 = vld [vmem:[%s5] sm:$0xff]
      %v3467 = vld [vmem:[%s5 + $0x8] sm:$0xf]
      %v3468 = vld [vmem:[%s5 + $0xc] sm:$0xff]
      %v3469 = vld [vmem:[%s5 + $0x14] sm:$0xf]
      %v3470 = vld [vmem:[%s5 + $0x18] sm:$0xff]
      %v3471 = vld [vmem:[%s5 + $0x20] sm:$0xf]
      %v3472 = vld [vmem:[%s5 + $0x24] sm:$0xff]
      %v3473 = vld [vmem:[%s5 + $0x2c] sm:$0xf]
      %v3474 = vld [vmem:[%s5 + $0x30] sm:$0xff]
      %v3475 = vld [vmem:[%s5 + $0x38] sm:$0xf]
      %v3476 = vld [vmem:[%s5 + $0x3c] sm:$0xff]
      %v3477 = vld [vmem:[%s5 + $0x44] sm:$0xf]
      %v3478 = vld [vmem:[%s5 + $0x48] sm:$0xff]
      %v3479 = vld [vmem:[%s5 + $0x50] sm:$0xf]
      %v3480 = vld [vmem:[%s5 + $0x54] sm:$0xff]
      %v3481 = vld [vmem:[%s5 + $0x5c] sm:$0xf]
      %v3482 = vld [vmem:[%s5 + $0x60] sm:$0xff]
      %v3483 = vld [vmem:[%s5 + $0x68] sm:$0xf]
      %v3484 = vld [vmem:[%s5 + $0x6c] sm:$0xff]
      %v3485 = vld [vmem:[%s5 + $0x74] sm:$0xf]
      %v3486 = vld [vmem:[%s5 + $0x78] sm:$0xff]
      %v3487 = vld [vmem:[%s5 + $0x80] sm:$0xf]
      %v3488 = vld [vmem:[%s5 + $0x84] sm:$0xff]
      %v3489 = vld [vmem:[%s5 + $0x8c] sm:$0xf]
      %v3490 = vld [vmem:[%s5 + $0x90] sm:$0xff]
      %v3491 = vld [vmem:[%s5 + $0x98] sm:$0xf]
      %v3492 = vld [vmem:[%s5 + $0x9c] sm:$0xff]
      %v3493 = vld [vmem:[%s5 + $0xa4] sm:$0xf]
      %v3494 = vld [vmem:[%s5 + $0xa8] sm:$0xff]
      %v3495 = vld [vmem:[%s5 + $0xb0] sm:$0xf]
      %v3496 = vld [vmem:[%s5 + $0xb4] sm:$0xff]
      %v3497 = vld [vmem:[%s5 + $0xbc] sm:$0xf]
      %v3498 = vld [vmem:[%s6] sm:$0xff]
      %v3499 = vld [vmem:[%s6 + $0x8] sm:$0xf]
      %v3500 = vld [vmem:[%s6 + $0xc] sm:$0xff]
      %v3501 = vld [vmem:[%s6 + $0x14] sm:$0xf]
      %v3502 = vld [vmem:[%s6 + $0x18] sm:$0xff]
      %v3503 = vld [vmem:[%s6 + $0x20] sm:$0xf]
      %v3504 = vld [vmem:[%s6 + $0x24] sm:$0xff]
      %v3505 = vld [vmem:[%s6 + $0x2c] sm:$0xf]
      %v3506 = vld [vmem:[%s6 + $0x30] sm:$0xff]
      %v3507 = vld [vmem:[%s6 + $0x38] sm:$0xf]
      %v3508 = vld [vmem:[%s6 + $0x3c] sm:$0xff]
      %v3509 = vld [vmem:[%s6 + $0x44] sm:$0xf]
      %v3510 = vld [vmem:[%s6 + $0x48] sm:$0xff]
      %v3511 = vld [vmem:[%s6 + $0x50] sm:$0xf]
      %v3512 = vld [vmem:[%s6 + $0x54] sm:$0xff]
      %v3513 = vld [vmem:[%s6 + $0x5c] sm:$0xf]
      %v3514 = vld [vmem:[%s6 + $0x60] sm:$0xff]
      %v3515 = vld [vmem:[%s6 + $0x68] sm:$0xf]
      %v3516 = vld [vmem:[%s6 + $0x6c] sm:$0xff]
      %v3517 = vld [vmem:[%s6 + $0x74] sm:$0xf]
      %v3518 = vld [vmem:[%s6 + $0x78] sm:$0xff]
      %v3519 = vld [vmem:[%s6 + $0x80] sm:$0xf]
      %v3520 = vld [vmem:[%s6 + $0x84] sm:$0xff]
      %v3521 = vld [vmem:[%s6 + $0x8c] sm:$0xf]
      %v3522 = vld [vmem:[%s6 + $0x90] sm:$0xff]
      %v3523 = vld [vmem:[%s6 + $0x98] sm:$0xf]
      %v3524 = vld [vmem:[%s6 + $0x9c] sm:$0xff]
      %v3525 = vld [vmem:[%s6 + $0xa4] sm:$0xf]
      %v3526 = vld [vmem:[%s6 + $0xa8] sm:$0xff]
      %v3527 = vld [vmem:[%s6 + $0xb0] sm:$0xf]
      %v3528 = vld [vmem:[%s6 + $0xb4] sm:$0xff]
      %v3529 = vld [vmem:[%s6 + $0xbc] sm:$0xf]
      %s3530 = scalar_lea.vmem %s7, 1
      %v3531 = vld [vmem:[%s3530] ss:$2 sm:$0x7]
      %v3533 = vperm.slane %v3531, 0
      %v3534 = vperm.slane %v3531, 1
      %v3535 = vperm.slane %v3531, 2
      %s3539 = scalar_lea.vmem %s7, 7
      %v3540 = vld [vmem:[%s3539] ss:$2 sm:$0x7]
      %v3542 = vperm.slane %v3540, 0
      %v3543 = vperm.slane %v3540, 1
      %v3544 = vperm.slane %v3540, 2
      %s3548 = smul.u32 %s21, 48
      %s3549 = ssub.s32 1, %s21
      %s3550 = smul.u32 %s3549, 48
      %v3551 = vld [vmem:[#allocation6] sm:$0xff]
      %v3552 = vld [vmem:[#allocation7] sm:$0xff]
      loop: start=0, step=1, limit=48
      $region57: #{forward.4} parent=51 // loop_pre_header
        _
      $region58: #{forward.4} parent=51 // loop_header
        %s3554 = sphi 0, %s3558
        %p3555 = scmp.ge.s32.totalorder %s3554, 48
        %v3559 = vphi %v3551, %v3962
        %v3560 = vphi %v3552, %v4021
      $region59: #{forward.4} parent=51 // loop_header_branch
        %3557 = sbr.rel (%p3555) target = $region63
      $region60: #{forward.4} parent=51 // loop_body
        %s3561 = ssub.s32 47, %s3554
        %s3562 = smul.u32 %s3554, 8
        %s3563 = smul.u32 %s3561, 8
        %s3564 = sshra.s32 %s3562, 3
        %s3565 = sand.u32 %s3562, 7
        %s3566 = smul.u32 %s3564, 3
        %s3567 = smul.addr %s3566, 8
        %s3568 = scalar_lea.vmem [#allocation2], %s3567
        %v3569 = vld [vmem:[%s3568] sm:$0xff]
        %v3570 = vld [vmem:[%s3568 + $0x8] sm:$0xff]
        %v3571 = vld [vmem:[%s3568 + $0x10] sm:$0xff]
        %s3572 = sshra.s32 %s3563, 3
        %s3573 = sand.u32 %s3563, 7
        %s3574 = smul.u32 %s3572, 3
        %s3575 = smul.addr %s3574, 8
        %s3576 = scalar_lea.vmem [#allocation3], %s3575
        %v3577 = vld [vmem:[%s3576] sm:$0xff]
        %v3578 = vld [vmem:[%s3576 + $0x8] sm:$0xff]
        %v3579 = vld [vmem:[%s3576 + $0x10] sm:$0xff]
        %v3580 = vpack.c.bf16 %v3559, %v3559
        %v3613 = vunpack.c.l.b16 %v3466
        %v3614 = vunpack.c.h.b16 %v3466
        %v3615 = vunpack.c.l.b16 %v3467
        %v3616 = vunpack.c.l.b16 %v3468
        %v3617 = vunpack.c.h.b16 %v3468
        %v3618 = vunpack.c.l.b16 %v3469
        %v3619 = vunpack.c.l.b16 %v3470
        %v3620 = vunpack.c.h.b16 %v3470
        %v3621 = vunpack.c.l.b16 %v3471
        %v3622 = vunpack.c.l.b16 %v3472
        %v3623 = vunpack.c.h.b16 %v3472
        %v3624 = vunpack.c.l.b16 %v3473
        %v3625 = vunpack.c.l.b16 %v3474
        %v3626 = vunpack.c.h.b16 %v3474
        %v3627 = vunpack.c.l.b16 %v3475
        %v3628 = vunpack.c.l.b16 %v3476
        %v3629 = vunpack.c.h.b16 %v3476
        %v3630 = vunpack.c.l.b16 %v3477
        %v3631 = vunpack.c.l.b16 %v3478
        %v3632 = vunpack.c.h.b16 %v3478
        %v3633 = vunpack.c.l.b16 %v3479
        %v3634 = vunpack.c.l.b16 %v3480
        %v3635 = vunpack.c.h.b16 %v3480
        %v3636 = vunpack.c.l.b16 %v3481
        %v3637 = vunpack.c.l.b16 %v3482
        %v3638 = vunpack.c.h.b16 %v3482
        %v3639 = vunpack.c.l.b16 %v3483
        %v3640 = vunpack.c.l.b16 %v3484
        %v3641 = vunpack.c.h.b16 %v3484
        %v3642 = vunpack.c.l.b16 %v3485
        %v3643 = vunpack.c.l.b16 %v3486
        %v3644 = vunpack.c.h.b16 %v3486
        %v3645 = vunpack.c.l.b16 %v3487
        %v3646 = vunpack.c.l.b16 %v3488
        %v3647 = vunpack.c.h.b16 %v3488
        %v3648 = vunpack.c.l.b16 %v3489
        %v3649 = vunpack.c.l.b16 %v3490
        %v3650 = vunpack.c.h.b16 %v3490
        %v3651 = vunpack.c.l.b16 %v3491
        %v3652 = vunpack.c.l.b16 %v3492
        %v3653 = vunpack.c.h.b16 %v3492
        %v3654 = vunpack.c.l.b16 %v3493
        %v3655 = vunpack.c.l.b16 %v3494
        %v3656 = vunpack.c.h.b16 %v3494
        %v3657 = vunpack.c.l.b16 %v3495
        %v3658 = vunpack.c.l.b16 %v3496
        %v3659 = vunpack.c.h.b16 %v3496
        %v3660 = vunpack.c.l.b16 %v3497
        %v3661 = vpack.c.b16 %v3616, %v3613
        %v3662 = vpack.c.b16 %v3617, %v3614
        %v3663 = vpack.c.b16 %v3618, %v3615
        %v3664 = vpack.c.b16 %v3622, %v3619
        %v3665 = vpack.c.b16 %v3623, %v3620
        %v3666 = vpack.c.b16 %v3624, %v3621
        %v3667 = vpack.c.b16 %v3628, %v3625
        %v3668 = vpack.c.b16 %v3629, %v3626
        %v3669 = vpack.c.b16 %v3630, %v3627
        %v3670 = vpack.c.b16 %v3634, %v3631
        %v3671 = vpack.c.b16 %v3635, %v3632
        %v3672 = vpack.c.b16 %v3636, %v3633
        %v3673 = vpack.c.b16 %v3640, %v3637
        %v3674 = vpack.c.b16 %v3641, %v3638
        %v3675 = vpack.c.b16 %v3642, %v3639
        %v3676 = vpack.c.b16 %v3646, %v3643
        %v3677 = vpack.c.b16 %v3647, %v3644
        %v3678 = vpack.c.b16 %v3648, %v3645
        %v3679 = vpack.c.b16 %v3652, %v3649
        %v3680 = vpack.c.b16 %v3653, %v3650
        %v3681 = vpack.c.b16 %v3654, %v3651
        %v3682 = vpack.c.b16 %v3658, %v3655
        %v3683 = vpack.c.b16 %v3659, %v3656
        %v3684 = vpack.c.b16 %v3660, %v3657
        %3709 = vmatpush.bf16.msra.mxu0 %v3682
        %3710 = vmatpush.bf16.msra.mxu0 %v3679
        %3711 = vmatpush.bf16.msra.mxu0 %v3676
        %3712 = vmatpush.bf16.msra.mxu0 %v3673
        %3713 = vmatpush.bf16.msra.mxu0 %v3670
        %3714 = vmatpush.bf16.msra.mxu0 %v3667
        %3715 = vmatpush.bf16.msra.mxu0 %v3664
        %3716 = vmatpush.bf16.msra.mxu0 %v3661
        %3717 = vmatmul.bf16.gmra.mxu0 %v3580
        %v3718 = vpop.f32.mrf.mxu0
        %v3719 = vadd.f32 %v3533, %v3718
        %v3720 = vpop.f32.mrf.mxu0
        %3721 = vdwg.mxu0
        %3722 = vmatpush.bf16.msra.mxu0 %v3683
        %3723 = vmatpush.bf16.msra.mxu0 %v3680
        %3724 = vmatpush.bf16.msra.mxu0 %v3677
        %3725 = vmatpush.bf16.msra.mxu0 %v3674
        %3726 = vmatpush.bf16.msra.mxu0 %v3671
        %3727 = vmatpush.bf16.msra.mxu0 %v3668
        %3728 = vmatpush.bf16.msra.mxu0 %v3665
        %3729 = vmatpush.bf16.msra.mxu0 %v3662
        %3730 = vmatmul.bf16.gmra.mxu0 %v3580
        %v3731 = vpop.f32.mrf.mxu0
        %v3732 = vadd.f32 %v3534, %v3731
        %v3733 = vpop.f32.mrf.mxu0
        %3734 = vdwg.mxu0
        %3735 = vmatpush.bf16.msra.mxu0 %v3684
        %3736 = vmatpush.bf16.msra.mxu0 %v3681
        %3737 = vmatpush.bf16.msra.mxu0 %v3678
        %3738 = vmatpush.bf16.msra.mxu0 %v3675
        %3739 = vmatpush.bf16.msra.mxu0 %v3672
        %3740 = vmatpush.bf16.msra.mxu0 %v3669
        %3741 = vmatpush.bf16.msra.mxu0 %v3666
        %3742 = vmatpush.bf16.msra.mxu0 %v3663
        %3743 = vmatmul.bf16.gmra.mxu0 %v3580
        %v3744 = vpop.f32.mrf.mxu0
        %v3745 = vadd.f32 %v3535, %v3744
        %v3746 = vpop.f32.mrf.mxu0
        %3747 = vdwg.mxu0
        %v3748 = vpack.c.bf16 %v3560, %v3560
        %v3781 = vunpack.c.l.b16 %v3498
        %v3782 = vunpack.c.h.b16 %v3498
        %v3783 = vunpack.c.l.b16 %v3499
        %v3784 = vunpack.c.l.b16 %v3500
        %v3785 = vunpack.c.h.b16 %v3500
        %v3786 = vunpack.c.l.b16 %v3501
        %v3787 = vunpack.c.l.b16 %v3502
        %v3788 = vunpack.c.h.b16 %v3502
        %v3789 = vunpack.c.l.b16 %v3503
        %v3790 = vunpack.c.l.b16 %v3504
        %v3791 = vunpack.c.h.b16 %v3504
        %v3792 = vunpack.c.l.b16 %v3505
        %v3793 = vunpack.c.l.b16 %v3506
        %v3794 = vunpack.c.h.b16 %v3506
        %v3795 = vunpack.c.l.b16 %v3507
        %v3796 = vunpack.c.l.b16 %v3508
        %v3797 = vunpack.c.h.b16 %v3508
        %v3798 = vunpack.c.l.b16 %v3509
        %v3799 = vunpack.c.l.b16 %v3510
        %v3800 = vunpack.c.h.b16 %v3510
        %v3801 = vunpack.c.l.b16 %v3511
        %v3802 = vunpack.c.l.b16 %v3512
        %v3803 = vunpack.c.h.b16 %v3512
        %v3804 = vunpack.c.l.b16 %v3513
        %v3805 = vunpack.c.l.b16 %v3514
        %v3806 = vunpack.c.h.b16 %v3514
        %v3807 = vunpack.c.l.b16 %v3515
        %v3808 = vunpack.c.l.b16 %v3516
        %v3809 = vunpack.c.h.b16 %v3516
        %v3810 = vunpack.c.l.b16 %v3517
        %v3811 = vunpack.c.l.b16 %v3518
        %v3812 = vunpack.c.h.b16 %v3518
        %v3813 = vunpack.c.l.b16 %v3519
        %v3814 = vunpack.c.l.b16 %v3520
        %v3815 = vunpack.c.h.b16 %v3520
        %v3816 = vunpack.c.l.b16 %v3521
        %v3817 = vunpack.c.l.b16 %v3522
        %v3818 = vunpack.c.h.b16 %v3522
        %v3819 = vunpack.c.l.b16 %v3523
        %v3820 = vunpack.c.l.b16 %v3524
        %v3821 = vunpack.c.h.b16 %v3524
        %v3822 = vunpack.c.l.b16 %v3525
        %v3823 = vunpack.c.l.b16 %v3526
        %v3824 = vunpack.c.h.b16 %v3526
        %v3825 = vunpack.c.l.b16 %v3527
        %v3826 = vunpack.c.l.b16 %v3528
        %v3827 = vunpack.c.h.b16 %v3528
        %v3828 = vunpack.c.l.b16 %v3529
        %v3829 = vpack.c.b16 %v3784, %v3781
        %v3830 = vpack.c.b16 %v3785, %v3782
        %v3831 = vpack.c.b16 %v3786, %v3783
        %v3832 = vpack.c.b16 %v3790, %v3787
        %v3833 = vpack.c.b16 %v3791, %v3788
        %v3834 = vpack.c.b16 %v3792, %v3789
        %v3835 = vpack.c.b16 %v3796, %v3793
        %v3836 = vpack.c.b16 %v3797, %v3794
        %v3837 = vpack.c.b16 %v3798, %v3795
        %v3838 = vpack.c.b16 %v3802, %v3799
        %v3839 = vpack.c.b16 %v3803, %v3800
        %v3840 = vpack.c.b16 %v3804, %v3801
        %v3841 = vpack.c.b16 %v3808, %v3805
        %v3842 = vpack.c.b16 %v3809, %v3806
        %v3843 = vpack.c.b16 %v3810, %v3807
        %v3844 = vpack.c.b16 %v3814, %v3811
        %v3845 = vpack.c.b16 %v3815, %v3812
        %v3846 = vpack.c.b16 %v3816, %v3813
        %v3847 = vpack.c.b16 %v3820, %v3817
        %v3848 = vpack.c.b16 %v3821, %v3818
        %v3849 = vpack.c.b16 %v3822, %v3819
        %v3850 = vpack.c.b16 %v3826, %v3823
        %v3851 = vpack.c.b16 %v3827, %v3824
        %v3852 = vpack.c.b16 %v3828, %v3825
        %3877 = vmatpush.bf16.msra.mxu0 %v3850
        %3878 = vmatpush.bf16.msra.mxu0 %v3847
        %3879 = vmatpush.bf16.msra.mxu0 %v3844
        %3880 = vmatpush.bf16.msra.mxu0 %v3841
        %3881 = vmatpush.bf16.msra.mxu0 %v3838
        %3882 = vmatpush.bf16.msra.mxu0 %v3835
        %3883 = vmatpush.bf16.msra.mxu0 %v3832
        %3884 = vmatpush.bf16.msra.mxu0 %v3829
        %3885 = vmatmul.bf16.gmra.mxu0 %v3748
        %v3886 = vpop.f32.mrf.mxu0
        %v3887 = vadd.f32 %v3542, %v3886
        %v3888 = vpop.f32.mrf.mxu0
        %3889 = vdwg.mxu0
        %3890 = vmatpush.bf16.msra.mxu0 %v3851
        %3891 = vmatpush.bf16.msra.mxu0 %v3848
        %3892 = vmatpush.bf16.msra.mxu0 %v3845
        %3893 = vmatpush.bf16.msra.mxu0 %v3842
        %3894 = vmatpush.bf16.msra.mxu0 %v3839
        %3895 = vmatpush.bf16.msra.mxu0 %v3836
        %3896 = vmatpush.bf16.msra.mxu0 %v3833
        %3897 = vmatpush.bf16.msra.mxu0 %v3830
        %3898 = vmatmul.bf16.gmra.mxu0 %v3748
        %v3899 = vpop.f32.mrf.mxu0
        %v3900 = vadd.f32 %v3543, %v3899
        %v3901 = vpop.f32.mrf.mxu0
        %3902 = vdwg.mxu0
        %3903 = vmatpush.bf16.msra.mxu0 %v3852
        %3904 = vmatpush.bf16.msra.mxu0 %v3849
        %3905 = vmatpush.bf16.msra.mxu0 %v3846
        %3906 = vmatpush.bf16.msra.mxu0 %v3843
        %3907 = vmatpush.bf16.msra.mxu0 %v3840
        %3908 = vmatpush.bf16.msra.mxu0 %v3837
        %3909 = vmatpush.bf16.msra.mxu0 %v3834
        %3910 = vmatpush.bf16.msra.mxu0 %v3831
        %3911 = vmatmul.bf16.gmra.mxu0 %v3748
        %v3912 = vpop.f32.mrf.mxu0
        %v3913 = vadd.f32 %v3544, %v3912
        %v3914 = vpop.f32.mrf.mxu0
        %3915 = vdwg.mxu0
        %v3916 = vadd.f32 %v3569, %v3719
        %v3917 = vxor.u32 %v3916, 2147483648
        %v3918 = vmul.f32 %v3917, 1.442695
        %v3919 = vpow.pop %v3918
        %v3920 = vadd.f32 %v3919, 1.0
        %v3921 = vrcp.pop %v3920
        %v3922 = vmul.f32 %v3920, %v3921
        %v3923 = vsub.f32 1.0, %v3922
        %v3924 = vmul.f32 %v3921, %v3923
        %v3925 = vadd.f32 %v3921, %v3924
        %vm3926 = vweird.f32 %v3920
        %vm3927 = vweird.f32 %v3921
        %vm3928 = vmor %vm3926, %vm3927
        %v3929 = vsel %vm3928, %v3921, %v3925
        %v3930 = vand.u32 2147483647, %v3920
        %vm3931 = vcmp.eq.f32.partialorder %v3930, 8.507059e+37
        %v3932 = vand.u32 %v3920, 2147483648
        %v3933 = vor.u32 1.1754944e-38, %v3932
        %v3934 = vsel %vm3931, %v3933, %v3929
        %v3935 = vmul.f32 1.0, %v3934
        %v3936 = vadd.f32 %v3570, %v3732
        %v3937 = vxor.u32 %v3936, 2147483648
        %v3938 = vmul.f32 %v3937, 1.442695
        %v3939 = vpow.pop %v3938
        %v3940 = vadd.f32 %v3939, 1.0
        %v3941 = vrcp.pop %v3940
        %v3942 = vmul.f32 %v3940, %v3941
        %v3943 = vsub.f32 1.0, %v3942
        %v3944 = vmul.f32 %v3941, %v3943
        %v3945 = vadd.f32 %v3941, %v3944
        %vm3946 = vweird.f32 %v3940
        %vm3947 = vweird.f32 %v3941
        %vm3948 = vmor %vm3946, %vm3947
        %v3949 = vsel %vm3948, %v3941, %v3945
        %v3950 = vand.u32 2147483647, %v3940
        %vm3951 = vcmp.eq.f32.partialorder %v3950, 8.507059e+37
        %v3952 = vand.u32 %v3940, 2147483648
        %v3953 = vor.u32 1.1754944e-38, %v3952
        %v3954 = vsel %vm3951, %v3953, %v3949
        %v3955 = vmul.f32 1.0, %v3954
        %v3956 = vmul.f32 %v3935, %v3745
        %v3957 = vadd.f32 %v3571, %v3956
        %v3958 = vtanh.pop %v3957
        %v3959 = vsub.f32 1.0, %v3955
        %v3960 = vmul.f32 %v3959, %v3958
        %v3961 = vmul.f32 %v3955, %v3559
        %v3962 = vadd.f32 %v3960, %v3961
        %v3963 = vadd.f32 %v3577, %v3887
        %v3964 = vxor.u32 %v3963, 2147483648
        %v3965 = vmul.f32 %v3964, 1.442695
        %v3966 = vpow.pop %v3965
        %v3967 = vadd.f32 %v3966, 1.0
        %v3968 = vrcp.pop %v3967
        %v3969 = vmul.f32 %v3967, %v3968
        %v3970 = vsub.f32 1.0, %v3969
        %v3971 = vmul.f32 %v3968, %v3970
        %v3972 = vadd.f32 %v3968, %v3971
        %vm3973 = vweird.f32 %v3967
        %vm3974 = vweird.f32 %v3968
        %vm3975 = vmor %vm3973, %vm3974
        %v3976 = vsel %vm3975, %v3968, %v3972
        %v3977 = vand.u32 2147483647, %v3967
        %vm3978 = vcmp.eq.f32.partialorder %v3977, 8.507059e+37
        %v3979 = vand.u32 %v3967, 2147483648
        %v3980 = vor.u32 1.1754944e-38, %v3979
        %v3981 = vsel %vm3978, %v3980, %v3976
        %v3982 = vmul.f32 1.0, %v3981
        %v3983 = vadd.f32 %v3578, %v3900
        %v3984 = vxor.u32 %v3983, 2147483648
        %v3985 = vmul.f32 %v3984, 1.442695
        %v3986 = vpow.pop %v3985
        %v3987 = vadd.f32 %v3986, 1.0
        %v3988 = vrcp.pop %v3987
        %v3989 = vmul.f32 %v3987, %v3988
        %v3990 = vsub.f32 1.0, %v3989
        %v3991 = vmul.f32 %v3988, %v3990
        %v3992 = vadd.f32 %v3988, %v3991
        %vm3993 = vweird.f32 %v3987
        %vm3994 = vweird.f32 %v3988
        %vm3995 = vmor %vm3993, %vm3994
        %v3996 = vsel %vm3995, %v3988, %v3992
        %v3997 = vand.u32 2147483647, %v3987
        %vm3998 = vcmp.eq.f32.partialorder %v3997, 8.507059e+37
        %v3999 = vand.u32 %v3987, 2147483648
        %v4000 = vor.u32 1.1754944e-38, %v3999
        %v4001 = vsel %vm3998, %v4000, %v3996
        %v4002 = vmul.f32 1.0, %v4001
        %v4003 = vmul.f32 %v3982, %v3913
        %v4004 = vadd.f32 %v3579, %v4003
        %v4005 = vtanh.pop %v4004
        %v4006 = vsub.f32 1.0, %v4002
        %v4007 = vmul.f32 %v4006, %v4005
        %v4008 = vmul.f32 %v4002, %v3560
        %v4009 = vadd.f32 %v4007, %v4008
        %s4010 = sadd.s32 %s3548, %s3554
        %v4011 = vstv %s4010
        %vm4012 = vcmp.lt.s32.totalorder %v4011, %v3465
        %s4013 = sadd.s32 %s3550, %s3561
        %v4014 = vstv %s4013
        %vm4015 = vcmp.lt.s32.totalorder %v4014, %v3465
        %v4016 = vsel %vm4015, 1, 0
        %4017 = vset.pattern.permute.xlu0 0
        %4018 = vperm.xlu0 %4017, %v4016
        %v4019 = vpop.permute.xlu0 %4018
        %vm4020 = vcmp.eq.s32.totalorder %v4019, 1
        %v4021 = vsel %vm4020, %v4009, 0.0
        %v4022 = vsel %vm4012, 1, 0
        %4023 = vset.pattern.permute.xlu0 0
        %4024 = vperm.xlu0 %4023, %v4022
        %v4025 = vpop.permute.xlu0 %4024
        %vm4026 = vcmp.eq.s32.totalorder %v4025, 1
        %v4027 = vsel %vm4026, %v3962, 0.0
        %s4028 = scalar_lea.vmem [#allocation4], %s3562
        %4029 = vst [vmem:[%s4028] sm:$0xff] %v4027
        %s4030 = scalar_lea.vmem [#allocation5], %s3563
        %4031 = vst [vmem:[%s4030] sm:$0xff] %v4021
      $region61: #{forward.4} parent=51 // loop_footer
        %s3558 = sadd.s32 1, %s3554
      $region62: #{forward.4} parent=51 // loop_footer_branch
        %3553 = sbr.rel target = $region58
      $region63: #{forward.4} parent=51 // loop_exit
        _
      %4032 = vst [vmem:[#allocation6] sm:$0xff] %v3559
      %4033 = vst [vmem:[#allocation7] sm:$0xff] %v3560
      %v4034 = vld [vmem:[#allocation4] sm:$0xff]
      %v4035 = vld [vmem:[#allocation4 + $0x8] sm:$0xff]
      %v4036 = vld [vmem:[#allocation4 + $0x10] sm:$0xff]
      %v4037 = vld [vmem:[#allocation4 + $0x18] sm:$0xff]
      %v4038 = vld [vmem:[#allocation4 + $0x20] sm:$0xff]
      %v4039 = vld [vmem:[#allocation4 + $0x28] sm:$0xff]
      %v4040 = vld [vmem:[#allocation4 + $0x30] sm:$0xff]
      %v4041 = vld [vmem:[#allocation4 + $0x38] sm:$0xff]
      %v4042 = vld [vmem:[#allocation4 + $0x40] sm:$0xff]
      %v4043 = vld [vmem:[#allocation4 + $0x48] sm:$0xff]
      %v4044 = vld [vmem:[#allocation4 + $0x50] sm:$0xff]
      %v4045 = vld [vmem:[#allocation4 + $0x58] sm:$0xff]
      %v4046 = vld [vmem:[#allocation4 + $0x60] sm:$0xff]
      %v4047 = vld [vmem:[#allocation4 + $0x68] sm:$0xff]
      %v4048 = vld [vmem:[#allocation4 + $0x70] sm:$0xff]
      %v4049 = vld [vmem:[#allocation4 + $0x78] sm:$0xff]
      %v4050 = vld [vmem:[#allocation4 + $0x80] sm:$0xff]
      %v4051 = vld [vmem:[#allocation4 + $0x88] sm:$0xff]
      %v4052 = vld [vmem:[#allocation4 + $0x90] sm:$0xff]
      %v4053 = vld [vmem:[#allocation4 + $0x98] sm:$0xff]
      %v4054 = vld [vmem:[#allocation4 + $0xa0] sm:$0xff]
      %v4055 = vld [vmem:[#allocation4 + $0xa8] sm:$0xff]
      %v4056 = vld [vmem:[#allocation4 + $0xb0] sm:$0xff]
      %v4057 = vld [vmem:[#allocation4 + $0xb8] sm:$0xff]
      %v4058 = vld [vmem:[#allocation4 + $0xc0] sm:$0xff]
      %v4059 = vld [vmem:[#allocation4 + $0xc8] sm:$0xff]
      %v4060 = vld [vmem:[#allocation4 + $0xd0] sm:$0xff]
      %v4061 = vld [vmem:[#allocation4 + $0xd8] sm:$0xff]
      %v4062 = vld [vmem:[#allocation4 + $0xe0] sm:$0xff]
      %v4063 = vld [vmem:[#allocation4 + $0xe8] sm:$0xff]
      %v4064 = vld [vmem:[#allocation4 + $0xf0] sm:$0xff]
      %v4065 = vld [vmem:[#allocation4 + $0xf8] sm:$0xff]
      %v4066 = vld [vmem:[#allocation4 + $0x100] sm:$0xff]
      %v4067 = vld [vmem:[#allocation4 + $0x108] sm:$0xff]
      %v4068 = vld [vmem:[#allocation4 + $0x110] sm:$0xff]
      %v4069 = vld [vmem:[#allocation4 + $0x118] sm:$0xff]
      %v4070 = vld [vmem:[#allocation4 + $0x120] sm:$0xff]
      %v4071 = vld [vmem:[#allocation4 + $0x128] sm:$0xff]
      %v4072 = vld [vmem:[#allocation4 + $0x130] sm:$0xff]
      %v4073 = vld [vmem:[#allocation4 + $0x138] sm:$0xff]
      %v4074 = vld [vmem:[#allocation4 + $0x140] sm:$0xff]
      %v4075 = vld [vmem:[#allocation4 + $0x148] sm:$0xff]
      %v4076 = vld [vmem:[#allocation4 + $0x150] sm:$0xff]
      %v4077 = vld [vmem:[#allocation4 + $0x158] sm:$0xff]
      %v4078 = vld [vmem:[#allocation4 + $0x160] sm:$0xff]
      %v4079 = vld [vmem:[#allocation4 + $0x168] sm:$0xff]
      %v4080 = vld [vmem:[#allocation4 + $0x170] sm:$0xff]
      %v4081 = vld [vmem:[#allocation4 + $0x178] sm:$0xff]
      %v4082 = vpack.c.bf16 %v4034, %v4034
      %v4083 = vpack.c.bf16 %v4035, %v4035
      %v4084 = vpack.c.bf16 %v4036, %v4036
      %v4085 = vpack.c.bf16 %v4037, %v4037
      %v4086 = vpack.c.bf16 %v4038, %v4038
      %v4087 = vpack.c.bf16 %v4039, %v4039
      %v4088 = vpack.c.bf16 %v4040, %v4040
      %v4089 = vpack.c.bf16 %v4041, %v4041
      %v4090 = vpack.c.bf16 %v4042, %v4042
      %v4091 = vpack.c.bf16 %v4043, %v4043
      %v4092 = vpack.c.bf16 %v4044, %v4044
      %v4093 = vpack.c.bf16 %v4045, %v4045
      %v4094 = vpack.c.bf16 %v4046, %v4046
      %v4095 = vpack.c.bf16 %v4047, %v4047
      %v4096 = vpack.c.bf16 %v4048, %v4048
      %v4097 = vpack.c.bf16 %v4049, %v4049
      %v4098 = vpack.c.bf16 %v4050, %v4050
      %v4099 = vpack.c.bf16 %v4051, %v4051
      %v4100 = vpack.c.bf16 %v4052, %v4052
      %v4101 = vpack.c.bf16 %v4053, %v4053
      %v4102 = vpack.c.bf16 %v4054, %v4054
      %v4103 = vpack.c.bf16 %v4055, %v4055
      %v4104 = vpack.c.bf16 %v4056, %v4056
      %v4105 = vpack.c.bf16 %v4057, %v4057
      %v4106 = vpack.c.bf16 %v4058, %v4058
      %v4107 = vpack.c.bf16 %v4059, %v4059
      %v4108 = vpack.c.bf16 %v4060, %v4060
      %v4109 = vpack.c.bf16 %v4061, %v4061
      %v4110 = vpack.c.bf16 %v4062, %v4062
      %v4111 = vpack.c.bf16 %v4063, %v4063
      %v4112 = vpack.c.bf16 %v4064, %v4064
      %v4113 = vpack.c.bf16 %v4065, %v4065
      %v4114 = vpack.c.bf16 %v4066, %v4066
      %v4115 = vpack.c.bf16 %v4067, %v4067
      %v4116 = vpack.c.bf16 %v4068, %v4068
      %v4117 = vpack.c.bf16 %v4069, %v4069
      %v4118 = vpack.c.bf16 %v4070, %v4070
      %v4119 = vpack.c.bf16 %v4071, %v4071
      %v4120 = vpack.c.bf16 %v4072, %v4072
      %v4121 = vpack.c.bf16 %v4073, %v4073
      %v4122 = vpack.c.bf16 %v4074, %v4074
      %v4123 = vpack.c.bf16 %v4075, %v4075
      %v4124 = vpack.c.bf16 %v4076, %v4076
      %v4125 = vpack.c.bf16 %v4077, %v4077
      %v4126 = vpack.c.bf16 %v4078, %v4078
      %v4127 = vpack.c.bf16 %v4079, %v4079
      %v4128 = vpack.c.bf16 %v4080, %v4080
      %v4129 = vpack.c.bf16 %v4081, %v4081
      %4130 = vst [vmem:[%s380] sm:$0xf] %v4082
      %4131 = vst [vmem:[%s380 + $0x4] sm:$0xf] %v4083
      %4132 = vst [vmem:[%s380 + $0x8] sm:$0xf] %v4084
      %4133 = vst [vmem:[%s380 + $0xc] sm:$0xf] %v4085
      %4134 = vst [vmem:[%s380 + $0x10] sm:$0xf] %v4086
      %4135 = vst [vmem:[%s380 + $0x14] sm:$0xf] %v4087
      %4136 = vst [vmem:[%s380 + $0x18] sm:$0xf] %v4088
      %4137 = vst [vmem:[%s380 + $0x1c] sm:$0xf] %v4089
      %4138 = vst [vmem:[%s380 + $0x20] sm:$0xf] %v4090
      %4139 = vst [vmem:[%s380 + $0x24] sm:$0xf] %v4091
      %4140 = vst [vmem:[%s380 + $0x28] sm:$0xf] %v4092
      %4141 = vst [vmem:[%s380 + $0x2c] sm:$0xf] %v4093
      %4142 = vst [vmem:[%s380 + $0x30] sm:$0xf] %v4094
      %4143 = vst [vmem:[%s380 + $0x34] sm:$0xf] %v4095
      %4144 = vst [vmem:[%s380 + $0x38] sm:$0xf] %v4096
      %4145 = vst [vmem:[%s380 + $0x3c] sm:$0xf] %v4097
      %4146 = vst [vmem:[%s380 + $0x40] sm:$0xf] %v4098
      %4147 = vst [vmem:[%s380 + $0x44] sm:$0xf] %v4099
      %4148 = vst [vmem:[%s380 + $0x48] sm:$0xf] %v4100
      %4149 = vst [vmem:[%s380 + $0x4c] sm:$0xf] %v4101
      %4150 = vst [vmem:[%s380 + $0x50] sm:$0xf] %v4102
      %4151 = vst [vmem:[%s380 + $0x54] sm:$0xf] %v4103
      %4152 = vst [vmem:[%s380 + $0x58] sm:$0xf] %v4104
      %4153 = vst [vmem:[%s380 + $0x5c] sm:$0xf] %v4105
      %4154 = vst [vmem:[%s380 + $0x60] sm:$0xf] %v4106
      %4155 = vst [vmem:[%s380 + $0x64] sm:$0xf] %v4107
      %4156 = vst [vmem:[%s380 + $0x68] sm:$0xf] %v4108
      %4157 = vst [vmem:[%s380 + $0x6c] sm:$0xf] %v4109
      %4158 = vst [vmem:[%s380 + $0x70] sm:$0xf] %v4110
      %4159 = vst [vmem:[%s380 + $0x74] sm:$0xf] %v4111
      %4160 = vst [vmem:[%s380 + $0x78] sm:$0xf] %v4112
      %4161 = vst [vmem:[%s380 + $0x7c] sm:$0xf] %v4113
      %4162 = vst [vmem:[%s380 + $0x80] sm:$0xf] %v4114
      %4163 = vst [vmem:[%s380 + $0x84] sm:$0xf] %v4115
      %4164 = vst [vmem:[%s380 + $0x88] sm:$0xf] %v4116
      %4165 = vst [vmem:[%s380 + $0x8c] sm:$0xf] %v4117
      %4166 = vst [vmem:[%s380 + $0x90] sm:$0xf] %v4118
      %4167 = vst [vmem:[%s380 + $0x94] sm:$0xf] %v4119
      %4168 = vst [vmem:[%s380 + $0x98] sm:$0xf] %v4120
      %4169 = vst [vmem:[%s380 + $0x9c] sm:$0xf] %v4121
      %4170 = vst [vmem:[%s380 + $0xa0] sm:$0xf] %v4122
      %4171 = vst [vmem:[%s380 + $0xa4] sm:$0xf] %v4123
      %4172 = vst [vmem:[%s380 + $0xa8] sm:$0xf] %v4124
      %4173 = vst [vmem:[%s380 + $0xac] sm:$0xf] %v4125
      %4174 = vst [vmem:[%s380 + $0xb0] sm:$0xf] %v4126
      %4175 = vst [vmem:[%s380 + $0xb4] sm:$0xf] %v4127
      %4176 = vst [vmem:[%s380 + $0xb8] sm:$0xf] %v4128
      %4177 = vst [vmem:[%s380 + $0xbc] sm:$0xf] %v4129
      %v4178 = vld [vmem:[#allocation5] sm:$0xff]
      %v4179 = vld [vmem:[#allocation5 + $0x8] sm:$0xff]
      %v4180 = vld [vmem:[#allocation5 + $0x10] sm:$0xff]
      %v4181 = vld [vmem:[#allocation5 + $0x18] sm:$0xff]
      %v4182 = vld [vmem:[#allocation5 + $0x20] sm:$0xff]
      %v4183 = vld [vmem:[#allocation5 + $0x28] sm:$0xff]
      %v4184 = vld [vmem:[#allocation5 + $0x30] sm:$0xff]
      %v4185 = vld [vmem:[#allocation5 + $0x38] sm:$0xff]
      %v4186 = vld [vmem:[#allocation5 + $0x40] sm:$0xff]
      %v4187 = vld [vmem:[#allocation5 + $0x48] sm:$0xff]
      %v4188 = vld [vmem:[#allocation5 + $0x50] sm:$0xff]
      %v4189 = vld [vmem:[#allocation5 + $0x58] sm:$0xff]
      %v4190 = vld [vmem:[#allocation5 + $0x60] sm:$0xff]
      %v4191 = vld [vmem:[#allocation5 + $0x68] sm:$0xff]
      %v4192 = vld [vmem:[#allocation5 + $0x70] sm:$0xff]
      %v4193 = vld [vmem:[#allocation5 + $0x78] sm:$0xff]
      %v4194 = vld [vmem:[#allocation5 + $0x80] sm:$0xff]
      %v4195 = vld [vmem:[#allocation5 + $0x88] sm:$0xff]
      %v4196 = vld [vmem:[#allocation5 + $0x90] sm:$0xff]
      %v4197 = vld [vmem:[#allocation5 + $0x98] sm:$0xff]
      %v4198 = vld [vmem:[#allocation5 + $0xa0] sm:$0xff]
      %v4199 = vld [vmem:[#allocation5 + $0xa8] sm:$0xff]
      %v4200 = vld [vmem:[#allocation5 + $0xb0] sm:$0xff]
      %v4201 = vld [vmem:[#allocation5 + $0xb8] sm:$0xff]
      %v4202 = vld [vmem:[#allocation5 + $0xc0] sm:$0xff]
      %v4203 = vld [vmem:[#allocation5 + $0xc8] sm:$0xff]
      %v4204 = vld [vmem:[#allocation5 + $0xd0] sm:$0xff]
      %v4205 = vld [vmem:[#allocation5 + $0xd8] sm:$0xff]
      %v4206 = vld [vmem:[#allocation5 + $0xe0] sm:$0xff]
      %v4207 = vld [vmem:[#allocation5 + $0xe8] sm:$0xff]
      %v4208 = vld [vmem:[#allocation5 + $0xf0] sm:$0xff]
      %v4209 = vld [vmem:[#allocation5 + $0xf8] sm:$0xff]
      %v4210 = vld [vmem:[#allocation5 + $0x100] sm:$0xff]
      %v4211 = vld [vmem:[#allocation5 + $0x108] sm:$0xff]
      %v4212 = vld [vmem:[#allocation5 + $0x110] sm:$0xff]
      %v4213 = vld [vmem:[#allocation5 + $0x118] sm:$0xff]
      %v4214 = vld [vmem:[#allocation5 + $0x120] sm:$0xff]
      %v4215 = vld [vmem:[#allocation5 + $0x128] sm:$0xff]
      %v4216 = vld [vmem:[#allocation5 + $0x130] sm:$0xff]
      %v4217 = vld [vmem:[#allocation5 + $0x138] sm:$0xff]
      %v4218 = vld [vmem:[#allocation5 + $0x140] sm:$0xff]
      %v4219 = vld [vmem:[#allocation5 + $0x148] sm:$0xff]
      %v4220 = vld [vmem:[#allocation5 + $0x150] sm:$0xff]
      %v4221 = vld [vmem:[#allocation5 + $0x158] sm:$0xff]
      %v4222 = vld [vmem:[#allocation5 + $0x160] sm:$0xff]
      %v4223 = vld [vmem:[#allocation5 + $0x168] sm:$0xff]
      %v4224 = vld [vmem:[#allocation5 + $0x170] sm:$0xff]
      %v4225 = vld [vmem:[#allocation5 + $0x178] sm:$0xff]
      %v4226 = vpack.c.bf16 %v4178, %v4178
      %v4227 = vpack.c.bf16 %v4179, %v4179
      %v4228 = vpack.c.bf16 %v4180, %v4180
      %v4229 = vpack.c.bf16 %v4181, %v4181
      %v4230 = vpack.c.bf16 %v4182, %v4182
      %v4231 = vpack.c.bf16 %v4183, %v4183
      %v4232 = vpack.c.bf16 %v4184, %v4184
      %v4233 = vpack.c.bf16 %v4185, %v4185
      %v4234 = vpack.c.bf16 %v4186, %v4186
      %v4235 = vpack.c.bf16 %v4187, %v4187
      %v4236 = vpack.c.bf16 %v4188, %v4188
      %v4237 = vpack.c.bf16 %v4189, %v4189
      %v4238 = vpack.c.bf16 %v4190, %v4190
      %v4239 = vpack.c.bf16 %v4191, %v4191
      %v4240 = vpack.c.bf16 %v4192, %v4192
      %v4241 = vpack.c.bf16 %v4193, %v4193
      %v4242 = vpack.c.bf16 %v4194, %v4194
      %v4243 = vpack.c.bf16 %v4195, %v4195
      %v4244 = vpack.c.bf16 %v4196, %v4196
      %v4245 = vpack.c.bf16 %v4197, %v4197
      %v4246 = vpack.c.bf16 %v4198, %v4198
      %v4247 = vpack.c.bf16 %v4199, %v4199
      %v4248 = vpack.c.bf16 %v4200, %v4200
      %v4249 = vpack.c.bf16 %v4201, %v4201
      %v4250 = vpack.c.bf16 %v4202, %v4202
      %v4251 = vpack.c.bf16 %v4203, %v4203
      %v4252 = vpack.c.bf16 %v4204, %v4204
      %v4253 = vpack.c.bf16 %v4205, %v4205
      %v4254 = vpack.c.bf16 %v4206, %v4206
      %v4255 = vpack.c.bf16 %v4207, %v4207
      %v4256 = vpack.c.bf16 %v4208, %v4208
      %v4257 = vpack.c.bf16 %v4209, %v4209
      %v4258 = vpack.c.bf16 %v4210, %v4210
      %v4259 = vpack.c.bf16 %v4211, %v4211
      %v4260 = vpack.c.bf16 %v4212, %v4212
      %v4261 = vpack.c.bf16 %v4213, %v4213
      %v4262 = vpack.c.bf16 %v4214, %v4214
      %v4263 = vpack.c.bf16 %v4215, %v4215
      %v4264 = vpack.c.bf16 %v4216, %v4216
      %v4265 = vpack.c.bf16 %v4217, %v4217
      %v4266 = vpack.c.bf16 %v4218, %v4218
      %v4267 = vpack.c.bf16 %v4219, %v4219
      %v4268 = vpack.c.bf16 %v4220, %v4220
      %v4269 = vpack.c.bf16 %v4221, %v4221
      %v4270 = vpack.c.bf16 %v4222, %v4222
      %v4271 = vpack.c.bf16 %v4223, %v4223
      %v4272 = vpack.c.bf16 %v4224, %v4224
      %v4273 = vpack.c.bf16 %v4225, %v4225
      %4274 = vst [vmem:[%s387] sm:$0xf] %v4226
      %4275 = vst [vmem:[%s387 + $0x4] sm:$0xf] %v4227
      %4276 = vst [vmem:[%s387 + $0x8] sm:$0xf] %v4228
      %4277 = vst [vmem:[%s387 + $0xc] sm:$0xf] %v4229
      %4278 = vst [vmem:[%s387 + $0x10] sm:$0xf] %v4230
      %4279 = vst [vmem:[%s387 + $0x14] sm:$0xf] %v4231
      %4280 = vst [vmem:[%s387 + $0x18] sm:$0xf] %v4232
      %4281 = vst [vmem:[%s387 + $0x1c] sm:$0xf] %v4233
      %4282 = vst [vmem:[%s387 + $0x20] sm:$0xf] %v4234
      %4283 = vst [vmem:[%s387 + $0x24] sm:$0xf] %v4235
      %4284 = vst [vmem:[%s387 + $0x28] sm:$0xf] %v4236
      %4285 = vst [vmem:[%s387 + $0x2c] sm:$0xf] %v4237
      %4286 = vst [vmem:[%s387 + $0x30] sm:$0xf] %v4238
      %4287 = vst [vmem:[%s387 + $0x34] sm:$0xf] %v4239
      %4288 = vst [vmem:[%s387 + $0x38] sm:$0xf] %v4240
      %4289 = vst [vmem:[%s387 + $0x3c] sm:$0xf] %v4241
      %4290 = vst [vmem:[%s387 + $0x40] sm:$0xf] %v4242
      %4291 = vst [vmem:[%s387 + $0x44] sm:$0xf] %v4243
      %4292 = vst [vmem:[%s387 + $0x48] sm:$0xf] %v4244
      %4293 = vst [vmem:[%s387 + $0x4c] sm:$0xf] %v4245
      %4294 = vst [vmem:[%s387 + $0x50] sm:$0xf] %v4246
      %4295 = vst [vmem:[%s387 + $0x54] sm:$0xf] %v4247
      %4296 = vst [vmem:[%s387 + $0x58] sm:$0xf] %v4248
      %4297 = vst [vmem:[%s387 + $0x5c] sm:$0xf] %v4249
      %4298 = vst [vmem:[%s387 + $0x60] sm:$0xf] %v4250
      %4299 = vst [vmem:[%s387 + $0x64] sm:$0xf] %v4251
      %4300 = vst [vmem:[%s387 + $0x68] sm:$0xf] %v4252
      %4301 = vst [vmem:[%s387 + $0x6c] sm:$0xf] %v4253
      %4302 = vst [vmem:[%s387 + $0x70] sm:$0xf] %v4254
      %4303 = vst [vmem:[%s387 + $0x74] sm:$0xf] %v4255
      %4304 = vst [vmem:[%s387 + $0x78] sm:$0xf] %v4256
      %4305 = vst [vmem:[%s387 + $0x7c] sm:$0xf] %v4257
      %4306 = vst [vmem:[%s387 + $0x80] sm:$0xf] %v4258
      %4307 = vst [vmem:[%s387 + $0x84] sm:$0xf] %v4259
      %4308 = vst [vmem:[%s387 + $0x88] sm:$0xf] %v4260
      %4309 = vst [vmem:[%s387 + $0x8c] sm:$0xf] %v4261
      %4310 = vst [vmem:[%s387 + $0x90] sm:$0xf] %v4262
      %4311 = vst [vmem:[%s387 + $0x94] sm:$0xf] %v4263
      %4312 = vst [vmem:[%s387 + $0x98] sm:$0xf] %v4264
      %4313 = vst [vmem:[%s387 + $0x9c] sm:$0xf] %v4265
      %4314 = vst [vmem:[%s387 + $0xa0] sm:$0xf] %v4266
      %4315 = vst [vmem:[%s387 + $0xa4] sm:$0xf] %v4267
      %4316 = vst [vmem:[%s387 + $0xa8] sm:$0xf] %v4268
      %4317 = vst [vmem:[%s387 + $0xac] sm:$0xf] %v4269
      %4318 = vst [vmem:[%s387 + $0xb0] sm:$0xf] %v4270
      %4319 = vst [vmem:[%s387 + $0xb4] sm:$0xf] %v4271
      %4320 = vst [vmem:[%s387 + $0xb8] sm:$0xf] %v4272
      %4321 = vst [vmem:[%s387 + $0xbc] sm:$0xf] %v4273
      %s4322 = smul.u32 48, %s21
      %p4323 = scmp.lt.s32.totalorder %s4322, 95
      %s4324 = scalar_select %p4323, %s4322, 95
      %s4325 = smul.addr %s4324, 4
      %s4326 = scalar_lea.vmem %s8, %s4325
      %s4327 = ssub.s32 1, %s21
      %s4328 = smul.u32 48, %s4327
      %p4329 = scmp.lt.s32.totalorder %s4328, 95
      %s4330 = scalar_select %p4329, %s4328, 95
      %s4331 = smul.addr %s4330, 4
      %s4332 = scalar_lea.vmem %s9, %s4331
      // Predicated region
      $region64: #{forward.4} parent=51 // pred_check
        %p4333 = pneg %p219
      $region65: #{forward.4} parent=51 // pred_check_branch
        %4335 = sbr.rel (%p4333) target = $region67
      $region66: #{forward.4} parent=51 // pred_region
        %s4336 = smul.u32 48, %s21
      $region67: #{forward.4} parent=51 // pred_fallthru
        _
      // Predicated region
      $region68: #{forward.4} parent=51 // pred_check
        %p4337 = pneg %p247
      $region69: #{forward.4} parent=51 // pred_check_branch
        %4339 = sbr.rel (%p4337) target = $region71
      $region70: #{forward.4} parent=51 // pred_region
        %s4340 = ssub.s32 1, %s21
        %s4341 = smul.u32 48, %s4340
      $region71: #{forward.4} parent=51 // pred_fallthru
        _
    $region52: #{forward.4} parent=5 // pred_fallthru
      _
    %p4342 = scmp.le.s32.totalorder 2, %s16
    // Predicated region
    $region72: #{forward.4} parent=5 // pred_check
      %p4343 = pneg %p4342
    $region73: #{forward.4} parent=5 // pred_check_branch
      %4345 = sbr.rel (%p4343) target = $region75
    $region74: #{forward.4} parent=5 // pred_region
      %s4346 = ssub.s32 %s16, 2
      // Predicated region
      $region76: #{forward.4} parent=74 // pred_check
        %p4347 = pneg %p225
      $region77: #{forward.4} parent=74 // pred_check_branch
        %4349 = sbr.rel (%p4347) target = $region79
      $region78: #{forward.4} parent=74 // pred_region
        %s4350 = smul.u32 48, %s22
        %p4351 = scmp.lt.s32.totalorder %s4350, 95
        %s4352 = scalar_select %p4351, %s4350, 95
        %s4353 = smul.addr %s4352, 4
        %s4354 = scalar_lea.vmem %s8, %s4353
      $region79: #{forward.4} parent=74 // pred_fallthru
        _
      // Predicated region
      $region80: #{forward.4} parent=74 // pred_check
        %p4355 = pneg %p253
      $region81: #{forward.4} parent=74 // pred_check_branch
        %4357 = sbr.rel (%p4355) target = $region83
      $region82: #{forward.4} parent=74 // pred_region
        %s4358 = ssub.s32 1, %s22
        %s4359 = smul.u32 48, %s4358
        %p4360 = scmp.lt.s32.totalorder %s4359, 95
        %s4361 = scalar_select %p4360, %s4359, 95
        %s4362 = smul.addr %s4361, 4
        %s4363 = scalar_lea.vmem %s9, %s4362
      $region83: #{forward.4} parent=74 // pred_fallthru
        _
    $region75: #{forward.4} parent=5 // pred_fallthru
      _
  $region6: #{forward.4} parent=0 // loop_footer
    %s20 = sadd.s32 1, %s16
  $region7: #{forward.4} parent=0 // loop_footer_branch
    %15 = sbr.rel target = $region3
  $region8: #{forward.4} parent=0 // loop_exit
    _

</llo_original>
